<compile_context>
chip_gen: v5e
topology: v5e:2x2
jax: 0.10.0
libtpu: 0.0.40
codegen_flags: <defaults>
</compile_context>

<pallas_src>
import functools

import jax
import jax.numpy as jnp
from jax.experimental import pallas as pl
from jax.experimental.pallas import tpu as pltpu

LANE = 128
SUBLANE = 8
CONV_BLOCK_CAP = 16                 # images per conv grid step (v7x-safe VMEM)
VMEM_LIMIT = 32 * 1024 * 1024       # plenty for these block sizes on v5e/v6e/v7x


def _round_up(x, m):
    return ((x + m - 1) // m) * m


def _pick_block(n, cap):
    """Images per conv grid step: bounded by `cap`, and >=2 grid steps whenever
    n >= 2 so the 'parallel' batch axis can shard across v7x's 2 TensorCores."""
    if n <= 1:
        return 1
    return max(1, min(cap, (n + 1) // 2))


# ---------------------------------------------------------------------------
# Pallas kernels
# ---------------------------------------------------------------------------
def _conv_kernel(x_ref, w_ref, b_ref, o_ref, *, pool, Hout, Wop, Wg):
    """Fused conv3x3 (one full-im2col GEMM) + bias (+2x2 maxpool) + ReLU for a
    block of images.

    x_ref: (B, rows, Kp) bf16   rows = Hrows*Wop, im2col features on lanes
    w_ref: (Kp, Cout)    bf16   resident across the grid
    b_ref: (1, Cout)     f32    resident across the grid
    o_ref: (B, out_rows, Cout) bf16
    """
    B, rows, Kp = x_ref.shape
    Cout = w_ref.shape[-1]

    # Single GEMM over the whole block; value-form accumulation (no VMEM
    # scratch += round trips), f32 MXU accumulation.
    acc = jnp.dot(x_ref[...].reshape(B * rows, Kp), w_ref[...],
                  preferred_element_type=jnp.float32)
    bias = b_ref[...]                               # (1, Cout), f32 epilogue

    if pool:
        # Rows are (oy, [even cols | odd cols]); 2x2 maxpool is two aligned
        # sublane-slice maxes, vectorized over the whole block at once.
        v = acc.reshape(B * Hout, 2 * Wop, Cout)
        h = jnp.maximum(v[:, :Wop, :], v[:, Wop:, :])      # row-pair max
        p = jnp.maximum(h[:, :Wg, :], h[:, Wg:, :])        # even/odd col max
        o = jnp.maximum(p + bias, 0.0)                     # bias hoisted (1x)
        o_ref[...] = o.reshape(B, Hout * Wg, Cout).astype(o_ref.dtype)
    else:
        o = jnp.maximum(acc + bias, 0.0)
        o_ref[...] = o.reshape(B, rows, Cout).astype(o_ref.dtype)


def _fc_kernel(x_ref, w1_ref, b1_ref, w2_ref, b2_ref, o_ref):
    """Fused fc1 (+ReLU) + fc2 for one row tile; intermediate stays on-chip."""
    h = jnp.dot(x_ref[...], w1_ref[...], preferred_element_type=jnp.float32)
    h = jnp.maximum(h + b1_ref[...], 0.0)
    o_ref[...] = jnp.dot(h.astype(jnp.bfloat16), w2_ref[...],
                         preferred_element_type=jnp.float32) + b2_ref[...]


# ---------------------------------------------------------------------------
# Layer wrappers
# ---------------------------------------------------------------------------
def _conv_layer(x, w, b, Hin, Win, *, pool, block):
    """conv3x3 (VALID) + bias, ReLU (and 2x2 maxpool if pool=True).

    `x` is NHWC bf16, physical (Npad, Hp, Wp, Cin) with logical extent
    Hin x Win; carried padding beyond the logical extent is never read here.
    Returns (out_4d, Hout_logical, Wout_logical) with out_4d width-padded."""
    Npad = x.shape[0]
    Cin = x.shape[-1]
    Ho, Wo = Hin - 2, Win - 2
    if pool:
        Hrows, Hout = (Ho // 2) * 2, Ho // 2           # drop the odd last row
        Wg = _round_up((Wo + 1) // 2, SUBLANE)
        Wop = 2 * Wg
    else:
        Hrows, Hout = Ho, Ho
        Wg = None
        Wop = _round_up(Wo, SUBLANE)

    # Full 3x3 im2col (XLA glue): feature index = (dy*3 + dx)*Cin + c.
    taps = [x[:, dy:dy + Hrows, dx:dx + Wo, :]
            for dy in range(3) for dx in range(3)]
    xw = jnp.concatenate(taps, axis=-1)                # (Npad, Hrows, Wo, 9*Cin)

    if pool:
        # [even | odd] column groups, each zero-padded to Wg -> aligned pooling.
        ev = xw[:, :, 0::2, :]
        od = xw[:, :, 1::2, :]
        ev = jnp.pad(ev, ((0, 0), (0, 0), (0, Wg - ev.shape[2]), (0, 0)))
        od = jnp.pad(od, ((0, 0), (0, 0), (0, Wg - od.shape[2]), (0, 0)))
        xw = jnp.concatenate([ev, od], axis=2)         # (Npad, Hrows, Wop, 9*Cin)
    else:
        xw = jnp.pad(xw, ((0, 0), (0, 0), (0, Wop - Wo), (0, 0)))

    K = 9 * Cin
    Kp, Cout = w.shape
    xw = jnp.pad(xw, ((0, 0), (0, 0), (0, 0), (0, Kp - K)))
    xg = xw.reshape(Npad, Hrows * Wop, Kp)             # bf16 already

    rows = Hrows * Wop
    Wphys = Wg if pool else Wop
    out_rows = Hout * Wphys

    kernel = functools.partial(_conv_kernel, pool=pool, Hout=Hout, Wop=Wop, Wg=Wg)

    out = pl.pallas_call(
        kernel,
        out_shape=jax.ShapeDtypeStruct((Npad, out_rows, Cout), jnp.bfloat16),
        grid=(Npad // block,),
        in_specs=[
            pl.BlockSpec((block, rows, Kp), lambda n: (n, 0, 0)),   # image block
            pl.BlockSpec((Kp, Cout), lambda n: (0, 0)),             # weights resident
            pl.BlockSpec((1, Cout), lambda n: (0, 0)),              # bias resident
        ],
        out_specs=pl.BlockSpec((block, out_rows, Cout), lambda n: (n, 0, 0)),
        compiler_params=pltpu.CompilerParams(
            dimension_semantics=("parallel",),
            vmem_limit_bytes=VMEM_LIMIT),
    )(xg, w, b)

    out = out.reshape(Npad, Hout, Wphys, Cout)
    Wlog = (Wo // 2) if pool else Wo
    return out, Hout, Wlog


def _fc_fused(x, w1, b1, w2, b2):
    """relu(x @ w1 + b1) @ w2 + b2, both GEMMs fused in one pallas_call.
    Output feature dim is pre-padded to 128 lanes (dense, unmasked stores)."""
    N0, K = x.shape
    TM = min(128, _round_up(N0, SUBLANE))
    Np = _round_up(N0, TM)
    if Np != N0:
        x = jnp.pad(x, ((0, Np - N0), (0, 0)))
    H1p = w1.shape[1]
    C2 = w2.shape[1]

    out = pl.pallas_call(
        _fc_kernel,
        out_shape=jax.ShapeDtypeStruct((Np, C2), jnp.float32),
        grid=(Np // TM,),
        in_specs=[
            pl.BlockSpec((TM, K), lambda i: (i, 0)),
            pl.BlockSpec((K, H1p), lambda i: (0, 0)),
            pl.BlockSpec((1, H1p), lambda i: (0, 0)),
            pl.BlockSpec((H1p, C2), lambda i: (0, 0)),
            pl.BlockSpec((1, C2), lambda i: (0, 0)),
        ],
        out_specs=pl.BlockSpec((TM, C2), lambda i: (i, 0)),
        compiler_params=pltpu.CompilerParams(
            dimension_semantics=("parallel",),
            vmem_limit_bytes=VMEM_LIMIT),
    )(x, w1, b1, w2, b2)
    return out


# ---------------------------------------------------------------------------
# Parameters
# ---------------------------------------------------------------------------
def init_params(key):
    ks = jax.random.split(key, 10)
    s = 0.05
    return {
        "w1": s * jax.random.normal(ks[0], (32, 3, 3, 3), jnp.float32),
        "b1": s * jax.random.normal(ks[1], (32,), jnp.float32),
        "w2": s * jax.random.normal(ks[2], (64, 32, 3, 3), jnp.float32),
        "b2": s * jax.random.normal(ks[3], (64,), jnp.float32),
        "w3": s * jax.random.normal(ks[4], (64, 64, 3, 3), jnp.float32),
        "b3": s * jax.random.normal(ks[5], (64,), jnp.float32),
        "wf1": s * jax.random.normal(ks[6], (64, 1024), jnp.float32),  # torch (out, in)
        "bf1": s * jax.random.normal(ks[7], (64,), jnp.float32),
        "wf2": s * jax.random.normal(ks[8], (10, 64), jnp.float32),
        "bf2": s * jax.random.normal(ks[9], (10,), jnp.float32),
    }


def prepare_params(p):
    """One-time weight prep (off the hot path)."""
    def conv_w(w_oihw):
        # Single full-im2col GEMM tap: rows = (dy*3+dx)*Cin + c, padded to 128k.
        Cout, Cin, kh, kw = w_oihw.shape
        w = jnp.transpose(w_oihw, (2, 3, 1, 0)).reshape(kh * kw * Cin, Cout)
        Kp = _round_up(kh * kw * Cin, LANE)
        w = jnp.pad(w, ((0, Kp - kh * kw * Cin), (0, 0)))
        return w.astype(jnp.bfloat16)

    # fc1 consumes conv3's NHWC width-padded (4, 8, 64) flatten directly:
    # rows permuted from torch's NCHW view(-1, 1024) order, rows at padded
    # width positions zeroed, hidden dim padded 64 -> 128.
    wf1 = p["wf1"].reshape(64, 64, 4, 4)               # (j, c, h, w)
    wf1 = jnp.transpose(wf1, (2, 3, 1, 0))             # (h, w, c, j)
    wf1 = jnp.pad(wf1, ((0, 0), (0, 4), (0, 0), (0, 64)))   # w:4->8, j:64->128
    f1_w = wf1.reshape(4 * 8 * 64, 128).astype(jnp.bfloat16)
    f1_b = jnp.zeros((1, 128), jnp.float32).at[0, :64].set(p["bf1"])

    # fc2: hidden padded to 128 rows, output padded 10 -> 128 lanes.
    f2_w = jnp.zeros((128, 128), jnp.float32).at[:64, :10].set(p["wf2"].T)
    f2_b = jnp.zeros((1, 128), jnp.float32).at[0, :10].set(p["bf2"])

    return {
        "c1_w": conv_w(p["w1"]), "c1_b": p["b1"].reshape(1, -1),
        "c2_w": conv_w(p["w2"]), "c2_b": p["b2"].reshape(1, -1),
        "c3_w": conv_w(p["w3"]), "c3_b": p["b3"].reshape(1, -1),
        "f1_w": f1_w, "f1_b": f1_b,
        "f2_w": f2_w.astype(jnp.bfloat16), "f2_b": f2_b,
    }


# ---------------------------------------------------------------------------
# Model
# ---------------------------------------------------------------------------
def cifar10_convnet_forward(x_nchw, pp):
    N = x_nchw.shape[0]
    x = jnp.transpose(x_nchw, (0, 2, 3, 1)).astype(jnp.bfloat16)   # NCHW -> NHWC

    B = _pick_block(N, CONV_BLOCK_CAP)
    Npad = _round_up(N, B)
    if Npad != N:
        x = jnp.pad(x, ((0, Npad - N), (0, 0), (0, 0), (0, 0)))

    a, H, W = _conv_layer(x, pp["c1_w"], pp["c1_b"], 32, 32, pool=True, block=B)
    a, H, W = _conv_layer(a, pp["c2_w"], pp["c2_b"], H, W, pool=True, block=B)
    a, H, W = _conv_layer(a, pp["c3_w"], pp["c3_b"], H, W, pool=False, block=B)

    # conv3 output (Npad, 4, 8, 64) feeds fc1 directly: weights were permuted /
    # zero-expanded at prep time, so no NHWC->NCHW transpose and no width slice.
    xf = a.reshape(Npad, a.shape[1] * a.shape[2] * a.shape[3])
    logits = _fc_fused(xf, pp["f1_w"], pp["f1_b"], pp["f2_w"], pp["f2_b"])
    return logits[:N, :10]


# Pure-JAX reference with the same bf16 matmul inputs (silent sanity check).
def _reference_forward(x_nchw, p):
    f = lambda a: a.astype(jnp.bfloat16)

    def conv(x, w, b):
        y = jax.lax.conv_general_dilated(
            f(x), f(w), (1, 1), "VALID",
            dimension_numbers=("NCHW", "OIHW", "NCHW"),
            preferred_element_type=jnp.float32)
        return y + b[None, :, None, None]

    def pool(x):
        return jax.lax.reduce_window(
            x, -jnp.inf, jax.lax.max, (1, 1, 2, 2), (1, 1, 2, 2), "VALID")

    x = jax.nn.relu(pool(conv(x_nchw, p["w1"], p["b1"])))
    x = jax.nn.relu(pool(conv(x, p["w2"], p["b2"])))
    x = jax.nn.relu(conv(x, p["w3"], p["b3"]))
    x = x.reshape(x.shape[0], 1024)
    x = jax.nn.relu(jnp.dot(f(x), f(p["wf1"].T),
                            preferred_element_type=jnp.float32) + p["bf1"])
    return jnp.dot(f(x), f(p["wf2"].T),
                   preferred_element_type=jnp.float32) + p["bf2"]


if __name__ == "__main__":
    key = jax.random.PRNGKey(0)
    k_params, k_x = jax.random.split(key)
    params = init_params(k_params)
    # CIFAR-10 sized input (spatial 32 is required by fc1's 1024 features);
    # batch 6 deliberately exercises the batch-block / row-padding paths.
    x = jax.random.normal(k_x, (6, 3, 32, 32), jnp.float32)

    pp = prepare_params(params)
    fwd = jax.jit(cifar10_convnet_forward)
    out = jax.block_until_ready(fwd(x, pp))

    ref = jax.block_until_ready(_reference_forward(x, params))
    assert out.shape == (6, 10)
    assert jnp.allclose(out, ref, atol=2e-2, rtol=2e-2), float(
        jnp.max(jnp.abs(out - ref)))

    print("KERNEL_OK")
</pallas_src>

<mosaic_0001>
module attributes {stable_mosaic.version = 11 : i64} {
  func.func @_conv_kernel(%arg0: i32, %arg1: memref<3x960x128xbf16, #tpu.memory_space<vmem>>, %arg2: memref<128x32xbf16, #tpu.memory_space<vmem>>, %arg3: memref<1x32xf32, #tpu.memory_space<vmem>>, %arg4: memref<3x240x32xbf16, #tpu.memory_space<vmem>>) attributes {dimension_semantics = [#tpu.dimension_semantics<parallel>], iteration_bounds = array<i64: 2>, scalar_prefetch = 0 : i64, scratch_operands = 0 : i64, tpu.core_type = #tpu.core_type<tc>, window_params = [{transform_indices = @transform_0, window_bounds = array<i64: 3, 960, 128>}, {pipeline_mode = #tpu.pipeline_mode<synchronous>, transform_indices = @transform_1, window_bounds = array<i64: 128, 32>}, {pipeline_mode = #tpu.pipeline_mode<synchronous>, transform_indices = @transform_2, window_bounds = array<i64: 1, 32>}, {transform_indices = @transform_3, window_bounds = array<i64: 3, 240, 32>}]} {
    %c0 = arith.constant 0 : index
    %c0_0 = arith.constant 0 : index
    %c0_1 = arith.constant 0 : index
    %0 = vector.load %arg1[%c0, %c0_0, %c0_1] : memref<3x960x128xbf16, #tpu.memory_space<vmem>>, vector<3x960x128xbf16>
    %1 = vector.shape_cast %0 : vector<3x960x128xbf16> to vector<2880x128xbf16>
    %c0_2 = arith.constant 0 : index
    %c0_3 = arith.constant 0 : index
    %2 = vector.load %arg2[%c0_2, %c0_3] : memref<128x32xbf16, #tpu.memory_space<vmem>>, vector<128x32xbf16>
    %cst = arith.constant dense<0.000000e+00> : vector<2880x32xf32>
    %3 = tpu.matmul %1, %2, %cst {dimension_numbers = #tpu.dot_dimension_numbers<[1], [0], [0], [1], [0, 0, 1, 1], [], []>} : vector<2880x128xbf16>, vector<128x32xbf16>, vector<2880x32xf32> -> vector<2880x32xf32>
    %c0_4 = arith.constant 0 : index
    %c0_5 = arith.constant 0 : index
    %4 = vector.load %arg3[%c0_4, %c0_5] : memref<1x32xf32, #tpu.memory_space<vmem>>, vector<1x32xf32>
    %5 = vector.shape_cast %3 : vector<2880x32xf32> to vector<45x64x32xf32>
    %6 = vector.extract_strided_slice %5 {offsets = [0, 0, 0], sizes = [45, 32, 32], strides = [1, 1, 1]} : vector<45x64x32xf32> to vector<45x32x32xf32>
    %7 = vector.extract_strided_slice %5 {offsets = [0, 32, 0], sizes = [45, 32, 32], strides = [1, 1, 1]} : vector<45x64x32xf32> to vector<45x32x32xf32>
    %8 = arith.maximumf %6, %7 : vector<45x32x32xf32>
    %9 = vector.extract_strided_slice %8 {offsets = [0, 0, 0], sizes = [45, 16, 32], strides = [1, 1, 1]} : vector<45x32x32xf32> to vector<45x16x32xf32>
    %10 = vector.extract_strided_slice %8 {offsets = [0, 16, 0], sizes = [45, 16, 32], strides = [1, 1, 1]} : vector<45x32x32xf32> to vector<45x16x32xf32>
    %11 = arith.maximumf %9, %10 : vector<45x16x32xf32>
    %12 = vector.shape_cast %4 : vector<1x32xf32> to vector<1x1x32xf32>
    %13 = vector.broadcast %12 : vector<1x1x32xf32> to vector<45x16x32xf32>
    %14 = arith.addf %11, %13 : vector<45x16x32xf32>
    %cst_6 = arith.constant 0.000000e+00 : f32
    %15 = vector.broadcast %cst_6 : f32 to vector<45x16x32xf32>
    %16 = arith.maximumf %14, %15 : vector<45x16x32xf32>
    %17 = vector.shape_cast %16 : vector<45x16x32xf32> to vector<3x240x32xf32>
    %18 = arith.truncf %17 : vector<3x240x32xf32> to vector<3x240x32xbf16>
    %c0_7 = arith.constant 0 : index
    %c0_8 = arith.constant 0 : index
    %c0_9 = arith.constant 0 : index
    %19 = vector.load %arg4[%c0_7, %c0_8, %c0_9] : memref<3x240x32xbf16, #tpu.memory_space<vmem>>, vector<3x240x32xbf16>
    tpu.vector_store %arg4[%c0_7, %c0_8, %c0_9], %18 {strides = array<i32>} : memref<3x240x32xbf16, #tpu.memory_space<vmem>>, vector<3x240x32xbf16>,
    return
  }
  func.func @transform_0(%arg0: i32) -> (i32, i32, i32) {
    %c0_i32 = arith.constant 0 : i32
    %c0_i32_0 = arith.constant 0 : i32
    %c0_i32_1 = arith.constant 0 : i32
    return %arg0, %c0_i32, %c0_i32_0 : i32, i32, i32
  }
  func.func @transform_1(%arg0: i32) -> (i32, i32) {
    %c0_i32 = arith.constant 0 : i32
    %c0_i32_0 = arith.constant 0 : i32
    %c0_i32_1 = arith.constant 0 : i32
    return %c0_i32, %c0_i32_0 : i32, i32
  }
  func.func @transform_2(%arg0: i32) -> (i32, i32) {
    %c0_i32 = arith.constant 0 : i32
    %c0_i32_0 = arith.constant 0 : i32
    %c0_i32_1 = arith.constant 0 : i32
    return %c0_i32, %c0_i32_0 : i32, i32
  }
  func.func @transform_3(%arg0: i32) -> (i32, i32, i32) {
    %c0_i32 = arith.constant 0 : i32
    %c0_i32_0 = arith.constant 0 : i32
    %c0_i32_1 = arith.constant 0 : i32
    return %arg0, %c0_i32, %c0_i32_0 : i32, i32, i32
  }
}

module attributes {stable_mosaic.version = 11 : i64} {
  func.func @_conv_kernel(%arg0: i32, %arg1: memref<3x192x384xbf16, #tpu.memory_space<vmem>>, %arg2: memref<384x64xbf16, #tpu.memory_space<vmem>>, %arg3: memref<1x64xf32, #tpu.memory_space<vmem>>, %arg4: memref<3x48x64xbf16, #tpu.memory_space<vmem>>) attributes {dimension_semantics = [#tpu.dimension_semantics<parallel>], iteration_bounds = array<i64: 2>, scalar_prefetch = 0 : i64, scratch_operands = 0 : i64, tpu.core_type = #tpu.core_type<tc>, window_params = [{transform_indices = @transform_0, window_bounds = array<i64: 3, 192, 384>}, {pipeline_mode = #tpu.pipeline_mode<synchronous>, transform_indices = @transform_1, window_bounds = array<i64: 384, 64>}, {pipeline_mode = #tpu.pipeline_mode<synchronous>, transform_indices = @transform_2, window_bounds = array<i64: 1, 64>}, {transform_indices = @transform_3, window_bounds = array<i64: 3, 48, 64>}]} {
    %c0 = arith.constant 0 : index
    %c0_0 = arith.constant 0 : index
    %c0_1 = arith.constant 0 : index
    %0 = vector.load %arg1[%c0, %c0_0, %c0_1] : memref<3x192x384xbf16, #tpu.memory_space<vmem>>, vector<3x192x384xbf16>
    %1 = vector.shape_cast %0 : vector<3x192x384xbf16> to vector<576x384xbf16>
    %c0_2 = arith.constant 0 : index
    %c0_3 = arith.constant 0 : index
    %2 = vector.load %arg2[%c0_2, %c0_3] : memref<384x64xbf16, #tpu.memory_space<vmem>>, vector<384x64xbf16>
    %cst = arith.constant dense<0.000000e+00> : vector<576x64xf32>
    %3 = tpu.matmul %1, %2, %cst {dimension_numbers = #tpu.dot_dimension_numbers<[1], [0], [0], [1], [0, 0, 1, 1], [], []>} : vector<576x384xbf16>, vector<384x64xbf16>, vector<576x64xf32> -> vector<576x64xf32>
    %c0_4 = arith.constant 0 : index
    %c0_5 = arith.constant 0 : index
    %4 = vector.load %arg3[%c0_4, %c0_5] : memref<1x64xf32, #tpu.memory_space<vmem>>, vector<1x64xf32>
    %5 = vector.shape_cast %3 : vector<576x64xf32> to vector<18x32x64xf32>
    %6 = vector.extract_strided_slice %5 {offsets = [0, 0, 0], sizes = [18, 16, 64], strides = [1, 1, 1]} : vector<18x32x64xf32> to vector<18x16x64xf32>
    %7 = vector.extract_strided_slice %5 {offsets = [0, 16, 0], sizes = [18, 16, 64], strides = [1, 1, 1]} : vector<18x32x64xf32> to vector<18x16x64xf32>
    %8 = arith.maximumf %6, %7 : vector<18x16x64xf32>
    %9 = vector.extract_strided_slice %8 {offsets = [0, 0, 0], sizes = [18, 8, 64], strides = [1, 1, 1]} : vector<18x16x64xf32> to vector<18x8x64xf32>
    %10 = vector.extract_strided_slice %8 {offsets = [0, 8, 0], sizes = [18, 8, 64], strides = [1, 1, 1]} : vector<18x16x64xf32> to vector<18x8x64xf32>
    %11 = arith.maximumf %9, %10 : vector<18x8x64xf32>
    %12 = vector.shape_cast %4 : vector<1x64xf32> to vector<1x1x64xf32>
    %13 = vector.broadcast %12 : vector<1x1x64xf32> to vector<18x8x64xf32>
    %14 = arith.addf %11, %13 : vector<18x8x64xf32>
    %cst_6 = arith.constant 0.000000e+00 : f32
    %15 = vector.broadcast %cst_6 : f32 to vector<18x8x64xf32>
    %16 = arith.maximumf %14, %15 : vector<18x8x64xf32>
    %17 = vector.shape_cast %16 : vector<18x8x64xf32> to vector<3x48x64xf32>
    %18 = arith.truncf %17 : vector<3x48x64xf32> to vector<3x48x64xbf16>
    %c0_7 = arith.constant 0 : index
    %c0_8 = arith.constant 0 : index
    %c0_9 = arith.constant 0 : index
    %19 = vector.load %arg4[%c0_7, %c0_8, %c0_9] : memref<3x48x64xbf16, #tpu.memory_space<vmem>>, vector<3x48x64xbf16>
    tpu.vector_store %arg4[%c0_7, %c0_8, %c0_9], %18 {strides = array<i32>} : memref<3x48x64xbf16, #tpu.memory_space<vmem>>, vector<3x48x64xbf16>,
    return
  }
  func.func @transform_0(%arg0: i32) -> (i32, i32, i32) {
    %c0_i32 = arith.constant 0 : i32
    %c0_i32_0 = arith.constant 0 : i32
    %c0_i32_1 = arith.constant 0 : i32
    return %arg0, %c0_i32, %c0_i32_0 : i32, i32, i32
  }
  func.func @transform_1(%arg0: i32) -> (i32, i32) {
    %c0_i32 = arith.constant 0 : i32
    %c0_i32_0 = arith.constant 0 : i32
    %c0_i32_1 = arith.constant 0 : i32
    return %c0_i32, %c0_i32_0 : i32, i32
  }
  func.func @transform_2(%arg0: i32) -> (i32, i32) {
    %c0_i32 = arith.constant 0 : i32
    %c0_i32_0 = arith.constant 0 : i32
    %c0_i32_1 = arith.constant 0 : i32
    return %c0_i32, %c0_i32_0 : i32, i32
  }
  func.func @transform_3(%arg0: i32) -> (i32, i32, i32) {
    %c0_i32 = arith.constant 0 : i32
    %c0_i32_0 = arith.constant 0 : i32
    %c0_i32_1 = arith.constant 0 : i32
    return %arg0, %c0_i32, %c0_i32_0 : i32, i32, i32
  }
}

module attributes {stable_mosaic.version = 11 : i64} {
  func.func @_conv_kernel(%arg0: i32, %arg1: memref<3x32x640xbf16, #tpu.memory_space<vmem>>, %arg2: memref<640x64xbf16, #tpu.memory_space<vmem>>, %arg3: memref<1x64xf32, #tpu.memory_space<vmem>>, %arg4: memref<3x32x64xbf16, #tpu.memory_space<vmem>>) attributes {dimension_semantics = [#tpu.dimension_semantics<parallel>], iteration_bounds = array<i64: 2>, scalar_prefetch = 0 : i64, scratch_operands = 0 : i64, tpu.core_type = #tpu.core_type<tc>, window_params = [{transform_indices = @transform_0, window_bounds = array<i64: 3, 32, 640>}, {pipeline_mode = #tpu.pipeline_mode<synchronous>, transform_indices = @transform_1, window_bounds = array<i64: 640, 64>}, {pipeline_mode = #tpu.pipeline_mode<synchronous>, transform_indices = @transform_2, window_bounds = array<i64: 1, 64>}, {transform_indices = @transform_3, window_bounds = array<i64: 3, 32, 64>}]} {
    %c0 = arith.constant 0 : index
    %c0_0 = arith.constant 0 : index
    %c0_1 = arith.constant 0 : index
    %0 = vector.load %arg1[%c0, %c0_0, %c0_1] : memref<3x32x640xbf16, #tpu.memory_space<vmem>>, vector<3x32x640xbf16>
    %1 = vector.shape_cast %0 : vector<3x32x640xbf16> to vector<96x640xbf16>
    %c0_2 = arith.constant 0 : index
    %c0_3 = arith.constant 0 : index
    %2 = vector.load %arg2[%c0_2, %c0_3] : memref<640x64xbf16, #tpu.memory_space<vmem>>, vector<640x64xbf16>
    %cst = arith.constant dense<0.000000e+00> : vector<96x64xf32>
    %3 = tpu.matmul %1, %2, %cst {dimension_numbers = #tpu.dot_dimension_numbers<[1], [0], [0], [1], [0, 0, 1, 1], [], []>} : vector<96x640xbf16>, vector<640x64xbf16>, vector<96x64xf32> -> vector<96x64xf32>
    %c0_4 = arith.constant 0 : index
    %c0_5 = arith.constant 0 : index
    %4 = vector.load %arg3[%c0_4, %c0_5] : memref<1x64xf32, #tpu.memory_space<vmem>>, vector<1x64xf32>
    %5 = vector.broadcast %4 : vector<1x64xf32> to vector<96x64xf32>
    %6 = arith.addf %3, %5 : vector<96x64xf32>
    %cst_6 = arith.constant 0.000000e+00 : f32
    %7 = vector.broadcast %cst_6 : f32 to vector<96x64xf32>
    %8 = arith.maximumf %6, %7 : vector<96x64xf32>
    %9 = vector.shape_cast %8 : vector<96x64xf32> to vector<3x32x64xf32>
    %10 = arith.truncf %9 : vector<3x32x64xf32> to vector<3x32x64xbf16>
    %c0_7 = arith.constant 0 : index
    %c0_8 = arith.constant 0 : index
    %c0_9 = arith.constant 0 : index
    %11 = vector.load %arg4[%c0_7, %c0_8, %c0_9] : memref<3x32x64xbf16, #tpu.memory_space<vmem>>, vector<3x32x64xbf16>
    tpu.vector_store %arg4[%c0_7, %c0_8, %c0_9], %10 {strides = array<i32>} : memref<3x32x64xbf16, #tpu.memory_space<vmem>>, vector<3x32x64xbf16>,
    return
  }
  func.func @transform_0(%arg0: i32) -> (i32, i32, i32) {
    %c0_i32 = arith.constant 0 : i32
    %c0_i32_0 = arith.constant 0 : i32
    %c0_i32_1 = arith.constant 0 : i32
    return %arg0, %c0_i32, %c0_i32_0 : i32, i32, i32
  }
  func.func @transform_1(%arg0: i32) -> (i32, i32) {
    %c0_i32 = arith.constant 0 : i32
    %c0_i32_0 = arith.constant 0 : i32
    %c0_i32_1 = arith.constant 0 : i32
    return %c0_i32, %c0_i32_0 : i32, i32
  }
  func.func @transform_2(%arg0: i32) -> (i32, i32) {
    %c0_i32 = arith.constant 0 : i32
    %c0_i32_0 = arith.constant 0 : i32
    %c0_i32_1 = arith.constant 0 : i32
    return %c0_i32, %c0_i32_0 : i32, i32
  }
  func.func @transform_3(%arg0: i32) -> (i32, i32, i32) {
    %c0_i32 = arith.constant 0 : i32
    %c0_i32_0 = arith.constant 0 : i32
    %c0_i32_1 = arith.constant 0 : i32
    return %arg0, %c0_i32, %c0_i32_0 : i32, i32, i32
  }
}

module attributes {stable_mosaic.version = 11 : i64} {
  func.func @_fc_kernel(%arg0: i32, %arg1: memref<8x2048xbf16, #tpu.memory_space<vmem>>, %arg2: memref<2048x128xbf16, #tpu.memory_space<vmem>>, %arg3: memref<1x128xf32, #tpu.memory_space<vmem>>, %arg4: memref<128x128xbf16, #tpu.memory_space<vmem>>, %arg5: memref<1x128xf32, #tpu.memory_space<vmem>>, %arg6: memref<8x128xf32, #tpu.memory_space<vmem>>) attributes {dimension_semantics = [#tpu.dimension_semantics<parallel>], iteration_bounds = array<i64: 1>, scalar_prefetch = 0 : i64, scratch_operands = 0 : i64, tpu.core_type = #tpu.core_type<tc>, window_params = [{transform_indices = @transform_0, window_bounds = array<i64: 8, 2048>}, {pipeline_mode = #tpu.pipeline_mode<synchronous>, transform_indices = @transform_1, window_bounds = array<i64: 2048, 128>}, {pipeline_mode = #tpu.pipeline_mode<synchronous>, transform_indices = @transform_2, window_bounds = array<i64: 1, 128>}, {pipeline_mode = #tpu.pipeline_mode<synchronous>, transform_indices = @transform_3, window_bounds = array<i64: 128, 128>}, {pipeline_mode = #tpu.pipeline_mode<synchronous>, transform_indices = @transform_4, window_bounds = array<i64: 1, 128>}, {transform_indices = @transform_5, window_bounds = array<i64: 8, 128>}]} {
    %c0 = arith.constant 0 : index
    %c0_0 = arith.constant 0 : index
    %0 = vector.load %arg1[%c0, %c0_0] : memref<8x2048xbf16, #tpu.memory_space<vmem>>, vector<8x2048xbf16>
    %c0_1 = arith.constant 0 : index
    %c0_2 = arith.constant 0 : index
    %1 = vector.load %arg2[%c0_1, %c0_2] : memref<2048x128xbf16, #tpu.memory_space<vmem>>, vector<2048x128xbf16>
    %cst = arith.constant dense<0.000000e+00> : vector<8x128xf32>
    %2 = tpu.matmul %0, %1, %cst {dimension_numbers = #tpu.dot_dimension_numbers<[1], [0], [0], [1], [0, 0, 1, 1], [], []>} : vector<8x2048xbf16>, vector<2048x128xbf16>, vector<8x128xf32> -> vector<8x128xf32>
    %c0_3 = arith.constant 0 : index
    %c0_4 = arith.constant 0 : index
    %3 = vector.load %arg3[%c0_3, %c0_4] : memref<1x128xf32, #tpu.memory_space<vmem>>, vector<1x128xf32>
    %4 = vector.broadcast %3 : vector<1x128xf32> to vector<8x128xf32>
    %5 = arith.addf %2, %4 : vector<8x128xf32>
    %cst_5 = arith.constant 0.000000e+00 : f32
    %6 = vector.broadcast %cst_5 : f32 to vector<8x128xf32>
    %7 = arith.maximumf %5, %6 : vector<8x128xf32>
    %8 = arith.truncf %7 : vector<8x128xf32> to vector<8x128xbf16>
    %c0_6 = arith.constant 0 : index
    %c0_7 = arith.constant 0 : index
    %9 = vector.load %arg4[%c0_6, %c0_7] : memref<128x128xbf16, #tpu.memory_space<vmem>>, vector<128x128xbf16>
    %cst_8 = arith.constant dense<0.000000e+00> : vector<8x128xf32>
    %10 = tpu.matmul %8, %9, %cst_8 {dimension_numbers = #tpu.dot_dimension_numbers<[1], [0], [0], [1], [0, 0, 1, 1], [], []>} : vector<8x128xbf16>, vector<128x128xbf16>, vector<8x128xf32> -> vector<8x128xf32>
    %c0_9 = arith.constant 0 : index
    %c0_10 = arith.constant 0 : index
    %11 = vector.load %arg5[%c0_9, %c0_10] : memref<1x128xf32, #tpu.memory_space<vmem>>, vector<1x128xf32>
    %12 = vector.broadcast %11 : vector<1x128xf32> to vector<8x128xf32>
    %13 = arith.addf %10, %12 : vector<8x128xf32>
    %c0_11 = arith.constant 0 : index
    %c0_12 = arith.constant 0 : index
    %14 = vector.load %arg6[%c0_11, %c0_12] : memref<8x128xf32, #tpu.memory_space<vmem>>, vector<8x128xf32>
    tpu.vector_store %arg6[%c0_11, %c0_12], %13 {strides = array<i32>} : memref<8x128xf32, #tpu.memory_space<vmem>>, vector<8x128xf32>,
    return
  }
  func.func @transform_0(%arg0: i32) -> (i32, i32) {
    %c0_i32 = arith.constant 0 : i32
    %c0_i32_0 = arith.constant 0 : i32
    return %arg0, %c0_i32 : i32, i32
  }
  func.func @transform_1(%arg0: i32) -> (i32, i32) {
    %c0_i32 = arith.constant 0 : i32
    %c0_i32_0 = arith.constant 0 : i32
    %c0_i32_1 = arith.constant 0 : i32
    return %c0_i32, %c0_i32_0 : i32, i32
  }
  func.func @transform_2(%arg0: i32) -> (i32, i32) {
    %c0_i32 = arith.constant 0 : i32
    %c0_i32_0 = arith.constant 0 : i32
    %c0_i32_1 = arith.constant 0 : i32
    return %c0_i32, %c0_i32_0 : i32, i32
  }
  func.func @transform_3(%arg0: i32) -> (i32, i32) {
    %c0_i32 = arith.constant 0 : i32
    %c0_i32_0 = arith.constant 0 : i32
    %c0_i32_1 = arith.constant 0 : i32
    return %c0_i32, %c0_i32_0 : i32, i32
  }
  func.func @transform_4(%arg0: i32) -> (i32, i32) {
    %c0_i32 = arith.constant 0 : i32
    %c0_i32_0 = arith.constant 0 : i32
    %c0_i32_1 = arith.constant 0 : i32
    return %c0_i32, %c0_i32_0 : i32, i32
  }
  func.func @transform_5(%arg0: i32) -> (i32, i32) {
    %c0_i32 = arith.constant 0 : i32
    %c0_i32_0 = arith.constant 0 : i32
    return %arg0, %c0_i32 : i32, i32
  }
}

</mosaic_0001>

<llo_original>
// kernel: cifar10_convnet_forward.4
$region0: #{cifar10_convnet_forward.4}
  #allocation0 [shape = 'u32[]', space=smem, size = 0x4, offset = 0x4, fixed_abs, tag = 'smem constant byte address 0x4 - core index']
  #allocation1 [shape = 'u32[72,128]{1,0:T(1,128)}', space=vmem, size = 0x9000, scoped, tag = 'internal scratch']
  %s0 = inlined_call_operand.vmem [shape: bf16[6,960,128], index: 0, kind: input, shape index: {}]
  %s1 = inlined_call_operand.vmem [shape: bf16[128,32], index: 1, kind: input, shape index: {}]
  %s2 = inlined_call_operand.vmem [shape: f32[1,32], index: 2, kind: input, shape index: {}]
  %s3 = inlined_call_operand.vmem [shape: bf16[6,240,32], index: 3, kind: output, shape index: {}]
  %s4 = sld [smem:[#allocation0]]
  $region45: #{cifar10_convnet_forward.4} parent=0
    _
  %s6 = ssub.s32 1, %s4
  %s7 = scalar_select 0, %s6, %s4
  loop: start=0, step=1, limit=4
  $region2: #{cifar10_convnet_forward.4} parent=0 // loop_pre_header
    _
  $region3: #{cifar10_convnet_forward.4} parent=0 // loop_header
    %s9 = sphi 0, %s13
    %p10 = scmp.ge.s32.totalorder %s9, 4
    %s19 = sphi 0, %s21
    %s22 = sphi 0, %s19
    %s23 = sphi 0, %s22
    %s39 = sphi 0, %s23
    %s43 = sphi 0, %s43
    %s45 = sphi 0, %s43
    %s46 = sphi 0, %s45
    %s60 = sphi 0, %s46
    %s64 = sphi 0, %s64
    %s66 = sphi 0, %s64
    %s67 = sphi 0, %s66
    %s81 = sphi 0, %s67
    %s87 = sphi 0, %s89
    %s90 = sphi 0, %s87
    %s91 = sphi 0, %s90
    %s107 = sphi 0, %s91
  $region4: #{cifar10_convnet_forward.4} parent=0 // loop_header_branch
    %12 = sbr.rel (%p10) target = $region8
  $region5: #{cifar10_convnet_forward.4} parent=0 // loop_body
    %s14 = ssub.s32 %s9, 1
    %s15 = ssub.s32 %s9, 2
    %s16 = sadd.s32 %s9, 1
    %s17 = ssub.s32 %s9, %s16
    %p18 = scmp.eq.s32.totalorder %s17, 0
    %s20 = sadd.s32 %s19, 1
    %s21 = scalar_select %p18, %s19, %s20
    %p24 = pneg %p18
    %p25 = scmp.eq.s32.totalorder %s9, 1
    %p26 = por %p24, %p25
    %p27 = scmp.ne.s32.totalorder %s19, %s22
    %p28 = scmp.eq.s32.totalorder %s9, 0
    %p29 = por %p27, %p28
    %p30 = scmp.ne.s32.totalorder %s19, %s22
    %p31 = scmp.eq.s32.totalorder %s14, 1
    %p32 = por %p30, %p31
    %p33 = scmp.ne.s32.totalorder %s22, %s23
    %p34 = scmp.eq.s32.totalorder %s14, 0
    %p35 = por %p33, %p34
    %p36 = scmp.ne.s32.totalorder %s22, %s23
    %p37 = scmp.eq.s32.totalorder %s15, 1
    %p38 = por %p36, %p37
    %p40 = scmp.ne.s32.totalorder %s23, %s39
    %p41 = scmp.eq.s32.totalorder %s15, 0
    %p42 = por %p40, %p41
    %s44 = sadd.s32 %s43, 1
    %p47 = scmp.eq.s32.totalorder %s9, 1
    %p48 = scmp.ne.s32.totalorder %s43, %s45
    %p49 = scmp.eq.s32.totalorder %s9, 0
    %p50 = por %p48, %p49
    %p51 = scmp.ne.s32.totalorder %s43, %s45
    %p52 = scmp.eq.s32.totalorder %s14, 1
    %p53 = por %p51, %p52
    %p54 = scmp.ne.s32.totalorder %s45, %s46
    %p55 = scmp.eq.s32.totalorder %s14, 0
    %p56 = por %p54, %p55
    %p57 = scmp.ne.s32.totalorder %s45, %s46
    %p58 = scmp.eq.s32.totalorder %s15, 1
    %p59 = por %p57, %p58
    %p61 = scmp.ne.s32.totalorder %s46, %s60
    %p62 = scmp.eq.s32.totalorder %s15, 0
    %p63 = por %p61, %p62
    %s65 = sadd.s32 %s64, 1
    %p68 = scmp.eq.s32.totalorder %s9, 1
    %p69 = scmp.ne.s32.totalorder %s64, %s66
    %p70 = scmp.eq.s32.totalorder %s9, 0
    %p71 = por %p69, %p70
    %p72 = scmp.ne.s32.totalorder %s64, %s66
    %p73 = scmp.eq.s32.totalorder %s14, 1
    %p74 = por %p72, %p73
    %p75 = scmp.ne.s32.totalorder %s66, %s67
    %p76 = scmp.eq.s32.totalorder %s14, 0
    %p77 = por %p75, %p76
    %p78 = scmp.ne.s32.totalorder %s66, %s67
    %p79 = scmp.eq.s32.totalorder %s15, 1
    %p80 = por %p78, %p79
    %p82 = scmp.ne.s32.totalorder %s67, %s81
    %p83 = scmp.eq.s32.totalorder %s15, 0
    %p84 = por %p82, %p83
    %s85 = ssub.s32 %s9, %s16
    %p86 = scmp.eq.s32.totalorder %s85, 0
    %s88 = sadd.s32 %s87, 1
    %s89 = scalar_select %p86, %s87, %s88
    %p92 = pneg %p86
    %p93 = scmp.eq.s32.totalorder %s9, 1
    %p94 = por %p92, %p93
    %p95 = scmp.ne.s32.totalorder %s87, %s90
    %p96 = scmp.eq.s32.totalorder %s9, 0
    %p97 = por %p95, %p96
    %p98 = scmp.ne.s32.totalorder %s87, %s90
    %p99 = scmp.eq.s32.totalorder %s14, 1
    %p100 = por %p98, %p99
    %p101 = scmp.ne.s32.totalorder %s90, %s91
    %p102 = scmp.eq.s32.totalorder %s14, 0
    %p103 = por %p101, %p102
    %p104 = scmp.ne.s32.totalorder %s90, %s91
    %p105 = scmp.eq.s32.totalorder %s15, 1
    %p106 = por %p104, %p105
    %p108 = scmp.ne.s32.totalorder %s91, %s107
    %p109 = scmp.eq.s32.totalorder %s15, 0
    %p110 = por %p108, %p109
    %p111 = scmp.le.s32.totalorder 1, %s9
    %p112 = scmp.lt.s32.totalorder %s9, 3
    %p113 = pnand %p111, %p112
    %p114 = pneg %p113
    // Predicated region
    $region9: #{cifar10_convnet_forward.4} parent=5 // pred_check
      _
    $region10: #{cifar10_convnet_forward.4} parent=5 // pred_check_branch
      %116 = sbr.rel (%p113) target = $region12
    $region11: #{cifar10_convnet_forward.4} parent=5 // pred_region
      %s117 = ssub.s32 %s9, 1
      // Predicated region
      $region13: #{cifar10_convnet_forward.4} parent=11 // pred_check
        %p118 = pneg %p56
      $region14: #{cifar10_convnet_forward.4} parent=11 // pred_check_branch
        %120 = sbr.rel (%p118) target = $region16
      $region15: #{cifar10_convnet_forward.4} parent=11 // pred_region
        _
      $region16: #{cifar10_convnet_forward.4} parent=11 // pred_fallthru
        _
      // Predicated region
      $region17: #{cifar10_convnet_forward.4} parent=11 // pred_check
        %p121 = pneg %p77
      $region18: #{cifar10_convnet_forward.4} parent=11 // pred_check_branch
        %123 = sbr.rel (%p121) target = $region20
      $region19: #{cifar10_convnet_forward.4} parent=11 // pred_region
        _
      $region20: #{cifar10_convnet_forward.4} parent=11 // pred_fallthru
        _
    $region12: #{cifar10_convnet_forward.4} parent=5 // pred_fallthru
      _
    %p124 = scmp.lt.s32.totalorder %s9, 2
    // Predicated region
    $region21: #{cifar10_convnet_forward.4} parent=5 // pred_check
      %p125 = pneg %p124
    $region22: #{cifar10_convnet_forward.4} parent=5 // pred_check_branch
      %127 = sbr.rel (%p125) target = $region24
    $region23: #{cifar10_convnet_forward.4} parent=5 // pred_region
      // Predicated region
      $region25: #{cifar10_convnet_forward.4} parent=23 // pred_check
        %p128 = pneg %p29
      $region26: #{cifar10_convnet_forward.4} parent=23 // pred_check_branch
        %130 = sbr.rel (%p128) target = $region28
      $region27: #{cifar10_convnet_forward.4} parent=23 // pred_region
        %s131 = smul.u32 3, %s9
        %p132 = scmp.lt.s32.totalorder %s131, 5
        %s133 = scalar_select %p132, %s131, 5
        %s134 = smul.addr %s133, 120
        %s135 = smul.addr %s134, 4
        %s136 = scalar_lea.vmem %s0, %s135
        %s137 = smul.u32 3, %s9
      $region28: #{cifar10_convnet_forward.4} parent=23 // pred_fallthru
        _
    $region24: #{cifar10_convnet_forward.4} parent=5 // pred_fallthru
      _
    %p138 = scmp.le.s32.totalorder 1, %s9
    %p139 = scmp.lt.s32.totalorder %s9, 3
    %p140 = pnand %p138, %p139
    %p141 = pneg %p140
    // Predicated region
    $region29: #{cifar10_convnet_forward.4} parent=5 // pred_check
      _
    $region30: #{cifar10_convnet_forward.4} parent=5 // pred_check_branch
      %143 = sbr.rel (%p140) target = $region32
    $region31: #{cifar10_convnet_forward.4} parent=5 // pred_region
      %s144 = ssub.s32 %s9, 1
      %s145 = smul.u32 3, %s14
      %p146 = scmp.lt.s32.totalorder %s145, 5
      %s147 = scalar_select %p146, %s145, 5
      %s148 = smul.addr %s147, 120
      %s149 = smul.addr %s148, 4
      %s150 = scalar_lea.vmem %s0, %s149
      %p151 = pneg %p35
      %p152 = pneg %p32
      %p153 = pneg %p56
      %p154 = pneg %p53
      %p155 = pneg %p77
      %p156 = pneg %p74
      %p157 = pneg %p103
      %p158 = pneg %p100
      %s159 = smul.u32 3, %s14
      %p160 = scmp.lt.s32.totalorder %s159, 5
      %s161 = scalar_select %p160, %s159, 5
      %s162 = smul.addr %s161, 30
      %s163 = smul.addr %s162, 4
      %s164 = scalar_lea.vmem %s3, %s163
      %s165 = smul.u32 3, %s14
      %p166 = scmp.lt.s32.totalorder %s165, 5
      %s167 = scalar_select %p166, %s165, 5
      %s168 = smul.addr %s167, 120
      %s169 = smul.addr %s168, 4
      %s170 = scalar_lea.vmem %s0, %s169
      %s171 = smul.u32 3, %s14
      %s172 = smul.u32 3, %s14
      %p173 = scmp.lt.s32.totalorder %s172, 5
      %s174 = scalar_select %p173, %s172, 5
      %s175 = smul.addr %s174, 30
      %s176 = smul.addr %s175, 4
      %s177 = scalar_lea.vmem %s3, %s176
      %s178 = smul.u32 3, %s14
      %v179 = vld [vmem:[%s170] sm:$0xf]
      %v180 = vld [vmem:[%s170 + $0x4] sm:$0xf]
      %v181 = vld [vmem:[%s170 + $0x8] sm:$0xf]
      %v182 = vld [vmem:[%s170 + $0xc] sm:$0xf]
      %v183 = vld [vmem:[%s170 + $0x10] sm:$0xf]
      %v184 = vld [vmem:[%s170 + $0x14] sm:$0xf]
      %v185 = vld [vmem:[%s170 + $0x18] sm:$0xf]
      %v186 = vld [vmem:[%s170 + $0x1c] sm:$0xf]
      %v187 = vld [vmem:[%s170 + $0x20] sm:$0xf]
      %v188 = vld [vmem:[%s170 + $0x24] sm:$0xf]
      %v189 = vld [vmem:[%s170 + $0x28] sm:$0xf]
      %v190 = vld [vmem:[%s170 + $0x2c] sm:$0xf]
      %v191 = vld [vmem:[%s170 + $0x30] sm:$0xf]
      %v192 = vld [vmem:[%s170 + $0x34] sm:$0xf]
      %v193 = vld [vmem:[%s170 + $0x38] sm:$0xf]
      %v194 = vld [vmem:[%s170 + $0x3c] sm:$0xf]
      %v195 = vld [vmem:[%s170 + $0x40] sm:$0xf]
      %v196 = vld [vmem:[%s170 + $0x44] sm:$0xf]
      %v197 = vld [vmem:[%s170 + $0x48] sm:$0xf]
      %v198 = vld [vmem:[%s170 + $0x4c] sm:$0xf]
      %v199 = vld [vmem:[%s170 + $0x50] sm:$0xf]
      %v200 = vld [vmem:[%s170 + $0x54] sm:$0xf]
      %v201 = vld [vmem:[%s170 + $0x58] sm:$0xf]
      %v202 = vld [vmem:[%s170 + $0x5c] sm:$0xf]
      %v203 = vld [vmem:[%s170 + $0x60] sm:$0xf]
      %v204 = vld [vmem:[%s170 + $0x64] sm:$0xf]
      %v205 = vld [vmem:[%s170 + $0x68] sm:$0xf]
      %v206 = vld [vmem:[%s170 + $0x6c] sm:$0xf]
      %v207 = vld [vmem:[%s170 + $0x70] sm:$0xf]
      %v208 = vld [vmem:[%s170 + $0x74] sm:$0xf]
      %v209 = vld [vmem:[%s170 + $0x78] sm:$0xf]
      %v210 = vld [vmem:[%s170 + $0x7c] sm:$0xf]
      %v211 = vld [vmem:[%s170 + $0x80] sm:$0xf]
      %v212 = vld [vmem:[%s170 + $0x84] sm:$0xf]
      %v213 = vld [vmem:[%s170 + $0x88] sm:$0xf]
      %v214 = vld [vmem:[%s170 + $0x8c] sm:$0xf]
      %v215 = vld [vmem:[%s170 + $0x90] sm:$0xf]
      %v216 = vld [vmem:[%s170 + $0x94] sm:$0xf]
      %v217 = vld [vmem:[%s170 + $0x98] sm:$0xf]
      %v218 = vld [vmem:[%s170 + $0x9c] sm:$0xf]
      %v219 = vld [vmem:[%s170 + $0xa0] sm:$0xf]
      %v220 = vld [vmem:[%s170 + $0xa4] sm:$0xf]
      %v221 = vld [vmem:[%s170 + $0xa8] sm:$0xf]
      %v222 = vld [vmem:[%s170 + $0xac] sm:$0xf]
      %v223 = vld [vmem:[%s170 + $0xb0] sm:$0xf]
      %v224 = vld [vmem:[%s170 + $0xb4] sm:$0xf]
      %v225 = vld [vmem:[%s170 + $0xb8] sm:$0xf]
      %v226 = vld [vmem:[%s170 + $0xbc] sm:$0xf]
      %v227 = vld [vmem:[%s170 + $0xc0] sm:$0xf]
      %v228 = vld [vmem:[%s170 + $0xc4] sm:$0xf]
      %v229 = vld [vmem:[%s170 + $0xc8] sm:$0xf]
      %v230 = vld [vmem:[%s170 + $0xcc] sm:$0xf]
      %v231 = vld [vmem:[%s170 + $0xd0] sm:$0xf]
      %v232 = vld [vmem:[%s170 + $0xd4] sm:$0xf]
      %v233 = vld [vmem:[%s170 + $0xd8] sm:$0xf]
      %v234 = vld [vmem:[%s170 + $0xdc] sm:$0xf]
      %v235 = vld [vmem:[%s170 + $0xe0] sm:$0xf]
      %v236 = vld [vmem:[%s170 + $0xe4] sm:$0xf]
      %v237 = vld [vmem:[%s170 + $0xe8] sm:$0xf]
      %v238 = vld [vmem:[%s170 + $0xec] sm:$0xf]
      %v239 = vld [vmem:[%s170 + $0xf0] sm:$0xf]
      %v240 = vld [vmem:[%s170 + $0xf4] sm:$0xf]
      %v241 = vld [vmem:[%s170 + $0xf8] sm:$0xf]
      %v242 = vld [vmem:[%s170 + $0xfc] sm:$0xf]
      %v243 = vld [vmem:[%s170 + $0x100] sm:$0xf]
      %v244 = vld [vmem:[%s170 + $0x104] sm:$0xf]
      %v245 = vld [vmem:[%s170 + $0x108] sm:$0xf]
      %v246 = vld [vmem:[%s170 + $0x10c] sm:$0xf]
      %v247 = vld [vmem:[%s170 + $0x110] sm:$0xf]
      %v248 = vld [vmem:[%s170 + $0x114] sm:$0xf]
      %v249 = vld [vmem:[%s170 + $0x118] sm:$0xf]
      %v250 = vld [vmem:[%s170 + $0x11c] sm:$0xf]
      %v251 = vld [vmem:[%s170 + $0x120] sm:$0xf]
      %v252 = vld [vmem:[%s170 + $0x124] sm:$0xf]
      %v253 = vld [vmem:[%s170 + $0x128] sm:$0xf]
      %v254 = vld [vmem:[%s170 + $0x12c] sm:$0xf]
      %v255 = vld [vmem:[%s170 + $0x130] sm:$0xf]
      %v256 = vld [vmem:[%s170 + $0x134] sm:$0xf]
      %v257 = vld [vmem:[%s170 + $0x138] sm:$0xf]
      %v258 = vld [vmem:[%s170 + $0x13c] sm:$0xf]
      %v259 = vld [vmem:[%s170 + $0x140] sm:$0xf]
      %v260 = vld [vmem:[%s170 + $0x144] sm:$0xf]
      %v261 = vld [vmem:[%s170 + $0x148] sm:$0xf]
      %v262 = vld [vmem:[%s170 + $0x14c] sm:$0xf]
      %v263 = vld [vmem:[%s170 + $0x150] sm:$0xf]
      %v264 = vld [vmem:[%s170 + $0x154] sm:$0xf]
      %v265 = vld [vmem:[%s170 + $0x158] sm:$0xf]
      %v266 = vld [vmem:[%s170 + $0x15c] sm:$0xf]
      %v267 = vld [vmem:[%s170 + $0x160] sm:$0xf]
      %v268 = vld [vmem:[%s170 + $0x164] sm:$0xf]
      %v269 = vld [vmem:[%s170 + $0x168] sm:$0xf]
      %v270 = vld [vmem:[%s170 + $0x16c] sm:$0xf]
      %v271 = vld [vmem:[%s170 + $0x170] sm:$0xf]
      %v272 = vld [vmem:[%s170 + $0x174] sm:$0xf]
      %v273 = vld [vmem:[%s170 + $0x178] sm:$0xf]
      %v274 = vld [vmem:[%s170 + $0x17c] sm:$0xf]
      %v275 = vld [vmem:[%s170 + $0x180] sm:$0xf]
      %v276 = vld [vmem:[%s170 + $0x184] sm:$0xf]
      %v277 = vld [vmem:[%s170 + $0x188] sm:$0xf]
      %v278 = vld [vmem:[%s170 + $0x18c] sm:$0xf]
      %v279 = vld [vmem:[%s170 + $0x190] sm:$0xf]
      %v280 = vld [vmem:[%s170 + $0x194] sm:$0xf]
      %v281 = vld [vmem:[%s170 + $0x198] sm:$0xf]
      %v282 = vld [vmem:[%s170 + $0x19c] sm:$0xf]
      %v283 = vld [vmem:[%s170 + $0x1a0] sm:$0xf]
      %v284 = vld [vmem:[%s170 + $0x1a4] sm:$0xf]
      %v285 = vld [vmem:[%s170 + $0x1a8] sm:$0xf]
      %v286 = vld [vmem:[%s170 + $0x1ac] sm:$0xf]
      %v287 = vld [vmem:[%s170 + $0x1b0] sm:$0xf]
      %v288 = vld [vmem:[%s170 + $0x1b4] sm:$0xf]
      %v289 = vld [vmem:[%s170 + $0x1b8] sm:$0xf]
      %v290 = vld [vmem:[%s170 + $0x1bc] sm:$0xf]
      %v291 = vld [vmem:[%s170 + $0x1c0] sm:$0xf]
      %v292 = vld [vmem:[%s170 + $0x1c4] sm:$0xf]
      %v293 = vld [vmem:[%s170 + $0x1c8] sm:$0xf]
      %v294 = vld [vmem:[%s170 + $0x1cc] sm:$0xf]
      %v295 = vld [vmem:[%s170 + $0x1d0] sm:$0xf]
      %v296 = vld [vmem:[%s170 + $0x1d4] sm:$0xf]
      %v297 = vld [vmem:[%s170 + $0x1d8] sm:$0xf]
      %v298 = vld [vmem:[%s170 + $0x1dc] sm:$0xf]
      %v299 = vld [vmem:[%s170 + $0x1e0] sm:$0xf]
      %v300 = vld [vmem:[%s170 + $0x1e4] sm:$0xf]
      %v301 = vld [vmem:[%s170 + $0x1e8] sm:$0xf]
      %v302 = vld [vmem:[%s170 + $0x1ec] sm:$0xf]
      %v303 = vld [vmem:[%s170 + $0x1f0] sm:$0xf]
      %v304 = vld [vmem:[%s170 + $0x1f4] sm:$0xf]
      %v305 = vld [vmem:[%s170 + $0x1f8] sm:$0xf]
      %v306 = vld [vmem:[%s170 + $0x1fc] sm:$0xf]
      %v307 = vld [vmem:[%s170 + $0x200] sm:$0xf]
      %v308 = vld [vmem:[%s170 + $0x204] sm:$0xf]
      %v309 = vld [vmem:[%s170 + $0x208] sm:$0xf]
      %v310 = vld [vmem:[%s170 + $0x20c] sm:$0xf]
      %v311 = vld [vmem:[%s170 + $0x210] sm:$0xf]
      %v312 = vld [vmem:[%s170 + $0x214] sm:$0xf]
      %v313 = vld [vmem:[%s170 + $0x218] sm:$0xf]
      %v314 = vld [vmem:[%s170 + $0x21c] sm:$0xf]
      %v315 = vld [vmem:[%s170 + $0x220] sm:$0xf]
      %v316 = vld [vmem:[%s170 + $0x224] sm:$0xf]
      %v317 = vld [vmem:[%s170 + $0x228] sm:$0xf]
      %v318 = vld [vmem:[%s170 + $0x22c] sm:$0xf]
      %v319 = vld [vmem:[%s170 + $0x230] sm:$0xf]
      %v320 = vld [vmem:[%s170 + $0x234] sm:$0xf]
      %v321 = vld [vmem:[%s170 + $0x238] sm:$0xf]
      %v322 = vld [vmem:[%s170 + $0x23c] sm:$0xf]
      %v323 = vld [vmem:[%s170 + $0x240] sm:$0xf]
      %v324 = vld [vmem:[%s170 + $0x244] sm:$0xf]
      %v325 = vld [vmem:[%s170 + $0x248] sm:$0xf]
      %v326 = vld [vmem:[%s170 + $0x24c] sm:$0xf]
      %v327 = vld [vmem:[%s170 + $0x250] sm:$0xf]
      %v328 = vld [vmem:[%s170 + $0x254] sm:$0xf]
      %v329 = vld [vmem:[%s170 + $0x258] sm:$0xf]
      %v330 = vld [vmem:[%s170 + $0x25c] sm:$0xf]
      %v331 = vld [vmem:[%s170 + $0x260] sm:$0xf]
      %v332 = vld [vmem:[%s170 + $0x264] sm:$0xf]
      %v333 = vld [vmem:[%s170 + $0x268] sm:$0xf]
      %v334 = vld [vmem:[%s170 + $0x26c] sm:$0xf]
      %v335 = vld [vmem:[%s170 + $0x270] sm:$0xf]
      %v336 = vld [vmem:[%s170 + $0x274] sm:$0xf]
      %v337 = vld [vmem:[%s170 + $0x278] sm:$0xf]
      %v338 = vld [vmem:[%s170 + $0x27c] sm:$0xf]
      %v339 = vld [vmem:[%s170 + $0x280] sm:$0xf]
      %v340 = vld [vmem:[%s170 + $0x284] sm:$0xf]
      %v341 = vld [vmem:[%s170 + $0x288] sm:$0xf]
      %v342 = vld [vmem:[%s170 + $0x28c] sm:$0xf]
      %v343 = vld [vmem:[%s170 + $0x290] sm:$0xf]
      %v344 = vld [vmem:[%s170 + $0x294] sm:$0xf]
      %v345 = vld [vmem:[%s170 + $0x298] sm:$0xf]
      %v346 = vld [vmem:[%s170 + $0x29c] sm:$0xf]
      %v347 = vld [vmem:[%s170 + $0x2a0] sm:$0xf]
      %v348 = vld [vmem:[%s170 + $0x2a4] sm:$0xf]
      %v349 = vld [vmem:[%s170 + $0x2a8] sm:$0xf]
      %v350 = vld [vmem:[%s170 + $0x2ac] sm:$0xf]
      %v351 = vld [vmem:[%s170 + $0x2b0] sm:$0xf]
      %v352 = vld [vmem:[%s170 + $0x2b4] sm:$0xf]
      %v353 = vld [vmem:[%s170 + $0x2b8] sm:$0xf]
      %v354 = vld [vmem:[%s170 + $0x2bc] sm:$0xf]
      %v355 = vld [vmem:[%s170 + $0x2c0] sm:$0xf]
      %v356 = vld [vmem:[%s170 + $0x2c4] sm:$0xf]
      %v357 = vld [vmem:[%s170 + $0x2c8] sm:$0xf]
      %v358 = vld [vmem:[%s170 + $0x2cc] sm:$0xf]
      %v359 = vld [vmem:[%s170 + $0x2d0] sm:$0xf]
      %v360 = vld [vmem:[%s170 + $0x2d4] sm:$0xf]
      %v361 = vld [vmem:[%s170 + $0x2d8] sm:$0xf]
      %v362 = vld [vmem:[%s170 + $0x2dc] sm:$0xf]
      %v363 = vld [vmem:[%s170 + $0x2e0] sm:$0xf]
      %v364 = vld [vmem:[%s170 + $0x2e4] sm:$0xf]
      %v365 = vld [vmem:[%s170 + $0x2e8] sm:$0xf]
      %v366 = vld [vmem:[%s170 + $0x2ec] sm:$0xf]
      %v367 = vld [vmem:[%s170 + $0x2f0] sm:$0xf]
      %v368 = vld [vmem:[%s170 + $0x2f4] sm:$0xf]
      %v369 = vld [vmem:[%s170 + $0x2f8] sm:$0xf]
      %v370 = vld [vmem:[%s170 + $0x2fc] sm:$0xf]
      %v371 = vld [vmem:[%s170 + $0x300] sm:$0xf]
      %v372 = vld [vmem:[%s170 + $0x304] sm:$0xf]
      %v373 = vld [vmem:[%s170 + $0x308] sm:$0xf]
      %v374 = vld [vmem:[%s170 + $0x30c] sm:$0xf]
      %v375 = vld [vmem:[%s170 + $0x310] sm:$0xf]
      %v376 = vld [vmem:[%s170 + $0x314] sm:$0xf]
      %v377 = vld [vmem:[%s170 + $0x318] sm:$0xf]
      %v378 = vld [vmem:[%s170 + $0x31c] sm:$0xf]
      %v379 = vld [vmem:[%s170 + $0x320] sm:$0xf]
      %v380 = vld [vmem:[%s170 + $0x324] sm:$0xf]
      %v381 = vld [vmem:[%s170 + $0x328] sm:$0xf]
      %v382 = vld [vmem:[%s170 + $0x32c] sm:$0xf]
      %v383 = vld [vmem:[%s170 + $0x330] sm:$0xf]
      %v384 = vld [vmem:[%s170 + $0x334] sm:$0xf]
      %v385 = vld [vmem:[%s170 + $0x338] sm:$0xf]
      %v386 = vld [vmem:[%s170 + $0x33c] sm:$0xf]
      %v387 = vld [vmem:[%s170 + $0x340] sm:$0xf]
      %v388 = vld [vmem:[%s170 + $0x344] sm:$0xf]
      %v389 = vld [vmem:[%s170 + $0x348] sm:$0xf]
      %v390 = vld [vmem:[%s170 + $0x34c] sm:$0xf]
      %v391 = vld [vmem:[%s170 + $0x350] sm:$0xf]
      %v392 = vld [vmem:[%s170 + $0x354] sm:$0xf]
      %v393 = vld [vmem:[%s170 + $0x358] sm:$0xf]
      %v394 = vld [vmem:[%s170 + $0x35c] sm:$0xf]
      %v395 = vld [vmem:[%s170 + $0x360] sm:$0xf]
      %v396 = vld [vmem:[%s170 + $0x364] sm:$0xf]
      %v397 = vld [vmem:[%s170 + $0x368] sm:$0xf]
      %v398 = vld [vmem:[%s170 + $0x36c] sm:$0xf]
      %v399 = vld [vmem:[%s170 + $0x370] sm:$0xf]
      %v400 = vld [vmem:[%s170 + $0x374] sm:$0xf]
      %v401 = vld [vmem:[%s170 + $0x378] sm:$0xf]
      %v402 = vld [vmem:[%s170 + $0x37c] sm:$0xf]
      %v403 = vld [vmem:[%s170 + $0x380] sm:$0xf]
      %v404 = vld [vmem:[%s170 + $0x384] sm:$0xf]
      %v405 = vld [vmem:[%s170 + $0x388] sm:$0xf]
      %v406 = vld [vmem:[%s170 + $0x38c] sm:$0xf]
      %v407 = vld [vmem:[%s170 + $0x390] sm:$0xf]
      %v408 = vld [vmem:[%s170 + $0x394] sm:$0xf]
      %v409 = vld [vmem:[%s170 + $0x398] sm:$0xf]
      %v410 = vld [vmem:[%s170 + $0x39c] sm:$0xf]
      %v411 = vld [vmem:[%s170 + $0x3a0] sm:$0xf]
      %v412 = vld [vmem:[%s170 + $0x3a4] sm:$0xf]
      %v413 = vld [vmem:[%s170 + $0x3a8] sm:$0xf]
      %v414 = vld [vmem:[%s170 + $0x3ac] sm:$0xf]
      %v415 = vld [vmem:[%s170 + $0x3b0] sm:$0xf]
      %v416 = vld [vmem:[%s170 + $0x3b4] sm:$0xf]
      %v417 = vld [vmem:[%s170 + $0x3b8] sm:$0xf]
      %v418 = vld [vmem:[%s170 + $0x3bc] sm:$0xf]
      %v419 = vld [vmem:[%s170 + $0x3c0] sm:$0xf]
      %v420 = vld [vmem:[%s170 + $0x3c4] sm:$0xf]
      %v421 = vld [vmem:[%s170 + $0x3c8] sm:$0xf]
      %v422 = vld [vmem:[%s170 + $0x3cc] sm:$0xf]
      %v423 = vld [vmem:[%s170 + $0x3d0] sm:$0xf]
      %v424 = vld [vmem:[%s170 + $0x3d4] sm:$0xf]
      %v425 = vld [vmem:[%s170 + $0x3d8] sm:$0xf]
      %v426 = vld [vmem:[%s170 + $0x3dc] sm:$0xf]
      %v427 = vld [vmem:[%s170 + $0x3e0] sm:$0xf]
      %v428 = vld [vmem:[%s170 + $0x3e4] sm:$0xf]
      %v429 = vld [vmem:[%s170 + $0x3e8] sm:$0xf]
      %v430 = vld [vmem:[%s170 + $0x3ec] sm:$0xf]
      %v431 = vld [vmem:[%s170 + $0x3f0] sm:$0xf]
      %v432 = vld [vmem:[%s170 + $0x3f4] sm:$0xf]
      %v433 = vld [vmem:[%s170 + $0x3f8] sm:$0xf]
      %v434 = vld [vmem:[%s170 + $0x3fc] sm:$0xf]
      %v435 = vld [vmem:[%s170 + $0x400] sm:$0xf]
      %v436 = vld [vmem:[%s170 + $0x404] sm:$0xf]
      %v437 = vld [vmem:[%s170 + $0x408] sm:$0xf]
      %v438 = vld [vmem:[%s170 + $0x40c] sm:$0xf]
      %v439 = vld [vmem:[%s170 + $0x410] sm:$0xf]
      %v440 = vld [vmem:[%s170 + $0x414] sm:$0xf]
      %v441 = vld [vmem:[%s170 + $0x418] sm:$0xf]
      %v442 = vld [vmem:[%s170 + $0x41c] sm:$0xf]
      %v443 = vld [vmem:[%s170 + $0x420] sm:$0xf]
      %v444 = vld [vmem:[%s170 + $0x424] sm:$0xf]
      %v445 = vld [vmem:[%s170 + $0x428] sm:$0xf]
      %v446 = vld [vmem:[%s170 + $0x42c] sm:$0xf]
      %v447 = vld [vmem:[%s170 + $0x430] sm:$0xf]
      %v448 = vld [vmem:[%s170 + $0x434] sm:$0xf]
      %v449 = vld [vmem:[%s170 + $0x438] sm:$0xf]
      %v450 = vld [vmem:[%s170 + $0x43c] sm:$0xf]
      %v451 = vld [vmem:[%s170 + $0x440] sm:$0xf]
      %v452 = vld [vmem:[%s170 + $0x444] sm:$0xf]
      %v453 = vld [vmem:[%s170 + $0x448] sm:$0xf]
      %v454 = vld [vmem:[%s170 + $0x44c] sm:$0xf]
      %v455 = vld [vmem:[%s170 + $0x450] sm:$0xf]
      %v456 = vld [vmem:[%s170 + $0x454] sm:$0xf]
      %v457 = vld [vmem:[%s170 + $0x458] sm:$0xf]
      %v458 = vld [vmem:[%s170 + $0x45c] sm:$0xf]
      %v459 = vld [vmem:[%s170 + $0x460] sm:$0xf]
      %v460 = vld [vmem:[%s170 + $0x464] sm:$0xf]
      %v461 = vld [vmem:[%s170 + $0x468] sm:$0xf]
      %v462 = vld [vmem:[%s170 + $0x46c] sm:$0xf]
      %v463 = vld [vmem:[%s170 + $0x470] sm:$0xf]
      %v464 = vld [vmem:[%s170 + $0x474] sm:$0xf]
      %v465 = vld [vmem:[%s170 + $0x478] sm:$0xf]
      %v466 = vld [vmem:[%s170 + $0x47c] sm:$0xf]
      %v467 = vld [vmem:[%s170 + $0x480] sm:$0xf]
      %v468 = vld [vmem:[%s170 + $0x484] sm:$0xf]
      %v469 = vld [vmem:[%s170 + $0x488] sm:$0xf]
      %v470 = vld [vmem:[%s170 + $0x48c] sm:$0xf]
      %v471 = vld [vmem:[%s170 + $0x490] sm:$0xf]
      %v472 = vld [vmem:[%s170 + $0x494] sm:$0xf]
      %v473 = vld [vmem:[%s170 + $0x498] sm:$0xf]
      %v474 = vld [vmem:[%s170 + $0x49c] sm:$0xf]
      %v475 = vld [vmem:[%s170 + $0x4a0] sm:$0xf]
      %v476 = vld [vmem:[%s170 + $0x4a4] sm:$0xf]
      %v477 = vld [vmem:[%s170 + $0x4a8] sm:$0xf]
      %v478 = vld [vmem:[%s170 + $0x4ac] sm:$0xf]
      %v479 = vld [vmem:[%s170 + $0x4b0] sm:$0xf]
      %v480 = vld [vmem:[%s170 + $0x4b4] sm:$0xf]
      %v481 = vld [vmem:[%s170 + $0x4b8] sm:$0xf]
      %v482 = vld [vmem:[%s170 + $0x4bc] sm:$0xf]
      %v483 = vld [vmem:[%s170 + $0x4c0] sm:$0xf]
      %v484 = vld [vmem:[%s170 + $0x4c4] sm:$0xf]
      %v485 = vld [vmem:[%s170 + $0x4c8] sm:$0xf]
      %v486 = vld [vmem:[%s170 + $0x4cc] sm:$0xf]
      %v487 = vld [vmem:[%s170 + $0x4d0] sm:$0xf]
      %v488 = vld [vmem:[%s170 + $0x4d4] sm:$0xf]
      %v489 = vld [vmem:[%s170 + $0x4d8] sm:$0xf]
      %v490 = vld [vmem:[%s170 + $0x4dc] sm:$0xf]
      %v491 = vld [vmem:[%s170 + $0x4e0] sm:$0xf]
      %v492 = vld [vmem:[%s170 + $0x4e4] sm:$0xf]
      %v493 = vld [vmem:[%s170 + $0x4e8] sm:$0xf]
      %v494 = vld [vmem:[%s170 + $0x4ec] sm:$0xf]
      %v495 = vld [vmem:[%s170 + $0x4f0] sm:$0xf]
      %v496 = vld [vmem:[%s170 + $0x4f4] sm:$0xf]
      %v497 = vld [vmem:[%s170 + $0x4f8] sm:$0xf]
      %v498 = vld [vmem:[%s170 + $0x4fc] sm:$0xf]
      %v499 = vld [vmem:[%s170 + $0x500] sm:$0xf]
      %v500 = vld [vmem:[%s170 + $0x504] sm:$0xf]
      %v501 = vld [vmem:[%s170 + $0x508] sm:$0xf]
      %v502 = vld [vmem:[%s170 + $0x50c] sm:$0xf]
      %v503 = vld [vmem:[%s170 + $0x510] sm:$0xf]
      %v504 = vld [vmem:[%s170 + $0x514] sm:$0xf]
      %v505 = vld [vmem:[%s170 + $0x518] sm:$0xf]
      %v506 = vld [vmem:[%s170 + $0x51c] sm:$0xf]
      %v507 = vld [vmem:[%s170 + $0x520] sm:$0xf]
      %v508 = vld [vmem:[%s170 + $0x524] sm:$0xf]
      %v509 = vld [vmem:[%s170 + $0x528] sm:$0xf]
      %v510 = vld [vmem:[%s170 + $0x52c] sm:$0xf]
      %v511 = vld [vmem:[%s170 + $0x530] sm:$0xf]
      %v512 = vld [vmem:[%s170 + $0x534] sm:$0xf]
      %v513 = vld [vmem:[%s170 + $0x538] sm:$0xf]
      %v514 = vld [vmem:[%s170 + $0x53c] sm:$0xf]
      %v515 = vld [vmem:[%s170 + $0x540] sm:$0xf]
      %v516 = vld [vmem:[%s170 + $0x544] sm:$0xf]
      %v517 = vld [vmem:[%s170 + $0x548] sm:$0xf]
      %v518 = vld [vmem:[%s170 + $0x54c] sm:$0xf]
      %v519 = vld [vmem:[%s170 + $0x550] sm:$0xf]
      %v520 = vld [vmem:[%s170 + $0x554] sm:$0xf]
      %v521 = vld [vmem:[%s170 + $0x558] sm:$0xf]
      %v522 = vld [vmem:[%s170 + $0x55c] sm:$0xf]
      %v523 = vld [vmem:[%s170 + $0x560] sm:$0xf]
      %v524 = vld [vmem:[%s170 + $0x564] sm:$0xf]
      %v525 = vld [vmem:[%s170 + $0x568] sm:$0xf]
      %v526 = vld [vmem:[%s170 + $0x56c] sm:$0xf]
      %v527 = vld [vmem:[%s170 + $0x570] sm:$0xf]
      %v528 = vld [vmem:[%s170 + $0x574] sm:$0xf]
      %v529 = vld [vmem:[%s170 + $0x578] sm:$0xf]
      %v530 = vld [vmem:[%s170 + $0x57c] sm:$0xf]
      %v531 = vld [vmem:[%s170 + $0x580] sm:$0xf]
      %v532 = vld [vmem:[%s170 + $0x584] sm:$0xf]
      %v533 = vld [vmem:[%s170 + $0x588] sm:$0xf]
      %v534 = vld [vmem:[%s170 + $0x58c] sm:$0xf]
      %v535 = vld [vmem:[%s170 + $0x590] sm:$0xf]
      %v536 = vld [vmem:[%s170 + $0x594] sm:$0xf]
      %v537 = vld [vmem:[%s170 + $0x598] sm:$0xf]
      %v538 = vld [vmem:[%s170 + $0x59c] sm:$0xf]
      %v539 = vld [vmem:[%s1] sm:$0xf]
      %v540 = vld [vmem:[%s1 + $0x4] sm:$0xf]
      %v541 = vld [vmem:[%s1 + $0x8] sm:$0xf]
      %v542 = vld [vmem:[%s1 + $0xc] sm:$0xf]
      %v543 = vld [vmem:[%s1 + $0x10] sm:$0xf]
      %v544 = vld [vmem:[%s1 + $0x14] sm:$0xf]
      %v545 = vld [vmem:[%s1 + $0x18] sm:$0xf]
      %v546 = vld [vmem:[%s1 + $0x1c] sm:$0xf]
      %v547 = vld [vmem:[%s1 + $0x20] sm:$0xf]
      %v548 = vld [vmem:[%s1 + $0x24] sm:$0xf]
      %v549 = vld [vmem:[%s1 + $0x28] sm:$0xf]
      %v550 = vld [vmem:[%s1 + $0x2c] sm:$0xf]
      %v551 = vld [vmem:[%s1 + $0x30] sm:$0xf]
      %v552 = vld [vmem:[%s1 + $0x34] sm:$0xf]
      %v553 = vld [vmem:[%s1 + $0x38] sm:$0xf]
      %v554 = vld [vmem:[%s1 + $0x3c] sm:$0xf]
      %v915 = vunpack.c.l.b16 %v179
      %v916 = vunpack.c.l.b16 %v180
      %v917 = vunpack.c.l.b16 %v181
      %v918 = vunpack.c.l.b16 %v182
      %v919 = vunpack.c.l.b16 %v183
      %v920 = vunpack.c.l.b16 %v184
      %v921 = vunpack.c.l.b16 %v185
      %v922 = vunpack.c.l.b16 %v186
      %v923 = vunpack.c.l.b16 %v187
      %v924 = vunpack.c.l.b16 %v188
      %v925 = vunpack.c.l.b16 %v189
      %v926 = vunpack.c.l.b16 %v190
      %v927 = vunpack.c.l.b16 %v191
      %v928 = vunpack.c.l.b16 %v192
      %v929 = vunpack.c.l.b16 %v193
      %v930 = vunpack.c.l.b16 %v194
      %v931 = vunpack.c.l.b16 %v195
      %v932 = vunpack.c.l.b16 %v196
      %v933 = vunpack.c.l.b16 %v197
      %v934 = vunpack.c.l.b16 %v198
      %v935 = vunpack.c.l.b16 %v199
      %v936 = vunpack.c.l.b16 %v200
      %v937 = vunpack.c.l.b16 %v201
      %v938 = vunpack.c.l.b16 %v202
      %v939 = vunpack.c.l.b16 %v203
      %v940 = vunpack.c.l.b16 %v204
      %v941 = vunpack.c.l.b16 %v205
      %v942 = vunpack.c.l.b16 %v206
      %v943 = vunpack.c.l.b16 %v207
      %v944 = vunpack.c.l.b16 %v208
      %v945 = vunpack.c.l.b16 %v209
      %v946 = vunpack.c.l.b16 %v210
      %v947 = vunpack.c.l.b16 %v211
      %v948 = vunpack.c.l.b16 %v212
      %v949 = vunpack.c.l.b16 %v213
      %v950 = vunpack.c.l.b16 %v214
      %v951 = vunpack.c.l.b16 %v215
      %v952 = vunpack.c.l.b16 %v216
      %v953 = vunpack.c.l.b16 %v217
      %v954 = vunpack.c.l.b16 %v218
      %v955 = vunpack.c.l.b16 %v219
      %v956 = vunpack.c.l.b16 %v220
      %v957 = vunpack.c.l.b16 %v221
      %v958 = vunpack.c.l.b16 %v222
      %v959 = vunpack.c.l.b16 %v223
      %v960 = vunpack.c.l.b16 %v224
      %v961 = vunpack.c.l.b16 %v225
      %v962 = vunpack.c.l.b16 %v226
      %v963 = vunpack.c.l.b16 %v227
      %v964 = vunpack.c.l.b16 %v228
      %v965 = vunpack.c.l.b16 %v229
      %v966 = vunpack.c.l.b16 %v230
      %v967 = vunpack.c.l.b16 %v231
      %v968 = vunpack.c.l.b16 %v232
      %v969 = vunpack.c.l.b16 %v233
      %v970 = vunpack.c.l.b16 %v234
      %v971 = vunpack.c.l.b16 %v235
      %v972 = vunpack.c.l.b16 %v236
      %v973 = vunpack.c.l.b16 %v237
      %v974 = vunpack.c.l.b16 %v238
      %v975 = vunpack.c.l.b16 %v239
      %v976 = vunpack.c.l.b16 %v240
      %v977 = vunpack.c.l.b16 %v241
      %v978 = vunpack.c.l.b16 %v242
      %v979 = vunpack.c.l.b16 %v243
      %v980 = vunpack.c.l.b16 %v244
      %v981 = vunpack.c.l.b16 %v245
      %v982 = vunpack.c.l.b16 %v246
      %v983 = vunpack.c.l.b16 %v247
      %v984 = vunpack.c.l.b16 %v248
      %v985 = vunpack.c.l.b16 %v249
      %v986 = vunpack.c.l.b16 %v250
      %v987 = vunpack.c.l.b16 %v251
      %v988 = vunpack.c.l.b16 %v252
      %v989 = vunpack.c.l.b16 %v253
      %v990 = vunpack.c.l.b16 %v254
      %v991 = vunpack.c.l.b16 %v255
      %v992 = vunpack.c.l.b16 %v256
      %v993 = vunpack.c.l.b16 %v257
      %v994 = vunpack.c.l.b16 %v258
      %v995 = vunpack.c.l.b16 %v259
      %v996 = vunpack.c.l.b16 %v260
      %v997 = vunpack.c.l.b16 %v261
      %v998 = vunpack.c.l.b16 %v262
      %v999 = vunpack.c.l.b16 %v263
      %v1000 = vunpack.c.l.b16 %v264
      %v1001 = vunpack.c.l.b16 %v265
      %v1002 = vunpack.c.l.b16 %v266
      %v1003 = vunpack.c.l.b16 %v267
      %v1004 = vunpack.c.l.b16 %v268
      %v1005 = vunpack.c.l.b16 %v269
      %v1006 = vunpack.c.l.b16 %v270
      %v1007 = vunpack.c.l.b16 %v271
      %v1008 = vunpack.c.l.b16 %v272
      %v1009 = vunpack.c.l.b16 %v273
      %v1010 = vunpack.c.l.b16 %v274
      %v1011 = vunpack.c.l.b16 %v275
      %v1012 = vunpack.c.l.b16 %v276
      %v1013 = vunpack.c.l.b16 %v277
      %v1014 = vunpack.c.l.b16 %v278
      %v1015 = vunpack.c.l.b16 %v279
      %v1016 = vunpack.c.l.b16 %v280
      %v1017 = vunpack.c.l.b16 %v281
      %v1018 = vunpack.c.l.b16 %v282
      %v1019 = vunpack.c.l.b16 %v283
      %v1020 = vunpack.c.l.b16 %v284
      %v1021 = vunpack.c.l.b16 %v285
      %v1022 = vunpack.c.l.b16 %v286
      %v1023 = vunpack.c.l.b16 %v287
      %v1024 = vunpack.c.l.b16 %v288
      %v1025 = vunpack.c.l.b16 %v289
      %v1026 = vunpack.c.l.b16 %v290
      %v1027 = vunpack.c.l.b16 %v291
      %v1028 = vunpack.c.l.b16 %v292
      %v1029 = vunpack.c.l.b16 %v293
      %v1030 = vunpack.c.l.b16 %v294
      %v1031 = vunpack.c.l.b16 %v295
      %v1032 = vunpack.c.l.b16 %v296
      %v1033 = vunpack.c.l.b16 %v297
      %v1034 = vunpack.c.l.b16 %v298
      %v1035 = vunpack.c.l.b16 %v299
      %v1036 = vunpack.c.l.b16 %v300
      %v1037 = vunpack.c.l.b16 %v301
      %v1038 = vunpack.c.l.b16 %v302
      %v1039 = vunpack.c.l.b16 %v303
      %v1040 = vunpack.c.l.b16 %v304
      %v1041 = vunpack.c.l.b16 %v305
      %v1042 = vunpack.c.l.b16 %v306
      %v1043 = vunpack.c.l.b16 %v307
      %v1044 = vunpack.c.l.b16 %v308
      %v1045 = vunpack.c.l.b16 %v309
      %v1046 = vunpack.c.l.b16 %v310
      %v1047 = vunpack.c.l.b16 %v311
      %v1048 = vunpack.c.l.b16 %v312
      %v1049 = vunpack.c.l.b16 %v313
      %v1050 = vunpack.c.l.b16 %v314
      %v1051 = vunpack.c.l.b16 %v315
      %v1052 = vunpack.c.l.b16 %v316
      %v1053 = vunpack.c.l.b16 %v317
      %v1054 = vunpack.c.l.b16 %v318
      %v1055 = vunpack.c.l.b16 %v319
      %v1056 = vunpack.c.l.b16 %v320
      %v1057 = vunpack.c.l.b16 %v321
      %v1058 = vunpack.c.l.b16 %v322
      %v1059 = vunpack.c.l.b16 %v323
      %v1060 = vunpack.c.l.b16 %v324
      %v1061 = vunpack.c.l.b16 %v325
      %v1062 = vunpack.c.l.b16 %v326
      %v1063 = vunpack.c.l.b16 %v327
      %v1064 = vunpack.c.l.b16 %v328
      %v1065 = vunpack.c.l.b16 %v329
      %v1066 = vunpack.c.l.b16 %v330
      %v1067 = vunpack.c.l.b16 %v331
      %v1068 = vunpack.c.l.b16 %v332
      %v1069 = vunpack.c.l.b16 %v333
      %v1070 = vunpack.c.l.b16 %v334
      %v1071 = vunpack.c.l.b16 %v335
      %v1072 = vunpack.c.l.b16 %v336
      %v1073 = vunpack.c.l.b16 %v337
      %v1074 = vunpack.c.l.b16 %v338
      %v1075 = vunpack.c.l.b16 %v339
      %v1076 = vunpack.c.l.b16 %v340
      %v1077 = vunpack.c.l.b16 %v341
      %v1078 = vunpack.c.l.b16 %v342
      %v1079 = vunpack.c.l.b16 %v343
      %v1080 = vunpack.c.l.b16 %v344
      %v1081 = vunpack.c.l.b16 %v345
      %v1082 = vunpack.c.l.b16 %v346
      %v1083 = vunpack.c.l.b16 %v347
      %v1084 = vunpack.c.l.b16 %v348
      %v1085 = vunpack.c.l.b16 %v349
      %v1086 = vunpack.c.l.b16 %v350
      %v1087 = vunpack.c.l.b16 %v351
      %v1088 = vunpack.c.l.b16 %v352
      %v1089 = vunpack.c.l.b16 %v353
      %v1090 = vunpack.c.l.b16 %v354
      %v1091 = vunpack.c.l.b16 %v355
      %v1092 = vunpack.c.l.b16 %v356
      %v1093 = vunpack.c.l.b16 %v357
      %v1094 = vunpack.c.l.b16 %v358
      %v1095 = vunpack.c.l.b16 %v359
      %v1096 = vunpack.c.l.b16 %v360
      %v1097 = vunpack.c.l.b16 %v361
      %v1098 = vunpack.c.l.b16 %v362
      %v1099 = vunpack.c.l.b16 %v363
      %v1100 = vunpack.c.l.b16 %v364
      %v1101 = vunpack.c.l.b16 %v365
      %v1102 = vunpack.c.l.b16 %v366
      %v1103 = vunpack.c.l.b16 %v367
      %v1104 = vunpack.c.l.b16 %v368
      %v1105 = vunpack.c.l.b16 %v369
      %v1106 = vunpack.c.l.b16 %v370
      %v1107 = vunpack.c.l.b16 %v371
      %v1108 = vunpack.c.l.b16 %v372
      %v1109 = vunpack.c.l.b16 %v373
      %v1110 = vunpack.c.l.b16 %v374
      %v1111 = vunpack.c.l.b16 %v375
      %v1112 = vunpack.c.l.b16 %v376
      %v1113 = vunpack.c.l.b16 %v377
      %v1114 = vunpack.c.l.b16 %v378
      %v1115 = vunpack.c.l.b16 %v379
      %v1116 = vunpack.c.l.b16 %v380
      %v1117 = vunpack.c.l.b16 %v381
      %v1118 = vunpack.c.l.b16 %v382
      %v1119 = vunpack.c.l.b16 %v383
      %v1120 = vunpack.c.l.b16 %v384
      %v1121 = vunpack.c.l.b16 %v385
      %v1122 = vunpack.c.l.b16 %v386
      %v1123 = vunpack.c.l.b16 %v387
      %v1124 = vunpack.c.l.b16 %v388
      %v1125 = vunpack.c.l.b16 %v389
      %v1126 = vunpack.c.l.b16 %v390
      %v1127 = vunpack.c.l.b16 %v391
      %v1128 = vunpack.c.l.b16 %v392
      %v1129 = vunpack.c.l.b16 %v393
      %v1130 = vunpack.c.l.b16 %v394
      %v1131 = vunpack.c.l.b16 %v395
      %v1132 = vunpack.c.l.b16 %v396
      %v1133 = vunpack.c.l.b16 %v397
      %v1134 = vunpack.c.l.b16 %v398
      %v1135 = vunpack.c.l.b16 %v399
      %v1136 = vunpack.c.l.b16 %v400
      %v1137 = vunpack.c.l.b16 %v401
      %v1138 = vunpack.c.l.b16 %v402
      %v1139 = vunpack.c.l.b16 %v403
      %v1140 = vunpack.c.l.b16 %v404
      %v1141 = vunpack.c.l.b16 %v405
      %v1142 = vunpack.c.l.b16 %v406
      %v1143 = vunpack.c.l.b16 %v407
      %v1144 = vunpack.c.l.b16 %v408
      %v1145 = vunpack.c.l.b16 %v409
      %v1146 = vunpack.c.l.b16 %v410
      %v1147 = vunpack.c.l.b16 %v411
      %v1148 = vunpack.c.l.b16 %v412
      %v1149 = vunpack.c.l.b16 %v413
      %v1150 = vunpack.c.l.b16 %v414
      %v1151 = vunpack.c.l.b16 %v415
      %v1152 = vunpack.c.l.b16 %v416
      %v1153 = vunpack.c.l.b16 %v417
      %v1154 = vunpack.c.l.b16 %v418
      %v1155 = vunpack.c.l.b16 %v419
      %v1156 = vunpack.c.l.b16 %v420
      %v1157 = vunpack.c.l.b16 %v421
      %v1158 = vunpack.c.l.b16 %v422
      %v1159 = vunpack.c.l.b16 %v423
      %v1160 = vunpack.c.l.b16 %v424
      %v1161 = vunpack.c.l.b16 %v425
      %v1162 = vunpack.c.l.b16 %v426
      %v1163 = vunpack.c.l.b16 %v427
      %v1164 = vunpack.c.l.b16 %v428
      %v1165 = vunpack.c.l.b16 %v429
      %v1166 = vunpack.c.l.b16 %v430
      %v1167 = vunpack.c.l.b16 %v431
      %v1168 = vunpack.c.l.b16 %v432
      %v1169 = vunpack.c.l.b16 %v433
      %v1170 = vunpack.c.l.b16 %v434
      %v1171 = vunpack.c.l.b16 %v435
      %v1172 = vunpack.c.l.b16 %v436
      %v1173 = vunpack.c.l.b16 %v437
      %v1174 = vunpack.c.l.b16 %v438
      %v1175 = vunpack.c.l.b16 %v439
      %v1176 = vunpack.c.l.b16 %v440
      %v1177 = vunpack.c.l.b16 %v441
      %v1178 = vunpack.c.l.b16 %v442
      %v1179 = vunpack.c.l.b16 %v443
      %v1180 = vunpack.c.l.b16 %v444
      %v1181 = vunpack.c.l.b16 %v445
      %v1182 = vunpack.c.l.b16 %v446
      %v1183 = vunpack.c.l.b16 %v447
      %v1184 = vunpack.c.l.b16 %v448
      %v1185 = vunpack.c.l.b16 %v449
      %v1186 = vunpack.c.l.b16 %v450
      %v1187 = vunpack.c.l.b16 %v451
      %v1188 = vunpack.c.l.b16 %v452
      %v1189 = vunpack.c.l.b16 %v453
      %v1190 = vunpack.c.l.b16 %v454
      %v1191 = vunpack.c.l.b16 %v455
      %v1192 = vunpack.c.l.b16 %v456
      %v1193 = vunpack.c.l.b16 %v457
      %v1194 = vunpack.c.l.b16 %v458
      %v1195 = vunpack.c.l.b16 %v459
      %v1196 = vunpack.c.l.b16 %v460
      %v1197 = vunpack.c.l.b16 %v461
      %v1198 = vunpack.c.l.b16 %v462
      %v1199 = vunpack.c.l.b16 %v463
      %v1200 = vunpack.c.l.b16 %v464
      %v1201 = vunpack.c.l.b16 %v465
      %v1202 = vunpack.c.l.b16 %v466
      %v1203 = vunpack.c.l.b16 %v467
      %v1204 = vunpack.c.l.b16 %v468
      %v1205 = vunpack.c.l.b16 %v469
      %v1206 = vunpack.c.l.b16 %v470
      %v1207 = vunpack.c.l.b16 %v471
      %v1208 = vunpack.c.l.b16 %v472
      %v1209 = vunpack.c.l.b16 %v473
      %v1210 = vunpack.c.l.b16 %v474
      %v1211 = vunpack.c.l.b16 %v475
      %v1212 = vunpack.c.l.b16 %v476
      %v1213 = vunpack.c.l.b16 %v477
      %v1214 = vunpack.c.l.b16 %v478
      %v1215 = vunpack.c.l.b16 %v479
      %v1216 = vunpack.c.l.b16 %v480
      %v1217 = vunpack.c.l.b16 %v481
      %v1218 = vunpack.c.l.b16 %v482
      %v1219 = vunpack.c.l.b16 %v483
      %v1220 = vunpack.c.l.b16 %v484
      %v1221 = vunpack.c.l.b16 %v485
      %v1222 = vunpack.c.l.b16 %v486
      %v1223 = vunpack.c.l.b16 %v487
      %v1224 = vunpack.c.l.b16 %v488
      %v1225 = vunpack.c.l.b16 %v489
      %v1226 = vunpack.c.l.b16 %v490
      %v1227 = vunpack.c.l.b16 %v491
      %v1228 = vunpack.c.l.b16 %v492
      %v1229 = vunpack.c.l.b16 %v493
      %v1230 = vunpack.c.l.b16 %v494
      %v1231 = vunpack.c.l.b16 %v495
      %v1232 = vunpack.c.l.b16 %v496
      %v1233 = vunpack.c.l.b16 %v497
      %v1234 = vunpack.c.l.b16 %v498
      %v1235 = vunpack.c.l.b16 %v499
      %v1236 = vunpack.c.l.b16 %v500
      %v1237 = vunpack.c.l.b16 %v501
      %v1238 = vunpack.c.l.b16 %v502
      %v1239 = vunpack.c.l.b16 %v503
      %v1240 = vunpack.c.l.b16 %v504
      %v1241 = vunpack.c.l.b16 %v505
      %v1242 = vunpack.c.l.b16 %v506
      %v1243 = vunpack.c.l.b16 %v507
      %v1244 = vunpack.c.l.b16 %v508
      %v1245 = vunpack.c.l.b16 %v509
      %v1246 = vunpack.c.l.b16 %v510
      %v1247 = vunpack.c.l.b16 %v511
      %v1248 = vunpack.c.l.b16 %v512
      %v1249 = vunpack.c.l.b16 %v513
      %v1250 = vunpack.c.l.b16 %v514
      %v1251 = vunpack.c.l.b16 %v515
      %v1252 = vunpack.c.l.b16 %v516
      %v1253 = vunpack.c.l.b16 %v517
      %v1254 = vunpack.c.l.b16 %v518
      %v1255 = vunpack.c.l.b16 %v519
      %v1256 = vunpack.c.l.b16 %v520
      %v1257 = vunpack.c.l.b16 %v521
      %v1258 = vunpack.c.l.b16 %v522
      %v1259 = vunpack.c.l.b16 %v523
      %v1260 = vunpack.c.l.b16 %v524
      %v1261 = vunpack.c.l.b16 %v525
      %v1262 = vunpack.c.l.b16 %v526
      %v1263 = vunpack.c.l.b16 %v527
      %v1264 = vunpack.c.l.b16 %v528
      %v1265 = vunpack.c.l.b16 %v529
      %v1266 = vunpack.c.l.b16 %v530
      %v1267 = vunpack.c.l.b16 %v531
      %v1268 = vunpack.c.l.b16 %v532
      %v1269 = vunpack.c.l.b16 %v533
      %v1270 = vunpack.c.l.b16 %v534
      %v1271 = vunpack.c.l.b16 %v535
      %v1272 = vunpack.c.l.b16 %v536
      %v1273 = vunpack.c.l.b16 %v537
      %v1274 = vunpack.c.l.b16 %v538
      %v1275 = vpack.c.b16 %v916, %v915
      %v1276 = vpack.c.b16 %v918, %v917
      %v1277 = vpack.c.b16 %v920, %v919
      %v1278 = vpack.c.b16 %v922, %v921
      %v1279 = vpack.c.b16 %v924, %v923
      %v1280 = vpack.c.b16 %v926, %v925
      %v1281 = vpack.c.b16 %v928, %v927
      %v1282 = vpack.c.b16 %v930, %v929
      %v1283 = vpack.c.b16 %v932, %v931
      %v1284 = vpack.c.b16 %v934, %v933
      %v1285 = vpack.c.b16 %v936, %v935
      %v1286 = vpack.c.b16 %v938, %v937
      %v1287 = vpack.c.b16 %v940, %v939
      %v1288 = vpack.c.b16 %v942, %v941
      %v1289 = vpack.c.b16 %v944, %v943
      %v1290 = vpack.c.b16 %v946, %v945
      %v1291 = vpack.c.b16 %v948, %v947
      %v1292 = vpack.c.b16 %v950, %v949
      %v1293 = vpack.c.b16 %v952, %v951
      %v1294 = vpack.c.b16 %v954, %v953
      %v1295 = vpack.c.b16 %v956, %v955
      %v1296 = vpack.c.b16 %v958, %v957
      %v1297 = vpack.c.b16 %v960, %v959
      %v1298 = vpack.c.b16 %v962, %v961
      %v1299 = vpack.c.b16 %v964, %v963
      %v1300 = vpack.c.b16 %v966, %v965
      %v1301 = vpack.c.b16 %v968, %v967
      %v1302 = vpack.c.b16 %v970, %v969
      %v1303 = vpack.c.b16 %v972, %v971
      %v1304 = vpack.c.b16 %v974, %v973
      %v1305 = vpack.c.b16 %v976, %v975
      %v1306 = vpack.c.b16 %v978, %v977
      %v1307 = vpack.c.b16 %v980, %v979
      %v1308 = vpack.c.b16 %v982, %v981
      %v1309 = vpack.c.b16 %v984, %v983
      %v1310 = vpack.c.b16 %v986, %v985
      %v1311 = vpack.c.b16 %v988, %v987
      %v1312 = vpack.c.b16 %v990, %v989
      %v1313 = vpack.c.b16 %v992, %v991
      %v1314 = vpack.c.b16 %v994, %v993
      %v1315 = vpack.c.b16 %v996, %v995
      %v1316 = vpack.c.b16 %v998, %v997
      %v1317 = vpack.c.b16 %v1000, %v999
      %v1318 = vpack.c.b16 %v1002, %v1001
      %v1319 = vpack.c.b16 %v1004, %v1003
      %v1320 = vpack.c.b16 %v1006, %v1005
      %v1321 = vpack.c.b16 %v1008, %v1007
      %v1322 = vpack.c.b16 %v1010, %v1009
      %v1323 = vpack.c.b16 %v1012, %v1011
      %v1324 = vpack.c.b16 %v1014, %v1013
      %v1325 = vpack.c.b16 %v1016, %v1015
      %v1326 = vpack.c.b16 %v1018, %v1017
      %v1327 = vpack.c.b16 %v1020, %v1019
      %v1328 = vpack.c.b16 %v1022, %v1021
      %v1329 = vpack.c.b16 %v1024, %v1023
      %v1330 = vpack.c.b16 %v1026, %v1025
      %v1331 = vpack.c.b16 %v1028, %v1027
      %v1332 = vpack.c.b16 %v1030, %v1029
      %v1333 = vpack.c.b16 %v1032, %v1031
      %v1334 = vpack.c.b16 %v1034, %v1033
      %v1335 = vpack.c.b16 %v1036, %v1035
      %v1336 = vpack.c.b16 %v1038, %v1037
      %v1337 = vpack.c.b16 %v1040, %v1039
      %v1338 = vpack.c.b16 %v1042, %v1041
      %v1339 = vpack.c.b16 %v1044, %v1043
      %v1340 = vpack.c.b16 %v1046, %v1045
      %v1341 = vpack.c.b16 %v1048, %v1047
      %v1342 = vpack.c.b16 %v1050, %v1049
      %v1343 = vpack.c.b16 %v1052, %v1051
      %v1344 = vpack.c.b16 %v1054, %v1053
      %v1345 = vpack.c.b16 %v1056, %v1055
      %v1346 = vpack.c.b16 %v1058, %v1057
      %v1347 = vpack.c.b16 %v1060, %v1059
      %v1348 = vpack.c.b16 %v1062, %v1061
      %v1349 = vpack.c.b16 %v1064, %v1063
      %v1350 = vpack.c.b16 %v1066, %v1065
      %v1351 = vpack.c.b16 %v1068, %v1067
      %v1352 = vpack.c.b16 %v1070, %v1069
      %v1353 = vpack.c.b16 %v1072, %v1071
      %v1354 = vpack.c.b16 %v1074, %v1073
      %v1355 = vpack.c.b16 %v1076, %v1075
      %v1356 = vpack.c.b16 %v1078, %v1077
      %v1357 = vpack.c.b16 %v1080, %v1079
      %v1358 = vpack.c.b16 %v1082, %v1081
      %v1359 = vpack.c.b16 %v1084, %v1083
      %v1360 = vpack.c.b16 %v1086, %v1085
      %v1361 = vpack.c.b16 %v1088, %v1087
      %v1362 = vpack.c.b16 %v1090, %v1089
      %v1363 = vpack.c.b16 %v1092, %v1091
      %v1364 = vpack.c.b16 %v1094, %v1093
      %v1365 = vpack.c.b16 %v1096, %v1095
      %v1366 = vpack.c.b16 %v1098, %v1097
      %v1367 = vpack.c.b16 %v1100, %v1099
      %v1368 = vpack.c.b16 %v1102, %v1101
      %v1369 = vpack.c.b16 %v1104, %v1103
      %v1370 = vpack.c.b16 %v1106, %v1105
      %v1371 = vpack.c.b16 %v1108, %v1107
      %v1372 = vpack.c.b16 %v1110, %v1109
      %v1373 = vpack.c.b16 %v1112, %v1111
      %v1374 = vpack.c.b16 %v1114, %v1113
      %v1375 = vpack.c.b16 %v1116, %v1115
      %v1376 = vpack.c.b16 %v1118, %v1117
      %v1377 = vpack.c.b16 %v1120, %v1119
      %v1378 = vpack.c.b16 %v1122, %v1121
      %v1379 = vpack.c.b16 %v1124, %v1123
      %v1380 = vpack.c.b16 %v1126, %v1125
      %v1381 = vpack.c.b16 %v1128, %v1127
      %v1382 = vpack.c.b16 %v1130, %v1129
      %v1383 = vpack.c.b16 %v1132, %v1131
      %v1384 = vpack.c.b16 %v1134, %v1133
      %v1385 = vpack.c.b16 %v1136, %v1135
      %v1386 = vpack.c.b16 %v1138, %v1137
      %v1387 = vpack.c.b16 %v1140, %v1139
      %v1388 = vpack.c.b16 %v1142, %v1141
      %v1389 = vpack.c.b16 %v1144, %v1143
      %v1390 = vpack.c.b16 %v1146, %v1145
      %v1391 = vpack.c.b16 %v1148, %v1147
      %v1392 = vpack.c.b16 %v1150, %v1149
      %v1393 = vpack.c.b16 %v1152, %v1151
      %v1394 = vpack.c.b16 %v1154, %v1153
      %v1395 = vpack.c.b16 %v1156, %v1155
      %v1396 = vpack.c.b16 %v1158, %v1157
      %v1397 = vpack.c.b16 %v1160, %v1159
      %v1398 = vpack.c.b16 %v1162, %v1161
      %v1399 = vpack.c.b16 %v1164, %v1163
      %v1400 = vpack.c.b16 %v1166, %v1165
      %v1401 = vpack.c.b16 %v1168, %v1167
      %v1402 = vpack.c.b16 %v1170, %v1169
      %v1403 = vpack.c.b16 %v1172, %v1171
      %v1404 = vpack.c.b16 %v1174, %v1173
      %v1405 = vpack.c.b16 %v1176, %v1175
      %v1406 = vpack.c.b16 %v1178, %v1177
      %v1407 = vpack.c.b16 %v1180, %v1179
      %v1408 = vpack.c.b16 %v1182, %v1181
      %v1409 = vpack.c.b16 %v1184, %v1183
      %v1410 = vpack.c.b16 %v1186, %v1185
      %v1411 = vpack.c.b16 %v1188, %v1187
      %v1412 = vpack.c.b16 %v1190, %v1189
      %v1413 = vpack.c.b16 %v1192, %v1191
      %v1414 = vpack.c.b16 %v1194, %v1193
      %v1415 = vpack.c.b16 %v1196, %v1195
      %v1416 = vpack.c.b16 %v1198, %v1197
      %v1417 = vpack.c.b16 %v1200, %v1199
      %v1418 = vpack.c.b16 %v1202, %v1201
      %v1419 = vpack.c.b16 %v1204, %v1203
      %v1420 = vpack.c.b16 %v1206, %v1205
      %v1421 = vpack.c.b16 %v1208, %v1207
      %v1422 = vpack.c.b16 %v1210, %v1209
      %v1423 = vpack.c.b16 %v1212, %v1211
      %v1424 = vpack.c.b16 %v1214, %v1213
      %v1425 = vpack.c.b16 %v1216, %v1215
      %v1426 = vpack.c.b16 %v1218, %v1217
      %v1427 = vpack.c.b16 %v1220, %v1219
      %v1428 = vpack.c.b16 %v1222, %v1221
      %v1429 = vpack.c.b16 %v1224, %v1223
      %v1430 = vpack.c.b16 %v1226, %v1225
      %v1431 = vpack.c.b16 %v1228, %v1227
      %v1432 = vpack.c.b16 %v1230, %v1229
      %v1433 = vpack.c.b16 %v1232, %v1231
      %v1434 = vpack.c.b16 %v1234, %v1233
      %v1435 = vpack.c.b16 %v1236, %v1235
      %v1436 = vpack.c.b16 %v1238, %v1237
      %v1437 = vpack.c.b16 %v1240, %v1239
      %v1438 = vpack.c.b16 %v1242, %v1241
      %v1439 = vpack.c.b16 %v1244, %v1243
      %v1440 = vpack.c.b16 %v1246, %v1245
      %v1441 = vpack.c.b16 %v1248, %v1247
      %v1442 = vpack.c.b16 %v1250, %v1249
      %v1443 = vpack.c.b16 %v1252, %v1251
      %v1444 = vpack.c.b16 %v1254, %v1253
      %v1445 = vpack.c.b16 %v1256, %v1255
      %v1446 = vpack.c.b16 %v1258, %v1257
      %v1447 = vpack.c.b16 %v1260, %v1259
      %v1448 = vpack.c.b16 %v1262, %v1261
      %v1449 = vpack.c.b16 %v1264, %v1263
      %v1450 = vpack.c.b16 %v1266, %v1265
      %v1451 = vpack.c.b16 %v1268, %v1267
      %v1452 = vpack.c.b16 %v1270, %v1269
      %v1453 = vpack.c.b16 %v1272, %v1271
      %v1454 = vpack.c.b16 %v1274, %v1273
      %v1651 = vunpack.c.l.b16 %v539
      %v1652 = vunpack.c.l.b16 %v540
      %v1653 = vunpack.c.l.b16 %v541
      %v1654 = vunpack.c.l.b16 %v542
      %v1655 = vunpack.c.l.b16 %v543
      %v1656 = vunpack.c.l.b16 %v544
      %v1657 = vunpack.c.l.b16 %v545
      %v1658 = vunpack.c.l.b16 %v546
      %v1659 = vunpack.c.l.b16 %v547
      %v1660 = vunpack.c.l.b16 %v548
      %v1661 = vunpack.c.l.b16 %v549
      %v1662 = vunpack.c.l.b16 %v550
      %v1663 = vunpack.c.l.b16 %v551
      %v1664 = vunpack.c.l.b16 %v552
      %v1665 = vunpack.c.l.b16 %v553
      %v1666 = vunpack.c.l.b16 %v554
      %v1667 = vpack.c.b16 %v1652, %v1651
      %v1668 = vpack.c.b16 %v1654, %v1653
      %v1669 = vpack.c.b16 %v1656, %v1655
      %v1670 = vpack.c.b16 %v1658, %v1657
      %v1671 = vpack.c.b16 %v1660, %v1659
      %v1672 = vpack.c.b16 %v1662, %v1661
      %v1673 = vpack.c.b16 %v1664, %v1663
      %v1674 = vpack.c.b16 %v1666, %v1665
      %1683 = vmatpush.bf16.msra.mxu0 %v1674
      %1684 = vmatpush.bf16.msra.mxu0 %v1673
      %1685 = vmatpush.bf16.msra.mxu0 %v1672
      %1686 = vmatpush.bf16.msra.mxu0 %v1671
      %1687 = vmatpush.bf16.msra.mxu0 %v1670
      %1688 = vmatpush.bf16.msra.mxu0 %v1669
      %1689 = vmatpush.bf16.msra.mxu0 %v1668
      %1690 = vmatpush.bf16.msra.mxu0 %v1667
      %1691 = vmatmul.bf16.gmra.mxu0 %v1275
      %v1692 = vpop.f32.mrf.mxu0
      %v1693 = vadd.f32 0.0, %v1692
      %v1694 = vpop.f32.mrf.mxu0
      %v1695 = vadd.f32 0.0, %v1694
      %1696 = vmatmul.bf16.gmra.mxu0 %v1276
      %v1697 = vpop.f32.mrf.mxu0
      %v1698 = vadd.f32 0.0, %v1697
      %v1699 = vpop.f32.mrf.mxu0
      %v1700 = vadd.f32 0.0, %v1699
      %1701 = vmatmul.bf16.gmra.mxu0 %v1277
      %v1702 = vpop.f32.mrf.mxu0
      %v1703 = vadd.f32 0.0, %v1702
      %v1704 = vpop.f32.mrf.mxu0
      %v1705 = vadd.f32 0.0, %v1704
      %1706 = vmatmul.bf16.gmra.mxu0 %v1278
      %v1707 = vpop.f32.mrf.mxu0
      %v1708 = vadd.f32 0.0, %v1707
      %v1709 = vpop.f32.mrf.mxu0
      %v1710 = vadd.f32 0.0, %v1709
      %1711 = vmatmul.bf16.gmra.mxu0 %v1279
      %v1712 = vpop.f32.mrf.mxu0
      %v1713 = vadd.f32 0.0, %v1712
      %v1714 = vpop.f32.mrf.mxu0
      %v1715 = vadd.f32 0.0, %v1714
      %1716 = vmatmul.bf16.gmra.mxu0 %v1280
      %v1717 = vpop.f32.mrf.mxu0
      %v1718 = vadd.f32 0.0, %v1717
      %v1719 = vpop.f32.mrf.mxu0
      %v1720 = vadd.f32 0.0, %v1719
      %1721 = vmatmul.bf16.gmra.mxu0 %v1281
      %v1722 = vpop.f32.mrf.mxu0
      %v1723 = vadd.f32 0.0, %v1722
      %v1724 = vpop.f32.mrf.mxu0
      %v1725 = vadd.f32 0.0, %v1724
      %1726 = vmatmul.bf16.gmra.mxu0 %v1282
      %v1727 = vpop.f32.mrf.mxu0
      %v1728 = vadd.f32 0.0, %v1727
      %v1729 = vpop.f32.mrf.mxu0
      %v1730 = vadd.f32 0.0, %v1729
      %1731 = vmatmul.bf16.gmra.mxu0 %v1283
      %v1732 = vpop.f32.mrf.mxu0
      %v1733 = vadd.f32 0.0, %v1732
      %v1734 = vpop.f32.mrf.mxu0
      %v1735 = vadd.f32 0.0, %v1734
      %1736 = vmatmul.bf16.gmra.mxu0 %v1284
      %v1737 = vpop.f32.mrf.mxu0
      %v1738 = vadd.f32 0.0, %v1737
      %v1739 = vpop.f32.mrf.mxu0
      %v1740 = vadd.f32 0.0, %v1739
      %1741 = vmatmul.bf16.gmra.mxu0 %v1285
      %v1742 = vpop.f32.mrf.mxu0
      %v1743 = vadd.f32 0.0, %v1742
      %v1744 = vpop.f32.mrf.mxu0
      %v1745 = vadd.f32 0.0, %v1744
      %1746 = vmatmul.bf16.gmra.mxu0 %v1286
      %v1747 = vpop.f32.mrf.mxu0
      %v1748 = vadd.f32 0.0, %v1747
      %v1749 = vpop.f32.mrf.mxu0
      %v1750 = vadd.f32 0.0, %v1749
      %1751 = vmatmul.bf16.gmra.mxu0 %v1287
      %v1752 = vpop.f32.mrf.mxu0
      %v1753 = vadd.f32 0.0, %v1752
      %v1754 = vpop.f32.mrf.mxu0
      %v1755 = vadd.f32 0.0, %v1754
      %1756 = vmatmul.bf16.gmra.mxu0 %v1288
      %v1757 = vpop.f32.mrf.mxu0
      %v1758 = vadd.f32 0.0, %v1757
      %v1759 = vpop.f32.mrf.mxu0
      %v1760 = vadd.f32 0.0, %v1759
      %1761 = vmatmul.bf16.gmra.mxu0 %v1289
      %v1762 = vpop.f32.mrf.mxu0
      %v1763 = vadd.f32 0.0, %v1762
      %v1764 = vpop.f32.mrf.mxu0
      %v1765 = vadd.f32 0.0, %v1764
      %1766 = vmatmul.bf16.gmra.mxu0 %v1290
      %v1767 = vpop.f32.mrf.mxu0
      %v1768 = vadd.f32 0.0, %v1767
      %v1769 = vpop.f32.mrf.mxu0
      %v1770 = vadd.f32 0.0, %v1769
      %1771 = vmatmul.bf16.gmra.mxu0 %v1291
      %v1772 = vpop.f32.mrf.mxu0
      %v1773 = vadd.f32 0.0, %v1772
      %v1774 = vpop.f32.mrf.mxu0
      %v1775 = vadd.f32 0.0, %v1774
      %1776 = vmatmul.bf16.gmra.mxu0 %v1292
      %v1777 = vpop.f32.mrf.mxu0
      %v1778 = vadd.f32 0.0, %v1777
      %v1779 = vpop.f32.mrf.mxu0
      %v1780 = vadd.f32 0.0, %v1779
      %1781 = vmatmul.bf16.gmra.mxu0 %v1293
      %v1782 = vpop.f32.mrf.mxu0
      %v1783 = vadd.f32 0.0, %v1782
      %v1784 = vpop.f32.mrf.mxu0
      %v1785 = vadd.f32 0.0, %v1784
      %1786 = vmatmul.bf16.gmra.mxu0 %v1294
      %v1787 = vpop.f32.mrf.mxu0
      %v1788 = vadd.f32 0.0, %v1787
      %v1789 = vpop.f32.mrf.mxu0
      %v1790 = vadd.f32 0.0, %v1789
      %1791 = vmatmul.bf16.gmra.mxu0 %v1295
      %v1792 = vpop.f32.mrf.mxu0
      %v1793 = vadd.f32 0.0, %v1792
      %v1794 = vpop.f32.mrf.mxu0
      %v1795 = vadd.f32 0.0, %v1794
      %1796 = vmatmul.bf16.gmra.mxu0 %v1296
      %v1797 = vpop.f32.mrf.mxu0
      %v1798 = vadd.f32 0.0, %v1797
      %v1799 = vpop.f32.mrf.mxu0
      %v1800 = vadd.f32 0.0, %v1799
      %1801 = vmatmul.bf16.gmra.mxu0 %v1297
      %v1802 = vpop.f32.mrf.mxu0
      %v1803 = vadd.f32 0.0, %v1802
      %v1804 = vpop.f32.mrf.mxu0
      %v1805 = vadd.f32 0.0, %v1804
      %1806 = vmatmul.bf16.gmra.mxu0 %v1298
      %v1807 = vpop.f32.mrf.mxu0
      %v1808 = vadd.f32 0.0, %v1807
      %v1809 = vpop.f32.mrf.mxu0
      %v1810 = vadd.f32 0.0, %v1809
      %1811 = vmatmul.bf16.gmra.mxu0 %v1299
      %v1812 = vpop.f32.mrf.mxu0
      %v1813 = vadd.f32 0.0, %v1812
      %v1814 = vpop.f32.mrf.mxu0
      %v1815 = vadd.f32 0.0, %v1814
      %1816 = vmatmul.bf16.gmra.mxu0 %v1300
      %v1817 = vpop.f32.mrf.mxu0
      %v1818 = vadd.f32 0.0, %v1817
      %v1819 = vpop.f32.mrf.mxu0
      %v1820 = vadd.f32 0.0, %v1819
      %1821 = vmatmul.bf16.gmra.mxu0 %v1301
      %v1822 = vpop.f32.mrf.mxu0
      %v1823 = vadd.f32 0.0, %v1822
      %v1824 = vpop.f32.mrf.mxu0
      %v1825 = vadd.f32 0.0, %v1824
      %1826 = vmatmul.bf16.gmra.mxu0 %v1302
      %v1827 = vpop.f32.mrf.mxu0
      %v1828 = vadd.f32 0.0, %v1827
      %v1829 = vpop.f32.mrf.mxu0
      %v1830 = vadd.f32 0.0, %v1829
      %1831 = vmatmul.bf16.gmra.mxu0 %v1303
      %v1832 = vpop.f32.mrf.mxu0
      %v1833 = vadd.f32 0.0, %v1832
      %v1834 = vpop.f32.mrf.mxu0
      %v1835 = vadd.f32 0.0, %v1834
      %1836 = vmatmul.bf16.gmra.mxu0 %v1304
      %v1837 = vpop.f32.mrf.mxu0
      %v1838 = vadd.f32 0.0, %v1837
      %v1839 = vpop.f32.mrf.mxu0
      %v1840 = vadd.f32 0.0, %v1839
      %1841 = vmatmul.bf16.gmra.mxu0 %v1305
      %v1842 = vpop.f32.mrf.mxu0
      %v1843 = vadd.f32 0.0, %v1842
      %v1844 = vpop.f32.mrf.mxu0
      %v1845 = vadd.f32 0.0, %v1844
      %1846 = vmatmul.bf16.gmra.mxu0 %v1306
      %v1847 = vpop.f32.mrf.mxu0
      %v1848 = vadd.f32 0.0, %v1847
      %v1849 = vpop.f32.mrf.mxu0
      %v1850 = vadd.f32 0.0, %v1849
      %1851 = vmatmul.bf16.gmra.mxu0 %v1307
      %v1852 = vpop.f32.mrf.mxu0
      %v1853 = vadd.f32 0.0, %v1852
      %v1854 = vpop.f32.mrf.mxu0
      %v1855 = vadd.f32 0.0, %v1854
      %1856 = vmatmul.bf16.gmra.mxu0 %v1308
      %v1857 = vpop.f32.mrf.mxu0
      %v1858 = vadd.f32 0.0, %v1857
      %v1859 = vpop.f32.mrf.mxu0
      %v1860 = vadd.f32 0.0, %v1859
      %1861 = vmatmul.bf16.gmra.mxu0 %v1309
      %v1862 = vpop.f32.mrf.mxu0
      %v1863 = vadd.f32 0.0, %v1862
      %v1864 = vpop.f32.mrf.mxu0
      %v1865 = vadd.f32 0.0, %v1864
      %1866 = vmatmul.bf16.gmra.mxu0 %v1310
      %v1867 = vpop.f32.mrf.mxu0
      %v1868 = vadd.f32 0.0, %v1867
      %v1869 = vpop.f32.mrf.mxu0
      %v1870 = vadd.f32 0.0, %v1869
      %1871 = vmatmul.bf16.gmra.mxu0 %v1311
      %v1872 = vpop.f32.mrf.mxu0
      %v1873 = vadd.f32 0.0, %v1872
      %v1874 = vpop.f32.mrf.mxu0
      %v1875 = vadd.f32 0.0, %v1874
      %1876 = vmatmul.bf16.gmra.mxu0 %v1312
      %v1877 = vpop.f32.mrf.mxu0
      %v1878 = vadd.f32 0.0, %v1877
      %v1879 = vpop.f32.mrf.mxu0
      %v1880 = vadd.f32 0.0, %v1879
      %1881 = vmatmul.bf16.gmra.mxu0 %v1313
      %v1882 = vpop.f32.mrf.mxu0
      %v1883 = vadd.f32 0.0, %v1882
      %v1884 = vpop.f32.mrf.mxu0
      %v1885 = vadd.f32 0.0, %v1884
      %1886 = vmatmul.bf16.gmra.mxu0 %v1314
      %v1887 = vpop.f32.mrf.mxu0
      %v1888 = vadd.f32 0.0, %v1887
      %v1889 = vpop.f32.mrf.mxu0
      %v1890 = vadd.f32 0.0, %v1889
      %1891 = vmatmul.bf16.gmra.mxu0 %v1315
      %v1892 = vpop.f32.mrf.mxu0
      %v1893 = vadd.f32 0.0, %v1892
      %v1894 = vpop.f32.mrf.mxu0
      %v1895 = vadd.f32 0.0, %v1894
      %1896 = vmatmul.bf16.gmra.mxu0 %v1316
      %v1897 = vpop.f32.mrf.mxu0
      %v1898 = vadd.f32 0.0, %v1897
      %v1899 = vpop.f32.mrf.mxu0
      %v1900 = vadd.f32 0.0, %v1899
      %1901 = vmatmul.bf16.gmra.mxu0 %v1317
      %v1902 = vpop.f32.mrf.mxu0
      %v1903 = vadd.f32 0.0, %v1902
      %v1904 = vpop.f32.mrf.mxu0
      %v1905 = vadd.f32 0.0, %v1904
      %1906 = vmatmul.bf16.gmra.mxu0 %v1318
      %v1907 = vpop.f32.mrf.mxu0
      %v1908 = vadd.f32 0.0, %v1907
      %v1909 = vpop.f32.mrf.mxu0
      %v1910 = vadd.f32 0.0, %v1909
      %1911 = vmatmul.bf16.gmra.mxu0 %v1319
      %v1912 = vpop.f32.mrf.mxu0
      %v1913 = vadd.f32 0.0, %v1912
      %v1914 = vpop.f32.mrf.mxu0
      %v1915 = vadd.f32 0.0, %v1914
      %1916 = vmatmul.bf16.gmra.mxu0 %v1320
      %v1917 = vpop.f32.mrf.mxu0
      %v1918 = vadd.f32 0.0, %v1917
      %v1919 = vpop.f32.mrf.mxu0
      %v1920 = vadd.f32 0.0, %v1919
      %1921 = vmatmul.bf16.gmra.mxu0 %v1321
      %v1922 = vpop.f32.mrf.mxu0
      %v1923 = vadd.f32 0.0, %v1922
      %v1924 = vpop.f32.mrf.mxu0
      %v1925 = vadd.f32 0.0, %v1924
      %1926 = vmatmul.bf16.gmra.mxu0 %v1322
      %v1927 = vpop.f32.mrf.mxu0
      %v1928 = vadd.f32 0.0, %v1927
      %v1929 = vpop.f32.mrf.mxu0
      %v1930 = vadd.f32 0.0, %v1929
      %1931 = vmatmul.bf16.gmra.mxu0 %v1323
      %v1932 = vpop.f32.mrf.mxu0
      %v1933 = vadd.f32 0.0, %v1932
      %v1934 = vpop.f32.mrf.mxu0
      %v1935 = vadd.f32 0.0, %v1934
      %1936 = vmatmul.bf16.gmra.mxu0 %v1324
      %v1937 = vpop.f32.mrf.mxu0
      %v1938 = vadd.f32 0.0, %v1937
      %v1939 = vpop.f32.mrf.mxu0
      %v1940 = vadd.f32 0.0, %v1939
      %1941 = vmatmul.bf16.gmra.mxu0 %v1325
      %v1942 = vpop.f32.mrf.mxu0
      %v1943 = vadd.f32 0.0, %v1942
      %v1944 = vpop.f32.mrf.mxu0
      %v1945 = vadd.f32 0.0, %v1944
      %1946 = vmatmul.bf16.gmra.mxu0 %v1326
      %v1947 = vpop.f32.mrf.mxu0
      %v1948 = vadd.f32 0.0, %v1947
      %v1949 = vpop.f32.mrf.mxu0
      %v1950 = vadd.f32 0.0, %v1949
      %1951 = vmatmul.bf16.gmra.mxu0 %v1327
      %v1952 = vpop.f32.mrf.mxu0
      %v1953 = vadd.f32 0.0, %v1952
      %v1954 = vpop.f32.mrf.mxu0
      %v1955 = vadd.f32 0.0, %v1954
      %1956 = vmatmul.bf16.gmra.mxu0 %v1328
      %v1957 = vpop.f32.mrf.mxu0
      %v1958 = vadd.f32 0.0, %v1957
      %v1959 = vpop.f32.mrf.mxu0
      %v1960 = vadd.f32 0.0, %v1959
      %1961 = vmatmul.bf16.gmra.mxu0 %v1329
      %v1962 = vpop.f32.mrf.mxu0
      %v1963 = vadd.f32 0.0, %v1962
      %v1964 = vpop.f32.mrf.mxu0
      %v1965 = vadd.f32 0.0, %v1964
      %1966 = vmatmul.bf16.gmra.mxu0 %v1330
      %v1967 = vpop.f32.mrf.mxu0
      %v1968 = vadd.f32 0.0, %v1967
      %v1969 = vpop.f32.mrf.mxu0
      %v1970 = vadd.f32 0.0, %v1969
      %1971 = vmatmul.bf16.gmra.mxu0 %v1331
      %v1972 = vpop.f32.mrf.mxu0
      %v1973 = vadd.f32 0.0, %v1972
      %v1974 = vpop.f32.mrf.mxu0
      %v1975 = vadd.f32 0.0, %v1974
      %1976 = vmatmul.bf16.gmra.mxu0 %v1332
      %v1977 = vpop.f32.mrf.mxu0
      %v1978 = vadd.f32 0.0, %v1977
      %v1979 = vpop.f32.mrf.mxu0
      %v1980 = vadd.f32 0.0, %v1979
      %1981 = vmatmul.bf16.gmra.mxu0 %v1333
      %v1982 = vpop.f32.mrf.mxu0
      %v1983 = vadd.f32 0.0, %v1982
      %v1984 = vpop.f32.mrf.mxu0
      %v1985 = vadd.f32 0.0, %v1984
      %1986 = vmatmul.bf16.gmra.mxu0 %v1334
      %v1987 = vpop.f32.mrf.mxu0
      %v1988 = vadd.f32 0.0, %v1987
      %v1989 = vpop.f32.mrf.mxu0
      %v1990 = vadd.f32 0.0, %v1989
      %1991 = vmatmul.bf16.gmra.mxu0 %v1335
      %v1992 = vpop.f32.mrf.mxu0
      %v1993 = vadd.f32 0.0, %v1992
      %v1994 = vpop.f32.mrf.mxu0
      %v1995 = vadd.f32 0.0, %v1994
      %1996 = vmatmul.bf16.gmra.mxu0 %v1336
      %v1997 = vpop.f32.mrf.mxu0
      %v1998 = vadd.f32 0.0, %v1997
      %v1999 = vpop.f32.mrf.mxu0
      %v2000 = vadd.f32 0.0, %v1999
      %2001 = vmatmul.bf16.gmra.mxu0 %v1337
      %v2002 = vpop.f32.mrf.mxu0
      %v2003 = vadd.f32 0.0, %v2002
      %v2004 = vpop.f32.mrf.mxu0
      %v2005 = vadd.f32 0.0, %v2004
      %2006 = vmatmul.bf16.gmra.mxu0 %v1338
      %v2007 = vpop.f32.mrf.mxu0
      %v2008 = vadd.f32 0.0, %v2007
      %v2009 = vpop.f32.mrf.mxu0
      %v2010 = vadd.f32 0.0, %v2009
      %2011 = vmatmul.bf16.gmra.mxu0 %v1339
      %v2012 = vpop.f32.mrf.mxu0
      %v2013 = vadd.f32 0.0, %v2012
      %v2014 = vpop.f32.mrf.mxu0
      %v2015 = vadd.f32 0.0, %v2014
      %2016 = vmatmul.bf16.gmra.mxu0 %v1340
      %v2017 = vpop.f32.mrf.mxu0
      %v2018 = vadd.f32 0.0, %v2017
      %v2019 = vpop.f32.mrf.mxu0
      %v2020 = vadd.f32 0.0, %v2019
      %2021 = vmatmul.bf16.gmra.mxu0 %v1341
      %v2022 = vpop.f32.mrf.mxu0
      %v2023 = vadd.f32 0.0, %v2022
      %v2024 = vpop.f32.mrf.mxu0
      %v2025 = vadd.f32 0.0, %v2024
      %2026 = vmatmul.bf16.gmra.mxu0 %v1342
      %v2027 = vpop.f32.mrf.mxu0
      %v2028 = vadd.f32 0.0, %v2027
      %v2029 = vpop.f32.mrf.mxu0
      %v2030 = vadd.f32 0.0, %v2029
      %2031 = vmatmul.bf16.gmra.mxu0 %v1343
      %v2032 = vpop.f32.mrf.mxu0
      %v2033 = vadd.f32 0.0, %v2032
      %v2034 = vpop.f32.mrf.mxu0
      %v2035 = vadd.f32 0.0, %v2034
      %2036 = vmatmul.bf16.gmra.mxu0 %v1344
      %v2037 = vpop.f32.mrf.mxu0
      %v2038 = vadd.f32 0.0, %v2037
      %v2039 = vpop.f32.mrf.mxu0
      %v2040 = vadd.f32 0.0, %v2039
      %2041 = vmatmul.bf16.gmra.mxu0 %v1345
      %v2042 = vpop.f32.mrf.mxu0
      %v2043 = vadd.f32 0.0, %v2042
      %v2044 = vpop.f32.mrf.mxu0
      %v2045 = vadd.f32 0.0, %v2044
      %2046 = vmatmul.bf16.gmra.mxu0 %v1346
      %v2047 = vpop.f32.mrf.mxu0
      %v2048 = vadd.f32 0.0, %v2047
      %v2049 = vpop.f32.mrf.mxu0
      %v2050 = vadd.f32 0.0, %v2049
      %2051 = vmatmul.bf16.gmra.mxu0 %v1347
      %v2052 = vpop.f32.mrf.mxu0
      %v2053 = vadd.f32 0.0, %v2052
      %v2054 = vpop.f32.mrf.mxu0
      %v2055 = vadd.f32 0.0, %v2054
      %2056 = vmatmul.bf16.gmra.mxu0 %v1348
      %v2057 = vpop.f32.mrf.mxu0
      %v2058 = vadd.f32 0.0, %v2057
      %v2059 = vpop.f32.mrf.mxu0
      %v2060 = vadd.f32 0.0, %v2059
      %2061 = vmatmul.bf16.gmra.mxu0 %v1349
      %v2062 = vpop.f32.mrf.mxu0
      %v2063 = vadd.f32 0.0, %v2062
      %v2064 = vpop.f32.mrf.mxu0
      %v2065 = vadd.f32 0.0, %v2064
      %2066 = vmatmul.bf16.gmra.mxu0 %v1350
      %v2067 = vpop.f32.mrf.mxu0
      %v2068 = vadd.f32 0.0, %v2067
      %v2069 = vpop.f32.mrf.mxu0
      %v2070 = vadd.f32 0.0, %v2069
      %2071 = vmatmul.bf16.gmra.mxu0 %v1351
      %v2072 = vpop.f32.mrf.mxu0
      %v2073 = vadd.f32 0.0, %v2072
      %v2074 = vpop.f32.mrf.mxu0
      %v2075 = vadd.f32 0.0, %v2074
      %2076 = vmatmul.bf16.gmra.mxu0 %v1352
      %v2077 = vpop.f32.mrf.mxu0
      %v2078 = vadd.f32 0.0, %v2077
      %v2079 = vpop.f32.mrf.mxu0
      %v2080 = vadd.f32 0.0, %v2079
      %2081 = vmatmul.bf16.gmra.mxu0 %v1353
      %v2082 = vpop.f32.mrf.mxu0
      %v2083 = vadd.f32 0.0, %v2082
      %v2084 = vpop.f32.mrf.mxu0
      %v2085 = vadd.f32 0.0, %v2084
      %2086 = vmatmul.bf16.gmra.mxu0 %v1354
      %v2087 = vpop.f32.mrf.mxu0
      %v2088 = vadd.f32 0.0, %v2087
      %v2089 = vpop.f32.mrf.mxu0
      %v2090 = vadd.f32 0.0, %v2089
      %2091 = vmatmul.bf16.gmra.mxu0 %v1355
      %v2092 = vpop.f32.mrf.mxu0
      %v2093 = vadd.f32 0.0, %v2092
      %v2094 = vpop.f32.mrf.mxu0
      %v2095 = vadd.f32 0.0, %v2094
      %2096 = vmatmul.bf16.gmra.mxu0 %v1356
      %v2097 = vpop.f32.mrf.mxu0
      %v2098 = vadd.f32 0.0, %v2097
      %v2099 = vpop.f32.mrf.mxu0
      %v2100 = vadd.f32 0.0, %v2099
      %2101 = vmatmul.bf16.gmra.mxu0 %v1357
      %v2102 = vpop.f32.mrf.mxu0
      %v2103 = vadd.f32 0.0, %v2102
      %v2104 = vpop.f32.mrf.mxu0
      %v2105 = vadd.f32 0.0, %v2104
      %2106 = vmatmul.bf16.gmra.mxu0 %v1358
      %v2107 = vpop.f32.mrf.mxu0
      %v2108 = vadd.f32 0.0, %v2107
      %v2109 = vpop.f32.mrf.mxu0
      %v2110 = vadd.f32 0.0, %v2109
      %2111 = vmatmul.bf16.gmra.mxu0 %v1359
      %v2112 = vpop.f32.mrf.mxu0
      %v2113 = vadd.f32 0.0, %v2112
      %v2114 = vpop.f32.mrf.mxu0
      %v2115 = vadd.f32 0.0, %v2114
      %2116 = vmatmul.bf16.gmra.mxu0 %v1360
      %v2117 = vpop.f32.mrf.mxu0
      %v2118 = vadd.f32 0.0, %v2117
      %v2119 = vpop.f32.mrf.mxu0
      %v2120 = vadd.f32 0.0, %v2119
      %2121 = vmatmul.bf16.gmra.mxu0 %v1361
      %v2122 = vpop.f32.mrf.mxu0
      %v2123 = vadd.f32 0.0, %v2122
      %v2124 = vpop.f32.mrf.mxu0
      %v2125 = vadd.f32 0.0, %v2124
      %2126 = vmatmul.bf16.gmra.mxu0 %v1362
      %v2127 = vpop.f32.mrf.mxu0
      %v2128 = vadd.f32 0.0, %v2127
      %v2129 = vpop.f32.mrf.mxu0
      %v2130 = vadd.f32 0.0, %v2129
      %2131 = vmatmul.bf16.gmra.mxu0 %v1363
      %v2132 = vpop.f32.mrf.mxu0
      %v2133 = vadd.f32 0.0, %v2132
      %v2134 = vpop.f32.mrf.mxu0
      %v2135 = vadd.f32 0.0, %v2134
      %2136 = vmatmul.bf16.gmra.mxu0 %v1364
      %v2137 = vpop.f32.mrf.mxu0
      %v2138 = vadd.f32 0.0, %v2137
      %v2139 = vpop.f32.mrf.mxu0
      %v2140 = vadd.f32 0.0, %v2139
      %2141 = vmatmul.bf16.gmra.mxu0 %v1365
      %v2142 = vpop.f32.mrf.mxu0
      %v2143 = vadd.f32 0.0, %v2142
      %v2144 = vpop.f32.mrf.mxu0
      %v2145 = vadd.f32 0.0, %v2144
      %2146 = vmatmul.bf16.gmra.mxu0 %v1366
      %v2147 = vpop.f32.mrf.mxu0
      %v2148 = vadd.f32 0.0, %v2147
      %v2149 = vpop.f32.mrf.mxu0
      %v2150 = vadd.f32 0.0, %v2149
      %2151 = vmatmul.bf16.gmra.mxu0 %v1367
      %v2152 = vpop.f32.mrf.mxu0
      %v2153 = vadd.f32 0.0, %v2152
      %v2154 = vpop.f32.mrf.mxu0
      %v2155 = vadd.f32 0.0, %v2154
      %2156 = vmatmul.bf16.gmra.mxu0 %v1368
      %v2157 = vpop.f32.mrf.mxu0
      %v2158 = vadd.f32 0.0, %v2157
      %v2159 = vpop.f32.mrf.mxu0
      %v2160 = vadd.f32 0.0, %v2159
      %2161 = vmatmul.bf16.gmra.mxu0 %v1369
      %v2162 = vpop.f32.mrf.mxu0
      %v2163 = vadd.f32 0.0, %v2162
      %v2164 = vpop.f32.mrf.mxu0
      %v2165 = vadd.f32 0.0, %v2164
      %2166 = vmatmul.bf16.gmra.mxu0 %v1370
      %v2167 = vpop.f32.mrf.mxu0
      %v2168 = vadd.f32 0.0, %v2167
      %v2169 = vpop.f32.mrf.mxu0
      %v2170 = vadd.f32 0.0, %v2169
      %2171 = vmatmul.bf16.gmra.mxu0 %v1371
      %v2172 = vpop.f32.mrf.mxu0
      %v2173 = vadd.f32 0.0, %v2172
      %v2174 = vpop.f32.mrf.mxu0
      %v2175 = vadd.f32 0.0, %v2174
      %2176 = vmatmul.bf16.gmra.mxu0 %v1372
      %v2177 = vpop.f32.mrf.mxu0
      %v2178 = vadd.f32 0.0, %v2177
      %v2179 = vpop.f32.mrf.mxu0
      %v2180 = vadd.f32 0.0, %v2179
      %2181 = vmatmul.bf16.gmra.mxu0 %v1373
      %v2182 = vpop.f32.mrf.mxu0
      %v2183 = vadd.f32 0.0, %v2182
      %v2184 = vpop.f32.mrf.mxu0
      %v2185 = vadd.f32 0.0, %v2184
      %2186 = vmatmul.bf16.gmra.mxu0 %v1374
      %v2187 = vpop.f32.mrf.mxu0
      %v2188 = vadd.f32 0.0, %v2187
      %v2189 = vpop.f32.mrf.mxu0
      %v2190 = vadd.f32 0.0, %v2189
      %2191 = vmatmul.bf16.gmra.mxu0 %v1375
      %v2192 = vpop.f32.mrf.mxu0
      %v2193 = vadd.f32 0.0, %v2192
      %v2194 = vpop.f32.mrf.mxu0
      %v2195 = vadd.f32 0.0, %v2194
      %2196 = vmatmul.bf16.gmra.mxu0 %v1376
      %v2197 = vpop.f32.mrf.mxu0
      %v2198 = vadd.f32 0.0, %v2197
      %v2199 = vpop.f32.mrf.mxu0
      %v2200 = vadd.f32 0.0, %v2199
      %2201 = vmatmul.bf16.gmra.mxu0 %v1377
      %v2202 = vpop.f32.mrf.mxu0
      %v2203 = vadd.f32 0.0, %v2202
      %v2204 = vpop.f32.mrf.mxu0
      %v2205 = vadd.f32 0.0, %v2204
      %2206 = vmatmul.bf16.gmra.mxu0 %v1378
      %v2207 = vpop.f32.mrf.mxu0
      %v2208 = vadd.f32 0.0, %v2207
      %v2209 = vpop.f32.mrf.mxu0
      %v2210 = vadd.f32 0.0, %v2209
      %2211 = vmatmul.bf16.gmra.mxu0 %v1379
      %v2212 = vpop.f32.mrf.mxu0
      %v2213 = vadd.f32 0.0, %v2212
      %v2214 = vpop.f32.mrf.mxu0
      %v2215 = vadd.f32 0.0, %v2214
      %2216 = vmatmul.bf16.gmra.mxu0 %v1380
      %v2217 = vpop.f32.mrf.mxu0
      %v2218 = vadd.f32 0.0, %v2217
      %v2219 = vpop.f32.mrf.mxu0
      %v2220 = vadd.f32 0.0, %v2219
      %2221 = vmatmul.bf16.gmra.mxu0 %v1381
      %v2222 = vpop.f32.mrf.mxu0
      %v2223 = vadd.f32 0.0, %v2222
      %v2224 = vpop.f32.mrf.mxu0
      %v2225 = vadd.f32 0.0, %v2224
      %2226 = vmatmul.bf16.gmra.mxu0 %v1382
      %v2227 = vpop.f32.mrf.mxu0
      %v2228 = vadd.f32 0.0, %v2227
      %v2229 = vpop.f32.mrf.mxu0
      %v2230 = vadd.f32 0.0, %v2229
      %2231 = vmatmul.bf16.gmra.mxu0 %v1383
      %v2232 = vpop.f32.mrf.mxu0
      %v2233 = vadd.f32 0.0, %v2232
      %v2234 = vpop.f32.mrf.mxu0
      %v2235 = vadd.f32 0.0, %v2234
      %2236 = vmatmul.bf16.gmra.mxu0 %v1384
      %v2237 = vpop.f32.mrf.mxu0
      %v2238 = vadd.f32 0.0, %v2237
      %v2239 = vpop.f32.mrf.mxu0
      %v2240 = vadd.f32 0.0, %v2239
      %2241 = vmatmul.bf16.gmra.mxu0 %v1385
      %v2242 = vpop.f32.mrf.mxu0
      %v2243 = vadd.f32 0.0, %v2242
      %v2244 = vpop.f32.mrf.mxu0
      %v2245 = vadd.f32 0.0, %v2244
      %2246 = vmatmul.bf16.gmra.mxu0 %v1386
      %v2247 = vpop.f32.mrf.mxu0
      %v2248 = vadd.f32 0.0, %v2247
      %v2249 = vpop.f32.mrf.mxu0
      %v2250 = vadd.f32 0.0, %v2249
      %2251 = vmatmul.bf16.gmra.mxu0 %v1387
      %v2252 = vpop.f32.mrf.mxu0
      %v2253 = vadd.f32 0.0, %v2252
      %v2254 = vpop.f32.mrf.mxu0
      %v2255 = vadd.f32 0.0, %v2254
      %2256 = vmatmul.bf16.gmra.mxu0 %v1388
      %v2257 = vpop.f32.mrf.mxu0
      %v2258 = vadd.f32 0.0, %v2257
      %v2259 = vpop.f32.mrf.mxu0
      %v2260 = vadd.f32 0.0, %v2259
      %2261 = vmatmul.bf16.gmra.mxu0 %v1389
      %v2262 = vpop.f32.mrf.mxu0
      %v2263 = vadd.f32 0.0, %v2262
      %v2264 = vpop.f32.mrf.mxu0
      %v2265 = vadd.f32 0.0, %v2264
      %2266 = vmatmul.bf16.gmra.mxu0 %v1390
      %v2267 = vpop.f32.mrf.mxu0
      %v2268 = vadd.f32 0.0, %v2267
      %v2269 = vpop.f32.mrf.mxu0
      %v2270 = vadd.f32 0.0, %v2269
      %2271 = vmatmul.bf16.gmra.mxu0 %v1391
      %v2272 = vpop.f32.mrf.mxu0
      %v2273 = vadd.f32 0.0, %v2272
      %v2274 = vpop.f32.mrf.mxu0
      %v2275 = vadd.f32 0.0, %v2274
      %2276 = vmatmul.bf16.gmra.mxu0 %v1392
      %v2277 = vpop.f32.mrf.mxu0
      %v2278 = vadd.f32 0.0, %v2277
      %v2279 = vpop.f32.mrf.mxu0
      %v2280 = vadd.f32 0.0, %v2279
      %2281 = vmatmul.bf16.gmra.mxu0 %v1393
      %v2282 = vpop.f32.mrf.mxu0
      %v2283 = vadd.f32 0.0, %v2282
      %v2284 = vpop.f32.mrf.mxu0
      %v2285 = vadd.f32 0.0, %v2284
      %2286 = vmatmul.bf16.gmra.mxu0 %v1394
      %v2287 = vpop.f32.mrf.mxu0
      %v2288 = vadd.f32 0.0, %v2287
      %v2289 = vpop.f32.mrf.mxu0
      %v2290 = vadd.f32 0.0, %v2289
      %2291 = vmatmul.bf16.gmra.mxu0 %v1395
      %v2292 = vpop.f32.mrf.mxu0
      %v2293 = vadd.f32 0.0, %v2292
      %v2294 = vpop.f32.mrf.mxu0
      %v2295 = vadd.f32 0.0, %v2294
      %2296 = vmatmul.bf16.gmra.mxu0 %v1396
      %v2297 = vpop.f32.mrf.mxu0
      %v2298 = vadd.f32 0.0, %v2297
      %v2299 = vpop.f32.mrf.mxu0
      %v2300 = vadd.f32 0.0, %v2299
      %2301 = vmatmul.bf16.gmra.mxu0 %v1397
      %v2302 = vpop.f32.mrf.mxu0
      %v2303 = vadd.f32 0.0, %v2302
      %v2304 = vpop.f32.mrf.mxu0
      %v2305 = vadd.f32 0.0, %v2304
      %2306 = vmatmul.bf16.gmra.mxu0 %v1398
      %v2307 = vpop.f32.mrf.mxu0
      %v2308 = vadd.f32 0.0, %v2307
      %v2309 = vpop.f32.mrf.mxu0
      %v2310 = vadd.f32 0.0, %v2309
      %2311 = vmatmul.bf16.gmra.mxu0 %v1399
      %v2312 = vpop.f32.mrf.mxu0
      %v2313 = vadd.f32 0.0, %v2312
      %v2314 = vpop.f32.mrf.mxu0
      %v2315 = vadd.f32 0.0, %v2314
      %2316 = vmatmul.bf16.gmra.mxu0 %v1400
      %v2317 = vpop.f32.mrf.mxu0
      %v2318 = vadd.f32 0.0, %v2317
      %v2319 = vpop.f32.mrf.mxu0
      %v2320 = vadd.f32 0.0, %v2319
      %2321 = vmatmul.bf16.gmra.mxu0 %v1401
      %v2322 = vpop.f32.mrf.mxu0
      %v2323 = vadd.f32 0.0, %v2322
      %v2324 = vpop.f32.mrf.mxu0
      %v2325 = vadd.f32 0.0, %v2324
      %2326 = vmatmul.bf16.gmra.mxu0 %v1402
      %v2327 = vpop.f32.mrf.mxu0
      %v2328 = vadd.f32 0.0, %v2327
      %v2329 = vpop.f32.mrf.mxu0
      %v2330 = vadd.f32 0.0, %v2329
      %2331 = vmatmul.bf16.gmra.mxu0 %v1403
      %v2332 = vpop.f32.mrf.mxu0
      %v2333 = vadd.f32 0.0, %v2332
      %v2334 = vpop.f32.mrf.mxu0
      %v2335 = vadd.f32 0.0, %v2334
      %2336 = vmatmul.bf16.gmra.mxu0 %v1404
      %v2337 = vpop.f32.mrf.mxu0
      %v2338 = vadd.f32 0.0, %v2337
      %v2339 = vpop.f32.mrf.mxu0
      %v2340 = vadd.f32 0.0, %v2339
      %2341 = vmatmul.bf16.gmra.mxu0 %v1405
      %v2342 = vpop.f32.mrf.mxu0
      %v2343 = vadd.f32 0.0, %v2342
      %v2344 = vpop.f32.mrf.mxu0
      %v2345 = vadd.f32 0.0, %v2344
      %2346 = vmatmul.bf16.gmra.mxu0 %v1406
      %v2347 = vpop.f32.mrf.mxu0
      %v2348 = vadd.f32 0.0, %v2347
      %v2349 = vpop.f32.mrf.mxu0
      %v2350 = vadd.f32 0.0, %v2349
      %2351 = vmatmul.bf16.gmra.mxu0 %v1407
      %v2352 = vpop.f32.mrf.mxu0
      %v2353 = vadd.f32 0.0, %v2352
      %v2354 = vpop.f32.mrf.mxu0
      %v2355 = vadd.f32 0.0, %v2354
      %2356 = vmatmul.bf16.gmra.mxu0 %v1408
      %v2357 = vpop.f32.mrf.mxu0
      %v2358 = vadd.f32 0.0, %v2357
      %v2359 = vpop.f32.mrf.mxu0
      %v2360 = vadd.f32 0.0, %v2359
      %2361 = vmatmul.bf16.gmra.mxu0 %v1409
      %v2362 = vpop.f32.mrf.mxu0
      %v2363 = vadd.f32 0.0, %v2362
      %v2364 = vpop.f32.mrf.mxu0
      %v2365 = vadd.f32 0.0, %v2364
      %2366 = vmatmul.bf16.gmra.mxu0 %v1410
      %v2367 = vpop.f32.mrf.mxu0
      %v2368 = vadd.f32 0.0, %v2367
      %v2369 = vpop.f32.mrf.mxu0
      %v2370 = vadd.f32 0.0, %v2369
      %2371 = vmatmul.bf16.gmra.mxu0 %v1411
      %v2372 = vpop.f32.mrf.mxu0
      %v2373 = vadd.f32 0.0, %v2372
      %v2374 = vpop.f32.mrf.mxu0
      %v2375 = vadd.f32 0.0, %v2374
      %2376 = vmatmul.bf16.gmra.mxu0 %v1412
      %v2377 = vpop.f32.mrf.mxu0
      %v2378 = vadd.f32 0.0, %v2377
      %v2379 = vpop.f32.mrf.mxu0
      %v2380 = vadd.f32 0.0, %v2379
      %2381 = vmatmul.bf16.gmra.mxu0 %v1413
      %v2382 = vpop.f32.mrf.mxu0
      %v2383 = vadd.f32 0.0, %v2382
      %v2384 = vpop.f32.mrf.mxu0
      %v2385 = vadd.f32 0.0, %v2384
      %2386 = vmatmul.bf16.gmra.mxu0 %v1414
      %v2387 = vpop.f32.mrf.mxu0
      %v2388 = vadd.f32 0.0, %v2387
      %v2389 = vpop.f32.mrf.mxu0
      %v2390 = vadd.f32 0.0, %v2389
      %2391 = vmatmul.bf16.gmra.mxu0 %v1415
      %v2392 = vpop.f32.mrf.mxu0
      %v2393 = vadd.f32 0.0, %v2392
      %v2394 = vpop.f32.mrf.mxu0
      %v2395 = vadd.f32 0.0, %v2394
      %2396 = vmatmul.bf16.gmra.mxu0 %v1416
      %v2397 = vpop.f32.mrf.mxu0
      %v2398 = vadd.f32 0.0, %v2397
      %v2399 = vpop.f32.mrf.mxu0
      %v2400 = vadd.f32 0.0, %v2399
      %2401 = vmatmul.bf16.gmra.mxu0 %v1417
      %v2402 = vpop.f32.mrf.mxu0
      %v2403 = vadd.f32 0.0, %v2402
      %v2404 = vpop.f32.mrf.mxu0
      %v2405 = vadd.f32 0.0, %v2404
      %2406 = vmatmul.bf16.gmra.mxu0 %v1418
      %v2407 = vpop.f32.mrf.mxu0
      %v2408 = vadd.f32 0.0, %v2407
      %v2409 = vpop.f32.mrf.mxu0
      %v2410 = vadd.f32 0.0, %v2409
      %2411 = vmatmul.bf16.gmra.mxu0 %v1419
      %v2412 = vpop.f32.mrf.mxu0
      %v2413 = vadd.f32 0.0, %v2412
      %v2414 = vpop.f32.mrf.mxu0
      %v2415 = vadd.f32 0.0, %v2414
      %2416 = vmatmul.bf16.gmra.mxu0 %v1420
      %v2417 = vpop.f32.mrf.mxu0
      %v2418 = vadd.f32 0.0, %v2417
      %v2419 = vpop.f32.mrf.mxu0
      %v2420 = vadd.f32 0.0, %v2419
      %2421 = vmatmul.bf16.gmra.mxu0 %v1421
      %v2422 = vpop.f32.mrf.mxu0
      %v2423 = vadd.f32 0.0, %v2422
      %v2424 = vpop.f32.mrf.mxu0
      %v2425 = vadd.f32 0.0, %v2424
      %2426 = vmatmul.bf16.gmra.mxu0 %v1422
      %v2427 = vpop.f32.mrf.mxu0
      %v2428 = vadd.f32 0.0, %v2427
      %v2429 = vpop.f32.mrf.mxu0
      %v2430 = vadd.f32 0.0, %v2429
      %2431 = vmatmul.bf16.gmra.mxu0 %v1423
      %v2432 = vpop.f32.mrf.mxu0
      %v2433 = vadd.f32 0.0, %v2432
      %v2434 = vpop.f32.mrf.mxu0
      %v2435 = vadd.f32 0.0, %v2434
      %2436 = vmatmul.bf16.gmra.mxu0 %v1424
      %v2437 = vpop.f32.mrf.mxu0
      %v2438 = vadd.f32 0.0, %v2437
      %v2439 = vpop.f32.mrf.mxu0
      %v2440 = vadd.f32 0.0, %v2439
      %2441 = vmatmul.bf16.gmra.mxu0 %v1425
      %v2442 = vpop.f32.mrf.mxu0
      %v2443 = vadd.f32 0.0, %v2442
      %v2444 = vpop.f32.mrf.mxu0
      %v2445 = vadd.f32 0.0, %v2444
      %2446 = vmatmul.bf16.gmra.mxu0 %v1426
      %v2447 = vpop.f32.mrf.mxu0
      %v2448 = vadd.f32 0.0, %v2447
      %v2449 = vpop.f32.mrf.mxu0
      %v2450 = vadd.f32 0.0, %v2449
      %2451 = vmatmul.bf16.gmra.mxu0 %v1427
      %v2452 = vpop.f32.mrf.mxu0
      %v2453 = vadd.f32 0.0, %v2452
      %v2454 = vpop.f32.mrf.mxu0
      %v2455 = vadd.f32 0.0, %v2454
      %2456 = vmatmul.bf16.gmra.mxu0 %v1428
      %v2457 = vpop.f32.mrf.mxu0
      %v2458 = vadd.f32 0.0, %v2457
      %v2459 = vpop.f32.mrf.mxu0
      %v2460 = vadd.f32 0.0, %v2459
      %2461 = vmatmul.bf16.gmra.mxu0 %v1429
      %v2462 = vpop.f32.mrf.mxu0
      %v2463 = vadd.f32 0.0, %v2462
      %v2464 = vpop.f32.mrf.mxu0
      %v2465 = vadd.f32 0.0, %v2464
      %2466 = vmatmul.bf16.gmra.mxu0 %v1430
      %v2467 = vpop.f32.mrf.mxu0
      %v2468 = vadd.f32 0.0, %v2467
      %v2469 = vpop.f32.mrf.mxu0
      %v2470 = vadd.f32 0.0, %v2469
      %2471 = vmatmul.bf16.gmra.mxu0 %v1431
      %v2472 = vpop.f32.mrf.mxu0
      %v2473 = vadd.f32 0.0, %v2472
      %v2474 = vpop.f32.mrf.mxu0
      %v2475 = vadd.f32 0.0, %v2474
      %2476 = vmatmul.bf16.gmra.mxu0 %v1432
      %v2477 = vpop.f32.mrf.mxu0
      %v2478 = vadd.f32 0.0, %v2477
      %v2479 = vpop.f32.mrf.mxu0
      %v2480 = vadd.f32 0.0, %v2479
      %2481 = vmatmul.bf16.gmra.mxu0 %v1433
      %v2482 = vpop.f32.mrf.mxu0
      %v2483 = vadd.f32 0.0, %v2482
      %v2484 = vpop.f32.mrf.mxu0
      %v2485 = vadd.f32 0.0, %v2484
      %2486 = vmatmul.bf16.gmra.mxu0 %v1434
      %v2487 = vpop.f32.mrf.mxu0
      %v2488 = vadd.f32 0.0, %v2487
      %v2489 = vpop.f32.mrf.mxu0
      %v2490 = vadd.f32 0.0, %v2489
      %2491 = vmatmul.bf16.gmra.mxu0 %v1435
      %v2492 = vpop.f32.mrf.mxu0
      %v2493 = vadd.f32 0.0, %v2492
      %v2494 = vpop.f32.mrf.mxu0
      %v2495 = vadd.f32 0.0, %v2494
      %2496 = vmatmul.bf16.gmra.mxu0 %v1436
      %v2497 = vpop.f32.mrf.mxu0
      %v2498 = vadd.f32 0.0, %v2497
      %v2499 = vpop.f32.mrf.mxu0
      %v2500 = vadd.f32 0.0, %v2499
      %2501 = vmatmul.bf16.gmra.mxu0 %v1437
      %v2502 = vpop.f32.mrf.mxu0
      %v2503 = vadd.f32 0.0, %v2502
      %v2504 = vpop.f32.mrf.mxu0
      %v2505 = vadd.f32 0.0, %v2504
      %2506 = vmatmul.bf16.gmra.mxu0 %v1438
      %v2507 = vpop.f32.mrf.mxu0
      %v2508 = vadd.f32 0.0, %v2507
      %v2509 = vpop.f32.mrf.mxu0
      %v2510 = vadd.f32 0.0, %v2509
      %2511 = vmatmul.bf16.gmra.mxu0 %v1439
      %v2512 = vpop.f32.mrf.mxu0
      %v2513 = vadd.f32 0.0, %v2512
      %v2514 = vpop.f32.mrf.mxu0
      %v2515 = vadd.f32 0.0, %v2514
      %2516 = vmatmul.bf16.gmra.mxu0 %v1440
      %v2517 = vpop.f32.mrf.mxu0
      %v2518 = vadd.f32 0.0, %v2517
      %v2519 = vpop.f32.mrf.mxu0
      %v2520 = vadd.f32 0.0, %v2519
      %2521 = vmatmul.bf16.gmra.mxu0 %v1441
      %v2522 = vpop.f32.mrf.mxu0
      %v2523 = vadd.f32 0.0, %v2522
      %v2524 = vpop.f32.mrf.mxu0
      %v2525 = vadd.f32 0.0, %v2524
      %2526 = vmatmul.bf16.gmra.mxu0 %v1442
      %v2527 = vpop.f32.mrf.mxu0
      %v2528 = vadd.f32 0.0, %v2527
      %v2529 = vpop.f32.mrf.mxu0
      %v2530 = vadd.f32 0.0, %v2529
      %2531 = vmatmul.bf16.gmra.mxu0 %v1443
      %v2532 = vpop.f32.mrf.mxu0
      %v2533 = vadd.f32 0.0, %v2532
      %v2534 = vpop.f32.mrf.mxu0
      %v2535 = vadd.f32 0.0, %v2534
      %2536 = vmatmul.bf16.gmra.mxu0 %v1444
      %v2537 = vpop.f32.mrf.mxu0
      %v2538 = vadd.f32 0.0, %v2537
      %v2539 = vpop.f32.mrf.mxu0
      %v2540 = vadd.f32 0.0, %v2539
      %2541 = vmatmul.bf16.gmra.mxu0 %v1445
      %v2542 = vpop.f32.mrf.mxu0
      %v2543 = vadd.f32 0.0, %v2542
      %v2544 = vpop.f32.mrf.mxu0
      %v2545 = vadd.f32 0.0, %v2544
      %2546 = vmatmul.bf16.gmra.mxu0 %v1446
      %v2547 = vpop.f32.mrf.mxu0
      %v2548 = vadd.f32 0.0, %v2547
      %v2549 = vpop.f32.mrf.mxu0
      %v2550 = vadd.f32 0.0, %v2549
      %2551 = vmatmul.bf16.gmra.mxu0 %v1447
      %v2552 = vpop.f32.mrf.mxu0
      %v2553 = vadd.f32 0.0, %v2552
      %v2554 = vpop.f32.mrf.mxu0
      %v2555 = vadd.f32 0.0, %v2554
      %2556 = vmatmul.bf16.gmra.mxu0 %v1448
      %v2557 = vpop.f32.mrf.mxu0
      %v2558 = vadd.f32 0.0, %v2557
      %v2559 = vpop.f32.mrf.mxu0
      %v2560 = vadd.f32 0.0, %v2559
      %2561 = vmatmul.bf16.gmra.mxu0 %v1449
      %v2562 = vpop.f32.mrf.mxu0
      %v2563 = vadd.f32 0.0, %v2562
      %v2564 = vpop.f32.mrf.mxu0
      %v2565 = vadd.f32 0.0, %v2564
      %2566 = vmatmul.bf16.gmra.mxu0 %v1450
      %v2567 = vpop.f32.mrf.mxu0
      %v2568 = vadd.f32 0.0, %v2567
      %v2569 = vpop.f32.mrf.mxu0
      %v2570 = vadd.f32 0.0, %v2569
      %2571 = vmatmul.bf16.gmra.mxu0 %v1451
      %v2572 = vpop.f32.mrf.mxu0
      %v2573 = vadd.f32 0.0, %v2572
      %v2574 = vpop.f32.mrf.mxu0
      %v2575 = vadd.f32 0.0, %v2574
      %2576 = vmatmul.bf16.gmra.mxu0 %v1452
      %v2577 = vpop.f32.mrf.mxu0
      %v2578 = vadd.f32 0.0, %v2577
      %v2579 = vpop.f32.mrf.mxu0
      %v2580 = vadd.f32 0.0, %v2579
      %2581 = vmatmul.bf16.gmra.mxu0 %v1453
      %v2582 = vpop.f32.mrf.mxu0
      %v2583 = vadd.f32 0.0, %v2582
      %v2584 = vpop.f32.mrf.mxu0
      %v2585 = vadd.f32 0.0, %v2584
      %2586 = vmatmul.bf16.gmra.mxu0 %v1454
      %v2587 = vpop.f32.mrf.mxu0
      %v2588 = vadd.f32 0.0, %v2587
      %v2589 = vpop.f32.mrf.mxu0
      %v2590 = vadd.f32 0.0, %v2589
      %2591 = vdwg.mxu0
      %v2592 = vld [vmem:[%s2] sm:$0x1]
      %v2593 = vmax.f32 %v1693, %v1703
      %v2594 = vmax.f32 %v1695, %v1705
      %v2595 = vmax.f32 %v1698, %v1708
      %v2596 = vmax.f32 %v1700, %v1710
      %v2597 = vmax.f32 %v1713, %v1723
      %v2598 = vmax.f32 %v1715, %v1725
      %v2599 = vmax.f32 %v1718, %v1728
      %v2600 = vmax.f32 %v1720, %v1730
      %v2601 = vmax.f32 %v1733, %v1743
      %v2602 = vmax.f32 %v1735, %v1745
      %v2603 = vmax.f32 %v1738, %v1748
      %v2604 = vmax.f32 %v1740, %v1750
      %v2605 = vmax.f32 %v1753, %v1763
      %v2606 = vmax.f32 %v1755, %v1765
      %v2607 = vmax.f32 %v1758, %v1768
      %v2608 = vmax.f32 %v1760, %v1770
      %v2609 = vmax.f32 %v1773, %v1783
      %v2610 = vmax.f32 %v1775, %v1785
      %v2611 = vmax.f32 %v1778, %v1788
      %v2612 = vmax.f32 %v1780, %v1790
      %v2613 = vmax.f32 %v1793, %v1803
      %v2614 = vmax.f32 %v1795, %v1805
      %v2615 = vmax.f32 %v1798, %v1808
      %v2616 = vmax.f32 %v1800, %v1810
      %v2617 = vmax.f32 %v1813, %v1823
      %v2618 = vmax.f32 %v1815, %v1825
      %v2619 = vmax.f32 %v1818, %v1828
      %v2620 = vmax.f32 %v1820, %v1830
      %v2621 = vmax.f32 %v1833, %v1843
      %v2622 = vmax.f32 %v1835, %v1845
      %v2623 = vmax.f32 %v1838, %v1848
      %v2624 = vmax.f32 %v1840, %v1850
      %v2625 = vmax.f32 %v1853, %v1863
      %v2626 = vmax.f32 %v1855, %v1865
      %v2627 = vmax.f32 %v1858, %v1868
      %v2628 = vmax.f32 %v1860, %v1870
      %v2629 = vmax.f32 %v1873, %v1883
      %v2630 = vmax.f32 %v1875, %v1885
      %v2631 = vmax.f32 %v1878, %v1888
      %v2632 = vmax.f32 %v1880, %v1890
      %v2633 = vmax.f32 %v1893, %v1903
      %v2634 = vmax.f32 %v1895, %v1905
      %v2635 = vmax.f32 %v1898, %v1908
      %v2636 = vmax.f32 %v1900, %v1910
      %v2637 = vmax.f32 %v1913, %v1923
      %v2638 = vmax.f32 %v1915, %v1925
      %v2639 = vmax.f32 %v1918, %v1928
      %v2640 = vmax.f32 %v1920, %v1930
      %v2641 = vmax.f32 %v1933, %v1943
      %v2642 = vmax.f32 %v1935, %v1945
      %v2643 = vmax.f32 %v1938, %v1948
      %v2644 = vmax.f32 %v1940, %v1950
      %v2645 = vmax.f32 %v1953, %v1963
      %v2646 = vmax.f32 %v1955, %v1965
      %v2647 = vmax.f32 %v1958, %v1968
      %v2648 = vmax.f32 %v1960, %v1970
      %v2649 = vmax.f32 %v1973, %v1983
      %v2650 = vmax.f32 %v1975, %v1985
      %v2651 = vmax.f32 %v1978, %v1988
      %v2652 = vmax.f32 %v1980, %v1990
      %v2653 = vmax.f32 %v1993, %v2003
      %v2654 = vmax.f32 %v1995, %v2005
      %v2655 = vmax.f32 %v1998, %v2008
      %v2656 = vmax.f32 %v2000, %v2010
      %v2657 = vmax.f32 %v2013, %v2023
      %v2658 = vmax.f32 %v2015, %v2025
      %v2659 = vmax.f32 %v2018, %v2028
      %v2660 = vmax.f32 %v2020, %v2030
      %v2661 = vmax.f32 %v2033, %v2043
      %v2662 = vmax.f32 %v2035, %v2045
      %v2663 = vmax.f32 %v2038, %v2048
      %v2664 = vmax.f32 %v2040, %v2050
      %v2665 = vmax.f32 %v2053, %v2063
      %v2666 = vmax.f32 %v2055, %v2065
      %v2667 = vmax.f32 %v2058, %v2068
      %v2668 = vmax.f32 %v2060, %v2070
      %v2669 = vmax.f32 %v2073, %v2083
      %v2670 = vmax.f32 %v2075, %v2085
      %v2671 = vmax.f32 %v2078, %v2088
      %v2672 = vmax.f32 %v2080, %v2090
      %v2673 = vmax.f32 %v2093, %v2103
      %v2674 = vmax.f32 %v2095, %v2105
      %v2675 = vmax.f32 %v2098, %v2108
      %v2676 = vmax.f32 %v2100, %v2110
      %v2677 = vmax.f32 %v2113, %v2123
      %v2678 = vmax.f32 %v2115, %v2125
      %v2679 = vmax.f32 %v2118, %v2128
      %v2680 = vmax.f32 %v2120, %v2130
      %v2681 = vmax.f32 %v2133, %v2143
      %v2682 = vmax.f32 %v2135, %v2145
      %v2683 = vmax.f32 %v2138, %v2148
      %v2684 = vmax.f32 %v2140, %v2150
      %v2685 = vmax.f32 %v2153, %v2163
      %v2686 = vmax.f32 %v2155, %v2165
      %v2687 = vmax.f32 %v2158, %v2168
      %v2688 = vmax.f32 %v2160, %v2170
      %v2689 = vmax.f32 %v2173, %v2183
      %v2690 = vmax.f32 %v2175, %v2185
      %v2691 = vmax.f32 %v2178, %v2188
      %v2692 = vmax.f32 %v2180, %v2190
      %v2693 = vmax.f32 %v2193, %v2203
      %v2694 = vmax.f32 %v2195, %v2205
      %v2695 = vmax.f32 %v2198, %v2208
      %v2696 = vmax.f32 %v2200, %v2210
      %v2697 = vmax.f32 %v2213, %v2223
      %v2698 = vmax.f32 %v2215, %v2225
      %v2699 = vmax.f32 %v2218, %v2228
      %v2700 = vmax.f32 %v2220, %v2230
      %v2701 = vmax.f32 %v2233, %v2243
      %v2702 = vmax.f32 %v2235, %v2245
      %v2703 = vmax.f32 %v2238, %v2248
      %v2704 = vmax.f32 %v2240, %v2250
      %v2705 = vmax.f32 %v2253, %v2263
      %v2706 = vmax.f32 %v2255, %v2265
      %v2707 = vmax.f32 %v2258, %v2268
      %v2708 = vmax.f32 %v2260, %v2270
      %v2709 = vmax.f32 %v2273, %v2283
      %v2710 = vmax.f32 %v2275, %v2285
      %v2711 = vmax.f32 %v2278, %v2288
      %v2712 = vmax.f32 %v2280, %v2290
      %v2713 = vmax.f32 %v2293, %v2303
      %v2714 = vmax.f32 %v2295, %v2305
      %v2715 = vmax.f32 %v2298, %v2308
      %v2716 = vmax.f32 %v2300, %v2310
      %v2717 = vmax.f32 %v2313, %v2323
      %v2718 = vmax.f32 %v2315, %v2325
      %v2719 = vmax.f32 %v2318, %v2328
      %v2720 = vmax.f32 %v2320, %v2330
      %v2721 = vmax.f32 %v2333, %v2343
      %v2722 = vmax.f32 %v2335, %v2345
      %v2723 = vmax.f32 %v2338, %v2348
      %v2724 = vmax.f32 %v2340, %v2350
      %v2725 = vmax.f32 %v2353, %v2363
      %v2726 = vmax.f32 %v2355, %v2365
      %v2727 = vmax.f32 %v2358, %v2368
      %v2728 = vmax.f32 %v2360, %v2370
      %v2729 = vmax.f32 %v2373, %v2383
      %v2730 = vmax.f32 %v2375, %v2385
      %v2731 = vmax.f32 %v2378, %v2388
      %v2732 = vmax.f32 %v2380, %v2390
      %v2733 = vmax.f32 %v2393, %v2403
      %v2734 = vmax.f32 %v2395, %v2405
      %v2735 = vmax.f32 %v2398, %v2408
      %v2736 = vmax.f32 %v2400, %v2410
      %v2737 = vmax.f32 %v2413, %v2423
      %v2738 = vmax.f32 %v2415, %v2425
      %v2739 = vmax.f32 %v2418, %v2428
      %v2740 = vmax.f32 %v2420, %v2430
      %v2741 = vmax.f32 %v2433, %v2443
      %v2742 = vmax.f32 %v2435, %v2445
      %v2743 = vmax.f32 %v2438, %v2448
      %v2744 = vmax.f32 %v2440, %v2450
      %v2745 = vmax.f32 %v2453, %v2463
      %v2746 = vmax.f32 %v2455, %v2465
      %v2747 = vmax.f32 %v2458, %v2468
      %v2748 = vmax.f32 %v2460, %v2470
      %v2749 = vmax.f32 %v2473, %v2483
      %v2750 = vmax.f32 %v2475, %v2485
      %v2751 = vmax.f32 %v2478, %v2488
      %v2752 = vmax.f32 %v2480, %v2490
      %v2753 = vmax.f32 %v2493, %v2503
      %v2754 = vmax.f32 %v2495, %v2505
      %v2755 = vmax.f32 %v2498, %v2508
      %v2756 = vmax.f32 %v2500, %v2510
      %v2757 = vmax.f32 %v2513, %v2523
      %v2758 = vmax.f32 %v2515, %v2525
      %v2759 = vmax.f32 %v2518, %v2528
      %v2760 = vmax.f32 %v2520, %v2530
      %v2761 = vmax.f32 %v2533, %v2543
      %v2762 = vmax.f32 %v2535, %v2545
      %v2763 = vmax.f32 %v2538, %v2548
      %v2764 = vmax.f32 %v2540, %v2550
      %v2765 = vmax.f32 %v2553, %v2563
      %v2766 = vmax.f32 %v2555, %v2565
      %v2767 = vmax.f32 %v2558, %v2568
      %v2768 = vmax.f32 %v2560, %v2570
      %v2769 = vmax.f32 %v2573, %v2583
      %v2770 = vmax.f32 %v2575, %v2585
      %v2771 = vmax.f32 %v2578, %v2588
      %v2772 = vmax.f32 %v2580, %v2590
      %v2773 = vmax.f32 %v2593, %v2595
      %v2774 = vmax.f32 %v2594, %v2596
      %v2775 = vmax.f32 %v2597, %v2599
      %v2776 = vmax.f32 %v2598, %v2600
      %v2777 = vmax.f32 %v2601, %v2603
      %v2778 = vmax.f32 %v2602, %v2604
      %v2779 = vmax.f32 %v2605, %v2607
      %v2780 = vmax.f32 %v2606, %v2608
      %v2781 = vmax.f32 %v2609, %v2611
      %v2782 = vmax.f32 %v2610, %v2612
      %v2783 = vmax.f32 %v2613, %v2615
      %v2784 = vmax.f32 %v2614, %v2616
      %v2785 = vmax.f32 %v2617, %v2619
      %v2786 = vmax.f32 %v2618, %v2620
      %v2787 = vmax.f32 %v2621, %v2623
      %v2788 = vmax.f32 %v2622, %v2624
      %v2789 = vmax.f32 %v2625, %v2627
      %v2790 = vmax.f32 %v2626, %v2628
      %v2791 = vmax.f32 %v2629, %v2631
      %v2792 = vmax.f32 %v2630, %v2632
      %v2793 = vmax.f32 %v2633, %v2635
      %v2794 = vmax.f32 %v2634, %v2636
      %v2795 = vmax.f32 %v2637, %v2639
      %v2796 = vmax.f32 %v2638, %v2640
      %v2797 = vmax.f32 %v2641, %v2643
      %v2798 = vmax.f32 %v2642, %v2644
      %v2799 = vmax.f32 %v2645, %v2647
      %v2800 = vmax.f32 %v2646, %v2648
      %v2801 = vmax.f32 %v2649, %v2651
      %v2802 = vmax.f32 %v2650, %v2652
      %v2803 = vmax.f32 %v2653, %v2655
      %v2804 = vmax.f32 %v2654, %v2656
      %v2805 = vmax.f32 %v2657, %v2659
      %v2806 = vmax.f32 %v2658, %v2660
      %v2807 = vmax.f32 %v2661, %v2663
      %v2808 = vmax.f32 %v2662, %v2664
      %v2809 = vmax.f32 %v2665, %v2667
      %v2810 = vmax.f32 %v2666, %v2668
      %v2811 = vmax.f32 %v2669, %v2671
      %v2812 = vmax.f32 %v2670, %v2672
      %v2813 = vmax.f32 %v2673, %v2675
      %v2814 = vmax.f32 %v2674, %v2676
      %v2815 = vmax.f32 %v2677, %v2679
      %v2816 = vmax.f32 %v2678, %v2680
      %v2817 = vmax.f32 %v2681, %v2683
      %v2818 = vmax.f32 %v2682, %v2684
      %v2819 = vmax.f32 %v2685, %v2687
      %v2820 = vmax.f32 %v2686, %v2688
      %v2821 = vmax.f32 %v2689, %v2691
      %v2822 = vmax.f32 %v2690, %v2692
      %v2823 = vmax.f32 %v2693, %v2695
      %v2824 = vmax.f32 %v2694, %v2696
      %v2825 = vmax.f32 %v2697, %v2699
      %v2826 = vmax.f32 %v2698, %v2700
      %v2827 = vmax.f32 %v2701, %v2703
      %v2828 = vmax.f32 %v2702, %v2704
      %v2829 = vmax.f32 %v2705, %v2707
      %v2830 = vmax.f32 %v2706, %v2708
      %v2831 = vmax.f32 %v2709, %v2711
      %v2832 = vmax.f32 %v2710, %v2712
      %v2833 = vmax.f32 %v2713, %v2715
      %v2834 = vmax.f32 %v2714, %v2716
      %v2835 = vmax.f32 %v2717, %v2719
      %v2836 = vmax.f32 %v2718, %v2720
      %v2837 = vmax.f32 %v2721, %v2723
      %v2838 = vmax.f32 %v2722, %v2724
      %v2839 = vmax.f32 %v2725, %v2727
      %v2840 = vmax.f32 %v2726, %v2728
      %v2841 = vmax.f32 %v2729, %v2731
      %v2842 = vmax.f32 %v2730, %v2732
      %v2843 = vmax.f32 %v2733, %v2735
      %v2844 = vmax.f32 %v2734, %v2736
      %v2845 = vmax.f32 %v2737, %v2739
      %v2846 = vmax.f32 %v2738, %v2740
      %v2847 = vmax.f32 %v2741, %v2743
      %v2848 = vmax.f32 %v2742, %v2744
      %v2849 = vmax.f32 %v2745, %v2747
      %v2850 = vmax.f32 %v2746, %v2748
      %v2851 = vmax.f32 %v2749, %v2751
      %v2852 = vmax.f32 %v2750, %v2752
      %v2853 = vmax.f32 %v2753, %v2755
      %v2854 = vmax.f32 %v2754, %v2756
      %v2855 = vmax.f32 %v2757, %v2759
      %v2856 = vmax.f32 %v2758, %v2760
      %v2857 = vmax.f32 %v2761, %v2763
      %v2858 = vmax.f32 %v2762, %v2764
      %v2859 = vmax.f32 %v2765, %v2767
      %v2860 = vmax.f32 %v2766, %v2768
      %v2861 = vmax.f32 %v2769, %v2771
      %v2862 = vmax.f32 %v2770, %v2772
      %v2864 = vperm.slane %v2592, 0
      %v2866 = vadd.f32 %v2773, %v2864
      %v2867 = vadd.f32 %v2774, %v2864
      %v2868 = vadd.f32 %v2775, %v2864
      %v2869 = vadd.f32 %v2776, %v2864
      %v2870 = vadd.f32 %v2777, %v2864
      %v2871 = vadd.f32 %v2778, %v2864
      %v2872 = vadd.f32 %v2779, %v2864
      %v2873 = vadd.f32 %v2780, %v2864
      %v2874 = vadd.f32 %v2781, %v2864
      %v2875 = vadd.f32 %v2782, %v2864
      %v2876 = vadd.f32 %v2783, %v2864
      %v2877 = vadd.f32 %v2784, %v2864
      %v2878 = vadd.f32 %v2785, %v2864
      %v2879 = vadd.f32 %v2786, %v2864
      %v2880 = vadd.f32 %v2787, %v2864
      %v2881 = vadd.f32 %v2788, %v2864
      %v2882 = vadd.f32 %v2789, %v2864
      %v2883 = vadd.f32 %v2790, %v2864
      %v2884 = vadd.f32 %v2791, %v2864
      %v2885 = vadd.f32 %v2792, %v2864
      %v2886 = vadd.f32 %v2793, %v2864
      %v2887 = vadd.f32 %v2794, %v2864
      %v2888 = vadd.f32 %v2795, %v2864
      %v2889 = vadd.f32 %v2796, %v2864
      %v2890 = vadd.f32 %v2797, %v2864
      %v2891 = vadd.f32 %v2798, %v2864
      %v2892 = vadd.f32 %v2799, %v2864
      %v2893 = vadd.f32 %v2800, %v2864
      %v2894 = vadd.f32 %v2801, %v2864
      %v2895 = vadd.f32 %v2802, %v2864
      %v2896 = vadd.f32 %v2803, %v2864
      %v2897 = vadd.f32 %v2804, %v2864
      %v2898 = vadd.f32 %v2805, %v2864
      %v2899 = vadd.f32 %v2806, %v2864
      %v2900 = vadd.f32 %v2807, %v2864
      %v2901 = vadd.f32 %v2808, %v2864
      %v2902 = vadd.f32 %v2809, %v2864
      %v2903 = vadd.f32 %v2810, %v2864
      %v2904 = vadd.f32 %v2811, %v2864
      %v2905 = vadd.f32 %v2812, %v2864
      %v2906 = vadd.f32 %v2813, %v2864
      %v2907 = vadd.f32 %v2814, %v2864
      %v2908 = vadd.f32 %v2815, %v2864
      %v2909 = vadd.f32 %v2816, %v2864
      %v2910 = vadd.f32 %v2817, %v2864
      %v2911 = vadd.f32 %v2818, %v2864
      %v2912 = vadd.f32 %v2819, %v2864
      %v2913 = vadd.f32 %v2820, %v2864
      %v2914 = vadd.f32 %v2821, %v2864
      %v2915 = vadd.f32 %v2822, %v2864
      %v2916 = vadd.f32 %v2823, %v2864
      %v2917 = vadd.f32 %v2824, %v2864
      %v2918 = vadd.f32 %v2825, %v2864
      %v2919 = vadd.f32 %v2826, %v2864
      %v2920 = vadd.f32 %v2827, %v2864
      %v2921 = vadd.f32 %v2828, %v2864
      %v2922 = vadd.f32 %v2829, %v2864
      %v2923 = vadd.f32 %v2830, %v2864
      %v2924 = vadd.f32 %v2831, %v2864
      %v2925 = vadd.f32 %v2832, %v2864
      %v2926 = vadd.f32 %v2833, %v2864
      %v2927 = vadd.f32 %v2834, %v2864
      %v2928 = vadd.f32 %v2835, %v2864
      %v2929 = vadd.f32 %v2836, %v2864
      %v2930 = vadd.f32 %v2837, %v2864
      %v2931 = vadd.f32 %v2838, %v2864
      %v2932 = vadd.f32 %v2839, %v2864
      %v2933 = vadd.f32 %v2840, %v2864
      %v2934 = vadd.f32 %v2841, %v2864
      %v2935 = vadd.f32 %v2842, %v2864
      %v2936 = vadd.f32 %v2843, %v2864
      %v2937 = vadd.f32 %v2844, %v2864
      %v2938 = vadd.f32 %v2845, %v2864
      %v2939 = vadd.f32 %v2846, %v2864
      %v2940 = vadd.f32 %v2847, %v2864
      %v2941 = vadd.f32 %v2848, %v2864
      %v2942 = vadd.f32 %v2849, %v2864
      %v2943 = vadd.f32 %v2850, %v2864
      %v2944 = vadd.f32 %v2851, %v2864
      %v2945 = vadd.f32 %v2852, %v2864
      %v2946 = vadd.f32 %v2853, %v2864
      %v2947 = vadd.f32 %v2854, %v2864
      %v2948 = vadd.f32 %v2855, %v2864
      %v2949 = vadd.f32 %v2856, %v2864
      %v2950 = vadd.f32 %v2857, %v2864
      %v2951 = vadd.f32 %v2858, %v2864
      %v2952 = vadd.f32 %v2859, %v2864
      %v2953 = vadd.f32 %v2860, %v2864
      %v2954 = vadd.f32 %v2861, %v2864
      %v2955 = vadd.f32 %v2862, %v2864
      %v2956 = vmax.f32 %v2866, 0.0
      %v2957 = vmax.f32 %v2867, 0.0
      %v2958 = vmax.f32 %v2868, 0.0
      %v2959 = vmax.f32 %v2869, 0.0
      %v2960 = vmax.f32 %v2870, 0.0
      %v2961 = vmax.f32 %v2871, 0.0
      %v2962 = vmax.f32 %v2872, 0.0
      %v2963 = vmax.f32 %v2873, 0.0
      %v2964 = vmax.f32 %v2874, 0.0
      %v2965 = vmax.f32 %v2875, 0.0
      %v2966 = vmax.f32 %v2876, 0.0
      %v2967 = vmax.f32 %v2877, 0.0
      %v2968 = vmax.f32 %v2878, 0.0
      %v2969 = vmax.f32 %v2879, 0.0
      %v2970 = vmax.f32 %v2880, 0.0
      %v2971 = vmax.f32 %v2881, 0.0
      %v2972 = vmax.f32 %v2882, 0.0
      %v2973 = vmax.f32 %v2883, 0.0
      %v2974 = vmax.f32 %v2884, 0.0
      %v2975 = vmax.f32 %v2885, 0.0
      %v2976 = vmax.f32 %v2886, 0.0
      %v2977 = vmax.f32 %v2887, 0.0
      %v2978 = vmax.f32 %v2888, 0.0
      %v2979 = vmax.f32 %v2889, 0.0
      %v2980 = vmax.f32 %v2890, 0.0
      %v2981 = vmax.f32 %v2891, 0.0
      %v2982 = vmax.f32 %v2892, 0.0
      %v2983 = vmax.f32 %v2893, 0.0
      %v2984 = vmax.f32 %v2894, 0.0
      %v2985 = vmax.f32 %v2895, 0.0
      %v2986 = vmax.f32 %v2896, 0.0
      %v2987 = vmax.f32 %v2897, 0.0
      %v2988 = vmax.f32 %v2898, 0.0
      %v2989 = vmax.f32 %v2899, 0.0
      %v2990 = vmax.f32 %v2900, 0.0
      %v2991 = vmax.f32 %v2901, 0.0
      %v2992 = vmax.f32 %v2902, 0.0
      %v2993 = vmax.f32 %v2903, 0.0
      %v2994 = vmax.f32 %v2904, 0.0
      %v2995 = vmax.f32 %v2905, 0.0
      %v2996 = vmax.f32 %v2906, 0.0
      %v2997 = vmax.f32 %v2907, 0.0
      %v2998 = vmax.f32 %v2908, 0.0
      %v2999 = vmax.f32 %v2909, 0.0
      %v3000 = vmax.f32 %v2910, 0.0
      %v3001 = vmax.f32 %v2911, 0.0
      %v3002 = vmax.f32 %v2912, 0.0
      %v3003 = vmax.f32 %v2913, 0.0
      %v3004 = vmax.f32 %v2914, 0.0
      %v3005 = vmax.f32 %v2915, 0.0
      %v3006 = vmax.f32 %v2916, 0.0
      %v3007 = vmax.f32 %v2917, 0.0
      %v3008 = vmax.f32 %v2918, 0.0
      %v3009 = vmax.f32 %v2919, 0.0
      %v3010 = vmax.f32 %v2920, 0.0
      %v3011 = vmax.f32 %v2921, 0.0
      %v3012 = vmax.f32 %v2922, 0.0
      %v3013 = vmax.f32 %v2923, 0.0
      %v3014 = vmax.f32 %v2924, 0.0
      %v3015 = vmax.f32 %v2925, 0.0
      %v3016 = vmax.f32 %v2926, 0.0
      %v3017 = vmax.f32 %v2927, 0.0
      %v3018 = vmax.f32 %v2928, 0.0
      %v3019 = vmax.f32 %v2929, 0.0
      %v3020 = vmax.f32 %v2930, 0.0
      %v3021 = vmax.f32 %v2931, 0.0
      %v3022 = vmax.f32 %v2932, 0.0
      %v3023 = vmax.f32 %v2933, 0.0
      %v3024 = vmax.f32 %v2934, 0.0
      %v3025 = vmax.f32 %v2935, 0.0
      %v3026 = vmax.f32 %v2936, 0.0
      %v3027 = vmax.f32 %v2937, 0.0
      %v3028 = vmax.f32 %v2938, 0.0
      %v3029 = vmax.f32 %v2939, 0.0
      %v3030 = vmax.f32 %v2940, 0.0
      %v3031 = vmax.f32 %v2941, 0.0
      %v3032 = vmax.f32 %v2942, 0.0
      %v3033 = vmax.f32 %v2943, 0.0
      %v3034 = vmax.f32 %v2944, 0.0
      %v3035 = vmax.f32 %v2945, 0.0
      %v3036 = vmax.f32 %v2946, 0.0
      %v3037 = vmax.f32 %v2947, 0.0
      %v3038 = vmax.f32 %v2948, 0.0
      %v3039 = vmax.f32 %v2949, 0.0
      %v3040 = vmax.f32 %v2950, 0.0
      %v3041 = vmax.f32 %v2951, 0.0
      %v3042 = vmax.f32 %v2952, 0.0
      %v3043 = vmax.f32 %v2953, 0.0
      %v3044 = vmax.f32 %v2954, 0.0
      %v3045 = vmax.f32 %v2955, 0.0
      %v3046 = vpack.c.bf16 %v2956, %v2956
      %v3047 = vpack.c.bf16 %v2957, %v2957
      %v3048 = vpack.c.bf16 %v2958, %v2958
      %v3049 = vpack.c.bf16 %v2959, %v2959
      %v3050 = vpack.c.bf16 %v2960, %v2960
      %v3051 = vpack.c.bf16 %v2961, %v2961
      %v3052 = vpack.c.bf16 %v2962, %v2962
      %v3053 = vpack.c.bf16 %v2963, %v2963
      %v3054 = vpack.c.bf16 %v2964, %v2964
      %v3055 = vpack.c.bf16 %v2965, %v2965
      %v3056 = vpack.c.bf16 %v2966, %v2966
      %v3057 = vpack.c.bf16 %v2967, %v2967
      %v3058 = vpack.c.bf16 %v2968, %v2968
      %v3059 = vpack.c.bf16 %v2969, %v2969
      %v3060 = vpack.c.bf16 %v2970, %v2970
      %v3061 = vpack.c.bf16 %v2971, %v2971
      %v3062 = vpack.c.bf16 %v2972, %v2972
      %v3063 = vpack.c.bf16 %v2973, %v2973
      %v3064 = vpack.c.bf16 %v2974, %v2974
      %v3065 = vpack.c.bf16 %v2975, %v2975
      %v3066 = vpack.c.bf16 %v2976, %v2976
      %v3067 = vpack.c.bf16 %v2977, %v2977
      %v3068 = vpack.c.bf16 %v2978, %v2978
      %v3069 = vpack.c.bf16 %v2979, %v2979
      %v3070 = vpack.c.bf16 %v2980, %v2980
      %v3071 = vpack.c.bf16 %v2981, %v2981
      %v3072 = vpack.c.bf16 %v2982, %v2982
      %v3073 = vpack.c.bf16 %v2983, %v2983
      %v3074 = vpack.c.bf16 %v2984, %v2984
      %v3075 = vpack.c.bf16 %v2985, %v2985
      %v3076 = vpack.c.bf16 %v2986, %v2986
      %v3077 = vpack.c.bf16 %v2987, %v2987
      %v3078 = vpack.c.bf16 %v2988, %v2988
      %v3079 = vpack.c.bf16 %v2989, %v2989
      %v3080 = vpack.c.bf16 %v2990, %v2990
      %v3081 = vpack.c.bf16 %v2991, %v2991
      %v3082 = vpack.c.bf16 %v2992, %v2992
      %v3083 = vpack.c.bf16 %v2993, %v2993
      %v3084 = vpack.c.bf16 %v2994, %v2994
      %v3085 = vpack.c.bf16 %v2995, %v2995
      %v3086 = vpack.c.bf16 %v2996, %v2996
      %v3087 = vpack.c.bf16 %v2997, %v2997
      %v3088 = vpack.c.bf16 %v2998, %v2998
      %v3089 = vpack.c.bf16 %v2999, %v2999
      %v3090 = vpack.c.bf16 %v3000, %v3000
      %v3091 = vpack.c.bf16 %v3001, %v3001
      %v3092 = vpack.c.bf16 %v3002, %v3002
      %v3093 = vpack.c.bf16 %v3003, %v3003
      %v3094 = vpack.c.bf16 %v3004, %v3004
      %v3095 = vpack.c.bf16 %v3005, %v3005
      %v3096 = vpack.c.bf16 %v3006, %v3006
      %v3097 = vpack.c.bf16 %v3007, %v3007
      %v3098 = vpack.c.bf16 %v3008, %v3008
      %v3099 = vpack.c.bf16 %v3009, %v3009
      %v3100 = vpack.c.bf16 %v3010, %v3010
      %v3101 = vpack.c.bf16 %v3011, %v3011
      %v3102 = vpack.c.bf16 %v3012, %v3012
      %v3103 = vpack.c.bf16 %v3013, %v3013
      %v3104 = vpack.c.bf16 %v3014, %v3014
      %v3105 = vpack.c.bf16 %v3015, %v3015
      %v3106 = vpack.c.bf16 %v3016, %v3016
      %v3107 = vpack.c.bf16 %v3017, %v3017
      %v3108 = vpack.c.bf16 %v3018, %v3018
      %v3109 = vpack.c.bf16 %v3019, %v3019
      %v3110 = vpack.c.bf16 %v3020, %v3020
      %v3111 = vpack.c.bf16 %v3021, %v3021
      %v3112 = vpack.c.bf16 %v3022, %v3022
      %v3113 = vpack.c.bf16 %v3023, %v3023
      %v3114 = vpack.c.bf16 %v3024, %v3024
      %v3115 = vpack.c.bf16 %v3025, %v3025
      %v3116 = vpack.c.bf16 %v3026, %v3026
      %v3117 = vpack.c.bf16 %v3027, %v3027
      %v3118 = vpack.c.bf16 %v3028, %v3028
      %v3119 = vpack.c.bf16 %v3029, %v3029
      %v3120 = vpack.c.bf16 %v3030, %v3030
      %v3121 = vpack.c.bf16 %v3031, %v3031
      %v3122 = vpack.c.bf16 %v3032, %v3032
      %v3123 = vpack.c.bf16 %v3033, %v3033
      %v3124 = vpack.c.bf16 %v3034, %v3034
      %v3125 = vpack.c.bf16 %v3035, %v3035
      %v3126 = vpack.c.bf16 %v3036, %v3036
      %v3127 = vpack.c.bf16 %v3037, %v3037
      %v3128 = vpack.c.bf16 %v3038, %v3038
      %v3129 = vpack.c.bf16 %v3039, %v3039
      %v3130 = vpack.c.bf16 %v3040, %v3040
      %v3131 = vpack.c.bf16 %v3041, %v3041
      %v3132 = vpack.c.bf16 %v3042, %v3042
      %v3133 = vpack.c.bf16 %v3043, %v3043
      %v3134 = vpack.c.bf16 %v3044, %v3044
      %v3135 = vpack.c.bf16 %v3045, %v3045
      %vm3136 = vcmask 257024
      %3137 = vst.msk [vmem:[%s177] sm:$0xf] %vm3136, %v3046
      %3138 = vst.msk [vmem:[%s177 + $0x4] sm:$0xf] %vm3136, %v3047
      %3139 = vst.msk [vmem:[%s177 + $0x8] sm:$0xf] %vm3136, %v3048
      %3140 = vst.msk [vmem:[%s177 + $0xc] sm:$0xf] %vm3136, %v3049
      %3141 = vst.msk [vmem:[%s177 + $0x10] sm:$0xf] %vm3136, %v3050
      %3142 = vst.msk [vmem:[%s177 + $0x14] sm:$0xf] %vm3136, %v3051
      %3143 = vst.msk [vmem:[%s177 + $0x18] sm:$0xf] %vm3136, %v3052
      %3144 = vst.msk [vmem:[%s177 + $0x1c] sm:$0xf] %vm3136, %v3053
      %3145 = vst.msk [vmem:[%s177 + $0x20] sm:$0xf] %vm3136, %v3054
      %3146 = vst.msk [vmem:[%s177 + $0x24] sm:$0xf] %vm3136, %v3055
      %3147 = vst.msk [vmem:[%s177 + $0x28] sm:$0xf] %vm3136, %v3056
      %3148 = vst.msk [vmem:[%s177 + $0x2c] sm:$0xf] %vm3136, %v3057
      %3149 = vst.msk [vmem:[%s177 + $0x30] sm:$0xf] %vm3136, %v3058
      %3150 = vst.msk [vmem:[%s177 + $0x34] sm:$0xf] %vm3136, %v3059
      %3151 = vst.msk [vmem:[%s177 + $0x38] sm:$0xf] %vm3136, %v3060
      %3152 = vst.msk [vmem:[%s177 + $0x3c] sm:$0xf] %vm3136, %v3061
      %3153 = vst.msk [vmem:[%s177 + $0x40] sm:$0xf] %vm3136, %v3062
      %3154 = vst.msk [vmem:[%s177 + $0x44] sm:$0xf] %vm3136, %v3063
      %3155 = vst.msk [vmem:[%s177 + $0x48] sm:$0xf] %vm3136, %v3064
      %3156 = vst.msk [vmem:[%s177 + $0x4c] sm:$0xf] %vm3136, %v3065
      %3157 = vst.msk [vmem:[%s177 + $0x50] sm:$0xf] %vm3136, %v3066
      %3158 = vst.msk [vmem:[%s177 + $0x54] sm:$0xf] %vm3136, %v3067
      %3159 = vst.msk [vmem:[%s177 + $0x58] sm:$0xf] %vm3136, %v3068
      %3160 = vst.msk [vmem:[%s177 + $0x5c] sm:$0xf] %vm3136, %v3069
      %3161 = vst.msk [vmem:[%s177 + $0x60] sm:$0xf] %vm3136, %v3070
      %3162 = vst.msk [vmem:[%s177 + $0x64] sm:$0xf] %vm3136, %v3071
      %3163 = vst.msk [vmem:[%s177 + $0x68] sm:$0xf] %vm3136, %v3072
      %3164 = vst.msk [vmem:[%s177 + $0x6c] sm:$0xf] %vm3136, %v3073
      %3165 = vst.msk [vmem:[%s177 + $0x70] sm:$0xf] %vm3136, %v3074
      %3166 = vst.msk [vmem:[%s177 + $0x74] sm:$0xf] %vm3136, %v3075
      %3167 = vst.msk [vmem:[%s177 + $0x78] sm:$0xf] %vm3136, %v3076
      %3168 = vst.msk [vmem:[%s177 + $0x7c] sm:$0xf] %vm3136, %v3077
      %3169 = vst.msk [vmem:[%s177 + $0x80] sm:$0xf] %vm3136, %v3078
      %3170 = vst.msk [vmem:[%s177 + $0x84] sm:$0xf] %vm3136, %v3079
      %3171 = vst.msk [vmem:[%s177 + $0x88] sm:$0xf] %vm3136, %v3080
      %3172 = vst.msk [vmem:[%s177 + $0x8c] sm:$0xf] %vm3136, %v3081
      %3173 = vst.msk [vmem:[%s177 + $0x90] sm:$0xf] %vm3136, %v3082
      %3174 = vst.msk [vmem:[%s177 + $0x94] sm:$0xf] %vm3136, %v3083
      %3175 = vst.msk [vmem:[%s177 + $0x98] sm:$0xf] %vm3136, %v3084
      %3176 = vst.msk [vmem:[%s177 + $0x9c] sm:$0xf] %vm3136, %v3085
      %3177 = vst.msk [vmem:[%s177 + $0xa0] sm:$0xf] %vm3136, %v3086
      %3178 = vst.msk [vmem:[%s177 + $0xa4] sm:$0xf] %vm3136, %v3087
      %3179 = vst.msk [vmem:[%s177 + $0xa8] sm:$0xf] %vm3136, %v3088
      %3180 = vst.msk [vmem:[%s177 + $0xac] sm:$0xf] %vm3136, %v3089
      %3181 = vst.msk [vmem:[%s177 + $0xb0] sm:$0xf] %vm3136, %v3090
      %3182 = vst.msk [vmem:[%s177 + $0xb4] sm:$0xf] %vm3136, %v3091
      %3183 = vst.msk [vmem:[%s177 + $0xb8] sm:$0xf] %vm3136, %v3092
      %3184 = vst.msk [vmem:[%s177 + $0xbc] sm:$0xf] %vm3136, %v3093
      %3185 = vst.msk [vmem:[%s177 + $0xc0] sm:$0xf] %vm3136, %v3094
      %3186 = vst.msk [vmem:[%s177 + $0xc4] sm:$0xf] %vm3136, %v3095
      %3187 = vst.msk [vmem:[%s177 + $0xc8] sm:$0xf] %vm3136, %v3096
      %3188 = vst.msk [vmem:[%s177 + $0xcc] sm:$0xf] %vm3136, %v3097
      %3189 = vst.msk [vmem:[%s177 + $0xd0] sm:$0xf] %vm3136, %v3098
      %3190 = vst.msk [vmem:[%s177 + $0xd4] sm:$0xf] %vm3136, %v3099
      %3191 = vst.msk [vmem:[%s177 + $0xd8] sm:$0xf] %vm3136, %v3100
      %3192 = vst.msk [vmem:[%s177 + $0xdc] sm:$0xf] %vm3136, %v3101
      %3193 = vst.msk [vmem:[%s177 + $0xe0] sm:$0xf] %vm3136, %v3102
      %3194 = vst.msk [vmem:[%s177 + $0xe4] sm:$0xf] %vm3136, %v3103
      %3195 = vst.msk [vmem:[%s177 + $0xe8] sm:$0xf] %vm3136, %v3104
      %3196 = vst.msk [vmem:[%s177 + $0xec] sm:$0xf] %vm3136, %v3105
      %3197 = vst.msk [vmem:[%s177 + $0xf0] sm:$0xf] %vm3136, %v3106
      %3198 = vst.msk [vmem:[%s177 + $0xf4] sm:$0xf] %vm3136, %v3107
      %3199 = vst.msk [vmem:[%s177 + $0xf8] sm:$0xf] %vm3136, %v3108
      %3200 = vst.msk [vmem:[%s177 + $0xfc] sm:$0xf] %vm3136, %v3109
      %3201 = vst.msk [vmem:[%s177 + $0x100] sm:$0xf] %vm3136, %v3110
      %3202 = vst.msk [vmem:[%s177 + $0x104] sm:$0xf] %vm3136, %v3111
      %3203 = vst.msk [vmem:[%s177 + $0x108] sm:$0xf] %vm3136, %v3112
      %3204 = vst.msk [vmem:[%s177 + $0x10c] sm:$0xf] %vm3136, %v3113
      %3205 = vst.msk [vmem:[%s177 + $0x110] sm:$0xf] %vm3136, %v3114
      %3206 = vst.msk [vmem:[%s177 + $0x114] sm:$0xf] %vm3136, %v3115
      %3207 = vst.msk [vmem:[%s177 + $0x118] sm:$0xf] %vm3136, %v3116
      %3208 = vst.msk [vmem:[%s177 + $0x11c] sm:$0xf] %vm3136, %v3117
      %3209 = vst.msk [vmem:[%s177 + $0x120] sm:$0xf] %vm3136, %v3118
      %3210 = vst.msk [vmem:[%s177 + $0x124] sm:$0xf] %vm3136, %v3119
      %3211 = vst.msk [vmem:[%s177 + $0x128] sm:$0xf] %vm3136, %v3120
      %3212 = vst.msk [vmem:[%s177 + $0x12c] sm:$0xf] %vm3136, %v3121
      %3213 = vst.msk [vmem:[%s177 + $0x130] sm:$0xf] %vm3136, %v3122
      %3214 = vst.msk [vmem:[%s177 + $0x134] sm:$0xf] %vm3136, %v3123
      %3215 = vst.msk [vmem:[%s177 + $0x138] sm:$0xf] %vm3136, %v3124
      %3216 = vst.msk [vmem:[%s177 + $0x13c] sm:$0xf] %vm3136, %v3125
      %3217 = vst.msk [vmem:[%s177 + $0x140] sm:$0xf] %vm3136, %v3126
      %3218 = vst.msk [vmem:[%s177 + $0x144] sm:$0xf] %vm3136, %v3127
      %3219 = vst.msk [vmem:[%s177 + $0x148] sm:$0xf] %vm3136, %v3128
      %3220 = vst.msk [vmem:[%s177 + $0x14c] sm:$0xf] %vm3136, %v3129
      %3221 = vst.msk [vmem:[%s177 + $0x150] sm:$0xf] %vm3136, %v3130
      %3222 = vst.msk [vmem:[%s177 + $0x154] sm:$0xf] %vm3136, %v3131
      %3223 = vst.msk [vmem:[%s177 + $0x158] sm:$0xf] %vm3136, %v3132
      %3224 = vst.msk [vmem:[%s177 + $0x15c] sm:$0xf] %vm3136, %v3133
      %3225 = vst.msk [vmem:[%s177 + $0x160] sm:$0xf] %vm3136, %v3134
      %3226 = vst.msk [vmem:[%s177 + $0x164] sm:$0xf] %vm3136, %v3135
      %s3227 = smul.u32 3, %s14
      %p3228 = scmp.lt.s32.totalorder %s3227, 5
      %s3229 = scalar_select %p3228, %s3227, 5
      %s3230 = smul.addr %s3229, 30
      %s3231 = smul.addr %s3230, 4
      %s3232 = scalar_lea.vmem %s3, %s3231
      // Predicated region
      $region33: #{cifar10_convnet_forward.4} parent=31 // pred_check
        %p3233 = pneg %p100
      $region34: #{cifar10_convnet_forward.4} parent=31 // pred_check_branch
        %3235 = sbr.rel (%p3233) target = $region36
      $region35: #{cifar10_convnet_forward.4} parent=31 // pred_region
        %s3236 = smul.u32 3, %s14
      $region36: #{cifar10_convnet_forward.4} parent=31 // pred_fallthru
        _
    $region32: #{cifar10_convnet_forward.4} parent=5 // pred_fallthru
      _
    %p3237 = scmp.le.s32.totalorder 2, %s9
    // Predicated region
    $region37: #{cifar10_convnet_forward.4} parent=5 // pred_check
      %p3238 = pneg %p3237
    $region38: #{cifar10_convnet_forward.4} parent=5 // pred_check_branch
      %3240 = sbr.rel (%p3238) target = $region40
    $region39: #{cifar10_convnet_forward.4} parent=5 // pred_region
      %s3241 = ssub.s32 %s9, 2
      // Predicated region
      $region41: #{cifar10_convnet_forward.4} parent=39 // pred_check
        %p3242 = pneg %p106
      $region42: #{cifar10_convnet_forward.4} parent=39 // pred_check_branch
        %3244 = sbr.rel (%p3242) target = $region44
      $region43: #{cifar10_convnet_forward.4} parent=39 // pred_region
        %s3245 = smul.u32 3, %s15
        %p3246 = scmp.lt.s32.totalorder %s3245, 5
        %s3247 = scalar_select %p3246, %s3245, 5
        %s3248 = smul.addr %s3247, 30
        %s3249 = smul.addr %s3248, 4
        %s3250 = scalar_lea.vmem %s3, %s3249
      $region44: #{cifar10_convnet_forward.4} parent=39 // pred_fallthru
        _
    $region40: #{cifar10_convnet_forward.4} parent=5 // pred_fallthru
      _
  $region6: #{cifar10_convnet_forward.4} parent=0 // loop_footer
    %s13 = sadd.s32 1, %s9
  $region7: #{cifar10_convnet_forward.4} parent=0 // loop_footer_branch
    %8 = sbr.rel target = $region3
  $region8: #{cifar10_convnet_forward.4} parent=0 // loop_exit
    _

// kernel: cifar10_convnet_forward.5
$region0: #{cifar10_convnet_forward.5}
  #allocation0 [shape = 'u32[]', space=smem, size = 0x4, offset = 0x4, fixed_abs, tag = 'smem constant byte address 0x4 - core index']
  #allocation1 [shape = 'u32[72,128]{1,0:T(1,128)}', space=vmem, size = 0x9000, scoped, tag = 'internal scratch']
  %s0 = inlined_call_operand.vmem [shape: bf16[6,192,384], index: 0, kind: input, shape index: {}]
  %s1 = inlined_call_operand.vmem [shape: bf16[384,64], index: 1, kind: input, shape index: {}]
  %s2 = inlined_call_operand.vmem [shape: f32[1,64], index: 2, kind: input, shape index: {}]
  %s3 = inlined_call_operand.vmem [shape: bf16[6,48,64], index: 3, kind: output, shape index: {}]
  %s4 = sld [smem:[#allocation0]]
  $region45: #{cifar10_convnet_forward.5} parent=0
    _
  %s6 = ssub.s32 1, %s4
  %s7 = scalar_select 0, %s6, %s4
  loop: start=0, step=1, limit=4
  $region2: #{cifar10_convnet_forward.5} parent=0 // loop_pre_header
    _
  $region3: #{cifar10_convnet_forward.5} parent=0 // loop_header
    %s9 = sphi 0, %s13
    %p10 = scmp.ge.s32.totalorder %s9, 4
    %s19 = sphi 0, %s21
    %s22 = sphi 0, %s19
    %s23 = sphi 0, %s22
    %s39 = sphi 0, %s23
    %s43 = sphi 0, %s43
    %s45 = sphi 0, %s43
    %s46 = sphi 0, %s45
    %s60 = sphi 0, %s46
    %s64 = sphi 0, %s64
    %s66 = sphi 0, %s64
    %s67 = sphi 0, %s66
    %s81 = sphi 0, %s67
    %s87 = sphi 0, %s89
    %s90 = sphi 0, %s87
    %s91 = sphi 0, %s90
    %s107 = sphi 0, %s91
  $region4: #{cifar10_convnet_forward.5} parent=0 // loop_header_branch
    %12 = sbr.rel (%p10) target = $region8
  $region5: #{cifar10_convnet_forward.5} parent=0 // loop_body
    %s14 = ssub.s32 %s9, 1
    %s15 = ssub.s32 %s9, 2
    %s16 = sadd.s32 %s9, 1
    %s17 = ssub.s32 %s9, %s16
    %p18 = scmp.eq.s32.totalorder %s17, 0
    %s20 = sadd.s32 %s19, 1
    %s21 = scalar_select %p18, %s19, %s20
    %p24 = pneg %p18
    %p25 = scmp.eq.s32.totalorder %s9, 1
    %p26 = por %p24, %p25
    %p27 = scmp.ne.s32.totalorder %s19, %s22
    %p28 = scmp.eq.s32.totalorder %s9, 0
    %p29 = por %p27, %p28
    %p30 = scmp.ne.s32.totalorder %s19, %s22
    %p31 = scmp.eq.s32.totalorder %s14, 1
    %p32 = por %p30, %p31
    %p33 = scmp.ne.s32.totalorder %s22, %s23
    %p34 = scmp.eq.s32.totalorder %s14, 0
    %p35 = por %p33, %p34
    %p36 = scmp.ne.s32.totalorder %s22, %s23
    %p37 = scmp.eq.s32.totalorder %s15, 1
    %p38 = por %p36, %p37
    %p40 = scmp.ne.s32.totalorder %s23, %s39
    %p41 = scmp.eq.s32.totalorder %s15, 0
    %p42 = por %p40, %p41
    %s44 = sadd.s32 %s43, 1
    %p47 = scmp.eq.s32.totalorder %s9, 1
    %p48 = scmp.ne.s32.totalorder %s43, %s45
    %p49 = scmp.eq.s32.totalorder %s9, 0
    %p50 = por %p48, %p49
    %p51 = scmp.ne.s32.totalorder %s43, %s45
    %p52 = scmp.eq.s32.totalorder %s14, 1
    %p53 = por %p51, %p52
    %p54 = scmp.ne.s32.totalorder %s45, %s46
    %p55 = scmp.eq.s32.totalorder %s14, 0
    %p56 = por %p54, %p55
    %p57 = scmp.ne.s32.totalorder %s45, %s46
    %p58 = scmp.eq.s32.totalorder %s15, 1
    %p59 = por %p57, %p58
    %p61 = scmp.ne.s32.totalorder %s46, %s60
    %p62 = scmp.eq.s32.totalorder %s15, 0
    %p63 = por %p61, %p62
    %s65 = sadd.s32 %s64, 1
    %p68 = scmp.eq.s32.totalorder %s9, 1
    %p69 = scmp.ne.s32.totalorder %s64, %s66
    %p70 = scmp.eq.s32.totalorder %s9, 0
    %p71 = por %p69, %p70
    %p72 = scmp.ne.s32.totalorder %s64, %s66
    %p73 = scmp.eq.s32.totalorder %s14, 1
    %p74 = por %p72, %p73
    %p75 = scmp.ne.s32.totalorder %s66, %s67
    %p76 = scmp.eq.s32.totalorder %s14, 0
    %p77 = por %p75, %p76
    %p78 = scmp.ne.s32.totalorder %s66, %s67
    %p79 = scmp.eq.s32.totalorder %s15, 1
    %p80 = por %p78, %p79
    %p82 = scmp.ne.s32.totalorder %s67, %s81
    %p83 = scmp.eq.s32.totalorder %s15, 0
    %p84 = por %p82, %p83
    %s85 = ssub.s32 %s9, %s16
    %p86 = scmp.eq.s32.totalorder %s85, 0
    %s88 = sadd.s32 %s87, 1
    %s89 = scalar_select %p86, %s87, %s88
    %p92 = pneg %p86
    %p93 = scmp.eq.s32.totalorder %s9, 1
    %p94 = por %p92, %p93
    %p95 = scmp.ne.s32.totalorder %s87, %s90
    %p96 = scmp.eq.s32.totalorder %s9, 0
    %p97 = por %p95, %p96
    %p98 = scmp.ne.s32.totalorder %s87, %s90
    %p99 = scmp.eq.s32.totalorder %s14, 1
    %p100 = por %p98, %p99
    %p101 = scmp.ne.s32.totalorder %s90, %s91
    %p102 = scmp.eq.s32.totalorder %s14, 0
    %p103 = por %p101, %p102
    %p104 = scmp.ne.s32.totalorder %s90, %s91
    %p105 = scmp.eq.s32.totalorder %s15, 1
    %p106 = por %p104, %p105
    %p108 = scmp.ne.s32.totalorder %s91, %s107
    %p109 = scmp.eq.s32.totalorder %s15, 0
    %p110 = por %p108, %p109
    %p111 = scmp.le.s32.totalorder 1, %s9
    %p112 = scmp.lt.s32.totalorder %s9, 3
    %p113 = pnand %p111, %p112
    %p114 = pneg %p113
    // Predicated region
    $region9: #{cifar10_convnet_forward.5} parent=5 // pred_check
      _
    $region10: #{cifar10_convnet_forward.5} parent=5 // pred_check_branch
      %116 = sbr.rel (%p113) target = $region12
    $region11: #{cifar10_convnet_forward.5} parent=5 // pred_region
      %s117 = ssub.s32 %s9, 1
      // Predicated region
      $region13: #{cifar10_convnet_forward.5} parent=11 // pred_check
        %p118 = pneg %p56
      $region14: #{cifar10_convnet_forward.5} parent=11 // pred_check_branch
        %120 = sbr.rel (%p118) target = $region16
      $region15: #{cifar10_convnet_forward.5} parent=11 // pred_region
        _
      $region16: #{cifar10_convnet_forward.5} parent=11 // pred_fallthru
        _
      // Predicated region
      $region17: #{cifar10_convnet_forward.5} parent=11 // pred_check
        %p121 = pneg %p77
      $region18: #{cifar10_convnet_forward.5} parent=11 // pred_check_branch
        %123 = sbr.rel (%p121) target = $region20
      $region19: #{cifar10_convnet_forward.5} parent=11 // pred_region
        _
      $region20: #{cifar10_convnet_forward.5} parent=11 // pred_fallthru
        _
    $region12: #{cifar10_convnet_forward.5} parent=5 // pred_fallthru
      _
    %p124 = scmp.lt.s32.totalorder %s9, 2
    // Predicated region
    $region21: #{cifar10_convnet_forward.5} parent=5 // pred_check
      %p125 = pneg %p124
    $region22: #{cifar10_convnet_forward.5} parent=5 // pred_check_branch
      %127 = sbr.rel (%p125) target = $region24
    $region23: #{cifar10_convnet_forward.5} parent=5 // pred_region
      // Predicated region
      $region25: #{cifar10_convnet_forward.5} parent=23 // pred_check
        %p128 = pneg %p29
      $region26: #{cifar10_convnet_forward.5} parent=23 // pred_check_branch
        %130 = sbr.rel (%p128) target = $region28
      $region27: #{cifar10_convnet_forward.5} parent=23 // pred_region
        %s131 = smul.u32 3, %s9
        %p132 = scmp.lt.s32.totalorder %s131, 5
        %s133 = scalar_select %p132, %s131, 5
        %s134 = smul.addr %s133, 72
        %s135 = smul.addr %s134, 4
        %s136 = scalar_lea.vmem %s0, %s135
        %s137 = smul.u32 3, %s9
      $region28: #{cifar10_convnet_forward.5} parent=23 // pred_fallthru
        _
    $region24: #{cifar10_convnet_forward.5} parent=5 // pred_fallthru
      _
    %p138 = scmp.le.s32.totalorder 1, %s9
    %p139 = scmp.lt.s32.totalorder %s9, 3
    %p140 = pnand %p138, %p139
    %p141 = pneg %p140
    // Predicated region
    $region29: #{cifar10_convnet_forward.5} parent=5 // pred_check
      _
    $region30: #{cifar10_convnet_forward.5} parent=5 // pred_check_branch
      %143 = sbr.rel (%p140) target = $region32
    $region31: #{cifar10_convnet_forward.5} parent=5 // pred_region
      %s144 = ssub.s32 %s9, 1
      %s145 = smul.u32 3, %s14
      %p146 = scmp.lt.s32.totalorder %s145, 5
      %s147 = scalar_select %p146, %s145, 5
      %s148 = smul.addr %s147, 72
      %s149 = smul.addr %s148, 4
      %s150 = scalar_lea.vmem %s0, %s149
      %p151 = pneg %p35
      %p152 = pneg %p32
      %p153 = pneg %p56
      %p154 = pneg %p53
      %p155 = pneg %p77
      %p156 = pneg %p74
      %p157 = pneg %p103
      %p158 = pneg %p100
      %s159 = smul.u32 3, %s14
      %p160 = scmp.lt.s32.totalorder %s159, 5
      %s161 = scalar_select %p160, %s159, 5
      %s162 = smul.addr %s161, 6
      %s163 = smul.addr %s162, 4
      %s164 = scalar_lea.vmem %s3, %s163
      %s165 = smul.u32 3, %s14
      %p166 = scmp.lt.s32.totalorder %s165, 5
      %s167 = scalar_select %p166, %s165, 5
      %s168 = smul.addr %s167, 72
      %s169 = smul.addr %s168, 4
      %s170 = scalar_lea.vmem %s0, %s169
      %s171 = smul.u32 3, %s14
      %s172 = smul.u32 3, %s14
      %p173 = scmp.lt.s32.totalorder %s172, 5
      %s174 = scalar_select %p173, %s172, 5
      %s175 = smul.addr %s174, 6
      %s176 = smul.addr %s175, 4
      %s177 = scalar_lea.vmem %s3, %s176
      %s178 = smul.u32 3, %s14
      %v179 = vld [vmem:[%s170] sm:$0xff]
      %v180 = vld [vmem:[%s170 + $0x8] sm:$0xf]
      %v181 = vld [vmem:[%s170 + $0xc] sm:$0xff]
      %v182 = vld [vmem:[%s170 + $0x14] sm:$0xf]
      %v183 = vld [vmem:[%s170 + $0x18] sm:$0xff]
      %v184 = vld [vmem:[%s170 + $0x20] sm:$0xf]
      %v185 = vld [vmem:[%s170 + $0x24] sm:$0xff]
      %v186 = vld [vmem:[%s170 + $0x2c] sm:$0xf]
      %v187 = vld [vmem:[%s170 + $0x30] sm:$0xff]
      %v188 = vld [vmem:[%s170 + $0x38] sm:$0xf]
      %v189 = vld [vmem:[%s170 + $0x3c] sm:$0xff]
      %v190 = vld [vmem:[%s170 + $0x44] sm:$0xf]
      %v191 = vld [vmem:[%s170 + $0x48] sm:$0xff]
      %v192 = vld [vmem:[%s170 + $0x50] sm:$0xf]
      %v193 = vld [vmem:[%s170 + $0x54] sm:$0xff]
      %v194 = vld [vmem:[%s170 + $0x5c] sm:$0xf]
      %v195 = vld [vmem:[%s170 + $0x60] sm:$0xff]
      %v196 = vld [vmem:[%s170 + $0x68] sm:$0xf]
      %v197 = vld [vmem:[%s170 + $0x6c] sm:$0xff]
      %v198 = vld [vmem:[%s170 + $0x74] sm:$0xf]
      %v199 = vld [vmem:[%s170 + $0x78] sm:$0xff]
      %v200 = vld [vmem:[%s170 + $0x80] sm:$0xf]
      %v201 = vld [vmem:[%s170 + $0x84] sm:$0xff]
      %v202 = vld [vmem:[%s170 + $0x8c] sm:$0xf]
      %v203 = vld [vmem:[%s170 + $0x90] sm:$0xff]
      %v204 = vld [vmem:[%s170 + $0x98] sm:$0xf]
      %v205 = vld [vmem:[%s170 + $0x9c] sm:$0xff]
      %v206 = vld [vmem:[%s170 + $0xa4] sm:$0xf]
      %v207 = vld [vmem:[%s170 + $0xa8] sm:$0xff]
      %v208 = vld [vmem:[%s170 + $0xb0] sm:$0xf]
      %v209 = vld [vmem:[%s170 + $0xb4] sm:$0xff]
      %v210 = vld [vmem:[%s170 + $0xbc] sm:$0xf]
      %v211 = vld [vmem:[%s170 + $0xc0] sm:$0xff]
      %v212 = vld [vmem:[%s170 + $0xc8] sm:$0xf]
      %v213 = vld [vmem:[%s170 + $0xcc] sm:$0xff]
      %v214 = vld [vmem:[%s170 + $0xd4] sm:$0xf]
      %v215 = vld [vmem:[%s170 + $0xd8] sm:$0xff]
      %v216 = vld [vmem:[%s170 + $0xe0] sm:$0xf]
      %v217 = vld [vmem:[%s170 + $0xe4] sm:$0xff]
      %v218 = vld [vmem:[%s170 + $0xec] sm:$0xf]
      %v219 = vld [vmem:[%s170 + $0xf0] sm:$0xff]
      %v220 = vld [vmem:[%s170 + $0xf8] sm:$0xf]
      %v221 = vld [vmem:[%s170 + $0xfc] sm:$0xff]
      %v222 = vld [vmem:[%s170 + $0x104] sm:$0xf]
      %v223 = vld [vmem:[%s170 + $0x108] sm:$0xff]
      %v224 = vld [vmem:[%s170 + $0x110] sm:$0xf]
      %v225 = vld [vmem:[%s170 + $0x114] sm:$0xff]
      %v226 = vld [vmem:[%s170 + $0x11c] sm:$0xf]
      %v227 = vld [vmem:[%s170 + $0x120] sm:$0xff]
      %v228 = vld [vmem:[%s170 + $0x128] sm:$0xf]
      %v229 = vld [vmem:[%s170 + $0x12c] sm:$0xff]
      %v230 = vld [vmem:[%s170 + $0x134] sm:$0xf]
      %v231 = vld [vmem:[%s170 + $0x138] sm:$0xff]
      %v232 = vld [vmem:[%s170 + $0x140] sm:$0xf]
      %v233 = vld [vmem:[%s170 + $0x144] sm:$0xff]
      %v234 = vld [vmem:[%s170 + $0x14c] sm:$0xf]
      %v235 = vld [vmem:[%s170 + $0x150] sm:$0xff]
      %v236 = vld [vmem:[%s170 + $0x158] sm:$0xf]
      %v237 = vld [vmem:[%s170 + $0x15c] sm:$0xff]
      %v238 = vld [vmem:[%s170 + $0x164] sm:$0xf]
      %v239 = vld [vmem:[%s170 + $0x168] sm:$0xff]
      %v240 = vld [vmem:[%s170 + $0x170] sm:$0xf]
      %v241 = vld [vmem:[%s170 + $0x174] sm:$0xff]
      %v242 = vld [vmem:[%s170 + $0x17c] sm:$0xf]
      %v243 = vld [vmem:[%s170 + $0x180] sm:$0xff]
      %v244 = vld [vmem:[%s170 + $0x188] sm:$0xf]
      %v245 = vld [vmem:[%s170 + $0x18c] sm:$0xff]
      %v246 = vld [vmem:[%s170 + $0x194] sm:$0xf]
      %v247 = vld [vmem:[%s170 + $0x198] sm:$0xff]
      %v248 = vld [vmem:[%s170 + $0x1a0] sm:$0xf]
      %v249 = vld [vmem:[%s170 + $0x1a4] sm:$0xff]
      %v250 = vld [vmem:[%s170 + $0x1ac] sm:$0xf]
      %v251 = vld [vmem:[%s170 + $0x1b0] sm:$0xff]
      %v252 = vld [vmem:[%s170 + $0x1b8] sm:$0xf]
      %v253 = vld [vmem:[%s170 + $0x1bc] sm:$0xff]
      %v254 = vld [vmem:[%s170 + $0x1c4] sm:$0xf]
      %v255 = vld [vmem:[%s170 + $0x1c8] sm:$0xff]
      %v256 = vld [vmem:[%s170 + $0x1d0] sm:$0xf]
      %v257 = vld [vmem:[%s170 + $0x1d4] sm:$0xff]
      %v258 = vld [vmem:[%s170 + $0x1dc] sm:$0xf]
      %v259 = vld [vmem:[%s170 + $0x1e0] sm:$0xff]
      %v260 = vld [vmem:[%s170 + $0x1e8] sm:$0xf]
      %v261 = vld [vmem:[%s170 + $0x1ec] sm:$0xff]
      %v262 = vld [vmem:[%s170 + $0x1f4] sm:$0xf]
      %v263 = vld [vmem:[%s170 + $0x1f8] sm:$0xff]
      %v264 = vld [vmem:[%s170 + $0x200] sm:$0xf]
      %v265 = vld [vmem:[%s170 + $0x204] sm:$0xff]
      %v266 = vld [vmem:[%s170 + $0x20c] sm:$0xf]
      %v267 = vld [vmem:[%s170 + $0x210] sm:$0xff]
      %v268 = vld [vmem:[%s170 + $0x218] sm:$0xf]
      %v269 = vld [vmem:[%s170 + $0x21c] sm:$0xff]
      %v270 = vld [vmem:[%s170 + $0x224] sm:$0xf]
      %v271 = vld [vmem:[%s170 + $0x228] sm:$0xff]
      %v272 = vld [vmem:[%s170 + $0x230] sm:$0xf]
      %v273 = vld [vmem:[%s170 + $0x234] sm:$0xff]
      %v274 = vld [vmem:[%s170 + $0x23c] sm:$0xf]
      %v275 = vld [vmem:[%s170 + $0x240] sm:$0xff]
      %v276 = vld [vmem:[%s170 + $0x248] sm:$0xf]
      %v277 = vld [vmem:[%s170 + $0x24c] sm:$0xff]
      %v278 = vld [vmem:[%s170 + $0x254] sm:$0xf]
      %v279 = vld [vmem:[%s170 + $0x258] sm:$0xff]
      %v280 = vld [vmem:[%s170 + $0x260] sm:$0xf]
      %v281 = vld [vmem:[%s170 + $0x264] sm:$0xff]
      %v282 = vld [vmem:[%s170 + $0x26c] sm:$0xf]
      %v283 = vld [vmem:[%s170 + $0x270] sm:$0xff]
      %v284 = vld [vmem:[%s170 + $0x278] sm:$0xf]
      %v285 = vld [vmem:[%s170 + $0x27c] sm:$0xff]
      %v286 = vld [vmem:[%s170 + $0x284] sm:$0xf]
      %v287 = vld [vmem:[%s170 + $0x288] sm:$0xff]
      %v288 = vld [vmem:[%s170 + $0x290] sm:$0xf]
      %v289 = vld [vmem:[%s170 + $0x294] sm:$0xff]
      %v290 = vld [vmem:[%s170 + $0x29c] sm:$0xf]
      %v291 = vld [vmem:[%s170 + $0x2a0] sm:$0xff]
      %v292 = vld [vmem:[%s170 + $0x2a8] sm:$0xf]
      %v293 = vld [vmem:[%s170 + $0x2ac] sm:$0xff]
      %v294 = vld [vmem:[%s170 + $0x2b4] sm:$0xf]
      %v295 = vld [vmem:[%s170 + $0x2b8] sm:$0xff]
      %v296 = vld [vmem:[%s170 + $0x2c0] sm:$0xf]
      %v297 = vld [vmem:[%s170 + $0x2c4] sm:$0xff]
      %v298 = vld [vmem:[%s170 + $0x2cc] sm:$0xf]
      %v299 = vld [vmem:[%s170 + $0x2d0] sm:$0xff]
      %v300 = vld [vmem:[%s170 + $0x2d8] sm:$0xf]
      %v301 = vld [vmem:[%s170 + $0x2dc] sm:$0xff]
      %v302 = vld [vmem:[%s170 + $0x2e4] sm:$0xf]
      %v303 = vld [vmem:[%s170 + $0x2e8] sm:$0xff]
      %v304 = vld [vmem:[%s170 + $0x2f0] sm:$0xf]
      %v305 = vld [vmem:[%s170 + $0x2f4] sm:$0xff]
      %v306 = vld [vmem:[%s170 + $0x2fc] sm:$0xf]
      %v307 = vld [vmem:[%s170 + $0x300] sm:$0xff]
      %v308 = vld [vmem:[%s170 + $0x308] sm:$0xf]
      %v309 = vld [vmem:[%s170 + $0x30c] sm:$0xff]
      %v310 = vld [vmem:[%s170 + $0x314] sm:$0xf]
      %v311 = vld [vmem:[%s170 + $0x318] sm:$0xff]
      %v312 = vld [vmem:[%s170 + $0x320] sm:$0xf]
      %v313 = vld [vmem:[%s170 + $0x324] sm:$0xff]
      %v314 = vld [vmem:[%s170 + $0x32c] sm:$0xf]
      %v315 = vld [vmem:[%s170 + $0x330] sm:$0xff]
      %v316 = vld [vmem:[%s170 + $0x338] sm:$0xf]
      %v317 = vld [vmem:[%s170 + $0x33c] sm:$0xff]
      %v318 = vld [vmem:[%s170 + $0x344] sm:$0xf]
      %v319 = vld [vmem:[%s170 + $0x348] sm:$0xff]
      %v320 = vld [vmem:[%s170 + $0x350] sm:$0xf]
      %v321 = vld [vmem:[%s170 + $0x354] sm:$0xff]
      %v322 = vld [vmem:[%s170 + $0x35c] sm:$0xf]
      %v323 = vld [vmem:[%s1] sm:$0xf]
      %v324 = vld [vmem:[%s1 + $0x4] sm:$0xf]
      %v325 = vld [vmem:[%s1 + $0x8] sm:$0xf]
      %v326 = vld [vmem:[%s1 + $0xc] sm:$0xf]
      %v327 = vld [vmem:[%s1 + $0x10] sm:$0xf]
      %v328 = vld [vmem:[%s1 + $0x14] sm:$0xf]
      %v329 = vld [vmem:[%s1 + $0x18] sm:$0xf]
      %v330 = vld [vmem:[%s1 + $0x1c] sm:$0xf]
      %v331 = vld [vmem:[%s1 + $0x20] sm:$0xf]
      %v332 = vld [vmem:[%s1 + $0x24] sm:$0xf]
      %v333 = vld [vmem:[%s1 + $0x28] sm:$0xf]
      %v334 = vld [vmem:[%s1 + $0x2c] sm:$0xf]
      %v335 = vld [vmem:[%s1 + $0x30] sm:$0xf]
      %v336 = vld [vmem:[%s1 + $0x34] sm:$0xf]
      %v337 = vld [vmem:[%s1 + $0x38] sm:$0xf]
      %v338 = vld [vmem:[%s1 + $0x3c] sm:$0xf]
      %v339 = vld [vmem:[%s1 + $0x40] sm:$0xf]
      %v340 = vld [vmem:[%s1 + $0x44] sm:$0xf]
      %v341 = vld [vmem:[%s1 + $0x48] sm:$0xf]
      %v342 = vld [vmem:[%s1 + $0x4c] sm:$0xf]
      %v343 = vld [vmem:[%s1 + $0x50] sm:$0xf]
      %v344 = vld [vmem:[%s1 + $0x54] sm:$0xf]
      %v345 = vld [vmem:[%s1 + $0x58] sm:$0xf]
      %v346 = vld [vmem:[%s1 + $0x5c] sm:$0xf]
      %v347 = vld [vmem:[%s1 + $0x60] sm:$0xf]
      %v348 = vld [vmem:[%s1 + $0x64] sm:$0xf]
      %v349 = vld [vmem:[%s1 + $0x68] sm:$0xf]
      %v350 = vld [vmem:[%s1 + $0x6c] sm:$0xf]
      %v351 = vld [vmem:[%s1 + $0x70] sm:$0xf]
      %v352 = vld [vmem:[%s1 + $0x74] sm:$0xf]
      %v353 = vld [vmem:[%s1 + $0x78] sm:$0xf]
      %v354 = vld [vmem:[%s1 + $0x7c] sm:$0xf]
      %v355 = vld [vmem:[%s1 + $0x80] sm:$0xf]
      %v356 = vld [vmem:[%s1 + $0x84] sm:$0xf]
      %v357 = vld [vmem:[%s1 + $0x88] sm:$0xf]
      %v358 = vld [vmem:[%s1 + $0x8c] sm:$0xf]
      %v359 = vld [vmem:[%s1 + $0x90] sm:$0xf]
      %v360 = vld [vmem:[%s1 + $0x94] sm:$0xf]
      %v361 = vld [vmem:[%s1 + $0x98] sm:$0xf]
      %v362 = vld [vmem:[%s1 + $0x9c] sm:$0xf]
      %v363 = vld [vmem:[%s1 + $0xa0] sm:$0xf]
      %v364 = vld [vmem:[%s1 + $0xa4] sm:$0xf]
      %v365 = vld [vmem:[%s1 + $0xa8] sm:$0xf]
      %v366 = vld [vmem:[%s1 + $0xac] sm:$0xf]
      %v367 = vld [vmem:[%s1 + $0xb0] sm:$0xf]
      %v368 = vld [vmem:[%s1 + $0xb4] sm:$0xf]
      %v369 = vld [vmem:[%s1 + $0xb8] sm:$0xf]
      %v370 = vld [vmem:[%s1 + $0xbc] sm:$0xf]
      %v515 = vunpack.c.l.b16 %v179
      %v516 = vunpack.c.h.b16 %v179
      %v517 = vunpack.c.l.b16 %v180
      %v518 = vunpack.c.l.b16 %v181
      %v519 = vunpack.c.h.b16 %v181
      %v520 = vunpack.c.l.b16 %v182
      %v521 = vunpack.c.l.b16 %v183
      %v522 = vunpack.c.h.b16 %v183
      %v523 = vunpack.c.l.b16 %v184
      %v524 = vunpack.c.l.b16 %v185
      %v525 = vunpack.c.h.b16 %v185
      %v526 = vunpack.c.l.b16 %v186
      %v527 = vunpack.c.l.b16 %v187
      %v528 = vunpack.c.h.b16 %v187
      %v529 = vunpack.c.l.b16 %v188
      %v530 = vunpack.c.l.b16 %v189
      %v531 = vunpack.c.h.b16 %v189
      %v532 = vunpack.c.l.b16 %v190
      %v533 = vunpack.c.l.b16 %v191
      %v534 = vunpack.c.h.b16 %v191
      %v535 = vunpack.c.l.b16 %v192
      %v536 = vunpack.c.l.b16 %v193
      %v537 = vunpack.c.h.b16 %v193
      %v538 = vunpack.c.l.b16 %v194
      %v539 = vunpack.c.l.b16 %v195
      %v540 = vunpack.c.h.b16 %v195
      %v541 = vunpack.c.l.b16 %v196
      %v542 = vunpack.c.l.b16 %v197
      %v543 = vunpack.c.h.b16 %v197
      %v544 = vunpack.c.l.b16 %v198
      %v545 = vunpack.c.l.b16 %v199
      %v546 = vunpack.c.h.b16 %v199
      %v547 = vunpack.c.l.b16 %v200
      %v548 = vunpack.c.l.b16 %v201
      %v549 = vunpack.c.h.b16 %v201
      %v550 = vunpack.c.l.b16 %v202
      %v551 = vunpack.c.l.b16 %v203
      %v552 = vunpack.c.h.b16 %v203
      %v553 = vunpack.c.l.b16 %v204
      %v554 = vunpack.c.l.b16 %v205
      %v555 = vunpack.c.h.b16 %v205
      %v556 = vunpack.c.l.b16 %v206
      %v557 = vunpack.c.l.b16 %v207
      %v558 = vunpack.c.h.b16 %v207
      %v559 = vunpack.c.l.b16 %v208
      %v560 = vunpack.c.l.b16 %v209
      %v561 = vunpack.c.h.b16 %v209
      %v562 = vunpack.c.l.b16 %v210
      %v563 = vunpack.c.l.b16 %v211
      %v564 = vunpack.c.h.b16 %v211
      %v565 = vunpack.c.l.b16 %v212
      %v566 = vunpack.c.l.b16 %v213
      %v567 = vunpack.c.h.b16 %v213
      %v568 = vunpack.c.l.b16 %v214
      %v569 = vunpack.c.l.b16 %v215
      %v570 = vunpack.c.h.b16 %v215
      %v571 = vunpack.c.l.b16 %v216
      %v572 = vunpack.c.l.b16 %v217
      %v573 = vunpack.c.h.b16 %v217
      %v574 = vunpack.c.l.b16 %v218
      %v575 = vunpack.c.l.b16 %v219
      %v576 = vunpack.c.h.b16 %v219
      %v577 = vunpack.c.l.b16 %v220
      %v578 = vunpack.c.l.b16 %v221
      %v579 = vunpack.c.h.b16 %v221
      %v580 = vunpack.c.l.b16 %v222
      %v581 = vunpack.c.l.b16 %v223
      %v582 = vunpack.c.h.b16 %v223
      %v583 = vunpack.c.l.b16 %v224
      %v584 = vunpack.c.l.b16 %v225
      %v585 = vunpack.c.h.b16 %v225
      %v586 = vunpack.c.l.b16 %v226
      %v587 = vunpack.c.l.b16 %v227
      %v588 = vunpack.c.h.b16 %v227
      %v589 = vunpack.c.l.b16 %v228
      %v590 = vunpack.c.l.b16 %v229
      %v591 = vunpack.c.h.b16 %v229
      %v592 = vunpack.c.l.b16 %v230
      %v593 = vunpack.c.l.b16 %v231
      %v594 = vunpack.c.h.b16 %v231
      %v595 = vunpack.c.l.b16 %v232
      %v596 = vunpack.c.l.b16 %v233
      %v597 = vunpack.c.h.b16 %v233
      %v598 = vunpack.c.l.b16 %v234
      %v599 = vunpack.c.l.b16 %v235
      %v600 = vunpack.c.h.b16 %v235
      %v601 = vunpack.c.l.b16 %v236
      %v602 = vunpack.c.l.b16 %v237
      %v603 = vunpack.c.h.b16 %v237
      %v604 = vunpack.c.l.b16 %v238
      %v605 = vunpack.c.l.b16 %v239
      %v606 = vunpack.c.h.b16 %v239
      %v607 = vunpack.c.l.b16 %v240
      %v608 = vunpack.c.l.b16 %v241
      %v609 = vunpack.c.h.b16 %v241
      %v610 = vunpack.c.l.b16 %v242
      %v611 = vunpack.c.l.b16 %v243
      %v612 = vunpack.c.h.b16 %v243
      %v613 = vunpack.c.l.b16 %v244
      %v614 = vunpack.c.l.b16 %v245
      %v615 = vunpack.c.h.b16 %v245
      %v616 = vunpack.c.l.b16 %v246
      %v617 = vunpack.c.l.b16 %v247
      %v618 = vunpack.c.h.b16 %v247
      %v619 = vunpack.c.l.b16 %v248
      %v620 = vunpack.c.l.b16 %v249
      %v621 = vunpack.c.h.b16 %v249
      %v622 = vunpack.c.l.b16 %v250
      %v623 = vunpack.c.l.b16 %v251
      %v624 = vunpack.c.h.b16 %v251
      %v625 = vunpack.c.l.b16 %v252
      %v626 = vunpack.c.l.b16 %v253
      %v627 = vunpack.c.h.b16 %v253
      %v628 = vunpack.c.l.b16 %v254
      %v629 = vunpack.c.l.b16 %v255
      %v630 = vunpack.c.h.b16 %v255
      %v631 = vunpack.c.l.b16 %v256
      %v632 = vunpack.c.l.b16 %v257
      %v633 = vunpack.c.h.b16 %v257
      %v634 = vunpack.c.l.b16 %v258
      %v635 = vunpack.c.l.b16 %v259
      %v636 = vunpack.c.h.b16 %v259
      %v637 = vunpack.c.l.b16 %v260
      %v638 = vunpack.c.l.b16 %v261
      %v639 = vunpack.c.h.b16 %v261
      %v640 = vunpack.c.l.b16 %v262
      %v641 = vunpack.c.l.b16 %v263
      %v642 = vunpack.c.h.b16 %v263
      %v643 = vunpack.c.l.b16 %v264
      %v644 = vunpack.c.l.b16 %v265
      %v645 = vunpack.c.h.b16 %v265
      %v646 = vunpack.c.l.b16 %v266
      %v647 = vunpack.c.l.b16 %v267
      %v648 = vunpack.c.h.b16 %v267
      %v649 = vunpack.c.l.b16 %v268
      %v650 = vunpack.c.l.b16 %v269
      %v651 = vunpack.c.h.b16 %v269
      %v652 = vunpack.c.l.b16 %v270
      %v653 = vunpack.c.l.b16 %v271
      %v654 = vunpack.c.h.b16 %v271
      %v655 = vunpack.c.l.b16 %v272
      %v656 = vunpack.c.l.b16 %v273
      %v657 = vunpack.c.h.b16 %v273
      %v658 = vunpack.c.l.b16 %v274
      %v659 = vunpack.c.l.b16 %v275
      %v660 = vunpack.c.h.b16 %v275
      %v661 = vunpack.c.l.b16 %v276
      %v662 = vunpack.c.l.b16 %v277
      %v663 = vunpack.c.h.b16 %v277
      %v664 = vunpack.c.l.b16 %v278
      %v665 = vunpack.c.l.b16 %v279
      %v666 = vunpack.c.h.b16 %v279
      %v667 = vunpack.c.l.b16 %v280
      %v668 = vunpack.c.l.b16 %v281
      %v669 = vunpack.c.h.b16 %v281
      %v670 = vunpack.c.l.b16 %v282
      %v671 = vunpack.c.l.b16 %v283
      %v672 = vunpack.c.h.b16 %v283
      %v673 = vunpack.c.l.b16 %v284
      %v674 = vunpack.c.l.b16 %v285
      %v675 = vunpack.c.h.b16 %v285
      %v676 = vunpack.c.l.b16 %v286
      %v677 = vunpack.c.l.b16 %v287
      %v678 = vunpack.c.h.b16 %v287
      %v679 = vunpack.c.l.b16 %v288
      %v680 = vunpack.c.l.b16 %v289
      %v681 = vunpack.c.h.b16 %v289
      %v682 = vunpack.c.l.b16 %v290
      %v683 = vunpack.c.l.b16 %v291
      %v684 = vunpack.c.h.b16 %v291
      %v685 = vunpack.c.l.b16 %v292
      %v686 = vunpack.c.l.b16 %v293
      %v687 = vunpack.c.h.b16 %v293
      %v688 = vunpack.c.l.b16 %v294
      %v689 = vunpack.c.l.b16 %v295
      %v690 = vunpack.c.h.b16 %v295
      %v691 = vunpack.c.l.b16 %v296
      %v692 = vunpack.c.l.b16 %v297
      %v693 = vunpack.c.h.b16 %v297
      %v694 = vunpack.c.l.b16 %v298
      %v695 = vunpack.c.l.b16 %v299
      %v696 = vunpack.c.h.b16 %v299
      %v697 = vunpack.c.l.b16 %v300
      %v698 = vunpack.c.l.b16 %v301
      %v699 = vunpack.c.h.b16 %v301
      %v700 = vunpack.c.l.b16 %v302
      %v701 = vunpack.c.l.b16 %v303
      %v702 = vunpack.c.h.b16 %v303
      %v703 = vunpack.c.l.b16 %v304
      %v704 = vunpack.c.l.b16 %v305
      %v705 = vunpack.c.h.b16 %v305
      %v706 = vunpack.c.l.b16 %v306
      %v707 = vunpack.c.l.b16 %v307
      %v708 = vunpack.c.h.b16 %v307
      %v709 = vunpack.c.l.b16 %v308
      %v710 = vunpack.c.l.b16 %v309
      %v711 = vunpack.c.h.b16 %v309
      %v712 = vunpack.c.l.b16 %v310
      %v713 = vunpack.c.l.b16 %v311
      %v714 = vunpack.c.h.b16 %v311
      %v715 = vunpack.c.l.b16 %v312
      %v716 = vunpack.c.l.b16 %v313
      %v717 = vunpack.c.h.b16 %v313
      %v718 = vunpack.c.l.b16 %v314
      %v719 = vunpack.c.l.b16 %v315
      %v720 = vunpack.c.h.b16 %v315
      %v721 = vunpack.c.l.b16 %v316
      %v722 = vunpack.c.l.b16 %v317
      %v723 = vunpack.c.h.b16 %v317
      %v724 = vunpack.c.l.b16 %v318
      %v725 = vunpack.c.l.b16 %v319
      %v726 = vunpack.c.h.b16 %v319
      %v727 = vunpack.c.l.b16 %v320
      %v728 = vunpack.c.l.b16 %v321
      %v729 = vunpack.c.h.b16 %v321
      %v730 = vunpack.c.l.b16 %v322
      %v731 = vpack.c.b16 %v518, %v515
      %v732 = vpack.c.b16 %v519, %v516
      %v733 = vpack.c.b16 %v520, %v517
      %v734 = vpack.c.b16 %v524, %v521
      %v735 = vpack.c.b16 %v525, %v522
      %v736 = vpack.c.b16 %v526, %v523
      %v737 = vpack.c.b16 %v530, %v527
      %v738 = vpack.c.b16 %v531, %v528
      %v739 = vpack.c.b16 %v532, %v529
      %v740 = vpack.c.b16 %v536, %v533
      %v741 = vpack.c.b16 %v537, %v534
      %v742 = vpack.c.b16 %v538, %v535
      %v743 = vpack.c.b16 %v542, %v539
      %v744 = vpack.c.b16 %v543, %v540
      %v745 = vpack.c.b16 %v544, %v541
      %v746 = vpack.c.b16 %v548, %v545
      %v747 = vpack.c.b16 %v549, %v546
      %v748 = vpack.c.b16 %v550, %v547
      %v749 = vpack.c.b16 %v554, %v551
      %v750 = vpack.c.b16 %v555, %v552
      %v751 = vpack.c.b16 %v556, %v553
      %v752 = vpack.c.b16 %v560, %v557
      %v753 = vpack.c.b16 %v561, %v558
      %v754 = vpack.c.b16 %v562, %v559
      %v755 = vpack.c.b16 %v566, %v563
      %v756 = vpack.c.b16 %v567, %v564
      %v757 = vpack.c.b16 %v568, %v565
      %v758 = vpack.c.b16 %v572, %v569
      %v759 = vpack.c.b16 %v573, %v570
      %v760 = vpack.c.b16 %v574, %v571
      %v761 = vpack.c.b16 %v578, %v575
      %v762 = vpack.c.b16 %v579, %v576
      %v763 = vpack.c.b16 %v580, %v577
      %v764 = vpack.c.b16 %v584, %v581
      %v765 = vpack.c.b16 %v585, %v582
      %v766 = vpack.c.b16 %v586, %v583
      %v767 = vpack.c.b16 %v590, %v587
      %v768 = vpack.c.b16 %v591, %v588
      %v769 = vpack.c.b16 %v592, %v589
      %v770 = vpack.c.b16 %v596, %v593
      %v771 = vpack.c.b16 %v597, %v594
      %v772 = vpack.c.b16 %v598, %v595
      %v773 = vpack.c.b16 %v602, %v599
      %v774 = vpack.c.b16 %v603, %v600
      %v775 = vpack.c.b16 %v604, %v601
      %v776 = vpack.c.b16 %v608, %v605
      %v777 = vpack.c.b16 %v609, %v606
      %v778 = vpack.c.b16 %v610, %v607
      %v779 = vpack.c.b16 %v614, %v611
      %v780 = vpack.c.b16 %v615, %v612
      %v781 = vpack.c.b16 %v616, %v613
      %v782 = vpack.c.b16 %v620, %v617
      %v783 = vpack.c.b16 %v621, %v618
      %v784 = vpack.c.b16 %v622, %v619
      %v785 = vpack.c.b16 %v626, %v623
      %v786 = vpack.c.b16 %v627, %v624
      %v787 = vpack.c.b16 %v628, %v625
      %v788 = vpack.c.b16 %v632, %v629
      %v789 = vpack.c.b16 %v633, %v630
      %v790 = vpack.c.b16 %v634, %v631
      %v791 = vpack.c.b16 %v638, %v635
      %v792 = vpack.c.b16 %v639, %v636
      %v793 = vpack.c.b16 %v640, %v637
      %v794 = vpack.c.b16 %v644, %v641
      %v795 = vpack.c.b16 %v645, %v642
      %v796 = vpack.c.b16 %v646, %v643
      %v797 = vpack.c.b16 %v650, %v647
      %v798 = vpack.c.b16 %v651, %v648
      %v799 = vpack.c.b16 %v652, %v649
      %v800 = vpack.c.b16 %v656, %v653
      %v801 = vpack.c.b16 %v657, %v654
      %v802 = vpack.c.b16 %v658, %v655
      %v803 = vpack.c.b16 %v662, %v659
      %v804 = vpack.c.b16 %v663, %v660
      %v805 = vpack.c.b16 %v664, %v661
      %v806 = vpack.c.b16 %v668, %v665
      %v807 = vpack.c.b16 %v669, %v666
      %v808 = vpack.c.b16 %v670, %v667
      %v809 = vpack.c.b16 %v674, %v671
      %v810 = vpack.c.b16 %v675, %v672
      %v811 = vpack.c.b16 %v676, %v673
      %v812 = vpack.c.b16 %v680, %v677
      %v813 = vpack.c.b16 %v681, %v678
      %v814 = vpack.c.b16 %v682, %v679
      %v815 = vpack.c.b16 %v686, %v683
      %v816 = vpack.c.b16 %v687, %v684
      %v817 = vpack.c.b16 %v688, %v685
      %v818 = vpack.c.b16 %v692, %v689
      %v819 = vpack.c.b16 %v693, %v690
      %v820 = vpack.c.b16 %v694, %v691
      %v821 = vpack.c.b16 %v698, %v695
      %v822 = vpack.c.b16 %v699, %v696
      %v823 = vpack.c.b16 %v700, %v697
      %v824 = vpack.c.b16 %v704, %v701
      %v825 = vpack.c.b16 %v705, %v702
      %v826 = vpack.c.b16 %v706, %v703
      %v827 = vpack.c.b16 %v710, %v707
      %v828 = vpack.c.b16 %v711, %v708
      %v829 = vpack.c.b16 %v712, %v709
      %v830 = vpack.c.b16 %v716, %v713
      %v831 = vpack.c.b16 %v717, %v714
      %v832 = vpack.c.b16 %v718, %v715
      %v833 = vpack.c.b16 %v722, %v719
      %v834 = vpack.c.b16 %v723, %v720
      %v835 = vpack.c.b16 %v724, %v721
      %v836 = vpack.c.b16 %v728, %v725
      %v837 = vpack.c.b16 %v729, %v726
      %v838 = vpack.c.b16 %v730, %v727
      %v995 = vunpack.c.l.b16 %v323
      %v996 = vunpack.c.l.b16 %v324
      %v997 = vunpack.c.l.b16 %v325
      %v998 = vunpack.c.l.b16 %v326
      %v999 = vunpack.c.l.b16 %v327
      %v1000 = vunpack.c.l.b16 %v328
      %v1001 = vunpack.c.l.b16 %v329
      %v1002 = vunpack.c.l.b16 %v330
      %v1003 = vunpack.c.l.b16 %v331
      %v1004 = vunpack.c.l.b16 %v332
      %v1005 = vunpack.c.l.b16 %v333
      %v1006 = vunpack.c.l.b16 %v334
      %v1007 = vunpack.c.l.b16 %v335
      %v1008 = vunpack.c.l.b16 %v336
      %v1009 = vunpack.c.l.b16 %v337
      %v1010 = vunpack.c.l.b16 %v338
      %v1011 = vunpack.c.l.b16 %v339
      %v1012 = vunpack.c.l.b16 %v340
      %v1013 = vunpack.c.l.b16 %v341
      %v1014 = vunpack.c.l.b16 %v342
      %v1015 = vunpack.c.l.b16 %v343
      %v1016 = vunpack.c.l.b16 %v344
      %v1017 = vunpack.c.l.b16 %v345
      %v1018 = vunpack.c.l.b16 %v346
      %v1019 = vunpack.c.l.b16 %v347
      %v1020 = vunpack.c.l.b16 %v348
      %v1021 = vunpack.c.l.b16 %v349
      %v1022 = vunpack.c.l.b16 %v350
      %v1023 = vunpack.c.l.b16 %v351
      %v1024 = vunpack.c.l.b16 %v352
      %v1025 = vunpack.c.l.b16 %v353
      %v1026 = vunpack.c.l.b16 %v354
      %v1027 = vunpack.c.l.b16 %v355
      %v1028 = vunpack.c.l.b16 %v356
      %v1029 = vunpack.c.l.b16 %v357
      %v1030 = vunpack.c.l.b16 %v358
      %v1031 = vunpack.c.l.b16 %v359
      %v1032 = vunpack.c.l.b16 %v360
      %v1033 = vunpack.c.l.b16 %v361
      %v1034 = vunpack.c.l.b16 %v362
      %v1035 = vunpack.c.l.b16 %v363
      %v1036 = vunpack.c.l.b16 %v364
      %v1037 = vunpack.c.l.b16 %v365
      %v1038 = vunpack.c.l.b16 %v366
      %v1039 = vunpack.c.l.b16 %v367
      %v1040 = vunpack.c.l.b16 %v368
      %v1041 = vunpack.c.l.b16 %v369
      %v1042 = vunpack.c.l.b16 %v370
      %v1043 = vpack.c.b16 %v996, %v995
      %v1044 = vpack.c.b16 %v998, %v997
      %v1045 = vpack.c.b16 %v1000, %v999
      %v1046 = vpack.c.b16 %v1002, %v1001
      %v1047 = vpack.c.b16 %v1004, %v1003
      %v1048 = vpack.c.b16 %v1006, %v1005
      %v1049 = vpack.c.b16 %v1008, %v1007
      %v1050 = vpack.c.b16 %v1010, %v1009
      %v1051 = vpack.c.b16 %v1012, %v1011
      %v1052 = vpack.c.b16 %v1014, %v1013
      %v1053 = vpack.c.b16 %v1016, %v1015
      %v1054 = vpack.c.b16 %v1018, %v1017
      %v1055 = vpack.c.b16 %v1020, %v1019
      %v1056 = vpack.c.b16 %v1022, %v1021
      %v1057 = vpack.c.b16 %v1024, %v1023
      %v1058 = vpack.c.b16 %v1026, %v1025
      %v1059 = vpack.c.b16 %v1028, %v1027
      %v1060 = vpack.c.b16 %v1030, %v1029
      %v1061 = vpack.c.b16 %v1032, %v1031
      %v1062 = vpack.c.b16 %v1034, %v1033
      %v1063 = vpack.c.b16 %v1036, %v1035
      %v1064 = vpack.c.b16 %v1038, %v1037
      %v1065 = vpack.c.b16 %v1040, %v1039
      %v1066 = vpack.c.b16 %v1042, %v1041
      %1091 = vmatpush.bf16.msra.mxu0 %v1050
      %1092 = vmatpush.bf16.msra.mxu0 %v1049
      %1093 = vmatpush.bf16.msra.mxu0 %v1048
      %1094 = vmatpush.bf16.msra.mxu0 %v1047
      %1095 = vmatpush.bf16.msra.mxu0 %v1046
      %1096 = vmatpush.bf16.msra.mxu0 %v1045
      %1097 = vmatpush.bf16.msra.mxu0 %v1044
      %1098 = vmatpush.bf16.msra.mxu0 %v1043
      %1099 = vmatmul.bf16.gmra.mxu0 %v731
      %v1100 = vpop.f32.mrf.mxu0
      %v1101 = vadd.f32 0.0, %v1100
      %v1102 = vpop.f32.mrf.mxu0
      %v1103 = vadd.f32 0.0, %v1102
      %1104 = vmatmul.bf16.gmra.mxu0 %v734
      %v1105 = vpop.f32.mrf.mxu0
      %v1106 = vadd.f32 0.0, %v1105
      %v1107 = vpop.f32.mrf.mxu0
      %v1108 = vadd.f32 0.0, %v1107
      %1109 = vmatmul.bf16.gmra.mxu0 %v737
      %v1110 = vpop.f32.mrf.mxu0
      %v1111 = vadd.f32 0.0, %v1110
      %v1112 = vpop.f32.mrf.mxu0
      %v1113 = vadd.f32 0.0, %v1112
      %1114 = vmatmul.bf16.gmra.mxu0 %v740
      %v1115 = vpop.f32.mrf.mxu0
      %v1116 = vadd.f32 0.0, %v1115
      %v1117 = vpop.f32.mrf.mxu0
      %v1118 = vadd.f32 0.0, %v1117
      %1119 = vmatmul.bf16.gmra.mxu0 %v743
      %v1120 = vpop.f32.mrf.mxu0
      %v1121 = vadd.f32 0.0, %v1120
      %v1122 = vpop.f32.mrf.mxu0
      %v1123 = vadd.f32 0.0, %v1122
      %1124 = vmatmul.bf16.gmra.mxu0 %v746
      %v1125 = vpop.f32.mrf.mxu0
      %v1126 = vadd.f32 0.0, %v1125
      %v1127 = vpop.f32.mrf.mxu0
      %v1128 = vadd.f32 0.0, %v1127
      %1129 = vmatmul.bf16.gmra.mxu0 %v749
      %v1130 = vpop.f32.mrf.mxu0
      %v1131 = vadd.f32 0.0, %v1130
      %v1132 = vpop.f32.mrf.mxu0
      %v1133 = vadd.f32 0.0, %v1132
      %1134 = vmatmul.bf16.gmra.mxu0 %v752
      %v1135 = vpop.f32.mrf.mxu0
      %v1136 = vadd.f32 0.0, %v1135
      %v1137 = vpop.f32.mrf.mxu0
      %v1138 = vadd.f32 0.0, %v1137
      %1139 = vmatmul.bf16.gmra.mxu0 %v755
      %v1140 = vpop.f32.mrf.mxu0
      %v1141 = vadd.f32 0.0, %v1140
      %v1142 = vpop.f32.mrf.mxu0
      %v1143 = vadd.f32 0.0, %v1142
      %1144 = vmatmul.bf16.gmra.mxu0 %v758
      %v1145 = vpop.f32.mrf.mxu0
      %v1146 = vadd.f32 0.0, %v1145
      %v1147 = vpop.f32.mrf.mxu0
      %v1148 = vadd.f32 0.0, %v1147
      %1149 = vmatmul.bf16.gmra.mxu0 %v761
      %v1150 = vpop.f32.mrf.mxu0
      %v1151 = vadd.f32 0.0, %v1150
      %v1152 = vpop.f32.mrf.mxu0
      %v1153 = vadd.f32 0.0, %v1152
      %1154 = vmatmul.bf16.gmra.mxu0 %v764
      %v1155 = vpop.f32.mrf.mxu0
      %v1156 = vadd.f32 0.0, %v1155
      %v1157 = vpop.f32.mrf.mxu0
      %v1158 = vadd.f32 0.0, %v1157
      %1159 = vmatmul.bf16.gmra.mxu0 %v767
      %v1160 = vpop.f32.mrf.mxu0
      %v1161 = vadd.f32 0.0, %v1160
      %v1162 = vpop.f32.mrf.mxu0
      %v1163 = vadd.f32 0.0, %v1162
      %1164 = vmatmul.bf16.gmra.mxu0 %v770
      %v1165 = vpop.f32.mrf.mxu0
      %v1166 = vadd.f32 0.0, %v1165
      %v1167 = vpop.f32.mrf.mxu0
      %v1168 = vadd.f32 0.0, %v1167
      %1169 = vmatmul.bf16.gmra.mxu0 %v773
      %v1170 = vpop.f32.mrf.mxu0
      %v1171 = vadd.f32 0.0, %v1170
      %v1172 = vpop.f32.mrf.mxu0
      %v1173 = vadd.f32 0.0, %v1172
      %1174 = vmatmul.bf16.gmra.mxu0 %v776
      %v1175 = vpop.f32.mrf.mxu0
      %v1176 = vadd.f32 0.0, %v1175
      %v1177 = vpop.f32.mrf.mxu0
      %v1178 = vadd.f32 0.0, %v1177
      %1179 = vmatmul.bf16.gmra.mxu0 %v779
      %v1180 = vpop.f32.mrf.mxu0
      %v1181 = vadd.f32 0.0, %v1180
      %v1182 = vpop.f32.mrf.mxu0
      %v1183 = vadd.f32 0.0, %v1182
      %1184 = vmatmul.bf16.gmra.mxu0 %v782
      %v1185 = vpop.f32.mrf.mxu0
      %v1186 = vadd.f32 0.0, %v1185
      %v1187 = vpop.f32.mrf.mxu0
      %v1188 = vadd.f32 0.0, %v1187
      %1189 = vmatmul.bf16.gmra.mxu0 %v785
      %v1190 = vpop.f32.mrf.mxu0
      %v1191 = vadd.f32 0.0, %v1190
      %v1192 = vpop.f32.mrf.mxu0
      %v1193 = vadd.f32 0.0, %v1192
      %1194 = vmatmul.bf16.gmra.mxu0 %v788
      %v1195 = vpop.f32.mrf.mxu0
      %v1196 = vadd.f32 0.0, %v1195
      %v1197 = vpop.f32.mrf.mxu0
      %v1198 = vadd.f32 0.0, %v1197
      %1199 = vmatmul.bf16.gmra.mxu0 %v791
      %v1200 = vpop.f32.mrf.mxu0
      %v1201 = vadd.f32 0.0, %v1200
      %v1202 = vpop.f32.mrf.mxu0
      %v1203 = vadd.f32 0.0, %v1202
      %1204 = vmatmul.bf16.gmra.mxu0 %v794
      %v1205 = vpop.f32.mrf.mxu0
      %v1206 = vadd.f32 0.0, %v1205
      %v1207 = vpop.f32.mrf.mxu0
      %v1208 = vadd.f32 0.0, %v1207
      %1209 = vmatmul.bf16.gmra.mxu0 %v797
      %v1210 = vpop.f32.mrf.mxu0
      %v1211 = vadd.f32 0.0, %v1210
      %v1212 = vpop.f32.mrf.mxu0
      %v1213 = vadd.f32 0.0, %v1212
      %1214 = vmatmul.bf16.gmra.mxu0 %v800
      %v1215 = vpop.f32.mrf.mxu0
      %v1216 = vadd.f32 0.0, %v1215
      %v1217 = vpop.f32.mrf.mxu0
      %v1218 = vadd.f32 0.0, %v1217
      %1219 = vmatmul.bf16.gmra.mxu0 %v803
      %v1220 = vpop.f32.mrf.mxu0
      %v1221 = vadd.f32 0.0, %v1220
      %v1222 = vpop.f32.mrf.mxu0
      %v1223 = vadd.f32 0.0, %v1222
      %1224 = vmatmul.bf16.gmra.mxu0 %v806
      %v1225 = vpop.f32.mrf.mxu0
      %v1226 = vadd.f32 0.0, %v1225
      %v1227 = vpop.f32.mrf.mxu0
      %v1228 = vadd.f32 0.0, %v1227
      %1229 = vmatmul.bf16.gmra.mxu0 %v809
      %v1230 = vpop.f32.mrf.mxu0
      %v1231 = vadd.f32 0.0, %v1230
      %v1232 = vpop.f32.mrf.mxu0
      %v1233 = vadd.f32 0.0, %v1232
      %1234 = vmatmul.bf16.gmra.mxu0 %v812
      %v1235 = vpop.f32.mrf.mxu0
      %v1236 = vadd.f32 0.0, %v1235
      %v1237 = vpop.f32.mrf.mxu0
      %v1238 = vadd.f32 0.0, %v1237
      %1239 = vmatmul.bf16.gmra.mxu0 %v815
      %v1240 = vpop.f32.mrf.mxu0
      %v1241 = vadd.f32 0.0, %v1240
      %v1242 = vpop.f32.mrf.mxu0
      %v1243 = vadd.f32 0.0, %v1242
      %1244 = vmatmul.bf16.gmra.mxu0 %v818
      %v1245 = vpop.f32.mrf.mxu0
      %v1246 = vadd.f32 0.0, %v1245
      %v1247 = vpop.f32.mrf.mxu0
      %v1248 = vadd.f32 0.0, %v1247
      %1249 = vmatmul.bf16.gmra.mxu0 %v821
      %v1250 = vpop.f32.mrf.mxu0
      %v1251 = vadd.f32 0.0, %v1250
      %v1252 = vpop.f32.mrf.mxu0
      %v1253 = vadd.f32 0.0, %v1252
      %1254 = vmatmul.bf16.gmra.mxu0 %v824
      %v1255 = vpop.f32.mrf.mxu0
      %v1256 = vadd.f32 0.0, %v1255
      %v1257 = vpop.f32.mrf.mxu0
      %v1258 = vadd.f32 0.0, %v1257
      %1259 = vmatmul.bf16.gmra.mxu0 %v827
      %v1260 = vpop.f32.mrf.mxu0
      %v1261 = vadd.f32 0.0, %v1260
      %v1262 = vpop.f32.mrf.mxu0
      %v1263 = vadd.f32 0.0, %v1262
      %1264 = vmatmul.bf16.gmra.mxu0 %v830
      %v1265 = vpop.f32.mrf.mxu0
      %v1266 = vadd.f32 0.0, %v1265
      %v1267 = vpop.f32.mrf.mxu0
      %v1268 = vadd.f32 0.0, %v1267
      %1269 = vmatmul.bf16.gmra.mxu0 %v833
      %v1270 = vpop.f32.mrf.mxu0
      %v1271 = vadd.f32 0.0, %v1270
      %v1272 = vpop.f32.mrf.mxu0
      %v1273 = vadd.f32 0.0, %v1272
      %1274 = vmatmul.bf16.gmra.mxu0 %v836
      %v1275 = vpop.f32.mrf.mxu0
      %v1276 = vadd.f32 0.0, %v1275
      %v1277 = vpop.f32.mrf.mxu0
      %v1278 = vadd.f32 0.0, %v1277
      %1279 = vdwg.mxu0
      %1280 = vmatpush.bf16.msra.mxu0 %v1058
      %1281 = vmatpush.bf16.msra.mxu0 %v1057
      %1282 = vmatpush.bf16.msra.mxu0 %v1056
      %1283 = vmatpush.bf16.msra.mxu0 %v1055
      %1284 = vmatpush.bf16.msra.mxu0 %v1054
      %1285 = vmatpush.bf16.msra.mxu0 %v1053
      %1286 = vmatpush.bf16.msra.mxu0 %v1052
      %1287 = vmatpush.bf16.msra.mxu0 %v1051
      %1288 = vmatmul.bf16.gmra.mxu0 %v732
      %v1289 = vpop.f32.mrf.mxu0
      %v1290 = vadd.f32 %v1101, %v1289
      %v1291 = vpop.f32.mrf.mxu0
      %v1292 = vadd.f32 %v1103, %v1291
      %1293 = vmatmul.bf16.gmra.mxu0 %v735
      %v1294 = vpop.f32.mrf.mxu0
      %v1295 = vadd.f32 %v1106, %v1294
      %v1296 = vpop.f32.mrf.mxu0
      %v1297 = vadd.f32 %v1108, %v1296
      %1298 = vmatmul.bf16.gmra.mxu0 %v738
      %v1299 = vpop.f32.mrf.mxu0
      %v1300 = vadd.f32 %v1111, %v1299
      %v1301 = vpop.f32.mrf.mxu0
      %v1302 = vadd.f32 %v1113, %v1301
      %1303 = vmatmul.bf16.gmra.mxu0 %v741
      %v1304 = vpop.f32.mrf.mxu0
      %v1305 = vadd.f32 %v1116, %v1304
      %v1306 = vpop.f32.mrf.mxu0
      %v1307 = vadd.f32 %v1118, %v1306
      %1308 = vmatmul.bf16.gmra.mxu0 %v744
      %v1309 = vpop.f32.mrf.mxu0
      %v1310 = vadd.f32 %v1121, %v1309
      %v1311 = vpop.f32.mrf.mxu0
      %v1312 = vadd.f32 %v1123, %v1311
      %1313 = vmatmul.bf16.gmra.mxu0 %v747
      %v1314 = vpop.f32.mrf.mxu0
      %v1315 = vadd.f32 %v1126, %v1314
      %v1316 = vpop.f32.mrf.mxu0
      %v1317 = vadd.f32 %v1128, %v1316
      %1318 = vmatmul.bf16.gmra.mxu0 %v750
      %v1319 = vpop.f32.mrf.mxu0
      %v1320 = vadd.f32 %v1131, %v1319
      %v1321 = vpop.f32.mrf.mxu0
      %v1322 = vadd.f32 %v1133, %v1321
      %1323 = vmatmul.bf16.gmra.mxu0 %v753
      %v1324 = vpop.f32.mrf.mxu0
      %v1325 = vadd.f32 %v1136, %v1324
      %v1326 = vpop.f32.mrf.mxu0
      %v1327 = vadd.f32 %v1138, %v1326
      %1328 = vmatmul.bf16.gmra.mxu0 %v756
      %v1329 = vpop.f32.mrf.mxu0
      %v1330 = vadd.f32 %v1141, %v1329
      %v1331 = vpop.f32.mrf.mxu0
      %v1332 = vadd.f32 %v1143, %v1331
      %1333 = vmatmul.bf16.gmra.mxu0 %v759
      %v1334 = vpop.f32.mrf.mxu0
      %v1335 = vadd.f32 %v1146, %v1334
      %v1336 = vpop.f32.mrf.mxu0
      %v1337 = vadd.f32 %v1148, %v1336
      %1338 = vmatmul.bf16.gmra.mxu0 %v762
      %v1339 = vpop.f32.mrf.mxu0
      %v1340 = vadd.f32 %v1151, %v1339
      %v1341 = vpop.f32.mrf.mxu0
      %v1342 = vadd.f32 %v1153, %v1341
      %1343 = vmatmul.bf16.gmra.mxu0 %v765
      %v1344 = vpop.f32.mrf.mxu0
      %v1345 = vadd.f32 %v1156, %v1344
      %v1346 = vpop.f32.mrf.mxu0
      %v1347 = vadd.f32 %v1158, %v1346
      %1348 = vmatmul.bf16.gmra.mxu0 %v768
      %v1349 = vpop.f32.mrf.mxu0
      %v1350 = vadd.f32 %v1161, %v1349
      %v1351 = vpop.f32.mrf.mxu0
      %v1352 = vadd.f32 %v1163, %v1351
      %1353 = vmatmul.bf16.gmra.mxu0 %v771
      %v1354 = vpop.f32.mrf.mxu0
      %v1355 = vadd.f32 %v1166, %v1354
      %v1356 = vpop.f32.mrf.mxu0
      %v1357 = vadd.f32 %v1168, %v1356
      %1358 = vmatmul.bf16.gmra.mxu0 %v774
      %v1359 = vpop.f32.mrf.mxu0
      %v1360 = vadd.f32 %v1171, %v1359
      %v1361 = vpop.f32.mrf.mxu0
      %v1362 = vadd.f32 %v1173, %v1361
      %1363 = vmatmul.bf16.gmra.mxu0 %v777
      %v1364 = vpop.f32.mrf.mxu0
      %v1365 = vadd.f32 %v1176, %v1364
      %v1366 = vpop.f32.mrf.mxu0
      %v1367 = vadd.f32 %v1178, %v1366
      %1368 = vmatmul.bf16.gmra.mxu0 %v780
      %v1369 = vpop.f32.mrf.mxu0
      %v1370 = vadd.f32 %v1181, %v1369
      %v1371 = vpop.f32.mrf.mxu0
      %v1372 = vadd.f32 %v1183, %v1371
      %1373 = vmatmul.bf16.gmra.mxu0 %v783
      %v1374 = vpop.f32.mrf.mxu0
      %v1375 = vadd.f32 %v1186, %v1374
      %v1376 = vpop.f32.mrf.mxu0
      %v1377 = vadd.f32 %v1188, %v1376
      %1378 = vmatmul.bf16.gmra.mxu0 %v786
      %v1379 = vpop.f32.mrf.mxu0
      %v1380 = vadd.f32 %v1191, %v1379
      %v1381 = vpop.f32.mrf.mxu0
      %v1382 = vadd.f32 %v1193, %v1381
      %1383 = vmatmul.bf16.gmra.mxu0 %v789
      %v1384 = vpop.f32.mrf.mxu0
      %v1385 = vadd.f32 %v1196, %v1384
      %v1386 = vpop.f32.mrf.mxu0
      %v1387 = vadd.f32 %v1198, %v1386
      %1388 = vmatmul.bf16.gmra.mxu0 %v792
      %v1389 = vpop.f32.mrf.mxu0
      %v1390 = vadd.f32 %v1201, %v1389
      %v1391 = vpop.f32.mrf.mxu0
      %v1392 = vadd.f32 %v1203, %v1391
      %1393 = vmatmul.bf16.gmra.mxu0 %v795
      %v1394 = vpop.f32.mrf.mxu0
      %v1395 = vadd.f32 %v1206, %v1394
      %v1396 = vpop.f32.mrf.mxu0
      %v1397 = vadd.f32 %v1208, %v1396
      %1398 = vmatmul.bf16.gmra.mxu0 %v798
      %v1399 = vpop.f32.mrf.mxu0
      %v1400 = vadd.f32 %v1211, %v1399
      %v1401 = vpop.f32.mrf.mxu0
      %v1402 = vadd.f32 %v1213, %v1401
      %1403 = vmatmul.bf16.gmra.mxu0 %v801
      %v1404 = vpop.f32.mrf.mxu0
      %v1405 = vadd.f32 %v1216, %v1404
      %v1406 = vpop.f32.mrf.mxu0
      %v1407 = vadd.f32 %v1218, %v1406
      %1408 = vmatmul.bf16.gmra.mxu0 %v804
      %v1409 = vpop.f32.mrf.mxu0
      %v1410 = vadd.f32 %v1221, %v1409
      %v1411 = vpop.f32.mrf.mxu0
      %v1412 = vadd.f32 %v1223, %v1411
      %1413 = vmatmul.bf16.gmra.mxu0 %v807
      %v1414 = vpop.f32.mrf.mxu0
      %v1415 = vadd.f32 %v1226, %v1414
      %v1416 = vpop.f32.mrf.mxu0
      %v1417 = vadd.f32 %v1228, %v1416
      %1418 = vmatmul.bf16.gmra.mxu0 %v810
      %v1419 = vpop.f32.mrf.mxu0
      %v1420 = vadd.f32 %v1231, %v1419
      %v1421 = vpop.f32.mrf.mxu0
      %v1422 = vadd.f32 %v1233, %v1421
      %1423 = vmatmul.bf16.gmra.mxu0 %v813
      %v1424 = vpop.f32.mrf.mxu0
      %v1425 = vadd.f32 %v1236, %v1424
      %v1426 = vpop.f32.mrf.mxu0
      %v1427 = vadd.f32 %v1238, %v1426
      %1428 = vmatmul.bf16.gmra.mxu0 %v816
      %v1429 = vpop.f32.mrf.mxu0
      %v1430 = vadd.f32 %v1241, %v1429
      %v1431 = vpop.f32.mrf.mxu0
      %v1432 = vadd.f32 %v1243, %v1431
      %1433 = vmatmul.bf16.gmra.mxu0 %v819
      %v1434 = vpop.f32.mrf.mxu0
      %v1435 = vadd.f32 %v1246, %v1434
      %v1436 = vpop.f32.mrf.mxu0
      %v1437 = vadd.f32 %v1248, %v1436
      %1438 = vmatmul.bf16.gmra.mxu0 %v822
      %v1439 = vpop.f32.mrf.mxu0
      %v1440 = vadd.f32 %v1251, %v1439
      %v1441 = vpop.f32.mrf.mxu0
      %v1442 = vadd.f32 %v1253, %v1441
      %1443 = vmatmul.bf16.gmra.mxu0 %v825
      %v1444 = vpop.f32.mrf.mxu0
      %v1445 = vadd.f32 %v1256, %v1444
      %v1446 = vpop.f32.mrf.mxu0
      %v1447 = vadd.f32 %v1258, %v1446
      %1448 = vmatmul.bf16.gmra.mxu0 %v828
      %v1449 = vpop.f32.mrf.mxu0
      %v1450 = vadd.f32 %v1261, %v1449
      %v1451 = vpop.f32.mrf.mxu0
      %v1452 = vadd.f32 %v1263, %v1451
      %1453 = vmatmul.bf16.gmra.mxu0 %v831
      %v1454 = vpop.f32.mrf.mxu0
      %v1455 = vadd.f32 %v1266, %v1454
      %v1456 = vpop.f32.mrf.mxu0
      %v1457 = vadd.f32 %v1268, %v1456
      %1458 = vmatmul.bf16.gmra.mxu0 %v834
      %v1459 = vpop.f32.mrf.mxu0
      %v1460 = vadd.f32 %v1271, %v1459
      %v1461 = vpop.f32.mrf.mxu0
      %v1462 = vadd.f32 %v1273, %v1461
      %1463 = vmatmul.bf16.gmra.mxu0 %v837
      %v1464 = vpop.f32.mrf.mxu0
      %v1465 = vadd.f32 %v1276, %v1464
      %v1466 = vpop.f32.mrf.mxu0
      %v1467 = vadd.f32 %v1278, %v1466
      %1468 = vdwg.mxu0
      %1469 = vmatpush.bf16.msra.mxu0 %v1066
      %1470 = vmatpush.bf16.msra.mxu0 %v1065
      %1471 = vmatpush.bf16.msra.mxu0 %v1064
      %1472 = vmatpush.bf16.msra.mxu0 %v1063
      %1473 = vmatpush.bf16.msra.mxu0 %v1062
      %1474 = vmatpush.bf16.msra.mxu0 %v1061
      %1475 = vmatpush.bf16.msra.mxu0 %v1060
      %1476 = vmatpush.bf16.msra.mxu0 %v1059
      %1477 = vmatmul.bf16.gmra.mxu0 %v733
      %v1478 = vpop.f32.mrf.mxu0
      %v1479 = vadd.f32 %v1290, %v1478
      %v1480 = vpop.f32.mrf.mxu0
      %v1481 = vadd.f32 %v1292, %v1480
      %1482 = vmatmul.bf16.gmra.mxu0 %v736
      %v1483 = vpop.f32.mrf.mxu0
      %v1484 = vadd.f32 %v1295, %v1483
      %v1485 = vpop.f32.mrf.mxu0
      %v1486 = vadd.f32 %v1297, %v1485
      %1487 = vmatmul.bf16.gmra.mxu0 %v739
      %v1488 = vpop.f32.mrf.mxu0
      %v1489 = vadd.f32 %v1300, %v1488
      %v1490 = vpop.f32.mrf.mxu0
      %v1491 = vadd.f32 %v1302, %v1490
      %1492 = vmatmul.bf16.gmra.mxu0 %v742
      %v1493 = vpop.f32.mrf.mxu0
      %v1494 = vadd.f32 %v1305, %v1493
      %v1495 = vpop.f32.mrf.mxu0
      %v1496 = vadd.f32 %v1307, %v1495
      %1497 = vmatmul.bf16.gmra.mxu0 %v745
      %v1498 = vpop.f32.mrf.mxu0
      %v1499 = vadd.f32 %v1310, %v1498
      %v1500 = vpop.f32.mrf.mxu0
      %v1501 = vadd.f32 %v1312, %v1500
      %1502 = vmatmul.bf16.gmra.mxu0 %v748
      %v1503 = vpop.f32.mrf.mxu0
      %v1504 = vadd.f32 %v1315, %v1503
      %v1505 = vpop.f32.mrf.mxu0
      %v1506 = vadd.f32 %v1317, %v1505
      %1507 = vmatmul.bf16.gmra.mxu0 %v751
      %v1508 = vpop.f32.mrf.mxu0
      %v1509 = vadd.f32 %v1320, %v1508
      %v1510 = vpop.f32.mrf.mxu0
      %v1511 = vadd.f32 %v1322, %v1510
      %1512 = vmatmul.bf16.gmra.mxu0 %v754
      %v1513 = vpop.f32.mrf.mxu0
      %v1514 = vadd.f32 %v1325, %v1513
      %v1515 = vpop.f32.mrf.mxu0
      %v1516 = vadd.f32 %v1327, %v1515
      %1517 = vmatmul.bf16.gmra.mxu0 %v757
      %v1518 = vpop.f32.mrf.mxu0
      %v1519 = vadd.f32 %v1330, %v1518
      %v1520 = vpop.f32.mrf.mxu0
      %v1521 = vadd.f32 %v1332, %v1520
      %1522 = vmatmul.bf16.gmra.mxu0 %v760
      %v1523 = vpop.f32.mrf.mxu0
      %v1524 = vadd.f32 %v1335, %v1523
      %v1525 = vpop.f32.mrf.mxu0
      %v1526 = vadd.f32 %v1337, %v1525
      %1527 = vmatmul.bf16.gmra.mxu0 %v763
      %v1528 = vpop.f32.mrf.mxu0
      %v1529 = vadd.f32 %v1340, %v1528
      %v1530 = vpop.f32.mrf.mxu0
      %v1531 = vadd.f32 %v1342, %v1530
      %1532 = vmatmul.bf16.gmra.mxu0 %v766
      %v1533 = vpop.f32.mrf.mxu0
      %v1534 = vadd.f32 %v1345, %v1533
      %v1535 = vpop.f32.mrf.mxu0
      %v1536 = vadd.f32 %v1347, %v1535
      %1537 = vmatmul.bf16.gmra.mxu0 %v769
      %v1538 = vpop.f32.mrf.mxu0
      %v1539 = vadd.f32 %v1350, %v1538
      %v1540 = vpop.f32.mrf.mxu0
      %v1541 = vadd.f32 %v1352, %v1540
      %1542 = vmatmul.bf16.gmra.mxu0 %v772
      %v1543 = vpop.f32.mrf.mxu0
      %v1544 = vadd.f32 %v1355, %v1543
      %v1545 = vpop.f32.mrf.mxu0
      %v1546 = vadd.f32 %v1357, %v1545
      %1547 = vmatmul.bf16.gmra.mxu0 %v775
      %v1548 = vpop.f32.mrf.mxu0
      %v1549 = vadd.f32 %v1360, %v1548
      %v1550 = vpop.f32.mrf.mxu0
      %v1551 = vadd.f32 %v1362, %v1550
      %1552 = vmatmul.bf16.gmra.mxu0 %v778
      %v1553 = vpop.f32.mrf.mxu0
      %v1554 = vadd.f32 %v1365, %v1553
      %v1555 = vpop.f32.mrf.mxu0
      %v1556 = vadd.f32 %v1367, %v1555
      %1557 = vmatmul.bf16.gmra.mxu0 %v781
      %v1558 = vpop.f32.mrf.mxu0
      %v1559 = vadd.f32 %v1370, %v1558
      %v1560 = vpop.f32.mrf.mxu0
      %v1561 = vadd.f32 %v1372, %v1560
      %1562 = vmatmul.bf16.gmra.mxu0 %v784
      %v1563 = vpop.f32.mrf.mxu0
      %v1564 = vadd.f32 %v1375, %v1563
      %v1565 = vpop.f32.mrf.mxu0
      %v1566 = vadd.f32 %v1377, %v1565
      %1567 = vmatmul.bf16.gmra.mxu0 %v787
      %v1568 = vpop.f32.mrf.mxu0
      %v1569 = vadd.f32 %v1380, %v1568
      %v1570 = vpop.f32.mrf.mxu0
      %v1571 = vadd.f32 %v1382, %v1570
      %1572 = vmatmul.bf16.gmra.mxu0 %v790
      %v1573 = vpop.f32.mrf.mxu0
      %v1574 = vadd.f32 %v1385, %v1573
      %v1575 = vpop.f32.mrf.mxu0
      %v1576 = vadd.f32 %v1387, %v1575
      %1577 = vmatmul.bf16.gmra.mxu0 %v793
      %v1578 = vpop.f32.mrf.mxu0
      %v1579 = vadd.f32 %v1390, %v1578
      %v1580 = vpop.f32.mrf.mxu0
      %v1581 = vadd.f32 %v1392, %v1580
      %1582 = vmatmul.bf16.gmra.mxu0 %v796
      %v1583 = vpop.f32.mrf.mxu0
      %v1584 = vadd.f32 %v1395, %v1583
      %v1585 = vpop.f32.mrf.mxu0
      %v1586 = vadd.f32 %v1397, %v1585
      %1587 = vmatmul.bf16.gmra.mxu0 %v799
      %v1588 = vpop.f32.mrf.mxu0
      %v1589 = vadd.f32 %v1400, %v1588
      %v1590 = vpop.f32.mrf.mxu0
      %v1591 = vadd.f32 %v1402, %v1590
      %1592 = vmatmul.bf16.gmra.mxu0 %v802
      %v1593 = vpop.f32.mrf.mxu0
      %v1594 = vadd.f32 %v1405, %v1593
      %v1595 = vpop.f32.mrf.mxu0
      %v1596 = vadd.f32 %v1407, %v1595
      %1597 = vmatmul.bf16.gmra.mxu0 %v805
      %v1598 = vpop.f32.mrf.mxu0
      %v1599 = vadd.f32 %v1410, %v1598
      %v1600 = vpop.f32.mrf.mxu0
      %v1601 = vadd.f32 %v1412, %v1600
      %1602 = vmatmul.bf16.gmra.mxu0 %v808
      %v1603 = vpop.f32.mrf.mxu0
      %v1604 = vadd.f32 %v1415, %v1603
      %v1605 = vpop.f32.mrf.mxu0
      %v1606 = vadd.f32 %v1417, %v1605
      %1607 = vmatmul.bf16.gmra.mxu0 %v811
      %v1608 = vpop.f32.mrf.mxu0
      %v1609 = vadd.f32 %v1420, %v1608
      %v1610 = vpop.f32.mrf.mxu0
      %v1611 = vadd.f32 %v1422, %v1610
      %1612 = vmatmul.bf16.gmra.mxu0 %v814
      %v1613 = vpop.f32.mrf.mxu0
      %v1614 = vadd.f32 %v1425, %v1613
      %v1615 = vpop.f32.mrf.mxu0
      %v1616 = vadd.f32 %v1427, %v1615
      %1617 = vmatmul.bf16.gmra.mxu0 %v817
      %v1618 = vpop.f32.mrf.mxu0
      %v1619 = vadd.f32 %v1430, %v1618
      %v1620 = vpop.f32.mrf.mxu0
      %v1621 = vadd.f32 %v1432, %v1620
      %1622 = vmatmul.bf16.gmra.mxu0 %v820
      %v1623 = vpop.f32.mrf.mxu0
      %v1624 = vadd.f32 %v1435, %v1623
      %v1625 = vpop.f32.mrf.mxu0
      %v1626 = vadd.f32 %v1437, %v1625
      %1627 = vmatmul.bf16.gmra.mxu0 %v823
      %v1628 = vpop.f32.mrf.mxu0
      %v1629 = vadd.f32 %v1440, %v1628
      %v1630 = vpop.f32.mrf.mxu0
      %v1631 = vadd.f32 %v1442, %v1630
      %1632 = vmatmul.bf16.gmra.mxu0 %v826
      %v1633 = vpop.f32.mrf.mxu0
      %v1634 = vadd.f32 %v1445, %v1633
      %v1635 = vpop.f32.mrf.mxu0
      %v1636 = vadd.f32 %v1447, %v1635
      %1637 = vmatmul.bf16.gmra.mxu0 %v829
      %v1638 = vpop.f32.mrf.mxu0
      %v1639 = vadd.f32 %v1450, %v1638
      %v1640 = vpop.f32.mrf.mxu0
      %v1641 = vadd.f32 %v1452, %v1640
      %1642 = vmatmul.bf16.gmra.mxu0 %v832
      %v1643 = vpop.f32.mrf.mxu0
      %v1644 = vadd.f32 %v1455, %v1643
      %v1645 = vpop.f32.mrf.mxu0
      %v1646 = vadd.f32 %v1457, %v1645
      %1647 = vmatmul.bf16.gmra.mxu0 %v835
      %v1648 = vpop.f32.mrf.mxu0
      %v1649 = vadd.f32 %v1460, %v1648
      %v1650 = vpop.f32.mrf.mxu0
      %v1651 = vadd.f32 %v1462, %v1650
      %1652 = vmatmul.bf16.gmra.mxu0 %v838
      %v1653 = vpop.f32.mrf.mxu0
      %v1654 = vadd.f32 %v1465, %v1653
      %v1655 = vpop.f32.mrf.mxu0
      %v1656 = vadd.f32 %v1467, %v1655
      %1657 = vdwg.mxu0
      %v1658 = vld [vmem:[%s2] sm:$0x1]
      %v1659 = vmax.f32 %v1479, %v1484
      %v1660 = vmax.f32 %v1481, %v1486
      %v1661 = vmax.f32 %v1489, %v1494
      %v1662 = vmax.f32 %v1491, %v1496
      %v1663 = vmax.f32 %v1499, %v1504
      %v1664 = vmax.f32 %v1501, %v1506
      %v1665 = vmax.f32 %v1509, %v1514
      %v1666 = vmax.f32 %v1511, %v1516
      %v1667 = vmax.f32 %v1519, %v1524
      %v1668 = vmax.f32 %v1521, %v1526
      %v1669 = vmax.f32 %v1529, %v1534
      %v1670 = vmax.f32 %v1531, %v1536
      %v1671 = vmax.f32 %v1539, %v1544
      %v1672 = vmax.f32 %v1541, %v1546
      %v1673 = vmax.f32 %v1549, %v1554
      %v1674 = vmax.f32 %v1551, %v1556
      %v1675 = vmax.f32 %v1559, %v1564
      %v1676 = vmax.f32 %v1561, %v1566
      %v1677 = vmax.f32 %v1569, %v1574
      %v1678 = vmax.f32 %v1571, %v1576
      %v1679 = vmax.f32 %v1579, %v1584
      %v1680 = vmax.f32 %v1581, %v1586
      %v1681 = vmax.f32 %v1589, %v1594
      %v1682 = vmax.f32 %v1591, %v1596
      %v1683 = vmax.f32 %v1599, %v1604
      %v1684 = vmax.f32 %v1601, %v1606
      %v1685 = vmax.f32 %v1609, %v1614
      %v1686 = vmax.f32 %v1611, %v1616
      %v1687 = vmax.f32 %v1619, %v1624
      %v1688 = vmax.f32 %v1621, %v1626
      %v1689 = vmax.f32 %v1629, %v1634
      %v1690 = vmax.f32 %v1631, %v1636
      %v1691 = vmax.f32 %v1639, %v1644
      %v1692 = vmax.f32 %v1641, %v1646
      %v1693 = vmax.f32 %v1649, %v1654
      %v1694 = vmax.f32 %v1651, %v1656
      %v1695 = vmax.f32 %v1659, %v1660
      %v1696 = vmax.f32 %v1661, %v1662
      %v1697 = vmax.f32 %v1663, %v1664
      %v1698 = vmax.f32 %v1665, %v1666
      %v1699 = vmax.f32 %v1667, %v1668
      %v1700 = vmax.f32 %v1669, %v1670
      %v1701 = vmax.f32 %v1671, %v1672
      %v1702 = vmax.f32 %v1673, %v1674
      %v1703 = vmax.f32 %v1675, %v1676
      %v1704 = vmax.f32 %v1677, %v1678
      %v1705 = vmax.f32 %v1679, %v1680
      %v1706 = vmax.f32 %v1681, %v1682
      %v1707 = vmax.f32 %v1683, %v1684
      %v1708 = vmax.f32 %v1685, %v1686
      %v1709 = vmax.f32 %v1687, %v1688
      %v1710 = vmax.f32 %v1689, %v1690
      %v1711 = vmax.f32 %v1691, %v1692
      %v1712 = vmax.f32 %v1693, %v1694
      %v1714 = vperm.slane %v1658, 0
      %v1716 = vadd.f32 %v1695, %v1714
      %v1717 = vadd.f32 %v1696, %v1714
      %v1718 = vadd.f32 %v1697, %v1714
      %v1719 = vadd.f32 %v1698, %v1714
      %v1720 = vadd.f32 %v1699, %v1714
      %v1721 = vadd.f32 %v1700, %v1714
      %v1722 = vadd.f32 %v1701, %v1714
      %v1723 = vadd.f32 %v1702, %v1714
      %v1724 = vadd.f32 %v1703, %v1714
      %v1725 = vadd.f32 %v1704, %v1714
      %v1726 = vadd.f32 %v1705, %v1714
      %v1727 = vadd.f32 %v1706, %v1714
      %v1728 = vadd.f32 %v1707, %v1714
      %v1729 = vadd.f32 %v1708, %v1714
      %v1730 = vadd.f32 %v1709, %v1714
      %v1731 = vadd.f32 %v1710, %v1714
      %v1732 = vadd.f32 %v1711, %v1714
      %v1733 = vadd.f32 %v1712, %v1714
      %v1734 = vmax.f32 %v1716, 0.0
      %v1735 = vmax.f32 %v1717, 0.0
      %v1736 = vmax.f32 %v1718, 0.0
      %v1737 = vmax.f32 %v1719, 0.0
      %v1738 = vmax.f32 %v1720, 0.0
      %v1739 = vmax.f32 %v1721, 0.0
      %v1740 = vmax.f32 %v1722, 0.0
      %v1741 = vmax.f32 %v1723, 0.0
      %v1742 = vmax.f32 %v1724, 0.0
      %v1743 = vmax.f32 %v1725, 0.0
      %v1744 = vmax.f32 %v1726, 0.0
      %v1745 = vmax.f32 %v1727, 0.0
      %v1746 = vmax.f32 %v1728, 0.0
      %v1747 = vmax.f32 %v1729, 0.0
      %v1748 = vmax.f32 %v1730, 0.0
      %v1749 = vmax.f32 %v1731, 0.0
      %v1750 = vmax.f32 %v1732, 0.0
      %v1751 = vmax.f32 %v1733, 0.0
      %v1752 = vpack.c.bf16 %v1734, %v1734
      %v1753 = vpack.c.bf16 %v1735, %v1735
      %v1754 = vpack.c.bf16 %v1736, %v1736
      %v1755 = vpack.c.bf16 %v1737, %v1737
      %v1756 = vpack.c.bf16 %v1738, %v1738
      %v1757 = vpack.c.bf16 %v1739, %v1739
      %v1758 = vpack.c.bf16 %v1740, %v1740
      %v1759 = vpack.c.bf16 %v1741, %v1741
      %v1760 = vpack.c.bf16 %v1742, %v1742
      %v1761 = vpack.c.bf16 %v1743, %v1743
      %v1762 = vpack.c.bf16 %v1744, %v1744
      %v1763 = vpack.c.bf16 %v1745, %v1745
      %v1764 = vpack.c.bf16 %v1746, %v1746
      %v1765 = vpack.c.bf16 %v1747, %v1747
      %v1766 = vpack.c.bf16 %v1748, %v1748
      %v1767 = vpack.c.bf16 %v1749, %v1749
      %v1768 = vpack.c.bf16 %v1750, %v1750
      %v1769 = vpack.c.bf16 %v1751, %v1751
      %vm1770 = vcmask 519168
      %1771 = vst.msk [vmem:[%s177] sm:$0xf] %vm1770, %v1752
      %1772 = vst.msk [vmem:[%s177 + $0x4] sm:$0xf] %vm1770, %v1753
      %1773 = vst.msk [vmem:[%s177 + $0x8] sm:$0xf] %vm1770, %v1754
      %1774 = vst.msk [vmem:[%s177 + $0xc] sm:$0xf] %vm1770, %v1755
      %1775 = vst.msk [vmem:[%s177 + $0x10] sm:$0xf] %vm1770, %v1756
      %1776 = vst.msk [vmem:[%s177 + $0x14] sm:$0xf] %vm1770, %v1757
      %1777 = vst.msk [vmem:[%s177 + $0x18] sm:$0xf] %vm1770, %v1758
      %1778 = vst.msk [vmem:[%s177 + $0x1c] sm:$0xf] %vm1770, %v1759
      %1779 = vst.msk [vmem:[%s177 + $0x20] sm:$0xf] %vm1770, %v1760
      %1780 = vst.msk [vmem:[%s177 + $0x24] sm:$0xf] %vm1770, %v1761
      %1781 = vst.msk [vmem:[%s177 + $0x28] sm:$0xf] %vm1770, %v1762
      %1782 = vst.msk [vmem:[%s177 + $0x2c] sm:$0xf] %vm1770, %v1763
      %1783 = vst.msk [vmem:[%s177 + $0x30] sm:$0xf] %vm1770, %v1764
      %1784 = vst.msk [vmem:[%s177 + $0x34] sm:$0xf] %vm1770, %v1765
      %1785 = vst.msk [vmem:[%s177 + $0x38] sm:$0xf] %vm1770, %v1766
      %1786 = vst.msk [vmem:[%s177 + $0x3c] sm:$0xf] %vm1770, %v1767
      %1787 = vst.msk [vmem:[%s177 + $0x40] sm:$0xf] %vm1770, %v1768
      %1788 = vst.msk [vmem:[%s177 + $0x44] sm:$0xf] %vm1770, %v1769
      %s1789 = smul.u32 3, %s14
      %p1790 = scmp.lt.s32.totalorder %s1789, 5
      %s1791 = scalar_select %p1790, %s1789, 5
      %s1792 = smul.addr %s1791, 6
      %s1793 = smul.addr %s1792, 4
      %s1794 = scalar_lea.vmem %s3, %s1793
      // Predicated region
      $region33: #{cifar10_convnet_forward.5} parent=31 // pred_check
        %p1795 = pneg %p100
      $region34: #{cifar10_convnet_forward.5} parent=31 // pred_check_branch
        %1797 = sbr.rel (%p1795) target = $region36
      $region35: #{cifar10_convnet_forward.5} parent=31 // pred_region
        %s1798 = smul.u32 3, %s14
      $region36: #{cifar10_convnet_forward.5} parent=31 // pred_fallthru
        _
    $region32: #{cifar10_convnet_forward.5} parent=5 // pred_fallthru
      _
    %p1799 = scmp.le.s32.totalorder 2, %s9
    // Predicated region
    $region37: #{cifar10_convnet_forward.5} parent=5 // pred_check
      %p1800 = pneg %p1799
    $region38: #{cifar10_convnet_forward.5} parent=5 // pred_check_branch
      %1802 = sbr.rel (%p1800) target = $region40
    $region39: #{cifar10_convnet_forward.5} parent=5 // pred_region
      %s1803 = ssub.s32 %s9, 2
      // Predicated region
      $region41: #{cifar10_convnet_forward.5} parent=39 // pred_check
        %p1804 = pneg %p106
      $region42: #{cifar10_convnet_forward.5} parent=39 // pred_check_branch
        %1806 = sbr.rel (%p1804) target = $region44
      $region43: #{cifar10_convnet_forward.5} parent=39 // pred_region
        %s1807 = smul.u32 3, %s15
        %p1808 = scmp.lt.s32.totalorder %s1807, 5
        %s1809 = scalar_select %p1808, %s1807, 5
        %s1810 = smul.addr %s1809, 6
        %s1811 = smul.addr %s1810, 4
        %s1812 = scalar_lea.vmem %s3, %s1811
      $region44: #{cifar10_convnet_forward.5} parent=39 // pred_fallthru
        _
    $region40: #{cifar10_convnet_forward.5} parent=5 // pred_fallthru
      _
  $region6: #{cifar10_convnet_forward.5} parent=0 // loop_footer
    %s13 = sadd.s32 1, %s9
  $region7: #{cifar10_convnet_forward.5} parent=0 // loop_footer_branch
    %8 = sbr.rel target = $region3
  $region8: #{cifar10_convnet_forward.5} parent=0 // loop_exit
    _

// kernel: cifar10_convnet_forward.6
$region0: #{cifar10_convnet_forward.6}
  #allocation0 [shape = 'u32[]', space=smem, size = 0x4, offset = 0x4, fixed_abs, tag = 'smem constant byte address 0x4 - core index']
  #allocation1 [shape = 'u32[72,128]{1,0:T(1,128)}', space=vmem, size = 0x9000, scoped, tag = 'internal scratch']
  %s0 = inlined_call_operand.vmem [shape: bf16[6,32,640], index: 0, kind: input, shape index: {}]
  %s1 = inlined_call_operand.vmem [shape: bf16[640,64], index: 1, kind: input, shape index: {}]
  %s2 = inlined_call_operand.vmem [shape: f32[1,64], index: 2, kind: input, shape index: {}]
  %s3 = inlined_call_operand.vmem [shape: bf16[6,32,64], index: 3, kind: output, shape index: {}]
  %s4 = sld [smem:[#allocation0]]
  $region45: #{cifar10_convnet_forward.6} parent=0
    _
  %s6 = ssub.s32 1, %s4
  %s7 = scalar_select 0, %s6, %s4
  loop: start=0, step=1, limit=4
  $region2: #{cifar10_convnet_forward.6} parent=0 // loop_pre_header
    _
  $region3: #{cifar10_convnet_forward.6} parent=0 // loop_header
    %s9 = sphi 0, %s13
    %p10 = scmp.ge.s32.totalorder %s9, 4
    %s19 = sphi 0, %s21
    %s22 = sphi 0, %s19
    %s23 = sphi 0, %s22
    %s39 = sphi 0, %s23
    %s43 = sphi 0, %s43
    %s45 = sphi 0, %s43
    %s46 = sphi 0, %s45
    %s60 = sphi 0, %s46
    %s64 = sphi 0, %s64
    %s66 = sphi 0, %s64
    %s67 = sphi 0, %s66
    %s81 = sphi 0, %s67
    %s87 = sphi 0, %s89
    %s90 = sphi 0, %s87
    %s91 = sphi 0, %s90
    %s107 = sphi 0, %s91
  $region4: #{cifar10_convnet_forward.6} parent=0 // loop_header_branch
    %12 = sbr.rel (%p10) target = $region8
  $region5: #{cifar10_convnet_forward.6} parent=0 // loop_body
    %s14 = ssub.s32 %s9, 1
    %s15 = ssub.s32 %s9, 2
    %s16 = sadd.s32 %s9, 1
    %s17 = ssub.s32 %s9, %s16
    %p18 = scmp.eq.s32.totalorder %s17, 0
    %s20 = sadd.s32 %s19, 1
    %s21 = scalar_select %p18, %s19, %s20
    %p24 = pneg %p18
    %p25 = scmp.eq.s32.totalorder %s9, 1
    %p26 = por %p24, %p25
    %p27 = scmp.ne.s32.totalorder %s19, %s22
    %p28 = scmp.eq.s32.totalorder %s9, 0
    %p29 = por %p27, %p28
    %p30 = scmp.ne.s32.totalorder %s19, %s22
    %p31 = scmp.eq.s32.totalorder %s14, 1
    %p32 = por %p30, %p31
    %p33 = scmp.ne.s32.totalorder %s22, %s23
    %p34 = scmp.eq.s32.totalorder %s14, 0
    %p35 = por %p33, %p34
    %p36 = scmp.ne.s32.totalorder %s22, %s23
    %p37 = scmp.eq.s32.totalorder %s15, 1
    %p38 = por %p36, %p37
    %p40 = scmp.ne.s32.totalorder %s23, %s39
    %p41 = scmp.eq.s32.totalorder %s15, 0
    %p42 = por %p40, %p41
    %s44 = sadd.s32 %s43, 1
    %p47 = scmp.eq.s32.totalorder %s9, 1
    %p48 = scmp.ne.s32.totalorder %s43, %s45
    %p49 = scmp.eq.s32.totalorder %s9, 0
    %p50 = por %p48, %p49
    %p51 = scmp.ne.s32.totalorder %s43, %s45
    %p52 = scmp.eq.s32.totalorder %s14, 1
    %p53 = por %p51, %p52
    %p54 = scmp.ne.s32.totalorder %s45, %s46
    %p55 = scmp.eq.s32.totalorder %s14, 0
    %p56 = por %p54, %p55
    %p57 = scmp.ne.s32.totalorder %s45, %s46
    %p58 = scmp.eq.s32.totalorder %s15, 1
    %p59 = por %p57, %p58
    %p61 = scmp.ne.s32.totalorder %s46, %s60
    %p62 = scmp.eq.s32.totalorder %s15, 0
    %p63 = por %p61, %p62
    %s65 = sadd.s32 %s64, 1
    %p68 = scmp.eq.s32.totalorder %s9, 1
    %p69 = scmp.ne.s32.totalorder %s64, %s66
    %p70 = scmp.eq.s32.totalorder %s9, 0
    %p71 = por %p69, %p70
    %p72 = scmp.ne.s32.totalorder %s64, %s66
    %p73 = scmp.eq.s32.totalorder %s14, 1
    %p74 = por %p72, %p73
    %p75 = scmp.ne.s32.totalorder %s66, %s67
    %p76 = scmp.eq.s32.totalorder %s14, 0
    %p77 = por %p75, %p76
    %p78 = scmp.ne.s32.totalorder %s66, %s67
    %p79 = scmp.eq.s32.totalorder %s15, 1
    %p80 = por %p78, %p79
    %p82 = scmp.ne.s32.totalorder %s67, %s81
    %p83 = scmp.eq.s32.totalorder %s15, 0
    %p84 = por %p82, %p83
    %s85 = ssub.s32 %s9, %s16
    %p86 = scmp.eq.s32.totalorder %s85, 0
    %s88 = sadd.s32 %s87, 1
    %s89 = scalar_select %p86, %s87, %s88
    %p92 = pneg %p86
    %p93 = scmp.eq.s32.totalorder %s9, 1
    %p94 = por %p92, %p93
    %p95 = scmp.ne.s32.totalorder %s87, %s90
    %p96 = scmp.eq.s32.totalorder %s9, 0
    %p97 = por %p95, %p96
    %p98 = scmp.ne.s32.totalorder %s87, %s90
    %p99 = scmp.eq.s32.totalorder %s14, 1
    %p100 = por %p98, %p99
    %p101 = scmp.ne.s32.totalorder %s90, %s91
    %p102 = scmp.eq.s32.totalorder %s14, 0
    %p103 = por %p101, %p102
    %p104 = scmp.ne.s32.totalorder %s90, %s91
    %p105 = scmp.eq.s32.totalorder %s15, 1
    %p106 = por %p104, %p105
    %p108 = scmp.ne.s32.totalorder %s91, %s107
    %p109 = scmp.eq.s32.totalorder %s15, 0
    %p110 = por %p108, %p109
    %p111 = scmp.le.s32.totalorder 1, %s9
    %p112 = scmp.lt.s32.totalorder %s9, 3
    %p113 = pnand %p111, %p112
    %p114 = pneg %p113
    // Predicated region
    $region9: #{cifar10_convnet_forward.6} parent=5 // pred_check
      _
    $region10: #{cifar10_convnet_forward.6} parent=5 // pred_check_branch
      %116 = sbr.rel (%p113) target = $region12
    $region11: #{cifar10_convnet_forward.6} parent=5 // pred_region
      %s117 = ssub.s32 %s9, 1
      // Predicated region
      $region13: #{cifar10_convnet_forward.6} parent=11 // pred_check
        %p118 = pneg %p56
      $region14: #{cifar10_convnet_forward.6} parent=11 // pred_check_branch
        %120 = sbr.rel (%p118) target = $region16
      $region15: #{cifar10_convnet_forward.6} parent=11 // pred_region
        _
      $region16: #{cifar10_convnet_forward.6} parent=11 // pred_fallthru
        _
      // Predicated region
      $region17: #{cifar10_convnet_forward.6} parent=11 // pred_check
        %p121 = pneg %p77
      $region18: #{cifar10_convnet_forward.6} parent=11 // pred_check_branch
        %123 = sbr.rel (%p121) target = $region20
      $region19: #{cifar10_convnet_forward.6} parent=11 // pred_region
        _
      $region20: #{cifar10_convnet_forward.6} parent=11 // pred_fallthru
        _
    $region12: #{cifar10_convnet_forward.6} parent=5 // pred_fallthru
      _
    %p124 = scmp.lt.s32.totalorder %s9, 2
    // Predicated region
    $region21: #{cifar10_convnet_forward.6} parent=5 // pred_check
      %p125 = pneg %p124
    $region22: #{cifar10_convnet_forward.6} parent=5 // pred_check_branch
      %127 = sbr.rel (%p125) target = $region24
    $region23: #{cifar10_convnet_forward.6} parent=5 // pred_region
      // Predicated region
      $region25: #{cifar10_convnet_forward.6} parent=23 // pred_check
        %p128 = pneg %p29
      $region26: #{cifar10_convnet_forward.6} parent=23 // pred_check_branch
        %130 = sbr.rel (%p128) target = $region28
      $region27: #{cifar10_convnet_forward.6} parent=23 // pred_region
        %s131 = smul.u32 3, %s9
        %p132 = scmp.lt.s32.totalorder %s131, 5
        %s133 = scalar_select %p132, %s131, 5
        %s134 = smul.addr %s133, 20
        %s135 = smul.addr %s134, 4
        %s136 = scalar_lea.vmem %s0, %s135
        %s137 = smul.u32 3, %s9
      $region28: #{cifar10_convnet_forward.6} parent=23 // pred_fallthru
        _
    $region24: #{cifar10_convnet_forward.6} parent=5 // pred_fallthru
      _
    %p138 = scmp.le.s32.totalorder 1, %s9
    %p139 = scmp.lt.s32.totalorder %s9, 3
    %p140 = pnand %p138, %p139
    %p141 = pneg %p140
    // Predicated region
    $region29: #{cifar10_convnet_forward.6} parent=5 // pred_check
      _
    $region30: #{cifar10_convnet_forward.6} parent=5 // pred_check_branch
      %143 = sbr.rel (%p140) target = $region32
    $region31: #{cifar10_convnet_forward.6} parent=5 // pred_region
      %s144 = ssub.s32 %s9, 1
      %s145 = smul.u32 3, %s14
      %p146 = scmp.lt.s32.totalorder %s145, 5
      %s147 = scalar_select %p146, %s145, 5
      %s148 = smul.addr %s147, 20
      %s149 = smul.addr %s148, 4
      %s150 = scalar_lea.vmem %s0, %s149
      %p151 = pneg %p35
      %p152 = pneg %p32
      %p153 = pneg %p56
      %p154 = pneg %p53
      %p155 = pneg %p77
      %p156 = pneg %p74
      %p157 = pneg %p103
      %p158 = pneg %p100
      %s159 = smul.u32 3, %s14
      %p160 = scmp.lt.s32.totalorder %s159, 5
      %s161 = scalar_select %p160, %s159, 5
      %s162 = smul.addr %s161, 4
      %s163 = smul.addr %s162, 4
      %s164 = scalar_lea.vmem %s3, %s163
      %s165 = smul.u32 3, %s14
      %p166 = scmp.lt.s32.totalorder %s165, 5
      %s167 = scalar_select %p166, %s165, 5
      %s168 = smul.addr %s167, 20
      %s169 = smul.addr %s168, 4
      %s170 = scalar_lea.vmem %s0, %s169
      %s171 = smul.u32 3, %s14
      %s172 = smul.u32 3, %s14
      %p173 = scmp.lt.s32.totalorder %s172, 5
      %s174 = scalar_select %p173, %s172, 5
      %s175 = smul.addr %s174, 4
      %s176 = smul.addr %s175, 4
      %s177 = scalar_lea.vmem %s3, %s176
      %s178 = smul.u32 3, %s14
      %v179 = vld [vmem:[%s170] sm:$0xff]
      %v180 = vld [vmem:[%s170 + $0x8] sm:$0xff]
      %v181 = vld [vmem:[%s170 + $0x10] sm:$0xf]
      %v182 = vld [vmem:[%s170 + $0x14] sm:$0xff]
      %v183 = vld [vmem:[%s170 + $0x1c] sm:$0xff]
      %v184 = vld [vmem:[%s170 + $0x24] sm:$0xf]
      %v185 = vld [vmem:[%s170 + $0x28] sm:$0xff]
      %v186 = vld [vmem:[%s170 + $0x30] sm:$0xff]
      %v187 = vld [vmem:[%s170 + $0x38] sm:$0xf]
      %v188 = vld [vmem:[%s170 + $0x3c] sm:$0xff]
      %v189 = vld [vmem:[%s170 + $0x44] sm:$0xff]
      %v190 = vld [vmem:[%s170 + $0x4c] sm:$0xf]
      %v191 = vld [vmem:[%s170 + $0x50] sm:$0xff]
      %v192 = vld [vmem:[%s170 + $0x58] sm:$0xff]
      %v193 = vld [vmem:[%s170 + $0x60] sm:$0xf]
      %v194 = vld [vmem:[%s170 + $0x64] sm:$0xff]
      %v195 = vld [vmem:[%s170 + $0x6c] sm:$0xff]
      %v196 = vld [vmem:[%s170 + $0x74] sm:$0xf]
      %v197 = vld [vmem:[%s170 + $0x78] sm:$0xff]
      %v198 = vld [vmem:[%s170 + $0x80] sm:$0xff]
      %v199 = vld [vmem:[%s170 + $0x88] sm:$0xf]
      %v200 = vld [vmem:[%s170 + $0x8c] sm:$0xff]
      %v201 = vld [vmem:[%s170 + $0x94] sm:$0xff]
      %v202 = vld [vmem:[%s170 + $0x9c] sm:$0xf]
      %v203 = vld [vmem:[%s170 + $0xa0] sm:$0xff]
      %v204 = vld [vmem:[%s170 + $0xa8] sm:$0xff]
      %v205 = vld [vmem:[%s170 + $0xb0] sm:$0xf]
      %v206 = vld [vmem:[%s170 + $0xb4] sm:$0xff]
      %v207 = vld [vmem:[%s170 + $0xbc] sm:$0xff]
      %v208 = vld [vmem:[%s170 + $0xc4] sm:$0xf]
      %v209 = vld [vmem:[%s170 + $0xc8] sm:$0xff]
      %v210 = vld [vmem:[%s170 + $0xd0] sm:$0xff]
      %v211 = vld [vmem:[%s170 + $0xd8] sm:$0xf]
      %v212 = vld [vmem:[%s170 + $0xdc] sm:$0xff]
      %v213 = vld [vmem:[%s170 + $0xe4] sm:$0xff]
      %v214 = vld [vmem:[%s170 + $0xec] sm:$0xf]
      %v215 = vld [vmem:[%s1] sm:$0xf]
      %v216 = vld [vmem:[%s1 + $0x4] sm:$0xf]
      %v217 = vld [vmem:[%s1 + $0x8] sm:$0xf]
      %v218 = vld [vmem:[%s1 + $0xc] sm:$0xf]
      %v219 = vld [vmem:[%s1 + $0x10] sm:$0xf]
      %v220 = vld [vmem:[%s1 + $0x14] sm:$0xf]
      %v221 = vld [vmem:[%s1 + $0x18] sm:$0xf]
      %v222 = vld [vmem:[%s1 + $0x1c] sm:$0xf]
      %v223 = vld [vmem:[%s1 + $0x20] sm:$0xf]
      %v224 = vld [vmem:[%s1 + $0x24] sm:$0xf]
      %v225 = vld [vmem:[%s1 + $0x28] sm:$0xf]
      %v226 = vld [vmem:[%s1 + $0x2c] sm:$0xf]
      %v227 = vld [vmem:[%s1 + $0x30] sm:$0xf]
      %v228 = vld [vmem:[%s1 + $0x34] sm:$0xf]
      %v229 = vld [vmem:[%s1 + $0x38] sm:$0xf]
      %v230 = vld [vmem:[%s1 + $0x3c] sm:$0xf]
      %v231 = vld [vmem:[%s1 + $0x40] sm:$0xf]
      %v232 = vld [vmem:[%s1 + $0x44] sm:$0xf]
      %v233 = vld [vmem:[%s1 + $0x48] sm:$0xf]
      %v234 = vld [vmem:[%s1 + $0x4c] sm:$0xf]
      %v235 = vld [vmem:[%s1 + $0x50] sm:$0xf]
      %v236 = vld [vmem:[%s1 + $0x54] sm:$0xf]
      %v237 = vld [vmem:[%s1 + $0x58] sm:$0xf]
      %v238 = vld [vmem:[%s1 + $0x5c] sm:$0xf]
      %v239 = vld [vmem:[%s1 + $0x60] sm:$0xf]
      %v240 = vld [vmem:[%s1 + $0x64] sm:$0xf]
      %v241 = vld [vmem:[%s1 + $0x68] sm:$0xf]
      %v242 = vld [vmem:[%s1 + $0x6c] sm:$0xf]
      %v243 = vld [vmem:[%s1 + $0x70] sm:$0xf]
      %v244 = vld [vmem:[%s1 + $0x74] sm:$0xf]
      %v245 = vld [vmem:[%s1 + $0x78] sm:$0xf]
      %v246 = vld [vmem:[%s1 + $0x7c] sm:$0xf]
      %v247 = vld [vmem:[%s1 + $0x80] sm:$0xf]
      %v248 = vld [vmem:[%s1 + $0x84] sm:$0xf]
      %v249 = vld [vmem:[%s1 + $0x88] sm:$0xf]
      %v250 = vld [vmem:[%s1 + $0x8c] sm:$0xf]
      %v251 = vld [vmem:[%s1 + $0x90] sm:$0xf]
      %v252 = vld [vmem:[%s1 + $0x94] sm:$0xf]
      %v253 = vld [vmem:[%s1 + $0x98] sm:$0xf]
      %v254 = vld [vmem:[%s1 + $0x9c] sm:$0xf]
      %v255 = vld [vmem:[%s1 + $0xa0] sm:$0xf]
      %v256 = vld [vmem:[%s1 + $0xa4] sm:$0xf]
      %v257 = vld [vmem:[%s1 + $0xa8] sm:$0xf]
      %v258 = vld [vmem:[%s1 + $0xac] sm:$0xf]
      %v259 = vld [vmem:[%s1 + $0xb0] sm:$0xf]
      %v260 = vld [vmem:[%s1 + $0xb4] sm:$0xf]
      %v261 = vld [vmem:[%s1 + $0xb8] sm:$0xf]
      %v262 = vld [vmem:[%s1 + $0xbc] sm:$0xf]
      %v263 = vld [vmem:[%s1 + $0xc0] sm:$0xf]
      %v264 = vld [vmem:[%s1 + $0xc4] sm:$0xf]
      %v265 = vld [vmem:[%s1 + $0xc8] sm:$0xf]
      %v266 = vld [vmem:[%s1 + $0xcc] sm:$0xf]
      %v267 = vld [vmem:[%s1 + $0xd0] sm:$0xf]
      %v268 = vld [vmem:[%s1 + $0xd4] sm:$0xf]
      %v269 = vld [vmem:[%s1 + $0xd8] sm:$0xf]
      %v270 = vld [vmem:[%s1 + $0xdc] sm:$0xf]
      %v271 = vld [vmem:[%s1 + $0xe0] sm:$0xf]
      %v272 = vld [vmem:[%s1 + $0xe4] sm:$0xf]
      %v273 = vld [vmem:[%s1 + $0xe8] sm:$0xf]
      %v274 = vld [vmem:[%s1 + $0xec] sm:$0xf]
      %v275 = vld [vmem:[%s1 + $0xf0] sm:$0xf]
      %v276 = vld [vmem:[%s1 + $0xf4] sm:$0xf]
      %v277 = vld [vmem:[%s1 + $0xf8] sm:$0xf]
      %v278 = vld [vmem:[%s1 + $0xfc] sm:$0xf]
      %v279 = vld [vmem:[%s1 + $0x100] sm:$0xf]
      %v280 = vld [vmem:[%s1 + $0x104] sm:$0xf]
      %v281 = vld [vmem:[%s1 + $0x108] sm:$0xf]
      %v282 = vld [vmem:[%s1 + $0x10c] sm:$0xf]
      %v283 = vld [vmem:[%s1 + $0x110] sm:$0xf]
      %v284 = vld [vmem:[%s1 + $0x114] sm:$0xf]
      %v285 = vld [vmem:[%s1 + $0x118] sm:$0xf]
      %v286 = vld [vmem:[%s1 + $0x11c] sm:$0xf]
      %v287 = vld [vmem:[%s1 + $0x120] sm:$0xf]
      %v288 = vld [vmem:[%s1 + $0x124] sm:$0xf]
      %v289 = vld [vmem:[%s1 + $0x128] sm:$0xf]
      %v290 = vld [vmem:[%s1 + $0x12c] sm:$0xf]
      %v291 = vld [vmem:[%s1 + $0x130] sm:$0xf]
      %v292 = vld [vmem:[%s1 + $0x134] sm:$0xf]
      %v293 = vld [vmem:[%s1 + $0x138] sm:$0xf]
      %v294 = vld [vmem:[%s1 + $0x13c] sm:$0xf]
      %v295 = vld [vmem:[%s2] sm:$0x1]
      %v297 = vperm.slane %v295, 0
      %v335 = vunpack.c.l.b16 %v179
      %v336 = vunpack.c.h.b16 %v179
      %v337 = vunpack.c.l.b16 %v180
      %v338 = vunpack.c.h.b16 %v180
      %v339 = vunpack.c.l.b16 %v181
      %v340 = vunpack.c.l.b16 %v182
      %v341 = vunpack.c.h.b16 %v182
      %v342 = vunpack.c.l.b16 %v183
      %v343 = vunpack.c.h.b16 %v183
      %v344 = vunpack.c.l.b16 %v184
      %v345 = vunpack.c.l.b16 %v185
      %v346 = vunpack.c.h.b16 %v185
      %v347 = vunpack.c.l.b16 %v186
      %v348 = vunpack.c.h.b16 %v186
      %v349 = vunpack.c.l.b16 %v187
      %v350 = vunpack.c.l.b16 %v188
      %v351 = vunpack.c.h.b16 %v188
      %v352 = vunpack.c.l.b16 %v189
      %v353 = vunpack.c.h.b16 %v189
      %v354 = vunpack.c.l.b16 %v190
      %v355 = vunpack.c.l.b16 %v191
      %v356 = vunpack.c.h.b16 %v191
      %v357 = vunpack.c.l.b16 %v192
      %v358 = vunpack.c.h.b16 %v192
      %v359 = vunpack.c.l.b16 %v193
      %v360 = vunpack.c.l.b16 %v194
      %v361 = vunpack.c.h.b16 %v194
      %v362 = vunpack.c.l.b16 %v195
      %v363 = vunpack.c.h.b16 %v195
      %v364 = vunpack.c.l.b16 %v196
      %v365 = vunpack.c.l.b16 %v197
      %v366 = vunpack.c.h.b16 %v197
      %v367 = vunpack.c.l.b16 %v198
      %v368 = vunpack.c.h.b16 %v198
      %v369 = vunpack.c.l.b16 %v199
      %v370 = vunpack.c.l.b16 %v200
      %v371 = vunpack.c.h.b16 %v200
      %v372 = vunpack.c.l.b16 %v201
      %v373 = vunpack.c.h.b16 %v201
      %v374 = vunpack.c.l.b16 %v202
      %v375 = vunpack.c.l.b16 %v203
      %v376 = vunpack.c.h.b16 %v203
      %v377 = vunpack.c.l.b16 %v204
      %v378 = vunpack.c.h.b16 %v204
      %v379 = vunpack.c.l.b16 %v205
      %v380 = vunpack.c.l.b16 %v206
      %v381 = vunpack.c.h.b16 %v206
      %v382 = vunpack.c.l.b16 %v207
      %v383 = vunpack.c.h.b16 %v207
      %v384 = vunpack.c.l.b16 %v208
      %v385 = vunpack.c.l.b16 %v209
      %v386 = vunpack.c.h.b16 %v209
      %v387 = vunpack.c.l.b16 %v210
      %v388 = vunpack.c.h.b16 %v210
      %v389 = vunpack.c.l.b16 %v211
      %v390 = vunpack.c.l.b16 %v212
      %v391 = vunpack.c.h.b16 %v212
      %v392 = vunpack.c.l.b16 %v213
      %v393 = vunpack.c.h.b16 %v213
      %v394 = vunpack.c.l.b16 %v214
      %v395 = vpack.c.b16 %v340, %v335
      %v396 = vpack.c.b16 %v341, %v336
      %v397 = vpack.c.b16 %v342, %v337
      %v398 = vpack.c.b16 %v343, %v338
      %v399 = vpack.c.b16 %v344, %v339
      %v400 = vpack.c.b16 %v350, %v345
      %v401 = vpack.c.b16 %v351, %v346
      %v402 = vpack.c.b16 %v352, %v347
      %v403 = vpack.c.b16 %v353, %v348
      %v404 = vpack.c.b16 %v354, %v349
      %v405 = vpack.c.b16 %v360, %v355
      %v406 = vpack.c.b16 %v361, %v356
      %v407 = vpack.c.b16 %v362, %v357
      %v408 = vpack.c.b16 %v363, %v358
      %v409 = vpack.c.b16 %v364, %v359
      %v410 = vpack.c.b16 %v370, %v365
      %v411 = vpack.c.b16 %v371, %v366
      %v412 = vpack.c.b16 %v372, %v367
      %v413 = vpack.c.b16 %v373, %v368
      %v414 = vpack.c.b16 %v374, %v369
      %v415 = vpack.c.b16 %v380, %v375
      %v416 = vpack.c.b16 %v381, %v376
      %v417 = vpack.c.b16 %v382, %v377
      %v418 = vpack.c.b16 %v383, %v378
      %v419 = vpack.c.b16 %v384, %v379
      %v420 = vpack.c.b16 %v390, %v385
      %v421 = vpack.c.b16 %v391, %v386
      %v422 = vpack.c.b16 %v392, %v387
      %v423 = vpack.c.b16 %v393, %v388
      %v424 = vpack.c.b16 %v394, %v389
      %v535 = vunpack.c.l.b16 %v215
      %v536 = vunpack.c.l.b16 %v216
      %v537 = vunpack.c.l.b16 %v217
      %v538 = vunpack.c.l.b16 %v218
      %v539 = vunpack.c.l.b16 %v219
      %v540 = vunpack.c.l.b16 %v220
      %v541 = vunpack.c.l.b16 %v221
      %v542 = vunpack.c.l.b16 %v222
      %v543 = vunpack.c.l.b16 %v223
      %v544 = vunpack.c.l.b16 %v224
      %v545 = vunpack.c.l.b16 %v225
      %v546 = vunpack.c.l.b16 %v226
      %v547 = vunpack.c.l.b16 %v227
      %v548 = vunpack.c.l.b16 %v228
      %v549 = vunpack.c.l.b16 %v229
      %v550 = vunpack.c.l.b16 %v230
      %v551 = vunpack.c.l.b16 %v231
      %v552 = vunpack.c.l.b16 %v232
      %v553 = vunpack.c.l.b16 %v233
      %v554 = vunpack.c.l.b16 %v234
      %v555 = vunpack.c.l.b16 %v235
      %v556 = vunpack.c.l.b16 %v236
      %v557 = vunpack.c.l.b16 %v237
      %v558 = vunpack.c.l.b16 %v238
      %v559 = vunpack.c.l.b16 %v239
      %v560 = vunpack.c.l.b16 %v240
      %v561 = vunpack.c.l.b16 %v241
      %v562 = vunpack.c.l.b16 %v242
      %v563 = vunpack.c.l.b16 %v243
      %v564 = vunpack.c.l.b16 %v244
      %v565 = vunpack.c.l.b16 %v245
      %v566 = vunpack.c.l.b16 %v246
      %v567 = vunpack.c.l.b16 %v247
      %v568 = vunpack.c.l.b16 %v248
      %v569 = vunpack.c.l.b16 %v249
      %v570 = vunpack.c.l.b16 %v250
      %v571 = vunpack.c.l.b16 %v251
      %v572 = vunpack.c.l.b16 %v252
      %v573 = vunpack.c.l.b16 %v253
      %v574 = vunpack.c.l.b16 %v254
      %v575 = vunpack.c.l.b16 %v255
      %v576 = vunpack.c.l.b16 %v256
      %v577 = vunpack.c.l.b16 %v257
      %v578 = vunpack.c.l.b16 %v258
      %v579 = vunpack.c.l.b16 %v259
      %v580 = vunpack.c.l.b16 %v260
      %v581 = vunpack.c.l.b16 %v261
      %v582 = vunpack.c.l.b16 %v262
      %v583 = vunpack.c.l.b16 %v263
      %v584 = vunpack.c.l.b16 %v264
      %v585 = vunpack.c.l.b16 %v265
      %v586 = vunpack.c.l.b16 %v266
      %v587 = vunpack.c.l.b16 %v267
      %v588 = vunpack.c.l.b16 %v268
      %v589 = vunpack.c.l.b16 %v269
      %v590 = vunpack.c.l.b16 %v270
      %v591 = vunpack.c.l.b16 %v271
      %v592 = vunpack.c.l.b16 %v272
      %v593 = vunpack.c.l.b16 %v273
      %v594 = vunpack.c.l.b16 %v274
      %v595 = vunpack.c.l.b16 %v275
      %v596 = vunpack.c.l.b16 %v276
      %v597 = vunpack.c.l.b16 %v277
      %v598 = vunpack.c.l.b16 %v278
      %v599 = vunpack.c.l.b16 %v279
      %v600 = vunpack.c.l.b16 %v280
      %v601 = vunpack.c.l.b16 %v281
      %v602 = vunpack.c.l.b16 %v282
      %v603 = vunpack.c.l.b16 %v283
      %v604 = vunpack.c.l.b16 %v284
      %v605 = vunpack.c.l.b16 %v285
      %v606 = vunpack.c.l.b16 %v286
      %v607 = vunpack.c.l.b16 %v287
      %v608 = vunpack.c.l.b16 %v288
      %v609 = vunpack.c.l.b16 %v289
      %v610 = vunpack.c.l.b16 %v290
      %v611 = vunpack.c.l.b16 %v291
      %v612 = vunpack.c.l.b16 %v292
      %v613 = vunpack.c.l.b16 %v293
      %v614 = vunpack.c.l.b16 %v294
      %v615 = vpack.c.b16 %v536, %v535
      %v616 = vpack.c.b16 %v538, %v537
      %v617 = vpack.c.b16 %v540, %v539
      %v618 = vpack.c.b16 %v542, %v541
      %v619 = vpack.c.b16 %v544, %v543
      %v620 = vpack.c.b16 %v546, %v545
      %v621 = vpack.c.b16 %v548, %v547
      %v622 = vpack.c.b16 %v550, %v549
      %v623 = vpack.c.b16 %v552, %v551
      %v624 = vpack.c.b16 %v554, %v553
      %v625 = vpack.c.b16 %v556, %v555
      %v626 = vpack.c.b16 %v558, %v557
      %v627 = vpack.c.b16 %v560, %v559
      %v628 = vpack.c.b16 %v562, %v561
      %v629 = vpack.c.b16 %v564, %v563
      %v630 = vpack.c.b16 %v566, %v565
      %v631 = vpack.c.b16 %v568, %v567
      %v632 = vpack.c.b16 %v570, %v569
      %v633 = vpack.c.b16 %v572, %v571
      %v634 = vpack.c.b16 %v574, %v573
      %v635 = vpack.c.b16 %v576, %v575
      %v636 = vpack.c.b16 %v578, %v577
      %v637 = vpack.c.b16 %v580, %v579
      %v638 = vpack.c.b16 %v582, %v581
      %v639 = vpack.c.b16 %v584, %v583
      %v640 = vpack.c.b16 %v586, %v585
      %v641 = vpack.c.b16 %v588, %v587
      %v642 = vpack.c.b16 %v590, %v589
      %v643 = vpack.c.b16 %v592, %v591
      %v644 = vpack.c.b16 %v594, %v593
      %v645 = vpack.c.b16 %v596, %v595
      %v646 = vpack.c.b16 %v598, %v597
      %v647 = vpack.c.b16 %v600, %v599
      %v648 = vpack.c.b16 %v602, %v601
      %v649 = vpack.c.b16 %v604, %v603
      %v650 = vpack.c.b16 %v606, %v605
      %v651 = vpack.c.b16 %v608, %v607
      %v652 = vpack.c.b16 %v610, %v609
      %v653 = vpack.c.b16 %v612, %v611
      %v654 = vpack.c.b16 %v614, %v613
      %695 = vmatpush.bf16.msra.mxu0 %v622
      %696 = vmatpush.bf16.msra.mxu0 %v621
      %697 = vmatpush.bf16.msra.mxu0 %v620
      %698 = vmatpush.bf16.msra.mxu0 %v619
      %699 = vmatpush.bf16.msra.mxu0 %v618
      %700 = vmatpush.bf16.msra.mxu0 %v617
      %701 = vmatpush.bf16.msra.mxu0 %v616
      %702 = vmatpush.bf16.msra.mxu0 %v615
      %703 = vmatmul.bf16.gmra.mxu0 %v395
      %v704 = vpop.f32.mrf.mxu0
      %v705 = vadd.f32 %v297, %v704
      %v706 = vpop.f32.mrf.mxu0
      %v707 = vadd.f32 %v297, %v706
      %708 = vmatmul.bf16.gmra.mxu0 %v400
      %v709 = vpop.f32.mrf.mxu0
      %v710 = vadd.f32 %v297, %v709
      %v711 = vpop.f32.mrf.mxu0
      %v712 = vadd.f32 %v297, %v711
      %713 = vmatmul.bf16.gmra.mxu0 %v405
      %v714 = vpop.f32.mrf.mxu0
      %v715 = vadd.f32 %v297, %v714
      %v716 = vpop.f32.mrf.mxu0
      %v717 = vadd.f32 %v297, %v716
      %718 = vmatmul.bf16.gmra.mxu0 %v410
      %v719 = vpop.f32.mrf.mxu0
      %v720 = vadd.f32 %v297, %v719
      %v721 = vpop.f32.mrf.mxu0
      %v722 = vadd.f32 %v297, %v721
      %723 = vmatmul.bf16.gmra.mxu0 %v415
      %v724 = vpop.f32.mrf.mxu0
      %v725 = vadd.f32 %v297, %v724
      %v726 = vpop.f32.mrf.mxu0
      %v727 = vadd.f32 %v297, %v726
      %728 = vmatmul.bf16.gmra.mxu0 %v420
      %v729 = vpop.f32.mrf.mxu0
      %v730 = vadd.f32 %v297, %v729
      %v731 = vpop.f32.mrf.mxu0
      %v732 = vadd.f32 %v297, %v731
      %733 = vdwg.mxu0
      %734 = vmatpush.bf16.msra.mxu0 %v630
      %735 = vmatpush.bf16.msra.mxu0 %v629
      %736 = vmatpush.bf16.msra.mxu0 %v628
      %737 = vmatpush.bf16.msra.mxu0 %v627
      %738 = vmatpush.bf16.msra.mxu0 %v626
      %739 = vmatpush.bf16.msra.mxu0 %v625
      %740 = vmatpush.bf16.msra.mxu0 %v624
      %741 = vmatpush.bf16.msra.mxu0 %v623
      %742 = vmatmul.bf16.gmra.mxu0 %v396
      %v743 = vpop.f32.mrf.mxu0
      %v744 = vadd.f32 %v705, %v743
      %v745 = vpop.f32.mrf.mxu0
      %v746 = vadd.f32 %v707, %v745
      %747 = vmatmul.bf16.gmra.mxu0 %v401
      %v748 = vpop.f32.mrf.mxu0
      %v749 = vadd.f32 %v710, %v748
      %v750 = vpop.f32.mrf.mxu0
      %v751 = vadd.f32 %v712, %v750
      %752 = vmatmul.bf16.gmra.mxu0 %v406
      %v753 = vpop.f32.mrf.mxu0
      %v754 = vadd.f32 %v715, %v753
      %v755 = vpop.f32.mrf.mxu0
      %v756 = vadd.f32 %v717, %v755
      %757 = vmatmul.bf16.gmra.mxu0 %v411
      %v758 = vpop.f32.mrf.mxu0
      %v759 = vadd.f32 %v720, %v758
      %v760 = vpop.f32.mrf.mxu0
      %v761 = vadd.f32 %v722, %v760
      %762 = vmatmul.bf16.gmra.mxu0 %v416
      %v763 = vpop.f32.mrf.mxu0
      %v764 = vadd.f32 %v725, %v763
      %v765 = vpop.f32.mrf.mxu0
      %v766 = vadd.f32 %v727, %v765
      %767 = vmatmul.bf16.gmra.mxu0 %v421
      %v768 = vpop.f32.mrf.mxu0
      %v769 = vadd.f32 %v730, %v768
      %v770 = vpop.f32.mrf.mxu0
      %v771 = vadd.f32 %v732, %v770
      %772 = vdwg.mxu0
      %773 = vmatpush.bf16.msra.mxu0 %v638
      %774 = vmatpush.bf16.msra.mxu0 %v637
      %775 = vmatpush.bf16.msra.mxu0 %v636
      %776 = vmatpush.bf16.msra.mxu0 %v635
      %777 = vmatpush.bf16.msra.mxu0 %v634
      %778 = vmatpush.bf16.msra.mxu0 %v633
      %779 = vmatpush.bf16.msra.mxu0 %v632
      %780 = vmatpush.bf16.msra.mxu0 %v631
      %781 = vmatmul.bf16.gmra.mxu0 %v397
      %v782 = vpop.f32.mrf.mxu0
      %v783 = vadd.f32 %v744, %v782
      %v784 = vpop.f32.mrf.mxu0
      %v785 = vadd.f32 %v746, %v784
      %786 = vmatmul.bf16.gmra.mxu0 %v402
      %v787 = vpop.f32.mrf.mxu0
      %v788 = vadd.f32 %v749, %v787
      %v789 = vpop.f32.mrf.mxu0
      %v790 = vadd.f32 %v751, %v789
      %791 = vmatmul.bf16.gmra.mxu0 %v407
      %v792 = vpop.f32.mrf.mxu0
      %v793 = vadd.f32 %v754, %v792
      %v794 = vpop.f32.mrf.mxu0
      %v795 = vadd.f32 %v756, %v794
      %796 = vmatmul.bf16.gmra.mxu0 %v412
      %v797 = vpop.f32.mrf.mxu0
      %v798 = vadd.f32 %v759, %v797
      %v799 = vpop.f32.mrf.mxu0
      %v800 = vadd.f32 %v761, %v799
      %801 = vmatmul.bf16.gmra.mxu0 %v417
      %v802 = vpop.f32.mrf.mxu0
      %v803 = vadd.f32 %v764, %v802
      %v804 = vpop.f32.mrf.mxu0
      %v805 = vadd.f32 %v766, %v804
      %806 = vmatmul.bf16.gmra.mxu0 %v422
      %v807 = vpop.f32.mrf.mxu0
      %v808 = vadd.f32 %v769, %v807
      %v809 = vpop.f32.mrf.mxu0
      %v810 = vadd.f32 %v771, %v809
      %811 = vdwg.mxu0
      %812 = vmatpush.bf16.msra.mxu0 %v646
      %813 = vmatpush.bf16.msra.mxu0 %v645
      %814 = vmatpush.bf16.msra.mxu0 %v644
      %815 = vmatpush.bf16.msra.mxu0 %v643
      %816 = vmatpush.bf16.msra.mxu0 %v642
      %817 = vmatpush.bf16.msra.mxu0 %v641
      %818 = vmatpush.bf16.msra.mxu0 %v640
      %819 = vmatpush.bf16.msra.mxu0 %v639
      %820 = vmatmul.bf16.gmra.mxu0 %v398
      %v821 = vpop.f32.mrf.mxu0
      %v822 = vadd.f32 %v783, %v821
      %v823 = vpop.f32.mrf.mxu0
      %v824 = vadd.f32 %v785, %v823
      %825 = vmatmul.bf16.gmra.mxu0 %v403
      %v826 = vpop.f32.mrf.mxu0
      %v827 = vadd.f32 %v788, %v826
      %v828 = vpop.f32.mrf.mxu0
      %v829 = vadd.f32 %v790, %v828
      %830 = vmatmul.bf16.gmra.mxu0 %v408
      %v831 = vpop.f32.mrf.mxu0
      %v832 = vadd.f32 %v793, %v831
      %v833 = vpop.f32.mrf.mxu0
      %v834 = vadd.f32 %v795, %v833
      %835 = vmatmul.bf16.gmra.mxu0 %v413
      %v836 = vpop.f32.mrf.mxu0
      %v837 = vadd.f32 %v798, %v836
      %v838 = vpop.f32.mrf.mxu0
      %v839 = vadd.f32 %v800, %v838
      %840 = vmatmul.bf16.gmra.mxu0 %v418
      %v841 = vpop.f32.mrf.mxu0
      %v842 = vadd.f32 %v803, %v841
      %v843 = vpop.f32.mrf.mxu0
      %v844 = vadd.f32 %v805, %v843
      %845 = vmatmul.bf16.gmra.mxu0 %v423
      %v846 = vpop.f32.mrf.mxu0
      %v847 = vadd.f32 %v808, %v846
      %v848 = vpop.f32.mrf.mxu0
      %v849 = vadd.f32 %v810, %v848
      %850 = vdwg.mxu0
      %851 = vmatpush.bf16.msra.mxu0 %v654
      %852 = vmatpush.bf16.msra.mxu0 %v653
      %853 = vmatpush.bf16.msra.mxu0 %v652
      %854 = vmatpush.bf16.msra.mxu0 %v651
      %855 = vmatpush.bf16.msra.mxu0 %v650
      %856 = vmatpush.bf16.msra.mxu0 %v649
      %857 = vmatpush.bf16.msra.mxu0 %v648
      %858 = vmatpush.bf16.msra.mxu0 %v647
      %859 = vmatmul.bf16.gmra.mxu0 %v399
      %v860 = vpop.f32.mrf.mxu0
      %v861 = vadd.f32 %v822, %v860
      %v862 = vpop.f32.mrf.mxu0
      %v863 = vadd.f32 %v824, %v862
      %864 = vmatmul.bf16.gmra.mxu0 %v404
      %v865 = vpop.f32.mrf.mxu0
      %v866 = vadd.f32 %v827, %v865
      %v867 = vpop.f32.mrf.mxu0
      %v868 = vadd.f32 %v829, %v867
      %869 = vmatmul.bf16.gmra.mxu0 %v409
      %v870 = vpop.f32.mrf.mxu0
      %v871 = vadd.f32 %v832, %v870
      %v872 = vpop.f32.mrf.mxu0
      %v873 = vadd.f32 %v834, %v872
      %874 = vmatmul.bf16.gmra.mxu0 %v414
      %v875 = vpop.f32.mrf.mxu0
      %v876 = vadd.f32 %v837, %v875
      %v877 = vpop.f32.mrf.mxu0
      %v878 = vadd.f32 %v839, %v877
      %879 = vmatmul.bf16.gmra.mxu0 %v419
      %v880 = vpop.f32.mrf.mxu0
      %v881 = vadd.f32 %v842, %v880
      %v882 = vpop.f32.mrf.mxu0
      %v883 = vadd.f32 %v844, %v882
      %884 = vmatmul.bf16.gmra.mxu0 %v424
      %v885 = vpop.f32.mrf.mxu0
      %v886 = vadd.f32 %v847, %v885
      %v887 = vpop.f32.mrf.mxu0
      %v888 = vadd.f32 %v849, %v887
      %889 = vdwg.mxu0
      %v890 = vmax.f32 %v861, 0.0
      %v891 = vmax.f32 %v863, 0.0
      %v892 = vmax.f32 %v866, 0.0
      %v893 = vmax.f32 %v868, 0.0
      %v894 = vmax.f32 %v871, 0.0
      %v895 = vmax.f32 %v873, 0.0
      %v896 = vmax.f32 %v876, 0.0
      %v897 = vmax.f32 %v878, 0.0
      %v898 = vmax.f32 %v881, 0.0
      %v899 = vmax.f32 %v883, 0.0
      %v900 = vmax.f32 %v886, 0.0
      %v901 = vmax.f32 %v888, 0.0
      %v902 = vpack.c.bf16 %v890, %v890
      %v903 = vpack.c.bf16 %v891, %v891
      %v904 = vpack.c.bf16 %v892, %v892
      %v905 = vpack.c.bf16 %v893, %v893
      %v906 = vpack.c.bf16 %v894, %v894
      %v907 = vpack.c.bf16 %v895, %v895
      %v908 = vpack.c.bf16 %v896, %v896
      %v909 = vpack.c.bf16 %v897, %v897
      %v910 = vpack.c.bf16 %v898, %v898
      %v911 = vpack.c.bf16 %v899, %v899
      %v912 = vpack.c.bf16 %v900, %v900
      %v913 = vpack.c.bf16 %v901, %v901
      %vm914 = vcmask 519168
      %915 = vst.msk [vmem:[%s177] sm:$0xf] %vm914, %v902
      %916 = vst.msk [vmem:[%s177 + $0x4] sm:$0xf] %vm914, %v903
      %917 = vst.msk [vmem:[%s177 + $0x8] sm:$0xf] %vm914, %v904
      %918 = vst.msk [vmem:[%s177 + $0xc] sm:$0xf] %vm914, %v905
      %919 = vst.msk [vmem:[%s177 + $0x10] sm:$0xf] %vm914, %v906
      %920 = vst.msk [vmem:[%s177 + $0x14] sm:$0xf] %vm914, %v907
      %921 = vst.msk [vmem:[%s177 + $0x18] sm:$0xf] %vm914, %v908
      %922 = vst.msk [vmem:[%s177 + $0x1c] sm:$0xf] %vm914, %v909
      %923 = vst.msk [vmem:[%s177 + $0x20] sm:$0xf] %vm914, %v910
      %924 = vst.msk [vmem:[%s177 + $0x24] sm:$0xf] %vm914, %v911
      %925 = vst.msk [vmem:[%s177 + $0x28] sm:$0xf] %vm914, %v912
      %926 = vst.msk [vmem:[%s177 + $0x2c] sm:$0xf] %vm914, %v913
      %s927 = smul.u32 3, %s14
      %p928 = scmp.lt.s32.totalorder %s927, 5
      %s929 = scalar_select %p928, %s927, 5
      %s930 = smul.addr %s929, 4
      %s931 = smul.addr %s930, 4
      %s932 = scalar_lea.vmem %s3, %s931
      // Predicated region
      $region33: #{cifar10_convnet_forward.6} parent=31 // pred_check
        %p933 = pneg %p100
      $region34: #{cifar10_convnet_forward.6} parent=31 // pred_check_branch
        %935 = sbr.rel (%p933) target = $region36
      $region35: #{cifar10_convnet_forward.6} parent=31 // pred_region
        %s936 = smul.u32 3, %s14
      $region36: #{cifar10_convnet_forward.6} parent=31 // pred_fallthru
        _
    $region32: #{cifar10_convnet_forward.6} parent=5 // pred_fallthru
      _
    %p937 = scmp.le.s32.totalorder 2, %s9
    // Predicated region
    $region37: #{cifar10_convnet_forward.6} parent=5 // pred_check
      %p938 = pneg %p937
    $region38: #{cifar10_convnet_forward.6} parent=5 // pred_check_branch
      %940 = sbr.rel (%p938) target = $region40
    $region39: #{cifar10_convnet_forward.6} parent=5 // pred_region
      %s941 = ssub.s32 %s9, 2
      // Predicated region
      $region41: #{cifar10_convnet_forward.6} parent=39 // pred_check
        %p942 = pneg %p106
      $region42: #{cifar10_convnet_forward.6} parent=39 // pred_check_branch
        %944 = sbr.rel (%p942) target = $region44
      $region43: #{cifar10_convnet_forward.6} parent=39 // pred_region
        %s945 = smul.u32 3, %s15
        %p946 = scmp.lt.s32.totalorder %s945, 5
        %s947 = scalar_select %p946, %s945, 5
        %s948 = smul.addr %s947, 4
        %s949 = smul.addr %s948, 4
        %s950 = scalar_lea.vmem %s3, %s949
      $region44: #{cifar10_convnet_forward.6} parent=39 // pred_fallthru
        _
    $region40: #{cifar10_convnet_forward.6} parent=5 // pred_fallthru
      _
  $region6: #{cifar10_convnet_forward.6} parent=0 // loop_footer
    %s13 = sadd.s32 1, %s9
  $region7: #{cifar10_convnet_forward.6} parent=0 // loop_footer_branch
    %8 = sbr.rel target = $region3
  $region8: #{cifar10_convnet_forward.6} parent=0 // loop_exit
    _

// kernel: cifar10_convnet_forward.7
$region0: #{cifar10_convnet_forward.7}
  #allocation0 [shape = 'u32[]', space=smem, size = 0x4, offset = 0x4, fixed_abs, tag = 'smem constant byte address 0x4 - core index']
  #allocation1 [shape = 'u32[72,128]{1,0:T(1,128)}', space=vmem, size = 0x9000, scoped, tag = 'internal scratch']
  %s0 = inlined_call_operand.vmem [shape: bf16[8,2048], index: 0, kind: input, shape index: {}]
  %s1 = inlined_call_operand.vmem [shape: bf16[2048,128], index: 1, kind: input, shape index: {}]
  %s2 = inlined_call_operand.vmem [shape: f32[1,128], index: 2, kind: input, shape index: {}]
  %s3 = inlined_call_operand.vmem [shape: bf16[128,128], index: 3, kind: input, shape index: {}]
  %s4 = inlined_call_operand.vmem [shape: f32[1,128], index: 4, kind: input, shape index: {}]
  %s5 = inlined_call_operand.hbm [shape: f32[8,128], index: 5, kind: output, shape index: {}]
  %s6 = sld [smem:[#allocation0]]
  $region30: #{cifar10_convnet_forward.7} parent=0
    _
  %s8 = ssub.s32 1, %s6
  %s9 = scalar_select 0, %s8, %s6
  $region1: #{cifar10_convnet_forward.7} parent=0
    #allocation2 [shape = 'u8[4096]{0}', space=vmem, size = 0x1000, scoped, tag = 'output window, operand 0, single buffered']
    #allocation3 [shape = 's32[1]{0}', space=sflag, size = 0x4, scoped, tag = 'scoped memory for cifar10_convnet_forward.7']
    %10 = vsyncpa [#allocation3], 0
    // Predicated region
    $region2: #{cifar10_convnet_forward.7} parent=1 // pred_check
      _
    $region3: #{cifar10_convnet_forward.7} parent=1 // pred_check_branch
      %12 = sbr.rel (0) target = $region5
    $region4: #{cifar10_convnet_forward.7} parent=1 // pred_region
      _
    $region5: #{cifar10_convnet_forward.7} parent=1 // pred_fallthru
      _
    // Predicated region
    $region6: #{cifar10_convnet_forward.7} parent=1 // pred_check
      _
    $region7: #{cifar10_convnet_forward.7} parent=1 // pred_check_branch
      %14 = sbr.rel (0) target = $region9
    $region8: #{cifar10_convnet_forward.7} parent=1 // pred_region
      _
    $region9: #{cifar10_convnet_forward.7} parent=1 // pred_fallthru
      _
    // Predicated region
    $region10: #{cifar10_convnet_forward.7} parent=1 // pred_check
      _
    $region11: #{cifar10_convnet_forward.7} parent=1 // pred_check_branch
      %16 = sbr.rel (0) target = $region13
    $region12: #{cifar10_convnet_forward.7} parent=1 // pred_region
      _
    $region13: #{cifar10_convnet_forward.7} parent=1 // pred_fallthru
      _
    // Predicated region
    $region14: #{cifar10_convnet_forward.7} parent=1 // pred_check
      _
    $region15: #{cifar10_convnet_forward.7} parent=1 // pred_check_branch
      %18 = sbr.rel (0) target = $region17
    $region16: #{cifar10_convnet_forward.7} parent=1 // pred_region
      _
    $region17: #{cifar10_convnet_forward.7} parent=1 // pred_fallthru
      _
    // Predicated region
    $region18: #{cifar10_convnet_forward.7} parent=1 // pred_check
      _
    $region19: #{cifar10_convnet_forward.7} parent=1 // pred_check_branch
      %20 = sbr.rel (0) target = $region21
    $region20: #{cifar10_convnet_forward.7} parent=1 // pred_region
      _
    $region21: #{cifar10_convnet_forward.7} parent=1 // pred_fallthru
      _
    %v21 = vld [vmem:[%s0] sm:$0xff]
    %v22 = vld [vmem:[%s0 + $0x8] sm:$0xff]
    %v23 = vld [vmem:[%s0 + $0x10] sm:$0xff]
    %v24 = vld [vmem:[%s0 + $0x18] sm:$0xff]
    %v25 = vld [vmem:[%s0 + $0x20] sm:$0xff]
    %v26 = vld [vmem:[%s0 + $0x28] sm:$0xff]
    %v27 = vld [vmem:[%s0 + $0x30] sm:$0xff]
    %v28 = vld [vmem:[%s0 + $0x38] sm:$0xff]
    %v29 = vld [vmem:[%s1] sm:$0xf]
    %v30 = vld [vmem:[%s1 + $0x4] sm:$0xf]
    %v31 = vld [vmem:[%s1 + $0x8] sm:$0xf]
    %v32 = vld [vmem:[%s1 + $0xc] sm:$0xf]
    %v33 = vld [vmem:[%s1 + $0x10] sm:$0xf]
    %v34 = vld [vmem:[%s1 + $0x14] sm:$0xf]
    %v35 = vld [vmem:[%s1 + $0x18] sm:$0xf]
    %v36 = vld [vmem:[%s1 + $0x1c] sm:$0xf]
    %v37 = vld [vmem:[%s1 + $0x20] sm:$0xf]
    %v38 = vld [vmem:[%s1 + $0x24] sm:$0xf]
    %v39 = vld [vmem:[%s1 + $0x28] sm:$0xf]
    %v40 = vld [vmem:[%s1 + $0x2c] sm:$0xf]
    %v41 = vld [vmem:[%s1 + $0x30] sm:$0xf]
    %v42 = vld [vmem:[%s1 + $0x34] sm:$0xf]
    %v43 = vld [vmem:[%s1 + $0x38] sm:$0xf]
    %v44 = vld [vmem:[%s1 + $0x3c] sm:$0xf]
    %v45 = vld [vmem:[%s1 + $0x40] sm:$0xf]
    %v46 = vld [vmem:[%s1 + $0x44] sm:$0xf]
    %v47 = vld [vmem:[%s1 + $0x48] sm:$0xf]
    %v48 = vld [vmem:[%s1 + $0x4c] sm:$0xf]
    %v49 = vld [vmem:[%s1 + $0x50] sm:$0xf]
    %v50 = vld [vmem:[%s1 + $0x54] sm:$0xf]
    %v51 = vld [vmem:[%s1 + $0x58] sm:$0xf]
    %v52 = vld [vmem:[%s1 + $0x5c] sm:$0xf]
    %v53 = vld [vmem:[%s1 + $0x60] sm:$0xf]
    %v54 = vld [vmem:[%s1 + $0x64] sm:$0xf]
    %v55 = vld [vmem:[%s1 + $0x68] sm:$0xf]
    %v56 = vld [vmem:[%s1 + $0x6c] sm:$0xf]
    %v57 = vld [vmem:[%s1 + $0x70] sm:$0xf]
    %v58 = vld [vmem:[%s1 + $0x74] sm:$0xf]
    %v59 = vld [vmem:[%s1 + $0x78] sm:$0xf]
    %v60 = vld [vmem:[%s1 + $0x7c] sm:$0xf]
    %v61 = vld [vmem:[%s1 + $0x80] sm:$0xf]
    %v62 = vld [vmem:[%s1 + $0x84] sm:$0xf]
    %v63 = vld [vmem:[%s1 + $0x88] sm:$0xf]
    %v64 = vld [vmem:[%s1 + $0x8c] sm:$0xf]
    %v65 = vld [vmem:[%s1 + $0x90] sm:$0xf]
    %v66 = vld [vmem:[%s1 + $0x94] sm:$0xf]
    %v67 = vld [vmem:[%s1 + $0x98] sm:$0xf]
    %v68 = vld [vmem:[%s1 + $0x9c] sm:$0xf]
    %v69 = vld [vmem:[%s1 + $0xa0] sm:$0xf]
    %v70 = vld [vmem:[%s1 + $0xa4] sm:$0xf]
    %v71 = vld [vmem:[%s1 + $0xa8] sm:$0xf]
    %v72 = vld [vmem:[%s1 + $0xac] sm:$0xf]
    %v73 = vld [vmem:[%s1 + $0xb0] sm:$0xf]
    %v74 = vld [vmem:[%s1 + $0xb4] sm:$0xf]
    %v75 = vld [vmem:[%s1 + $0xb8] sm:$0xf]
    %v76 = vld [vmem:[%s1 + $0xbc] sm:$0xf]
    %v77 = vld [vmem:[%s1 + $0xc0] sm:$0xf]
    %v78 = vld [vmem:[%s1 + $0xc4] sm:$0xf]
    %v79 = vld [vmem:[%s1 + $0xc8] sm:$0xf]
    %v80 = vld [vmem:[%s1 + $0xcc] sm:$0xf]
    %v81 = vld [vmem:[%s1 + $0xd0] sm:$0xf]
    %v82 = vld [vmem:[%s1 + $0xd4] sm:$0xf]
    %v83 = vld [vmem:[%s1 + $0xd8] sm:$0xf]
    %v84 = vld [vmem:[%s1 + $0xdc] sm:$0xf]
    %v85 = vld [vmem:[%s1 + $0xe0] sm:$0xf]
    %v86 = vld [vmem:[%s1 + $0xe4] sm:$0xf]
    %v87 = vld [vmem:[%s1 + $0xe8] sm:$0xf]
    %v88 = vld [vmem:[%s1 + $0xec] sm:$0xf]
    %v89 = vld [vmem:[%s1 + $0xf0] sm:$0xf]
    %v90 = vld [vmem:[%s1 + $0xf4] sm:$0xf]
    %v91 = vld [vmem:[%s1 + $0xf8] sm:$0xf]
    %v92 = vld [vmem:[%s1 + $0xfc] sm:$0xf]
    %v93 = vld [vmem:[%s1 + $0x100] sm:$0xf]
    %v94 = vld [vmem:[%s1 + $0x104] sm:$0xf]
    %v95 = vld [vmem:[%s1 + $0x108] sm:$0xf]
    %v96 = vld [vmem:[%s1 + $0x10c] sm:$0xf]
    %v97 = vld [vmem:[%s1 + $0x110] sm:$0xf]
    %v98 = vld [vmem:[%s1 + $0x114] sm:$0xf]
    %v99 = vld [vmem:[%s1 + $0x118] sm:$0xf]
    %v100 = vld [vmem:[%s1 + $0x11c] sm:$0xf]
    %v101 = vld [vmem:[%s1 + $0x120] sm:$0xf]
    %v102 = vld [vmem:[%s1 + $0x124] sm:$0xf]
    %v103 = vld [vmem:[%s1 + $0x128] sm:$0xf]
    %v104 = vld [vmem:[%s1 + $0x12c] sm:$0xf]
    %v105 = vld [vmem:[%s1 + $0x130] sm:$0xf]
    %v106 = vld [vmem:[%s1 + $0x134] sm:$0xf]
    %v107 = vld [vmem:[%s1 + $0x138] sm:$0xf]
    %v108 = vld [vmem:[%s1 + $0x13c] sm:$0xf]
    %v109 = vld [vmem:[%s1 + $0x140] sm:$0xf]
    %v110 = vld [vmem:[%s1 + $0x144] sm:$0xf]
    %v111 = vld [vmem:[%s1 + $0x148] sm:$0xf]
    %v112 = vld [vmem:[%s1 + $0x14c] sm:$0xf]
    %v113 = vld [vmem:[%s1 + $0x150] sm:$0xf]
    %v114 = vld [vmem:[%s1 + $0x154] sm:$0xf]
    %v115 = vld [vmem:[%s1 + $0x158] sm:$0xf]
    %v116 = vld [vmem:[%s1 + $0x15c] sm:$0xf]
    %v117 = vld [vmem:[%s1 + $0x160] sm:$0xf]
    %v118 = vld [vmem:[%s1 + $0x164] sm:$0xf]
    %v119 = vld [vmem:[%s1 + $0x168] sm:$0xf]
    %v120 = vld [vmem:[%s1 + $0x16c] sm:$0xf]
    %v121 = vld [vmem:[%s1 + $0x170] sm:$0xf]
    %v122 = vld [vmem:[%s1 + $0x174] sm:$0xf]
    %v123 = vld [vmem:[%s1 + $0x178] sm:$0xf]
    %v124 = vld [vmem:[%s1 + $0x17c] sm:$0xf]
    %v125 = vld [vmem:[%s1 + $0x180] sm:$0xf]
    %v126 = vld [vmem:[%s1 + $0x184] sm:$0xf]
    %v127 = vld [vmem:[%s1 + $0x188] sm:$0xf]
    %v128 = vld [vmem:[%s1 + $0x18c] sm:$0xf]
    %v129 = vld [vmem:[%s1 + $0x190] sm:$0xf]
    %v130 = vld [vmem:[%s1 + $0x194] sm:$0xf]
    %v131 = vld [vmem:[%s1 + $0x198] sm:$0xf]
    %v132 = vld [vmem:[%s1 + $0x19c] sm:$0xf]
    %v133 = vld [vmem:[%s1 + $0x1a0] sm:$0xf]
    %v134 = vld [vmem:[%s1 + $0x1a4] sm:$0xf]
    %v135 = vld [vmem:[%s1 + $0x1a8] sm:$0xf]
    %v136 = vld [vmem:[%s1 + $0x1ac] sm:$0xf]
    %v137 = vld [vmem:[%s1 + $0x1b0] sm:$0xf]
    %v138 = vld [vmem:[%s1 + $0x1b4] sm:$0xf]
    %v139 = vld [vmem:[%s1 + $0x1b8] sm:$0xf]
    %v140 = vld [vmem:[%s1 + $0x1bc] sm:$0xf]
    %v141 = vld [vmem:[%s1 + $0x1c0] sm:$0xf]
    %v142 = vld [vmem:[%s1 + $0x1c4] sm:$0xf]
    %v143 = vld [vmem:[%s1 + $0x1c8] sm:$0xf]
    %v144 = vld [vmem:[%s1 + $0x1cc] sm:$0xf]
    %v145 = vld [vmem:[%s1 + $0x1d0] sm:$0xf]
    %v146 = vld [vmem:[%s1 + $0x1d4] sm:$0xf]
    %v147 = vld [vmem:[%s1 + $0x1d8] sm:$0xf]
    %v148 = vld [vmem:[%s1 + $0x1dc] sm:$0xf]
    %v149 = vld [vmem:[%s1 + $0x1e0] sm:$0xf]
    %v150 = vld [vmem:[%s1 + $0x1e4] sm:$0xf]
    %v151 = vld [vmem:[%s1 + $0x1e8] sm:$0xf]
    %v152 = vld [vmem:[%s1 + $0x1ec] sm:$0xf]
    %v153 = vld [vmem:[%s1 + $0x1f0] sm:$0xf]
    %v154 = vld [vmem:[%s1 + $0x1f4] sm:$0xf]
    %v155 = vld [vmem:[%s1 + $0x1f8] sm:$0xf]
    %v156 = vld [vmem:[%s1 + $0x1fc] sm:$0xf]
    %v157 = vld [vmem:[%s1 + $0x200] sm:$0xf]
    %v158 = vld [vmem:[%s1 + $0x204] sm:$0xf]
    %v159 = vld [vmem:[%s1 + $0x208] sm:$0xf]
    %v160 = vld [vmem:[%s1 + $0x20c] sm:$0xf]
    %v161 = vld [vmem:[%s1 + $0x210] sm:$0xf]
    %v162 = vld [vmem:[%s1 + $0x214] sm:$0xf]
    %v163 = vld [vmem:[%s1 + $0x218] sm:$0xf]
    %v164 = vld [vmem:[%s1 + $0x21c] sm:$0xf]
    %v165 = vld [vmem:[%s1 + $0x220] sm:$0xf]
    %v166 = vld [vmem:[%s1 + $0x224] sm:$0xf]
    %v167 = vld [vmem:[%s1 + $0x228] sm:$0xf]
    %v168 = vld [vmem:[%s1 + $0x22c] sm:$0xf]
    %v169 = vld [vmem:[%s1 + $0x230] sm:$0xf]
    %v170 = vld [vmem:[%s1 + $0x234] sm:$0xf]
    %v171 = vld [vmem:[%s1 + $0x238] sm:$0xf]
    %v172 = vld [vmem:[%s1 + $0x23c] sm:$0xf]
    %v173 = vld [vmem:[%s1 + $0x240] sm:$0xf]
    %v174 = vld [vmem:[%s1 + $0x244] sm:$0xf]
    %v175 = vld [vmem:[%s1 + $0x248] sm:$0xf]
    %v176 = vld [vmem:[%s1 + $0x24c] sm:$0xf]
    %v177 = vld [vmem:[%s1 + $0x250] sm:$0xf]
    %v178 = vld [vmem:[%s1 + $0x254] sm:$0xf]
    %v179 = vld [vmem:[%s1 + $0x258] sm:$0xf]
    %v180 = vld [vmem:[%s1 + $0x25c] sm:$0xf]
    %v181 = vld [vmem:[%s1 + $0x260] sm:$0xf]
    %v182 = vld [vmem:[%s1 + $0x264] sm:$0xf]
    %v183 = vld [vmem:[%s1 + $0x268] sm:$0xf]
    %v184 = vld [vmem:[%s1 + $0x26c] sm:$0xf]
    %v185 = vld [vmem:[%s1 + $0x270] sm:$0xf]
    %v186 = vld [vmem:[%s1 + $0x274] sm:$0xf]
    %v187 = vld [vmem:[%s1 + $0x278] sm:$0xf]
    %v188 = vld [vmem:[%s1 + $0x27c] sm:$0xf]
    %v189 = vld [vmem:[%s1 + $0x280] sm:$0xf]
    %v190 = vld [vmem:[%s1 + $0x284] sm:$0xf]
    %v191 = vld [vmem:[%s1 + $0x288] sm:$0xf]
    %v192 = vld [vmem:[%s1 + $0x28c] sm:$0xf]
    %v193 = vld [vmem:[%s1 + $0x290] sm:$0xf]
    %v194 = vld [vmem:[%s1 + $0x294] sm:$0xf]
    %v195 = vld [vmem:[%s1 + $0x298] sm:$0xf]
    %v196 = vld [vmem:[%s1 + $0x29c] sm:$0xf]
    %v197 = vld [vmem:[%s1 + $0x2a0] sm:$0xf]
    %v198 = vld [vmem:[%s1 + $0x2a4] sm:$0xf]
    %v199 = vld [vmem:[%s1 + $0x2a8] sm:$0xf]
    %v200 = vld [vmem:[%s1 + $0x2ac] sm:$0xf]
    %v201 = vld [vmem:[%s1 + $0x2b0] sm:$0xf]
    %v202 = vld [vmem:[%s1 + $0x2b4] sm:$0xf]
    %v203 = vld [vmem:[%s1 + $0x2b8] sm:$0xf]
    %v204 = vld [vmem:[%s1 + $0x2bc] sm:$0xf]
    %v205 = vld [vmem:[%s1 + $0x2c0] sm:$0xf]
    %v206 = vld [vmem:[%s1 + $0x2c4] sm:$0xf]
    %v207 = vld [vmem:[%s1 + $0x2c8] sm:$0xf]
    %v208 = vld [vmem:[%s1 + $0x2cc] sm:$0xf]
    %v209 = vld [vmem:[%s1 + $0x2d0] sm:$0xf]
    %v210 = vld [vmem:[%s1 + $0x2d4] sm:$0xf]
    %v211 = vld [vmem:[%s1 + $0x2d8] sm:$0xf]
    %v212 = vld [vmem:[%s1 + $0x2dc] sm:$0xf]
    %v213 = vld [vmem:[%s1 + $0x2e0] sm:$0xf]
    %v214 = vld [vmem:[%s1 + $0x2e4] sm:$0xf]
    %v215 = vld [vmem:[%s1 + $0x2e8] sm:$0xf]
    %v216 = vld [vmem:[%s1 + $0x2ec] sm:$0xf]
    %v217 = vld [vmem:[%s1 + $0x2f0] sm:$0xf]
    %v218 = vld [vmem:[%s1 + $0x2f4] sm:$0xf]
    %v219 = vld [vmem:[%s1 + $0x2f8] sm:$0xf]
    %v220 = vld [vmem:[%s1 + $0x2fc] sm:$0xf]
    %v221 = vld [vmem:[%s1 + $0x300] sm:$0xf]
    %v222 = vld [vmem:[%s1 + $0x304] sm:$0xf]
    %v223 = vld [vmem:[%s1 + $0x308] sm:$0xf]
    %v224 = vld [vmem:[%s1 + $0x30c] sm:$0xf]
    %v225 = vld [vmem:[%s1 + $0x310] sm:$0xf]
    %v226 = vld [vmem:[%s1 + $0x314] sm:$0xf]
    %v227 = vld [vmem:[%s1 + $0x318] sm:$0xf]
    %v228 = vld [vmem:[%s1 + $0x31c] sm:$0xf]
    %v229 = vld [vmem:[%s1 + $0x320] sm:$0xf]
    %v230 = vld [vmem:[%s1 + $0x324] sm:$0xf]
    %v231 = vld [vmem:[%s1 + $0x328] sm:$0xf]
    %v232 = vld [vmem:[%s1 + $0x32c] sm:$0xf]
    %v233 = vld [vmem:[%s1 + $0x330] sm:$0xf]
    %v234 = vld [vmem:[%s1 + $0x334] sm:$0xf]
    %v235 = vld [vmem:[%s1 + $0x338] sm:$0xf]
    %v236 = vld [vmem:[%s1 + $0x33c] sm:$0xf]
    %v237 = vld [vmem:[%s1 + $0x340] sm:$0xf]
    %v238 = vld [vmem:[%s1 + $0x344] sm:$0xf]
    %v239 = vld [vmem:[%s1 + $0x348] sm:$0xf]
    %v240 = vld [vmem:[%s1 + $0x34c] sm:$0xf]
    %v241 = vld [vmem:[%s1 + $0x350] sm:$0xf]
    %v242 = vld [vmem:[%s1 + $0x354] sm:$0xf]
    %v243 = vld [vmem:[%s1 + $0x358] sm:$0xf]
    %v244 = vld [vmem:[%s1 + $0x35c] sm:$0xf]
    %v245 = vld [vmem:[%s1 + $0x360] sm:$0xf]
    %v246 = vld [vmem:[%s1 + $0x364] sm:$0xf]
    %v247 = vld [vmem:[%s1 + $0x368] sm:$0xf]
    %v248 = vld [vmem:[%s1 + $0x36c] sm:$0xf]
    %v249 = vld [vmem:[%s1 + $0x370] sm:$0xf]
    %v250 = vld [vmem:[%s1 + $0x374] sm:$0xf]
    %v251 = vld [vmem:[%s1 + $0x378] sm:$0xf]
    %v252 = vld [vmem:[%s1 + $0x37c] sm:$0xf]
    %v253 = vld [vmem:[%s1 + $0x380] sm:$0xf]
    %v254 = vld [vmem:[%s1 + $0x384] sm:$0xf]
    %v255 = vld [vmem:[%s1 + $0x388] sm:$0xf]
    %v256 = vld [vmem:[%s1 + $0x38c] sm:$0xf]
    %v257 = vld [vmem:[%s1 + $0x390] sm:$0xf]
    %v258 = vld [vmem:[%s1 + $0x394] sm:$0xf]
    %v259 = vld [vmem:[%s1 + $0x398] sm:$0xf]
    %v260 = vld [vmem:[%s1 + $0x39c] sm:$0xf]
    %v261 = vld [vmem:[%s1 + $0x3a0] sm:$0xf]
    %v262 = vld [vmem:[%s1 + $0x3a4] sm:$0xf]
    %v263 = vld [vmem:[%s1 + $0x3a8] sm:$0xf]
    %v264 = vld [vmem:[%s1 + $0x3ac] sm:$0xf]
    %v265 = vld [vmem:[%s1 + $0x3b0] sm:$0xf]
    %v266 = vld [vmem:[%s1 + $0x3b4] sm:$0xf]
    %v267 = vld [vmem:[%s1 + $0x3b8] sm:$0xf]
    %v268 = vld [vmem:[%s1 + $0x3bc] sm:$0xf]
    %v269 = vld [vmem:[%s1 + $0x3c0] sm:$0xf]
    %v270 = vld [vmem:[%s1 + $0x3c4] sm:$0xf]
    %v271 = vld [vmem:[%s1 + $0x3c8] sm:$0xf]
    %v272 = vld [vmem:[%s1 + $0x3cc] sm:$0xf]
    %v273 = vld [vmem:[%s1 + $0x3d0] sm:$0xf]
    %v274 = vld [vmem:[%s1 + $0x3d4] sm:$0xf]
    %v275 = vld [vmem:[%s1 + $0x3d8] sm:$0xf]
    %v276 = vld [vmem:[%s1 + $0x3dc] sm:$0xf]
    %v277 = vld [vmem:[%s1 + $0x3e0] sm:$0xf]
    %v278 = vld [vmem:[%s1 + $0x3e4] sm:$0xf]
    %v279 = vld [vmem:[%s1 + $0x3e8] sm:$0xf]
    %v280 = vld [vmem:[%s1 + $0x3ec] sm:$0xf]
    %v281 = vld [vmem:[%s1 + $0x3f0] sm:$0xf]
    %v282 = vld [vmem:[%s1 + $0x3f4] sm:$0xf]
    %v283 = vld [vmem:[%s1 + $0x3f8] sm:$0xf]
    %v284 = vld [vmem:[%s1 + $0x3fc] sm:$0xf]
    %v285 = vld [vmem:[%s2] sm:$0x1]
    %v287 = vperm.slane %v285, 0
    %v297 = vunpack.c.l.b16 %v21
    %v298 = vunpack.c.h.b16 %v21
    %v299 = vunpack.c.l.b16 %v22
    %v300 = vunpack.c.h.b16 %v22
    %v301 = vunpack.c.l.b16 %v23
    %v302 = vunpack.c.h.b16 %v23
    %v303 = vunpack.c.l.b16 %v24
    %v304 = vunpack.c.h.b16 %v24
    %v305 = vunpack.c.l.b16 %v25
    %v306 = vunpack.c.h.b16 %v25
    %v307 = vunpack.c.l.b16 %v26
    %v308 = vunpack.c.h.b16 %v26
    %v309 = vunpack.c.l.b16 %v27
    %v310 = vunpack.c.h.b16 %v27
    %v311 = vunpack.c.l.b16 %v28
    %v312 = vunpack.c.h.b16 %v28
    %v313 = vpack.c.b16 %v297, %v297
    %v314 = vpack.c.b16 %v298, %v298
    %v315 = vpack.c.b16 %v299, %v299
    %v316 = vpack.c.b16 %v300, %v300
    %v317 = vpack.c.b16 %v301, %v301
    %v318 = vpack.c.b16 %v302, %v302
    %v319 = vpack.c.b16 %v303, %v303
    %v320 = vpack.c.b16 %v304, %v304
    %v321 = vpack.c.b16 %v305, %v305
    %v322 = vpack.c.b16 %v306, %v306
    %v323 = vpack.c.b16 %v307, %v307
    %v324 = vpack.c.b16 %v308, %v308
    %v325 = vpack.c.b16 %v309, %v309
    %v326 = vpack.c.b16 %v310, %v310
    %v327 = vpack.c.b16 %v311, %v311
    %v328 = vpack.c.b16 %v312, %v312
    %v601 = vunpack.c.l.b16 %v29
    %v602 = vunpack.c.l.b16 %v30
    %v603 = vunpack.c.l.b16 %v31
    %v604 = vunpack.c.l.b16 %v32
    %v605 = vunpack.c.l.b16 %v33
    %v606 = vunpack.c.l.b16 %v34
    %v607 = vunpack.c.l.b16 %v35
    %v608 = vunpack.c.l.b16 %v36
    %v609 = vunpack.c.l.b16 %v37
    %v610 = vunpack.c.l.b16 %v38
    %v611 = vunpack.c.l.b16 %v39
    %v612 = vunpack.c.l.b16 %v40
    %v613 = vunpack.c.l.b16 %v41
    %v614 = vunpack.c.l.b16 %v42
    %v615 = vunpack.c.l.b16 %v43
    %v616 = vunpack.c.l.b16 %v44
    %v617 = vunpack.c.l.b16 %v45
    %v618 = vunpack.c.l.b16 %v46
    %v619 = vunpack.c.l.b16 %v47
    %v620 = vunpack.c.l.b16 %v48
    %v621 = vunpack.c.l.b16 %v49
    %v622 = vunpack.c.l.b16 %v50
    %v623 = vunpack.c.l.b16 %v51
    %v624 = vunpack.c.l.b16 %v52
    %v625 = vunpack.c.l.b16 %v53
    %v626 = vunpack.c.l.b16 %v54
    %v627 = vunpack.c.l.b16 %v55
    %v628 = vunpack.c.l.b16 %v56
    %v629 = vunpack.c.l.b16 %v57
    %v630 = vunpack.c.l.b16 %v58
    %v631 = vunpack.c.l.b16 %v59
    %v632 = vunpack.c.l.b16 %v60
    %v633 = vunpack.c.l.b16 %v61
    %v634 = vunpack.c.l.b16 %v62
    %v635 = vunpack.c.l.b16 %v63
    %v636 = vunpack.c.l.b16 %v64
    %v637 = vunpack.c.l.b16 %v65
    %v638 = vunpack.c.l.b16 %v66
    %v639 = vunpack.c.l.b16 %v67
    %v640 = vunpack.c.l.b16 %v68
    %v641 = vunpack.c.l.b16 %v69
    %v642 = vunpack.c.l.b16 %v70
    %v643 = vunpack.c.l.b16 %v71
    %v644 = vunpack.c.l.b16 %v72
    %v645 = vunpack.c.l.b16 %v73
    %v646 = vunpack.c.l.b16 %v74
    %v647 = vunpack.c.l.b16 %v75
    %v648 = vunpack.c.l.b16 %v76
    %v649 = vunpack.c.l.b16 %v77
    %v650 = vunpack.c.l.b16 %v78
    %v651 = vunpack.c.l.b16 %v79
    %v652 = vunpack.c.l.b16 %v80
    %v653 = vunpack.c.l.b16 %v81
    %v654 = vunpack.c.l.b16 %v82
    %v655 = vunpack.c.l.b16 %v83
    %v656 = vunpack.c.l.b16 %v84
    %v657 = vunpack.c.l.b16 %v85
    %v658 = vunpack.c.l.b16 %v86
    %v659 = vunpack.c.l.b16 %v87
    %v660 = vunpack.c.l.b16 %v88
    %v661 = vunpack.c.l.b16 %v89
    %v662 = vunpack.c.l.b16 %v90
    %v663 = vunpack.c.l.b16 %v91
    %v664 = vunpack.c.l.b16 %v92
    %v665 = vunpack.c.l.b16 %v93
    %v666 = vunpack.c.l.b16 %v94
    %v667 = vunpack.c.l.b16 %v95
    %v668 = vunpack.c.l.b16 %v96
    %v669 = vunpack.c.l.b16 %v97
    %v670 = vunpack.c.l.b16 %v98
    %v671 = vunpack.c.l.b16 %v99
    %v672 = vunpack.c.l.b16 %v100
    %v673 = vunpack.c.l.b16 %v101
    %v674 = vunpack.c.l.b16 %v102
    %v675 = vunpack.c.l.b16 %v103
    %v676 = vunpack.c.l.b16 %v104
    %v677 = vunpack.c.l.b16 %v105
    %v678 = vunpack.c.l.b16 %v106
    %v679 = vunpack.c.l.b16 %v107
    %v680 = vunpack.c.l.b16 %v108
    %v681 = vunpack.c.l.b16 %v109
    %v682 = vunpack.c.l.b16 %v110
    %v683 = vunpack.c.l.b16 %v111
    %v684 = vunpack.c.l.b16 %v112
    %v685 = vunpack.c.l.b16 %v113
    %v686 = vunpack.c.l.b16 %v114
    %v687 = vunpack.c.l.b16 %v115
    %v688 = vunpack.c.l.b16 %v116
    %v689 = vunpack.c.l.b16 %v117
    %v690 = vunpack.c.l.b16 %v118
    %v691 = vunpack.c.l.b16 %v119
    %v692 = vunpack.c.l.b16 %v120
    %v693 = vunpack.c.l.b16 %v121
    %v694 = vunpack.c.l.b16 %v122
    %v695 = vunpack.c.l.b16 %v123
    %v696 = vunpack.c.l.b16 %v124
    %v697 = vunpack.c.l.b16 %v125
    %v698 = vunpack.c.l.b16 %v126
    %v699 = vunpack.c.l.b16 %v127
    %v700 = vunpack.c.l.b16 %v128
    %v701 = vunpack.c.l.b16 %v129
    %v702 = vunpack.c.l.b16 %v130
    %v703 = vunpack.c.l.b16 %v131
    %v704 = vunpack.c.l.b16 %v132
    %v705 = vunpack.c.l.b16 %v133
    %v706 = vunpack.c.l.b16 %v134
    %v707 = vunpack.c.l.b16 %v135
    %v708 = vunpack.c.l.b16 %v136
    %v709 = vunpack.c.l.b16 %v137
    %v710 = vunpack.c.l.b16 %v138
    %v711 = vunpack.c.l.b16 %v139
    %v712 = vunpack.c.l.b16 %v140
    %v713 = vunpack.c.l.b16 %v141
    %v714 = vunpack.c.l.b16 %v142
    %v715 = vunpack.c.l.b16 %v143
    %v716 = vunpack.c.l.b16 %v144
    %v717 = vunpack.c.l.b16 %v145
    %v718 = vunpack.c.l.b16 %v146
    %v719 = vunpack.c.l.b16 %v147
    %v720 = vunpack.c.l.b16 %v148
    %v721 = vunpack.c.l.b16 %v149
    %v722 = vunpack.c.l.b16 %v150
    %v723 = vunpack.c.l.b16 %v151
    %v724 = vunpack.c.l.b16 %v152
    %v725 = vunpack.c.l.b16 %v153
    %v726 = vunpack.c.l.b16 %v154
    %v727 = vunpack.c.l.b16 %v155
    %v728 = vunpack.c.l.b16 %v156
    %v729 = vunpack.c.l.b16 %v157
    %v730 = vunpack.c.l.b16 %v158
    %v731 = vunpack.c.l.b16 %v159
    %v732 = vunpack.c.l.b16 %v160
    %v733 = vunpack.c.l.b16 %v161
    %v734 = vunpack.c.l.b16 %v162
    %v735 = vunpack.c.l.b16 %v163
    %v736 = vunpack.c.l.b16 %v164
    %v737 = vunpack.c.l.b16 %v165
    %v738 = vunpack.c.l.b16 %v166
    %v739 = vunpack.c.l.b16 %v167
    %v740 = vunpack.c.l.b16 %v168
    %v741 = vunpack.c.l.b16 %v169
    %v742 = vunpack.c.l.b16 %v170
    %v743 = vunpack.c.l.b16 %v171
    %v744 = vunpack.c.l.b16 %v172
    %v745 = vunpack.c.l.b16 %v173
    %v746 = vunpack.c.l.b16 %v174
    %v747 = vunpack.c.l.b16 %v175
    %v748 = vunpack.c.l.b16 %v176
    %v749 = vunpack.c.l.b16 %v177
    %v750 = vunpack.c.l.b16 %v178
    %v751 = vunpack.c.l.b16 %v179
    %v752 = vunpack.c.l.b16 %v180
    %v753 = vunpack.c.l.b16 %v181
    %v754 = vunpack.c.l.b16 %v182
    %v755 = vunpack.c.l.b16 %v183
    %v756 = vunpack.c.l.b16 %v184
    %v757 = vunpack.c.l.b16 %v185
    %v758 = vunpack.c.l.b16 %v186
    %v759 = vunpack.c.l.b16 %v187
    %v760 = vunpack.c.l.b16 %v188
    %v761 = vunpack.c.l.b16 %v189
    %v762 = vunpack.c.l.b16 %v190
    %v763 = vunpack.c.l.b16 %v191
    %v764 = vunpack.c.l.b16 %v192
    %v765 = vunpack.c.l.b16 %v193
    %v766 = vunpack.c.l.b16 %v194
    %v767 = vunpack.c.l.b16 %v195
    %v768 = vunpack.c.l.b16 %v196
    %v769 = vunpack.c.l.b16 %v197
    %v770 = vunpack.c.l.b16 %v198
    %v771 = vunpack.c.l.b16 %v199
    %v772 = vunpack.c.l.b16 %v200
    %v773 = vunpack.c.l.b16 %v201
    %v774 = vunpack.c.l.b16 %v202
    %v775 = vunpack.c.l.b16 %v203
    %v776 = vunpack.c.l.b16 %v204
    %v777 = vunpack.c.l.b16 %v205
    %v778 = vunpack.c.l.b16 %v206
    %v779 = vunpack.c.l.b16 %v207
    %v780 = vunpack.c.l.b16 %v208
    %v781 = vunpack.c.l.b16 %v209
    %v782 = vunpack.c.l.b16 %v210
    %v783 = vunpack.c.l.b16 %v211
    %v784 = vunpack.c.l.b16 %v212
    %v785 = vunpack.c.l.b16 %v213
    %v786 = vunpack.c.l.b16 %v214
    %v787 = vunpack.c.l.b16 %v215
    %v788 = vunpack.c.l.b16 %v216
    %v789 = vunpack.c.l.b16 %v217
    %v790 = vunpack.c.l.b16 %v218
    %v791 = vunpack.c.l.b16 %v219
    %v792 = vunpack.c.l.b16 %v220
    %v793 = vunpack.c.l.b16 %v221
    %v794 = vunpack.c.l.b16 %v222
    %v795 = vunpack.c.l.b16 %v223
    %v796 = vunpack.c.l.b16 %v224
    %v797 = vunpack.c.l.b16 %v225
    %v798 = vunpack.c.l.b16 %v226
    %v799 = vunpack.c.l.b16 %v227
    %v800 = vunpack.c.l.b16 %v228
    %v801 = vunpack.c.l.b16 %v229
    %v802 = vunpack.c.l.b16 %v230
    %v803 = vunpack.c.l.b16 %v231
    %v804 = vunpack.c.l.b16 %v232
    %v805 = vunpack.c.l.b16 %v233
    %v806 = vunpack.c.l.b16 %v234
    %v807 = vunpack.c.l.b16 %v235
    %v808 = vunpack.c.l.b16 %v236
    %v809 = vunpack.c.l.b16 %v237
    %v810 = vunpack.c.l.b16 %v238
    %v811 = vunpack.c.l.b16 %v239
    %v812 = vunpack.c.l.b16 %v240
    %v813 = vunpack.c.l.b16 %v241
    %v814 = vunpack.c.l.b16 %v242
    %v815 = vunpack.c.l.b16 %v243
    %v816 = vunpack.c.l.b16 %v244
    %v817 = vunpack.c.l.b16 %v245
    %v818 = vunpack.c.l.b16 %v246
    %v819 = vunpack.c.l.b16 %v247
    %v820 = vunpack.c.l.b16 %v248
    %v821 = vunpack.c.l.b16 %v249
    %v822 = vunpack.c.l.b16 %v250
    %v823 = vunpack.c.l.b16 %v251
    %v824 = vunpack.c.l.b16 %v252
    %v825 = vunpack.c.l.b16 %v253
    %v826 = vunpack.c.l.b16 %v254
    %v827 = vunpack.c.l.b16 %v255
    %v828 = vunpack.c.l.b16 %v256
    %v829 = vunpack.c.l.b16 %v257
    %v830 = vunpack.c.l.b16 %v258
    %v831 = vunpack.c.l.b16 %v259
    %v832 = vunpack.c.l.b16 %v260
    %v833 = vunpack.c.l.b16 %v261
    %v834 = vunpack.c.l.b16 %v262
    %v835 = vunpack.c.l.b16 %v263
    %v836 = vunpack.c.l.b16 %v264
    %v837 = vunpack.c.l.b16 %v265
    %v838 = vunpack.c.l.b16 %v266
    %v839 = vunpack.c.l.b16 %v267
    %v840 = vunpack.c.l.b16 %v268
    %v841 = vunpack.c.l.b16 %v269
    %v842 = vunpack.c.l.b16 %v270
    %v843 = vunpack.c.l.b16 %v271
    %v844 = vunpack.c.l.b16 %v272
    %v845 = vunpack.c.l.b16 %v273
    %v846 = vunpack.c.l.b16 %v274
    %v847 = vunpack.c.l.b16 %v275
    %v848 = vunpack.c.l.b16 %v276
    %v849 = vunpack.c.l.b16 %v277
    %v850 = vunpack.c.l.b16 %v278
    %v851 = vunpack.c.l.b16 %v279
    %v852 = vunpack.c.l.b16 %v280
    %v853 = vunpack.c.l.b16 %v281
    %v854 = vunpack.c.l.b16 %v282
    %v855 = vunpack.c.l.b16 %v283
    %v856 = vunpack.c.l.b16 %v284
    %v857 = vpack.c.b16 %v602, %v601
    %v858 = vpack.c.b16 %v604, %v603
    %v859 = vpack.c.b16 %v606, %v605
    %v860 = vpack.c.b16 %v608, %v607
    %v861 = vpack.c.b16 %v610, %v609
    %v862 = vpack.c.b16 %v612, %v611
    %v863 = vpack.c.b16 %v614, %v613
    %v864 = vpack.c.b16 %v616, %v615
    %v865 = vpack.c.b16 %v618, %v617
    %v866 = vpack.c.b16 %v620, %v619
    %v867 = vpack.c.b16 %v622, %v621
    %v868 = vpack.c.b16 %v624, %v623
    %v869 = vpack.c.b16 %v626, %v625
    %v870 = vpack.c.b16 %v628, %v627
    %v871 = vpack.c.b16 %v630, %v629
    %v872 = vpack.c.b16 %v632, %v631
    %v873 = vpack.c.b16 %v634, %v633
    %v874 = vpack.c.b16 %v636, %v635
    %v875 = vpack.c.b16 %v638, %v637
    %v876 = vpack.c.b16 %v640, %v639
    %v877 = vpack.c.b16 %v642, %v641
    %v878 = vpack.c.b16 %v644, %v643
    %v879 = vpack.c.b16 %v646, %v645
    %v880 = vpack.c.b16 %v648, %v647
    %v881 = vpack.c.b16 %v650, %v649
    %v882 = vpack.c.b16 %v652, %v651
    %v883 = vpack.c.b16 %v654, %v653
    %v884 = vpack.c.b16 %v656, %v655
    %v885 = vpack.c.b16 %v658, %v657
    %v886 = vpack.c.b16 %v660, %v659
    %v887 = vpack.c.b16 %v662, %v661
    %v888 = vpack.c.b16 %v664, %v663
    %v889 = vpack.c.b16 %v666, %v665
    %v890 = vpack.c.b16 %v668, %v667
    %v891 = vpack.c.b16 %v670, %v669
    %v892 = vpack.c.b16 %v672, %v671
    %v893 = vpack.c.b16 %v674, %v673
    %v894 = vpack.c.b16 %v676, %v675
    %v895 = vpack.c.b16 %v678, %v677
    %v896 = vpack.c.b16 %v680, %v679
    %v897 = vpack.c.b16 %v682, %v681
    %v898 = vpack.c.b16 %v684, %v683
    %v899 = vpack.c.b16 %v686, %v685
    %v900 = vpack.c.b16 %v688, %v687
    %v901 = vpack.c.b16 %v690, %v689
    %v902 = vpack.c.b16 %v692, %v691
    %v903 = vpack.c.b16 %v694, %v693
    %v904 = vpack.c.b16 %v696, %v695
    %v905 = vpack.c.b16 %v698, %v697
    %v906 = vpack.c.b16 %v700, %v699
    %v907 = vpack.c.b16 %v702, %v701
    %v908 = vpack.c.b16 %v704, %v703
    %v909 = vpack.c.b16 %v706, %v705
    %v910 = vpack.c.b16 %v708, %v707
    %v911 = vpack.c.b16 %v710, %v709
    %v912 = vpack.c.b16 %v712, %v711
    %v913 = vpack.c.b16 %v714, %v713
    %v914 = vpack.c.b16 %v716, %v715
    %v915 = vpack.c.b16 %v718, %v717
    %v916 = vpack.c.b16 %v720, %v719
    %v917 = vpack.c.b16 %v722, %v721
    %v918 = vpack.c.b16 %v724, %v723
    %v919 = vpack.c.b16 %v726, %v725
    %v920 = vpack.c.b16 %v728, %v727
    %v921 = vpack.c.b16 %v730, %v729
    %v922 = vpack.c.b16 %v732, %v731
    %v923 = vpack.c.b16 %v734, %v733
    %v924 = vpack.c.b16 %v736, %v735
    %v925 = vpack.c.b16 %v738, %v737
    %v926 = vpack.c.b16 %v740, %v739
    %v927 = vpack.c.b16 %v742, %v741
    %v928 = vpack.c.b16 %v744, %v743
    %v929 = vpack.c.b16 %v746, %v745
    %v930 = vpack.c.b16 %v748, %v747
    %v931 = vpack.c.b16 %v750, %v749
    %v932 = vpack.c.b16 %v752, %v751
    %v933 = vpack.c.b16 %v754, %v753
    %v934 = vpack.c.b16 %v756, %v755
    %v935 = vpack.c.b16 %v758, %v757
    %v936 = vpack.c.b16 %v760, %v759
    %v937 = vpack.c.b16 %v762, %v761
    %v938 = vpack.c.b16 %v764, %v763
    %v939 = vpack.c.b16 %v766, %v765
    %v940 = vpack.c.b16 %v768, %v767
    %v941 = vpack.c.b16 %v770, %v769
    %v942 = vpack.c.b16 %v772, %v771
    %v943 = vpack.c.b16 %v774, %v773
    %v944 = vpack.c.b16 %v776, %v775
    %v945 = vpack.c.b16 %v778, %v777
    %v946 = vpack.c.b16 %v780, %v779
    %v947 = vpack.c.b16 %v782, %v781
    %v948 = vpack.c.b16 %v784, %v783
    %v949 = vpack.c.b16 %v786, %v785
    %v950 = vpack.c.b16 %v788, %v787
    %v951 = vpack.c.b16 %v790, %v789
    %v952 = vpack.c.b16 %v792, %v791
    %v953 = vpack.c.b16 %v794, %v793
    %v954 = vpack.c.b16 %v796, %v795
    %v955 = vpack.c.b16 %v798, %v797
    %v956 = vpack.c.b16 %v800, %v799
    %v957 = vpack.c.b16 %v802, %v801
    %v958 = vpack.c.b16 %v804, %v803
    %v959 = vpack.c.b16 %v806, %v805
    %v960 = vpack.c.b16 %v808, %v807
    %v961 = vpack.c.b16 %v810, %v809
    %v962 = vpack.c.b16 %v812, %v811
    %v963 = vpack.c.b16 %v814, %v813
    %v964 = vpack.c.b16 %v816, %v815
    %v965 = vpack.c.b16 %v818, %v817
    %v966 = vpack.c.b16 %v820, %v819
    %v967 = vpack.c.b16 %v822, %v821
    %v968 = vpack.c.b16 %v824, %v823
    %v969 = vpack.c.b16 %v826, %v825
    %v970 = vpack.c.b16 %v828, %v827
    %v971 = vpack.c.b16 %v830, %v829
    %v972 = vpack.c.b16 %v832, %v831
    %v973 = vpack.c.b16 %v834, %v833
    %v974 = vpack.c.b16 %v836, %v835
    %v975 = vpack.c.b16 %v838, %v837
    %v976 = vpack.c.b16 %v840, %v839
    %v977 = vpack.c.b16 %v842, %v841
    %v978 = vpack.c.b16 %v844, %v843
    %v979 = vpack.c.b16 %v846, %v845
    %v980 = vpack.c.b16 %v848, %v847
    %v981 = vpack.c.b16 %v850, %v849
    %v982 = vpack.c.b16 %v852, %v851
    %v983 = vpack.c.b16 %v854, %v853
    %v984 = vpack.c.b16 %v856, %v855
    %1113 = vmatpush.bf16.msra.mxu0 %v864
    %1114 = vmatpush.bf16.msra.mxu0 %v863
    %1115 = vmatpush.bf16.msra.mxu0 %v862
    %1116 = vmatpush.bf16.msra.mxu0 %v861
    %1117 = vmatpush.bf16.msra.mxu0 %v860
    %1118 = vmatpush.bf16.msra.mxu0 %v859
    %1119 = vmatpush.bf16.msra.mxu0 %v858
    %1120 = vmatpush.bf16.msra.mxu0 %v857
    %1121 = vmatmul.bf16.gmra.mxu0 %v313
    %v1122 = vpop.f32.mrf.mxu0
    %v1123 = vadd.f32 %v287, %v1122
    %v1124 = vpop.f32.mrf.mxu0
    %1125 = vdwg.mxu0
    %1126 = vmatpush.bf16.msra.mxu0 %v872
    %1127 = vmatpush.bf16.msra.mxu0 %v871
    %1128 = vmatpush.bf16.msra.mxu0 %v870
    %1129 = vmatpush.bf16.msra.mxu0 %v869
    %1130 = vmatpush.bf16.msra.mxu0 %v868
    %1131 = vmatpush.bf16.msra.mxu0 %v867
    %1132 = vmatpush.bf16.msra.mxu0 %v866
    %1133 = vmatpush.bf16.msra.mxu0 %v865
    %1134 = vmatmul.bf16.gmra.mxu0 %v314
    %v1135 = vpop.f32.mrf.mxu0
    %v1136 = vadd.f32 %v1123, %v1135
    %v1137 = vpop.f32.mrf.mxu0
    %1138 = vdwg.mxu0
    %1139 = vmatpush.bf16.msra.mxu0 %v880
    %1140 = vmatpush.bf16.msra.mxu0 %v879
    %1141 = vmatpush.bf16.msra.mxu0 %v878
    %1142 = vmatpush.bf16.msra.mxu0 %v877
    %1143 = vmatpush.bf16.msra.mxu0 %v876
    %1144 = vmatpush.bf16.msra.mxu0 %v875
    %1145 = vmatpush.bf16.msra.mxu0 %v874
    %1146 = vmatpush.bf16.msra.mxu0 %v873
    %1147 = vmatmul.bf16.gmra.mxu0 %v315
    %v1148 = vpop.f32.mrf.mxu0
    %v1149 = vadd.f32 %v1136, %v1148
    %v1150 = vpop.f32.mrf.mxu0
    %1151 = vdwg.mxu0
    %1152 = vmatpush.bf16.msra.mxu0 %v888
    %1153 = vmatpush.bf16.msra.mxu0 %v887
    %1154 = vmatpush.bf16.msra.mxu0 %v886
    %1155 = vmatpush.bf16.msra.mxu0 %v885
    %1156 = vmatpush.bf16.msra.mxu0 %v884
    %1157 = vmatpush.bf16.msra.mxu0 %v883
    %1158 = vmatpush.bf16.msra.mxu0 %v882
    %1159 = vmatpush.bf16.msra.mxu0 %v881
    %1160 = vmatmul.bf16.gmra.mxu0 %v316
    %v1161 = vpop.f32.mrf.mxu0
    %v1162 = vadd.f32 %v1149, %v1161
    %v1163 = vpop.f32.mrf.mxu0
    %1164 = vdwg.mxu0
    %1165 = vmatpush.bf16.msra.mxu0 %v896
    %1166 = vmatpush.bf16.msra.mxu0 %v895
    %1167 = vmatpush.bf16.msra.mxu0 %v894
    %1168 = vmatpush.bf16.msra.mxu0 %v893
    %1169 = vmatpush.bf16.msra.mxu0 %v892
    %1170 = vmatpush.bf16.msra.mxu0 %v891
    %1171 = vmatpush.bf16.msra.mxu0 %v890
    %1172 = vmatpush.bf16.msra.mxu0 %v889
    %1173 = vmatmul.bf16.gmra.mxu0 %v317
    %v1174 = vpop.f32.mrf.mxu0
    %v1175 = vadd.f32 %v1162, %v1174
    %v1176 = vpop.f32.mrf.mxu0
    %1177 = vdwg.mxu0
    %1178 = vmatpush.bf16.msra.mxu0 %v904
    %1179 = vmatpush.bf16.msra.mxu0 %v903
    %1180 = vmatpush.bf16.msra.mxu0 %v902
    %1181 = vmatpush.bf16.msra.mxu0 %v901
    %1182 = vmatpush.bf16.msra.mxu0 %v900
    %1183 = vmatpush.bf16.msra.mxu0 %v899
    %1184 = vmatpush.bf16.msra.mxu0 %v898
    %1185 = vmatpush.bf16.msra.mxu0 %v897
    %1186 = vmatmul.bf16.gmra.mxu0 %v318
    %v1187 = vpop.f32.mrf.mxu0
    %v1188 = vadd.f32 %v1175, %v1187
    %v1189 = vpop.f32.mrf.mxu0
    %1190 = vdwg.mxu0
    %1191 = vmatpush.bf16.msra.mxu0 %v912
    %1192 = vmatpush.bf16.msra.mxu0 %v911
    %1193 = vmatpush.bf16.msra.mxu0 %v910
    %1194 = vmatpush.bf16.msra.mxu0 %v909
    %1195 = vmatpush.bf16.msra.mxu0 %v908
    %1196 = vmatpush.bf16.msra.mxu0 %v907
    %1197 = vmatpush.bf16.msra.mxu0 %v906
    %1198 = vmatpush.bf16.msra.mxu0 %v905
    %1199 = vmatmul.bf16.gmra.mxu0 %v319
    %v1200 = vpop.f32.mrf.mxu0
    %v1201 = vadd.f32 %v1188, %v1200
    %v1202 = vpop.f32.mrf.mxu0
    %1203 = vdwg.mxu0
    %1204 = vmatpush.bf16.msra.mxu0 %v920
    %1205 = vmatpush.bf16.msra.mxu0 %v919
    %1206 = vmatpush.bf16.msra.mxu0 %v918
    %1207 = vmatpush.bf16.msra.mxu0 %v917
    %1208 = vmatpush.bf16.msra.mxu0 %v916
    %1209 = vmatpush.bf16.msra.mxu0 %v915
    %1210 = vmatpush.bf16.msra.mxu0 %v914
    %1211 = vmatpush.bf16.msra.mxu0 %v913
    %1212 = vmatmul.bf16.gmra.mxu0 %v320
    %v1213 = vpop.f32.mrf.mxu0
    %v1214 = vadd.f32 %v1201, %v1213
    %v1215 = vpop.f32.mrf.mxu0
    %1216 = vdwg.mxu0
    %1217 = vmatpush.bf16.msra.mxu0 %v928
    %1218 = vmatpush.bf16.msra.mxu0 %v927
    %1219 = vmatpush.bf16.msra.mxu0 %v926
    %1220 = vmatpush.bf16.msra.mxu0 %v925
    %1221 = vmatpush.bf16.msra.mxu0 %v924
    %1222 = vmatpush.bf16.msra.mxu0 %v923
    %1223 = vmatpush.bf16.msra.mxu0 %v922
    %1224 = vmatpush.bf16.msra.mxu0 %v921
    %1225 = vmatmul.bf16.gmra.mxu0 %v321
    %v1226 = vpop.f32.mrf.mxu0
    %v1227 = vadd.f32 %v1214, %v1226
    %v1228 = vpop.f32.mrf.mxu0
    %1229 = vdwg.mxu0
    %1230 = vmatpush.bf16.msra.mxu0 %v936
    %1231 = vmatpush.bf16.msra.mxu0 %v935
    %1232 = vmatpush.bf16.msra.mxu0 %v934
    %1233 = vmatpush.bf16.msra.mxu0 %v933
    %1234 = vmatpush.bf16.msra.mxu0 %v932
    %1235 = vmatpush.bf16.msra.mxu0 %v931
    %1236 = vmatpush.bf16.msra.mxu0 %v930
    %1237 = vmatpush.bf16.msra.mxu0 %v929
    %1238 = vmatmul.bf16.gmra.mxu0 %v322
    %v1239 = vpop.f32.mrf.mxu0
    %v1240 = vadd.f32 %v1227, %v1239
    %v1241 = vpop.f32.mrf.mxu0
    %1242 = vdwg.mxu0
    %1243 = vmatpush.bf16.msra.mxu0 %v944
    %1244 = vmatpush.bf16.msra.mxu0 %v943
    %1245 = vmatpush.bf16.msra.mxu0 %v942
    %1246 = vmatpush.bf16.msra.mxu0 %v941
    %1247 = vmatpush.bf16.msra.mxu0 %v940
    %1248 = vmatpush.bf16.msra.mxu0 %v939
    %1249 = vmatpush.bf16.msra.mxu0 %v938
    %1250 = vmatpush.bf16.msra.mxu0 %v937
    %1251 = vmatmul.bf16.gmra.mxu0 %v323
    %v1252 = vpop.f32.mrf.mxu0
    %v1253 = vadd.f32 %v1240, %v1252
    %v1254 = vpop.f32.mrf.mxu0
    %1255 = vdwg.mxu0
    %1256 = vmatpush.bf16.msra.mxu0 %v952
    %1257 = vmatpush.bf16.msra.mxu0 %v951
    %1258 = vmatpush.bf16.msra.mxu0 %v950
    %1259 = vmatpush.bf16.msra.mxu0 %v949
    %1260 = vmatpush.bf16.msra.mxu0 %v948
    %1261 = vmatpush.bf16.msra.mxu0 %v947
    %1262 = vmatpush.bf16.msra.mxu0 %v946
    %1263 = vmatpush.bf16.msra.mxu0 %v945
    %1264 = vmatmul.bf16.gmra.mxu0 %v324
    %v1265 = vpop.f32.mrf.mxu0
    %v1266 = vadd.f32 %v1253, %v1265
    %v1267 = vpop.f32.mrf.mxu0
    %1268 = vdwg.mxu0
    %1269 = vmatpush.bf16.msra.mxu0 %v960
    %1270 = vmatpush.bf16.msra.mxu0 %v959
    %1271 = vmatpush.bf16.msra.mxu0 %v958
    %1272 = vmatpush.bf16.msra.mxu0 %v957
    %1273 = vmatpush.bf16.msra.mxu0 %v956
    %1274 = vmatpush.bf16.msra.mxu0 %v955
    %1275 = vmatpush.bf16.msra.mxu0 %v954
    %1276 = vmatpush.bf16.msra.mxu0 %v953
    %1277 = vmatmul.bf16.gmra.mxu0 %v325
    %v1278 = vpop.f32.mrf.mxu0
    %v1279 = vadd.f32 %v1266, %v1278
    %v1280 = vpop.f32.mrf.mxu0
    %1281 = vdwg.mxu0
    %1282 = vmatpush.bf16.msra.mxu0 %v968
    %1283 = vmatpush.bf16.msra.mxu0 %v967
    %1284 = vmatpush.bf16.msra.mxu0 %v966
    %1285 = vmatpush.bf16.msra.mxu0 %v965
    %1286 = vmatpush.bf16.msra.mxu0 %v964
    %1287 = vmatpush.bf16.msra.mxu0 %v963
    %1288 = vmatpush.bf16.msra.mxu0 %v962
    %1289 = vmatpush.bf16.msra.mxu0 %v961
    %1290 = vmatmul.bf16.gmra.mxu0 %v326
    %v1291 = vpop.f32.mrf.mxu0
    %v1292 = vadd.f32 %v1279, %v1291
    %v1293 = vpop.f32.mrf.mxu0
    %1294 = vdwg.mxu0
    %1295 = vmatpush.bf16.msra.mxu0 %v976
    %1296 = vmatpush.bf16.msra.mxu0 %v975
    %1297 = vmatpush.bf16.msra.mxu0 %v974
    %1298 = vmatpush.bf16.msra.mxu0 %v973
    %1299 = vmatpush.bf16.msra.mxu0 %v972
    %1300 = vmatpush.bf16.msra.mxu0 %v971
    %1301 = vmatpush.bf16.msra.mxu0 %v970
    %1302 = vmatpush.bf16.msra.mxu0 %v969
    %1303 = vmatmul.bf16.gmra.mxu0 %v327
    %v1304 = vpop.f32.mrf.mxu0
    %v1305 = vadd.f32 %v1292, %v1304
    %v1306 = vpop.f32.mrf.mxu0
    %1307 = vdwg.mxu0
    %1308 = vmatpush.bf16.msra.mxu0 %v984
    %1309 = vmatpush.bf16.msra.mxu0 %v983
    %1310 = vmatpush.bf16.msra.mxu0 %v982
    %1311 = vmatpush.bf16.msra.mxu0 %v981
    %1312 = vmatpush.bf16.msra.mxu0 %v980
    %1313 = vmatpush.bf16.msra.mxu0 %v979
    %1314 = vmatpush.bf16.msra.mxu0 %v978
    %1315 = vmatpush.bf16.msra.mxu0 %v977
    %1316 = vmatmul.bf16.gmra.mxu0 %v328
    %v1317 = vpop.f32.mrf.mxu0
    %v1318 = vadd.f32 %v1305, %v1317
    %v1319 = vpop.f32.mrf.mxu0
    %1320 = vdwg.mxu0
    %v1321 = vmax.f32 %v1318, 0.0
    %v1322 = vpack.c.bf16 %v1321, %v1321
    %v1323 = vld [vmem:[%s3] sm:$0xf]
    %v1324 = vld [vmem:[%s3 + $0x4] sm:$0xf]
    %v1325 = vld [vmem:[%s3 + $0x8] sm:$0xf]
    %v1326 = vld [vmem:[%s3 + $0xc] sm:$0xf]
    %v1327 = vld [vmem:[%s3 + $0x10] sm:$0xf]
    %v1328 = vld [vmem:[%s3 + $0x14] sm:$0xf]
    %v1329 = vld [vmem:[%s3 + $0x18] sm:$0xf]
    %v1330 = vld [vmem:[%s3 + $0x1c] sm:$0xf]
    %v1331 = vld [vmem:[%s3 + $0x20] sm:$0xf]
    %v1332 = vld [vmem:[%s3 + $0x24] sm:$0xf]
    %v1333 = vld [vmem:[%s3 + $0x28] sm:$0xf]
    %v1334 = vld [vmem:[%s3 + $0x2c] sm:$0xf]
    %v1335 = vld [vmem:[%s3 + $0x30] sm:$0xf]
    %v1336 = vld [vmem:[%s3 + $0x34] sm:$0xf]
    %v1337 = vld [vmem:[%s3 + $0x38] sm:$0xf]
    %v1338 = vld [vmem:[%s3 + $0x3c] sm:$0xf]
    %v1339 = vld [vmem:[%s4] sm:$0x1]
    %v1341 = vperm.slane %v1339, 0
    %v1359 = vunpack.c.l.b16 %v1323
    %v1360 = vunpack.c.l.b16 %v1324
    %v1361 = vunpack.c.l.b16 %v1325
    %v1362 = vunpack.c.l.b16 %v1326
    %v1363 = vunpack.c.l.b16 %v1327
    %v1364 = vunpack.c.l.b16 %v1328
    %v1365 = vunpack.c.l.b16 %v1329
    %v1366 = vunpack.c.l.b16 %v1330
    %v1367 = vunpack.c.l.b16 %v1331
    %v1368 = vunpack.c.l.b16 %v1332
    %v1369 = vunpack.c.l.b16 %v1333
    %v1370 = vunpack.c.l.b16 %v1334
    %v1371 = vunpack.c.l.b16 %v1335
    %v1372 = vunpack.c.l.b16 %v1336
    %v1373 = vunpack.c.l.b16 %v1337
    %v1374 = vunpack.c.l.b16 %v1338
    %v1375 = vpack.c.b16 %v1360, %v1359
    %v1376 = vpack.c.b16 %v1362, %v1361
    %v1377 = vpack.c.b16 %v1364, %v1363
    %v1378 = vpack.c.b16 %v1366, %v1365
    %v1379 = vpack.c.b16 %v1368, %v1367
    %v1380 = vpack.c.b16 %v1370, %v1369
    %v1381 = vpack.c.b16 %v1372, %v1371
    %v1382 = vpack.c.b16 %v1374, %v1373
    %1391 = vmatpush.bf16.msra.mxu0 %v1382
    %1392 = vmatpush.bf16.msra.mxu0 %v1381
    %1393 = vmatpush.bf16.msra.mxu0 %v1380
    %1394 = vmatpush.bf16.msra.mxu0 %v1379
    %1395 = vmatpush.bf16.msra.mxu0 %v1378
    %1396 = vmatpush.bf16.msra.mxu0 %v1377
    %1397 = vmatpush.bf16.msra.mxu0 %v1376
    %1398 = vmatpush.bf16.msra.mxu0 %v1375
    %1399 = vmatmul.bf16.gmra.mxu0 %v1322
    %v1400 = vpop.f32.mrf.mxu0
    %v1401 = vadd.f32 %v1341, %v1400
    %v1402 = vpop.f32.mrf.mxu0
    %1403 = vdwg.mxu0
    %1404 = vst [vmem:[#allocation2] sm:$0xff] %v1401
    // Predicated region
    $region22: #{cifar10_convnet_forward.7} parent=1 // pred_check
      _
    $region23: #{cifar10_convnet_forward.7} parent=1 // pred_check_branch
      %1406 = sbr.rel (0) target = $region25
    $region24: #{cifar10_convnet_forward.7} parent=1 // pred_region
      %1408 = vsyncadd [#allocation3], 0
      %s1410 = sshll.u32 [#allocation2], 4
      %s1411 = int_to_ptr.vmem [resolvable:$true] %s1410
      %s1412 = sshll.u32 %s5, 4
      %s1413 = int_to_ptr.hbm [resolvable:$true] %s1412
      %1415 = dma.vmem_to_hbm [thread:$0]  %s1411, 128, %s1413, [#allocation3]
    $region25: #{cifar10_convnet_forward.7} parent=1 // pred_fallthru
      _
    // Predicated region
    $region26: #{cifar10_convnet_forward.7} parent=1 // pred_check
      _
    $region27: #{cifar10_convnet_forward.7} parent=1 // pred_check_branch
      %1417 = sbr.rel (0) target = $region29
    $region28: #{cifar10_convnet_forward.7} parent=1 // pred_region
      %1419 = dma.done [#allocation3], 128
    $region29: #{cifar10_convnet_forward.7} parent=1 // pred_fallthru
      _
    %1420 = vsyncpa [#allocation3], 1

</llo_original>
